<compile_context>
chip_gen: v5e
topology: v5e:2x2
jax: 0.10.0
libtpu: 0.0.40
codegen_flags: <defaults>
</compile_context>

<pallas_src>
import functools
import math

import numpy as np

import jax
import jax.numpy as jnp
from jax import lax
from jax.experimental import pallas as pl
from jax.experimental.pallas import tpu as pltpu

EPS = 1e-5  # eps of InstanceNorm / AdaIN(batch_norm) / custom LayerNorm in the reference


# ---------------------------------------------------------------------------
# layout helpers / host-side constants
# ---------------------------------------------------------------------------
def _round_up(x, m):
    return ((x + m - 1) // m) * m


def _frame_dims(H, W, C):
    """Lane-dense frame dims: interior at rows 1..H, groups 1..W; last dim Wp*C % 128 == 0."""
    Wp = _round_up(W + 2, 128 // math.gcd(C, 128))
    Hp = _round_up(H + 2, 8)
    return Hp, Wp


def _to_lane_frame(x_nhwc, Hp, Wp):
    """(B,H,W,C) -> zero-padded lane-dense frame (B, Hp, Wp*C)."""
    B, H, W, C = x_nhwc.shape
    xp = jnp.pad(x_nhwc, ((0, 0), (1, Hp - H - 1), (1, Wp - W - 1), (0, 0)))
    return xp.reshape(B, Hp, Wp * C)


def _from_lane_frame(x_lane, H, W, C):
    B, Hp, L = x_lane.shape
    Wp = L // C
    return x_lane.reshape(B, Hp, Wp, C)[:, 1:H + 1, 1:W + 1, :]


def _interior_mask(Hp, Wp, H, W, C):
    r = np.arange(Hp)[:, None]
    grp = (np.arange(Wp * C) // C)[None, :]
    m = (r >= 1) & (r <= H) & (grp >= 1) & (grp <= W)
    return jnp.asarray(m.astype(np.float32))


def _channel_group_matrix(Wp, C):
    """G[p, q] = 1 if lane p and q hold the same channel -> rowsum @ G = per-channel sum, broadcast."""
    ch = np.arange(Wp * C) % C
    return jnp.asarray((ch[:, None] == ch[None, :]).astype(np.float32))


def _row_tap_matrices(Hp, H):
    """T[dy, r, r_src] selects the reflection-padded source row (r + dy - 1) for output row r."""
    def refl(rr):
        if rr == 0:
            return 2
        if rr == H + 1:
            return H - 1
        return rr

    t = np.zeros((3, Hp, Hp), np.float32)
    for dy in range(3):
        for r in range(Hp):
            rr = r + dy - 1
            if 0 <= rr <= H + 1:
                t[dy, r, refl(rr)] = 1.0
    return jnp.asarray(t)


def _conv_band_stack_np(w_hwio, Wp, W, C):
    """3x3 conv with width-reflection folded in -> stacked (3*Wp*C, Wp*C) banded weight slab.

    Built directly in numpy (host side, once per parameter set) so the per-forward
    column-reflection einsum of the previous version disappears.  Row block dy holds M_dy
    such that conv(src) = [T0@src | T1@src | T2@src] @ stack_dy(M_dy).
    """
    w = np.asarray(w_hwio, np.float32)            # (3, 3, Cin, Cout)
    L = Wp * C

    def refl_col(g):
        if g == 0:
            return 2
        if g == W + 1:
            return W - 1
        return g

    m = np.zeros((3, L, L), np.float32)
    for dy in range(3):
        for g_out in range(Wp):
            for dx in range(3):
                g_pad = g_out + dx - 1
                if not (0 <= g_pad <= W + 1):
                    continue
                g_src = refl_col(g_pad)
                # += : reflection can map two padded groups onto the same source group
                m[dy, g_src * C:(g_src + 1) * C, g_out * C:(g_out + 1) * C] += w[dy, dx]
    return m.reshape(3 * L, L)


def build_resblock_plan(params, H, W):
    """Host-side (numpy) precomputation of the stacked banded conv weights / biases.

    Done once per parameter set, outside jit -> no per-forward weight-matrix construction.
    Weights are precast to bf16 (MXU operands); biases stay f32.
    """
    rbs = params["resblocks"]
    C = int(rbs[0]["w1"].shape[2])
    Hp, Wp = _frame_dims(H, W, C)
    del Hp
    w_rows, b_rows = [], []
    for rb in rbs:
        for wk, bk in (("w1", "b1"), ("w2", "b2")):
            w_np = np.asarray(jax.device_get(rb[wk]), np.float32)
            b_np = np.asarray(jax.device_get(rb[bk]), np.float32)
            w_rows.append(_conv_band_stack_np(w_np, Wp, W, C))
            b_rows.append(np.tile(b_np, Wp))
    w_stack = np.stack(w_rows)                    # (2*n_res, 3L, L)
    b_stack = np.stack(b_rows)                    # (2*n_res, L)
    return {"w_stack": jnp.asarray(w_stack, jnp.bfloat16),
            "b_stack": jnp.asarray(b_stack, jnp.float32)}


def _style_lane_stack(adain, n_res, C, Wp):
    """AdaIN params (B, n_res*4*C) -> lane-tiled (B, n_res*4, Wp*C).

    Row order per block i: [4i] adain1 scale, [4i+1] adain1 shift, [4i+2] adain2 scale,
    [4i+3] adain2 shift (MUNIT layout: shift first, then scale, per AdaIN module).
    """
    B = adain.shape[0]
    a = adain.reshape(B, n_res, 2, 2, C)          # [B, block, adain_idx, (shift, scale), C]
    st = jnp.stack([a[:, :, :, 1, :], a[:, :, :, 0, :]], axis=3)   # [..., (scale, shift), C]
    st = st.reshape(B, n_res * 4, C)
    return jnp.tile(st, (1, 1, Wp))               # lane p holds channel p % C


# ---------------------------------------------------------------------------
# fused AdaIN residual-block Pallas kernel (all n_res blocks in one call)
# ---------------------------------------------------------------------------
def _fused_resblock_kernel(x_ref, t_ref, w_ref, b_ref, st_ref, mask_ref, g_ref,
                           out_ref, *, n_res, n_valid):
    """One batch element; loops over all residual blocks with x resident in VMEM."""
    f32, bf16 = jnp.float32, jnp.bfloat16
    mask = mask_ref[...]                          # (Hp, L) interior validity
    gmat = g_ref[...]                             # (L, L) per-channel aggregate + broadcast
    t0 = t_ref[0].astype(bf16)                    # reflection row taps (selection matrices)
    t1 = t_ref[1].astype(bf16)
    t2 = t_ref[2].astype(bf16)
    b_all = b_ref[...]                            # (2*n_res, L) f32 lane-tiled biases
    st_all = st_ref[0]                            # (4*n_res, L) f32 lane-tiled AdaIN scale/shift
    inv_n = 1.0 / float(n_valid)

    def conv3x3(src, idx):
        # reflect-pad 3x3 conv: row reflection via t*, column reflection + im2col folded into
        # the precomputed banded weight slab; one bf16 MXU matmul with K = 3*L.
        s = src.astype(bf16)
        rows = jnp.concatenate(
            [jnp.dot(t0, s, preferred_element_type=f32),
             jnp.dot(t1, s, preferred_element_type=f32),
             jnp.dot(t2, s, preferred_element_type=f32)], axis=1).astype(bf16)
        acc = jnp.dot(rows, w_ref[idx], preferred_element_type=f32)
        return acc + b_all[idx:idx + 1, :]

    def adain(a, sc, sh):
        # masked instance-norm stats from ONE stacked [sum, sumsq] @ gmat matmul
        am = a * mask
        stats = jnp.concatenate(
            [jnp.sum(am, axis=0, keepdims=True),
             jnp.sum(am * a, axis=0, keepdims=True)], axis=0)        # (2, L)
        agg = jnp.dot(stats, gmat, preferred_element_type=f32) * inv_n
        mean = agg[0:1, :]
        var = agg[1:2, :] - mean * mean
        return (a - mean) * lax.rsqrt(var + EPS) * sc + sh

    x = x_ref[0].astype(f32)
    for i in range(n_res):                        # static unroll (n_res is small)
        h = conv3x3(x, 2 * i)
        h = jnp.maximum(adain(h, st_all[4 * i:4 * i + 1, :], st_all[4 * i + 1:4 * i + 2, :]), 0.0)
        h = conv3x3(h, 2 * i + 1)
        h = adain(h, st_all[4 * i + 2:4 * i + 3, :], st_all[4 * i + 3:4 * i + 4, :])
        x = (x + h) * mask                        # keep frame zeroed outside the interior
    out_ref[0] = x.astype(out_ref.dtype)


def _fused_resblocks(x_lane, w_stack, b_stack, st, *, H, W, C, Hp, Wp):
    B = x_lane.shape[0]
    L = Wp * C
    n_res = w_stack.shape[0] // 2
    mask = _interior_mask(Hp, Wp, H, W, C)        # trace-time constants (cheap numpy)
    gmat = _channel_group_matrix(Wp, C)
    t_mats = _row_tap_matrices(Hp, H)
    kernel = functools.partial(_fused_resblock_kernel, n_res=n_res, n_valid=H * W)
    return pl.pallas_call(
        kernel,
        out_shape=jax.ShapeDtypeStruct((B, Hp, L), x_lane.dtype),
        grid=(B,),
        in_specs=[
            pl.BlockSpec((1, Hp, L), lambda b: (b, 0, 0)),              # x (lane-dense frame)
            pl.BlockSpec((3, Hp, Hp), lambda b: (0, 0, 0)),             # row reflection taps
            pl.BlockSpec((2 * n_res, 3 * L, L), lambda b: (0, 0, 0)),   # banded weights (bf16)
            pl.BlockSpec((2 * n_res, L), lambda b: (0, 0)),             # biases (lane-tiled)
            pl.BlockSpec((1, 4 * n_res, L), lambda b: (b, 0, 0)),       # AdaIN scale/shift lanes
            pl.BlockSpec((Hp, L), lambda b: (0, 0)),                    # interior mask
            pl.BlockSpec((L, L), lambda b: (0, 0)),                     # per-channel aggregation
        ],
        out_specs=pl.BlockSpec((1, Hp, L), lambda b: (b, 0, 0)),
        compiler_params=pltpu.CompilerParams(
            dimension_semantics=("parallel",),       # B=2 -> both v7x TensorCores
            vmem_limit_bytes=32 * 1024 * 1024),
    )(x_lane, t_mats, w_stack, b_stack, st, mask, gmat)


# ---------------------------------------------------------------------------
# plain-JAX stages (tail) -- shared helpers
# ---------------------------------------------------------------------------
def _conv_nhwc(x, w_hwio, b, padding):
    y = lax.conv_general_dilated(
        x, w_hwio, window_strides=(1, 1), padding=padding,
        dimension_numbers=("NHWC", "HWIO", "NHWC"),
        precision=lax.Precision.HIGHEST)
    return y + b[None, None, None, :]


def _upsample2x(x):
    return jnp.repeat(jnp.repeat(x, 2, axis=1), 2, axis=2)


def _upsample_conv(x, w, b):
    """Nearest-2x upsample + 5x5 'same' conv fused into one lhs-dilated conv (perf review)."""
    wp = jnp.pad(w, ((1, 1), (1, 1), (0, 0), (0, 0)))
    w6 = wp[:-1, :-1] + wp[:-1, 1:] + wp[1:, :-1] + wp[1:, 1:]      # (6,6,Cin,Cout)
    y = lax.conv_general_dilated(
        x, w6, window_strides=(1, 1), padding=((3, 3), (3, 3)),
        lhs_dilation=(2, 2),
        dimension_numbers=("NHWC", "HWIO", "NHWC"),
        precision=lax.Precision.HIGHEST)
    return y + b[None, None, None, :]


def _layer_norm(x, gamma, beta, eps=EPS):
    b = x.shape[0]
    flat = x.reshape(b, -1)
    mean = flat.mean(axis=1).reshape(b, 1, 1, 1)
    std = jnp.std(flat, axis=1, ddof=1).reshape(b, 1, 1, 1)
    y = (x - mean) / (std + eps)
    return y * gamma[None, None, None, :] + beta[None, None, None, :]


def _tail_stages(h, params):
    # TODO(synk): move Upsample+Conv+LayerNorm+ReLU and the final ReflectionPad+Conv7x7+Tanh
    #             head into the same lane-dense (Hp, Wp*C) Pallas scheme.
    for st in params["up"]:
        h = _upsample_conv(h, st["w"], st["b"])
        h = _layer_norm(h, st["gamma"], st["beta"])
        h = jnp.maximum(h, 0.0)
    h = jnp.pad(h, ((0, 0), (3, 3), (3, 3), (0, 0)), mode="reflect")
    h = _conv_nhwc(h, params["final"]["w"], params["final"]["b"], padding=((0, 0), (0, 0)))
    return jnp.tanh(h)


def _tail_stages_ref(h, params):
    for st in params["up"]:
        h = _upsample2x(h)
        h = _conv_nhwc(h, st["w"], st["b"], padding=((2, 2), (2, 2)))
        h = _layer_norm(h, st["gamma"], st["beta"])
        h = jnp.maximum(h, 0.0)
    h = jnp.pad(h, ((0, 0), (3, 3), (3, 3), (0, 0)), mode="reflect")
    h = _conv_nhwc(h, params["final"]["w"], params["final"]["b"], padding=((0, 0), (0, 0)))
    return jnp.tanh(h)


# ---------------------------------------------------------------------------
# full Decoder forward (Pallas path) and pure-JAX reference
# ---------------------------------------------------------------------------
def decoder_forward(content_nchw, style_code, params, plan):
    B, C, H, W = content_nchw.shape
    hp = lax.Precision.HIGHEST
    # style MLP -> AdaIN parameters (tiny; intentionally left to XLA -- see perf notes)
    m = params["mlp"]
    h = jnp.maximum(jnp.dot(style_code, m["w1"], precision=hp) + m["b1"], 0.0)
    h = jnp.maximum(jnp.dot(h, m["w2"], precision=hp) + m["b2"], 0.0)
    adain = jnp.dot(h, m["w3"], precision=hp) + m["b3"]              # (B, n_res*4*C)

    # fused AdaIN residual blocks (single Pallas call, lane-dense padded frame)
    n_res = len(params["resblocks"])
    Hp, Wp = _frame_dims(H, W, C)
    x_lane = _to_lane_frame(jnp.transpose(content_nchw, (0, 2, 3, 1)), Hp, Wp)
    st = _style_lane_stack(adain, n_res, C, Wp)                      # (B, n_res*4, L)
    x_lane = _fused_resblocks(x_lane, plan["w_stack"], plan["b_stack"], st,
                              H=H, W=W, C=C, Hp=Hp, Wp=Wp)
    h = _from_lane_frame(x_lane, H, W, C)                            # (B, H, W, C)
    h = _tail_stages(h, params)
    return jnp.transpose(h, (0, 3, 1, 2))                            # back to NCHW


def _adain_resblock_ref(x, rb, a1, a2):
    def branch(x, w, b, sc, sh, relu):
        xp = jnp.pad(x, ((0, 0), (1, 1), (1, 1), (0, 0)), mode="reflect")
        y = _conv_nhwc(xp, w, b, padding=((0, 0), (0, 0)))
        mean = jnp.mean(y, axis=(1, 2), keepdims=True)
        var = jnp.mean((y - mean) ** 2, axis=(1, 2), keepdims=True)
        y = (y - mean) / jnp.sqrt(var + EPS)
        y = y * sc[:, None, None, :] + sh[:, None, None, :]
        return jnp.maximum(y, 0.0) if relu else y

    h = branch(x, rb["w1"], rb["b1"], a1[0], a1[1], True)
    h = branch(h, rb["w2"], rb["b2"], a2[0], a2[1], False)
    return x + h


def decoder_reference(content_nchw, style_code, params):
    hp = lax.Precision.HIGHEST
    m = params["mlp"]
    h = jnp.maximum(jnp.dot(style_code, m["w1"], precision=hp) + m["b1"], 0.0)
    h = jnp.maximum(jnp.dot(h, m["w2"], precision=hp) + m["b2"], 0.0)
    adain = jnp.dot(h, m["w3"], precision=hp) + m["b3"]
    x = jnp.transpose(content_nchw, (0, 2, 3, 1))
    C = x.shape[-1]
    off = 0
    for rb in params["resblocks"]:
        sh1, sc1 = adain[:, off:off + C], adain[:, off + C:off + 2 * C]
        off += 2 * C
        sh2, sc2 = adain[:, off:off + C], adain[:, off + C:off + 2 * C]
        off += 2 * C
        x = _adain_resblock_ref(x, rb, (sc1, sh1), (sc2, sh2))
    x = _tail_stages_ref(x, params)
    return jnp.transpose(x, (0, 3, 1, 2))


# ---------------------------------------------------------------------------
# deterministic synthetic parameters (PyTorch-style uniform init bounds)
# ---------------------------------------------------------------------------
def init_params(key, *, out_ch, dim, n_res, n_up, style_dim, mlp_dim):
    C = dim * 2 ** n_up
    num_adain = n_res * 2 * 2 * C
    keys = iter(jax.random.split(key, 64))

    def uni(shape, bound):
        return jax.random.uniform(next(keys), shape, jnp.float32, -bound, bound)

    def linear(cin, cout):
        b = 1.0 / cin ** 0.5
        return uni((cin, cout), b), uni((cout,), b)

    def conv(kh, kw, cin, cout):
        b = 1.0 / (cin * kh * kw) ** 0.5
        return uni((kh, kw, cin, cout), b), uni((cout,), b)

    mlp = {}
    mlp["w1"], mlp["b1"] = linear(style_dim, mlp_dim)
    mlp["w2"], mlp["b2"] = linear(mlp_dim, mlp_dim)
    mlp["w3"], mlp["b3"] = linear(mlp_dim, num_adain)

    resblocks = []
    for _ in range(n_res):
        w1, b1 = conv(3, 3, C, C)
        w2, b2 = conv(3, 3, C, C)
        resblocks.append({"w1": w1, "b1": b1, "w2": w2, "b2": b2})

    ups = []
    c = C
    for _ in range(n_up):
        w, b = conv(5, 5, c, c // 2)
        gamma = jax.random.uniform(next(keys), (c // 2,), jnp.float32, 0.0, 1.0)
        beta = jnp.zeros((c // 2,), jnp.float32)
        ups.append({"w": w, "b": b, "gamma": gamma, "beta": beta})
        c //= 2
    wf, bf = conv(7, 7, c, out_ch)
    return {"mlp": mlp, "resblocks": resblocks, "up": ups, "final": {"w": wf, "b": bf}}


if __name__ == "__main__":
    B = 2
    OUT_CH, DIM, N_RES, N_UP, STYLE_DIM, MLP_DIM = 3, 4, 3, 2, 8, 256
    C = DIM * 2 ** N_UP          # 16 channels inside the residual blocks
    H = W = 8                    # content resolution; output is 4x larger

    key = jax.random.PRNGKey(0)
    k_c, k_s, k_p = jax.random.split(key, 3)
    content = jax.random.normal(k_c, (B, C, H, W), jnp.float32)
    style = jax.random.normal(k_s, (B, STYLE_DIM), jnp.float32)
    params = init_params(k_p, out_ch=OUT_CH, dim=DIM, n_res=N_RES, n_up=N_UP,
                         style_dim=STYLE_DIM, mlp_dim=MLP_DIM)

    # host-side, once per parameter set (banded reflection-folded conv weights, bf16 precast)
    plan = build_resblock_plan(params, H, W)

    out = jax.jit(decoder_forward)(content, style, params, plan)
    out = jax.block_until_ready(out)

    ref = jax.jit(decoder_reference)(content, style, params)
    ref = jax.block_until_ready(ref)

    assert out.shape == (B, OUT_CH, H * 2 ** N_UP, W * 2 ** N_UP), out.shape
    assert out.dtype == jnp.float32
    err = float(jnp.max(jnp.abs(out - ref)))
    if not bool(jnp.allclose(out, ref, atol=1e-2, rtol=1e-2)):
        raise AssertionError(f"mismatch vs reference, max abs err = {err}")
    print("KERNEL_OK")
</pallas_src>

<mosaic_0001>
module attributes {stable_mosaic.version = 11 : i64} {
  func.func @_fused_resblock_kernel(%arg0: i32, %arg1: memref<1x16x256xf32, #tpu.memory_space<vmem>>, %arg2: memref<3x16x16xf32, #tpu.memory_space<vmem>>, %arg3: memref<6x768x256xbf16, #tpu.memory_space<vmem>>, %arg4: memref<6x256xf32, #tpu.memory_space<vmem>>, %arg5: memref<1x12x256xf32, #tpu.memory_space<vmem>>, %arg6: memref<16x256xf32, #tpu.memory_space<vmem>>, %arg7: memref<256x256xf32, #tpu.memory_space<vmem>>, %arg8: memref<1x16x256xf32, #tpu.memory_space<vmem>>) attributes {dimension_semantics = [#tpu.dimension_semantics<parallel>], iteration_bounds = array<i64: 2>, scalar_prefetch = 0 : i64, scratch_operands = 0 : i64, tpu.core_type = #tpu.core_type<tc>, window_params = [{transform_indices = @transform_0, window_bounds = array<i64: 1, 16, 256>}, {pipeline_mode = #tpu.pipeline_mode<synchronous>, transform_indices = @transform_1, window_bounds = array<i64: 3, 16, 16>}, {pipeline_mode = #tpu.pipeline_mode<synchronous>, transform_indices = @transform_2, window_bounds = array<i64: 6, 768, 256>}, {pipeline_mode = #tpu.pipeline_mode<synchronous>, transform_indices = @transform_3, window_bounds = array<i64: 6, 256>}, {transform_indices = @transform_4, window_bounds = array<i64: 1, 12, 256>}, {pipeline_mode = #tpu.pipeline_mode<synchronous>, transform_indices = @transform_5, window_bounds = array<i64: 16, 256>}, {pipeline_mode = #tpu.pipeline_mode<synchronous>, transform_indices = @transform_6, window_bounds = array<i64: 256, 256>}, {transform_indices = @transform_7, window_bounds = array<i64: 1, 16, 256>}]} {
    %c0 = arith.constant 0 : index
    %c0_0 = arith.constant 0 : index
    %0 = vector.load %arg6[%c0, %c0_0] : memref<16x256xf32, #tpu.memory_space<vmem>>, vector<16x256xf32>
    %c0_1 = arith.constant 0 : index
    %c0_2 = arith.constant 0 : index
    %1 = vector.load %arg7[%c0_1, %c0_2] : memref<256x256xf32, #tpu.memory_space<vmem>>, vector<256x256xf32>
    %c0_3 = arith.constant 0 : index
    %c0_4 = arith.constant 0 : index
    %c0_5 = arith.constant 0 : index
    %2 = vector.load %arg2[%c0_3, %c0_4, %c0_5] : memref<3x16x16xf32, #tpu.memory_space<vmem>>, vector<1x16x16xf32>
    %3 = vector.shape_cast %2 : vector<1x16x16xf32> to vector<16x16xf32>
    %4 = arith.truncf %3 : vector<16x16xf32> to vector<16x16xbf16>
    %c1 = arith.constant 1 : index
    %c0_6 = arith.constant 0 : index
    %c0_7 = arith.constant 0 : index
    %5 = vector.load %arg2[%c1, %c0_6, %c0_7] : memref<3x16x16xf32, #tpu.memory_space<vmem>>, vector<1x16x16xf32>
    %6 = vector.shape_cast %5 : vector<1x16x16xf32> to vector<16x16xf32>
    %7 = arith.truncf %6 : vector<16x16xf32> to vector<16x16xbf16>
    %c2 = arith.constant 2 : index
    %c0_8 = arith.constant 0 : index
    %c0_9 = arith.constant 0 : index
    %8 = vector.load %arg2[%c2, %c0_8, %c0_9] : memref<3x16x16xf32, #tpu.memory_space<vmem>>, vector<1x16x16xf32>
    %9 = vector.shape_cast %8 : vector<1x16x16xf32> to vector<16x16xf32>
    %10 = arith.truncf %9 : vector<16x16xf32> to vector<16x16xbf16>
    %c0_10 = arith.constant 0 : index
    %c0_11 = arith.constant 0 : index
    %11 = vector.load %arg4[%c0_10, %c0_11] : memref<6x256xf32, #tpu.memory_space<vmem>>, vector<6x256xf32>
    %c0_12 = arith.constant 0 : index
    %c0_13 = arith.constant 0 : index
    %c0_14 = arith.constant 0 : index
    %12 = vector.load %arg5[%c0_12, %c0_13, %c0_14] : memref<1x12x256xf32, #tpu.memory_space<vmem>>, vector<1x12x256xf32>
    %13 = vector.shape_cast %12 : vector<1x12x256xf32> to vector<12x256xf32>
    %c0_15 = arith.constant 0 : index
    %c0_16 = arith.constant 0 : index
    %c0_17 = arith.constant 0 : index
    %14 = vector.load %arg1[%c0_15, %c0_16, %c0_17] : memref<1x16x256xf32, #tpu.memory_space<vmem>>, vector<1x16x256xf32>
    %15 = vector.shape_cast %14 : vector<1x16x256xf32> to vector<16x256xf32>
    %16 = arith.truncf %15 : vector<16x256xf32> to vector<16x256xbf16>
    %cst = arith.constant dense<0.000000e+00> : vector<16x256xf32>
    %17 = tpu.matmul %4, %16, %cst {dimension_numbers = #tpu.dot_dimension_numbers<[1], [0], [0], [1], [0, 0, 1, 1], [], []>} : vector<16x16xbf16>, vector<16x256xbf16>, vector<16x256xf32> -> vector<16x256xf32>
    %cst_18 = arith.constant dense<0.000000e+00> : vector<16x256xf32>
    %18 = tpu.matmul %7, %16, %cst_18 {dimension_numbers = #tpu.dot_dimension_numbers<[1], [0], [0], [1], [0, 0, 1, 1], [], []>} : vector<16x16xbf16>, vector<16x256xbf16>, vector<16x256xf32> -> vector<16x256xf32>
    %cst_19 = arith.constant dense<0.000000e+00> : vector<16x256xf32>
    %19 = tpu.matmul %10, %16, %cst_19 {dimension_numbers = #tpu.dot_dimension_numbers<[1], [0], [0], [1], [0, 0, 1, 1], [], []>} : vector<16x16xbf16>, vector<16x256xbf16>, vector<16x256xf32> -> vector<16x256xf32>
    %20 = tpu.concatenate %17, %18, %19 in 1 : vector<16x256xf32>, vector<16x256xf32>, vector<16x256xf32> -> vector<16x768xf32>
    %21 = arith.truncf %20 : vector<16x768xf32> to vector<16x768xbf16>
    %c0_20 = arith.constant 0 : index
    %c0_21 = arith.constant 0 : index
    %c0_22 = arith.constant 0 : index
    %22 = vector.load %arg3[%c0_20, %c0_21, %c0_22] : memref<6x768x256xbf16, #tpu.memory_space<vmem>>, vector<1x768x256xbf16>
    %23 = vector.shape_cast %22 : vector<1x768x256xbf16> to vector<768x256xbf16>
    %cst_23 = arith.constant dense<0.000000e+00> : vector<16x256xf32>
    %24 = tpu.matmul %21, %23, %cst_23 {dimension_numbers = #tpu.dot_dimension_numbers<[1], [0], [0], [1], [0, 0, 1, 1], [], []>} : vector<16x768xbf16>, vector<768x256xbf16>, vector<16x256xf32> -> vector<16x256xf32>
    %25 = vector.extract_strided_slice %11 {offsets = [0, 0], sizes = [1, 256], strides = [1, 1]} : vector<6x256xf32> to vector<1x256xf32>
    %26 = vector.broadcast %25 : vector<1x256xf32> to vector<16x256xf32>
    %27 = arith.addf %24, %26 : vector<16x256xf32>
    %28 = vector.extract_strided_slice %13 {offsets = [0, 0], sizes = [1, 256], strides = [1, 1]} : vector<12x256xf32> to vector<1x256xf32>
    %29 = vector.extract_strided_slice %13 {offsets = [1, 0], sizes = [1, 256], strides = [1, 1]} : vector<12x256xf32> to vector<1x256xf32>
    %30 = arith.mulf %27, %0 : vector<16x256xf32>
    %cst_24 = arith.constant dense<0.000000e+00> : vector<256xf32>
    %31 = vector.multi_reduction <add>, %30, %cst_24 [0] : vector<16x256xf32> to vector<256xf32>
    %32 = vector.shape_cast %31 : vector<256xf32> to vector<1x256xf32>
    %33 = arith.mulf %30, %27 : vector<16x256xf32>
    %cst_25 = arith.constant dense<0.000000e+00> : vector<256xf32>
    %34 = vector.multi_reduction <add>, %33, %cst_25 [0] : vector<16x256xf32> to vector<256xf32>
    %35 = vector.shape_cast %34 : vector<256xf32> to vector<1x256xf32>
    %36 = tpu.concatenate %32, %35 in 0 : vector<1x256xf32>, vector<1x256xf32> -> vector<2x256xf32>
    %cst_26 = arith.constant dense<0.000000e+00> : vector<2x256xf32>
    %37 = tpu.matmul %36, %1, %cst_26 {dimension_numbers = #tpu.dot_dimension_numbers<[1], [0], [0], [1], [0, 0, 1, 1], [], []>} : vector<2x256xf32>, vector<256x256xf32>, vector<2x256xf32> -> vector<2x256xf32>
    %cst_27 = arith.constant 1.562500e-02 : f32
    %38 = vector.broadcast %cst_27 : f32 to vector<2x256xf32>
    %39 = arith.mulf %37, %38 : vector<2x256xf32>
    %40 = vector.extract_strided_slice %39 {offsets = [0, 0], sizes = [1, 256], strides = [1, 1]} : vector<2x256xf32> to vector<1x256xf32>
    %41 = vector.extract_strided_slice %39 {offsets = [1, 0], sizes = [1, 256], strides = [1, 1]} : vector<2x256xf32> to vector<1x256xf32>
    %42 = arith.mulf %40, %40 : vector<1x256xf32>
    %43 = arith.subf %41, %42 : vector<1x256xf32>
    %44 = vector.broadcast %40 : vector<1x256xf32> to vector<16x256xf32>
    %45 = arith.subf %27, %44 : vector<16x256xf32>
    %cst_28 = arith.constant 9.99999974E-6 : f32
    %46 = vector.broadcast %cst_28 : f32 to vector<1x256xf32>
    %47 = arith.addf %43, %46 : vector<1x256xf32>
    %48 = math.rsqrt %47 : vector<1x256xf32>
    %49 = vector.broadcast %48 : vector<1x256xf32> to vector<16x256xf32>
    %50 = arith.mulf %45, %49 : vector<16x256xf32>
    %51 = vector.broadcast %28 : vector<1x256xf32> to vector<16x256xf32>
    %52 = arith.mulf %50, %51 : vector<16x256xf32>
    %53 = vector.broadcast %29 : vector<1x256xf32> to vector<16x256xf32>
    %54 = arith.addf %52, %53 : vector<16x256xf32>
    %cst_29 = arith.constant 0.000000e+00 : f32
    %55 = vector.broadcast %cst_29 : f32 to vector<16x256xf32>
    %56 = arith.maximumf %54, %55 : vector<16x256xf32>
    %57 = arith.truncf %56 : vector<16x256xf32> to vector<16x256xbf16>
    %cst_30 = arith.constant dense<0.000000e+00> : vector<16x256xf32>
    %58 = tpu.matmul %4, %57, %cst_30 {dimension_numbers = #tpu.dot_dimension_numbers<[1], [0], [0], [1], [0, 0, 1, 1], [], []>} : vector<16x16xbf16>, vector<16x256xbf16>, vector<16x256xf32> -> vector<16x256xf32>
    %cst_31 = arith.constant dense<0.000000e+00> : vector<16x256xf32>
    %59 = tpu.matmul %7, %57, %cst_31 {dimension_numbers = #tpu.dot_dimension_numbers<[1], [0], [0], [1], [0, 0, 1, 1], [], []>} : vector<16x16xbf16>, vector<16x256xbf16>, vector<16x256xf32> -> vector<16x256xf32>
    %cst_32 = arith.constant dense<0.000000e+00> : vector<16x256xf32>
    %60 = tpu.matmul %10, %57, %cst_32 {dimension_numbers = #tpu.dot_dimension_numbers<[1], [0], [0], [1], [0, 0, 1, 1], [], []>} : vector<16x16xbf16>, vector<16x256xbf16>, vector<16x256xf32> -> vector<16x256xf32>
    %61 = tpu.concatenate %58, %59, %60 in 1 : vector<16x256xf32>, vector<16x256xf32>, vector<16x256xf32> -> vector<16x768xf32>
    %62 = arith.truncf %61 : vector<16x768xf32> to vector<16x768xbf16>
    %c1_33 = arith.constant 1 : index
    %c0_34 = arith.constant 0 : index
    %c0_35 = arith.constant 0 : index
    %63 = vector.load %arg3[%c1_33, %c0_34, %c0_35] : memref<6x768x256xbf16, #tpu.memory_space<vmem>>, vector<1x768x256xbf16>
    %64 = vector.shape_cast %63 : vector<1x768x256xbf16> to vector<768x256xbf16>
    %cst_36 = arith.constant dense<0.000000e+00> : vector<16x256xf32>
    %65 = tpu.matmul %62, %64, %cst_36 {dimension_numbers = #tpu.dot_dimension_numbers<[1], [0], [0], [1], [0, 0, 1, 1], [], []>} : vector<16x768xbf16>, vector<768x256xbf16>, vector<16x256xf32> -> vector<16x256xf32>
    %66 = vector.extract_strided_slice %11 {offsets = [1, 0], sizes = [1, 256], strides = [1, 1]} : vector<6x256xf32> to vector<1x256xf32>
    %67 = vector.broadcast %66 : vector<1x256xf32> to vector<16x256xf32>
    %68 = arith.addf %65, %67 : vector<16x256xf32>
    %69 = vector.extract_strided_slice %13 {offsets = [2, 0], sizes = [1, 256], strides = [1, 1]} : vector<12x256xf32> to vector<1x256xf32>
    %70 = vector.extract_strided_slice %13 {offsets = [3, 0], sizes = [1, 256], strides = [1, 1]} : vector<12x256xf32> to vector<1x256xf32>
    %71 = arith.mulf %68, %0 : vector<16x256xf32>
    %cst_37 = arith.constant dense<0.000000e+00> : vector<256xf32>
    %72 = vector.multi_reduction <add>, %71, %cst_37 [0] : vector<16x256xf32> to vector<256xf32>
    %73 = vector.shape_cast %72 : vector<256xf32> to vector<1x256xf32>
    %74 = arith.mulf %71, %68 : vector<16x256xf32>
    %cst_38 = arith.constant dense<0.000000e+00> : vector<256xf32>
    %75 = vector.multi_reduction <add>, %74, %cst_38 [0] : vector<16x256xf32> to vector<256xf32>
    %76 = vector.shape_cast %75 : vector<256xf32> to vector<1x256xf32>
    %77 = tpu.concatenate %73, %76 in 0 : vector<1x256xf32>, vector<1x256xf32> -> vector<2x256xf32>
    %cst_39 = arith.constant dense<0.000000e+00> : vector<2x256xf32>
    %78 = tpu.matmul %77, %1, %cst_39 {dimension_numbers = #tpu.dot_dimension_numbers<[1], [0], [0], [1], [0, 0, 1, 1], [], []>} : vector<2x256xf32>, vector<256x256xf32>, vector<2x256xf32> -> vector<2x256xf32>
    %cst_40 = arith.constant 1.562500e-02 : f32
    %79 = vector.broadcast %cst_40 : f32 to vector<2x256xf32>
    %80 = arith.mulf %78, %79 : vector<2x256xf32>
    %81 = vector.extract_strided_slice %80 {offsets = [0, 0], sizes = [1, 256], strides = [1, 1]} : vector<2x256xf32> to vector<1x256xf32>
    %82 = vector.extract_strided_slice %80 {offsets = [1, 0], sizes = [1, 256], strides = [1, 1]} : vector<2x256xf32> to vector<1x256xf32>
    %83 = arith.mulf %81, %81 : vector<1x256xf32>
    %84 = arith.subf %82, %83 : vector<1x256xf32>
    %85 = vector.broadcast %81 : vector<1x256xf32> to vector<16x256xf32>
    %86 = arith.subf %68, %85 : vector<16x256xf32>
    %cst_41 = arith.constant 9.99999974E-6 : f32
    %87 = vector.broadcast %cst_41 : f32 to vector<1x256xf32>
    %88 = arith.addf %84, %87 : vector<1x256xf32>
    %89 = math.rsqrt %88 : vector<1x256xf32>
    %90 = vector.broadcast %89 : vector<1x256xf32> to vector<16x256xf32>
    %91 = arith.mulf %86, %90 : vector<16x256xf32>
    %92 = vector.broadcast %69 : vector<1x256xf32> to vector<16x256xf32>
    %93 = arith.mulf %91, %92 : vector<16x256xf32>
    %94 = vector.broadcast %70 : vector<1x256xf32> to vector<16x256xf32>
    %95 = arith.addf %93, %94 : vector<16x256xf32>
    %96 = arith.addf %15, %95 : vector<16x256xf32>
    %97 = arith.mulf %96, %0 : vector<16x256xf32>
    %98 = arith.truncf %97 : vector<16x256xf32> to vector<16x256xbf16>
    %cst_42 = arith.constant dense<0.000000e+00> : vector<16x256xf32>
    %99 = tpu.matmul %4, %98, %cst_42 {dimension_numbers = #tpu.dot_dimension_numbers<[1], [0], [0], [1], [0, 0, 1, 1], [], []>} : vector<16x16xbf16>, vector<16x256xbf16>, vector<16x256xf32> -> vector<16x256xf32>
    %cst_43 = arith.constant dense<0.000000e+00> : vector<16x256xf32>
    %100 = tpu.matmul %7, %98, %cst_43 {dimension_numbers = #tpu.dot_dimension_numbers<[1], [0], [0], [1], [0, 0, 1, 1], [], []>} : vector<16x16xbf16>, vector<16x256xbf16>, vector<16x256xf32> -> vector<16x256xf32>
    %cst_44 = arith.constant dense<0.000000e+00> : vector<16x256xf32>
    %101 = tpu.matmul %10, %98, %cst_44 {dimension_numbers = #tpu.dot_dimension_numbers<[1], [0], [0], [1], [0, 0, 1, 1], [], []>} : vector<16x16xbf16>, vector<16x256xbf16>, vector<16x256xf32> -> vector<16x256xf32>
    %102 = tpu.concatenate %99, %100, %101 in 1 : vector<16x256xf32>, vector<16x256xf32>, vector<16x256xf32> -> vector<16x768xf32>
    %103 = arith.truncf %102 : vector<16x768xf32> to vector<16x768xbf16>
    %c2_45 = arith.constant 2 : index
    %c0_46 = arith.constant 0 : index
    %c0_47 = arith.constant 0 : index
    %104 = vector.load %arg3[%c2_45, %c0_46, %c0_47] : memref<6x768x256xbf16, #tpu.memory_space<vmem>>, vector<1x768x256xbf16>
    %105 = vector.shape_cast %104 : vector<1x768x256xbf16> to vector<768x256xbf16>
    %cst_48 = arith.constant dense<0.000000e+00> : vector<16x256xf32>
    %106 = tpu.matmul %103, %105, %cst_48 {dimension_numbers = #tpu.dot_dimension_numbers<[1], [0], [0], [1], [0, 0, 1, 1], [], []>} : vector<16x768xbf16>, vector<768x256xbf16>, vector<16x256xf32> -> vector<16x256xf32>
    %107 = vector.extract_strided_slice %11 {offsets = [2, 0], sizes = [1, 256], strides = [1, 1]} : vector<6x256xf32> to vector<1x256xf32>
    %108 = vector.broadcast %107 : vector<1x256xf32> to vector<16x256xf32>
    %109 = arith.addf %106, %108 : vector<16x256xf32>
    %110 = vector.extract_strided_slice %13 {offsets = [4, 0], sizes = [1, 256], strides = [1, 1]} : vector<12x256xf32> to vector<1x256xf32>
    %111 = vector.extract_strided_slice %13 {offsets = [5, 0], sizes = [1, 256], strides = [1, 1]} : vector<12x256xf32> to vector<1x256xf32>
    %112 = arith.mulf %109, %0 : vector<16x256xf32>
    %cst_49 = arith.constant dense<0.000000e+00> : vector<256xf32>
    %113 = vector.multi_reduction <add>, %112, %cst_49 [0] : vector<16x256xf32> to vector<256xf32>
    %114 = vector.shape_cast %113 : vector<256xf32> to vector<1x256xf32>
    %115 = arith.mulf %112, %109 : vector<16x256xf32>
    %cst_50 = arith.constant dense<0.000000e+00> : vector<256xf32>
    %116 = vector.multi_reduction <add>, %115, %cst_50 [0] : vector<16x256xf32> to vector<256xf32>
    %117 = vector.shape_cast %116 : vector<256xf32> to vector<1x256xf32>
    %118 = tpu.concatenate %114, %117 in 0 : vector<1x256xf32>, vector<1x256xf32> -> vector<2x256xf32>
    %cst_51 = arith.constant dense<0.000000e+00> : vector<2x256xf32>
    %119 = tpu.matmul %118, %1, %cst_51 {dimension_numbers = #tpu.dot_dimension_numbers<[1], [0], [0], [1], [0, 0, 1, 1], [], []>} : vector<2x256xf32>, vector<256x256xf32>, vector<2x256xf32> -> vector<2x256xf32>
    %cst_52 = arith.constant 1.562500e-02 : f32
    %120 = vector.broadcast %cst_52 : f32 to vector<2x256xf32>
    %121 = arith.mulf %119, %120 : vector<2x256xf32>
    %122 = vector.extract_strided_slice %121 {offsets = [0, 0], sizes = [1, 256], strides = [1, 1]} : vector<2x256xf32> to vector<1x256xf32>
    %123 = vector.extract_strided_slice %121 {offsets = [1, 0], sizes = [1, 256], strides = [1, 1]} : vector<2x256xf32> to vector<1x256xf32>
    %124 = arith.mulf %122, %122 : vector<1x256xf32>
    %125 = arith.subf %123, %124 : vector<1x256xf32>
    %126 = vector.broadcast %122 : vector<1x256xf32> to vector<16x256xf32>
    %127 = arith.subf %109, %126 : vector<16x256xf32>
    %cst_53 = arith.constant 9.99999974E-6 : f32
    %128 = vector.broadcast %cst_53 : f32 to vector<1x256xf32>
    %129 = arith.addf %125, %128 : vector<1x256xf32>
    %130 = math.rsqrt %129 : vector<1x256xf32>
    %131 = vector.broadcast %130 : vector<1x256xf32> to vector<16x256xf32>
    %132 = arith.mulf %127, %131 : vector<16x256xf32>
    %133 = vector.broadcast %110 : vector<1x256xf32> to vector<16x256xf32>
    %134 = arith.mulf %132, %133 : vector<16x256xf32>
    %135 = vector.broadcast %111 : vector<1x256xf32> to vector<16x256xf32>
    %136 = arith.addf %134, %135 : vector<16x256xf32>
    %cst_54 = arith.constant 0.000000e+00 : f32
    %137 = vector.broadcast %cst_54 : f32 to vector<16x256xf32>
    %138 = arith.maximumf %136, %137 : vector<16x256xf32>
    %139 = arith.truncf %138 : vector<16x256xf32> to vector<16x256xbf16>
    %cst_55 = arith.constant dense<0.000000e+00> : vector<16x256xf32>
    %140 = tpu.matmul %4, %139, %cst_55 {dimension_numbers = #tpu.dot_dimension_numbers<[1], [0], [0], [1], [0, 0, 1, 1], [], []>} : vector<16x16xbf16>, vector<16x256xbf16>, vector<16x256xf32> -> vector<16x256xf32>
    %cst_56 = arith.constant dense<0.000000e+00> : vector<16x256xf32>
    %141 = tpu.matmul %7, %139, %cst_56 {dimension_numbers = #tpu.dot_dimension_numbers<[1], [0], [0], [1], [0, 0, 1, 1], [], []>} : vector<16x16xbf16>, vector<16x256xbf16>, vector<16x256xf32> -> vector<16x256xf32>
    %cst_57 = arith.constant dense<0.000000e+00> : vector<16x256xf32>
    %142 = tpu.matmul %10, %139, %cst_57 {dimension_numbers = #tpu.dot_dimension_numbers<[1], [0], [0], [1], [0, 0, 1, 1], [], []>} : vector<16x16xbf16>, vector<16x256xbf16>, vector<16x256xf32> -> vector<16x256xf32>
    %143 = tpu.concatenate %140, %141, %142 in 1 : vector<16x256xf32>, vector<16x256xf32>, vector<16x256xf32> -> vector<16x768xf32>
    %144 = arith.truncf %143 : vector<16x768xf32> to vector<16x768xbf16>
    %c3 = arith.constant 3 : index
    %c0_58 = arith.constant 0 : index
    %c0_59 = arith.constant 0 : index
    %145 = vector.load %arg3[%c3, %c0_58, %c0_59] : memref<6x768x256xbf16, #tpu.memory_space<vmem>>, vector<1x768x256xbf16>
    %146 = vector.shape_cast %145 : vector<1x768x256xbf16> to vector<768x256xbf16>
    %cst_60 = arith.constant dense<0.000000e+00> : vector<16x256xf32>
    %147 = tpu.matmul %144, %146, %cst_60 {dimension_numbers = #tpu.dot_dimension_numbers<[1], [0], [0], [1], [0, 0, 1, 1], [], []>} : vector<16x768xbf16>, vector<768x256xbf16>, vector<16x256xf32> -> vector<16x256xf32>
    %148 = vector.extract_strided_slice %11 {offsets = [3, 0], sizes = [1, 256], strides = [1, 1]} : vector<6x256xf32> to vector<1x256xf32>
    %149 = vector.broadcast %148 : vector<1x256xf32> to vector<16x256xf32>
    %150 = arith.addf %147, %149 : vector<16x256xf32>
    %151 = vector.extract_strided_slice %13 {offsets = [6, 0], sizes = [1, 256], strides = [1, 1]} : vector<12x256xf32> to vector<1x256xf32>
    %152 = vector.extract_strided_slice %13 {offsets = [7, 0], sizes = [1, 256], strides = [1, 1]} : vector<12x256xf32> to vector<1x256xf32>
    %153 = arith.mulf %150, %0 : vector<16x256xf32>
    %cst_61 = arith.constant dense<0.000000e+00> : vector<256xf32>
    %154 = vector.multi_reduction <add>, %153, %cst_61 [0] : vector<16x256xf32> to vector<256xf32>
    %155 = vector.shape_cast %154 : vector<256xf32> to vector<1x256xf32>
    %156 = arith.mulf %153, %150 : vector<16x256xf32>
    %cst_62 = arith.constant dense<0.000000e+00> : vector<256xf32>
    %157 = vector.multi_reduction <add>, %156, %cst_62 [0] : vector<16x256xf32> to vector<256xf32>
    %158 = vector.shape_cast %157 : vector<256xf32> to vector<1x256xf32>
    %159 = tpu.concatenate %155, %158 in 0 : vector<1x256xf32>, vector<1x256xf32> -> vector<2x256xf32>
    %cst_63 = arith.constant dense<0.000000e+00> : vector<2x256xf32>
    %160 = tpu.matmul %159, %1, %cst_63 {dimension_numbers = #tpu.dot_dimension_numbers<[1], [0], [0], [1], [0, 0, 1, 1], [], []>} : vector<2x256xf32>, vector<256x256xf32>, vector<2x256xf32> -> vector<2x256xf32>
    %cst_64 = arith.constant 1.562500e-02 : f32
    %161 = vector.broadcast %cst_64 : f32 to vector<2x256xf32>
    %162 = arith.mulf %160, %161 : vector<2x256xf32>
    %163 = vector.extract_strided_slice %162 {offsets = [0, 0], sizes = [1, 256], strides = [1, 1]} : vector<2x256xf32> to vector<1x256xf32>
    %164 = vector.extract_strided_slice %162 {offsets = [1, 0], sizes = [1, 256], strides = [1, 1]} : vector<2x256xf32> to vector<1x256xf32>
    %165 = arith.mulf %163, %163 : vector<1x256xf32>
    %166 = arith.subf %164, %165 : vector<1x256xf32>
    %167 = vector.broadcast %163 : vector<1x256xf32> to vector<16x256xf32>
    %168 = arith.subf %150, %167 : vector<16x256xf32>
    %cst_65 = arith.constant 9.99999974E-6 : f32
    %169 = vector.broadcast %cst_65 : f32 to vector<1x256xf32>
    %170 = arith.addf %166, %169 : vector<1x256xf32>
    %171 = math.rsqrt %170 : vector<1x256xf32>
    %172 = vector.broadcast %171 : vector<1x256xf32> to vector<16x256xf32>
    %173 = arith.mulf %168, %172 : vector<16x256xf32>
    %174 = vector.broadcast %151 : vector<1x256xf32> to vector<16x256xf32>
    %175 = arith.mulf %173, %174 : vector<16x256xf32>
    %176 = vector.broadcast %152 : vector<1x256xf32> to vector<16x256xf32>
    %177 = arith.addf %175, %176 : vector<16x256xf32>
    %178 = arith.addf %97, %177 : vector<16x256xf32>
    %179 = arith.mulf %178, %0 : vector<16x256xf32>
    %180 = arith.truncf %179 : vector<16x256xf32> to vector<16x256xbf16>
    %cst_66 = arith.constant dense<0.000000e+00> : vector<16x256xf32>
    %181 = tpu.matmul %4, %180, %cst_66 {dimension_numbers = #tpu.dot_dimension_numbers<[1], [0], [0], [1], [0, 0, 1, 1], [], []>} : vector<16x16xbf16>, vector<16x256xbf16>, vector<16x256xf32> -> vector<16x256xf32>
    %cst_67 = arith.constant dense<0.000000e+00> : vector<16x256xf32>
    %182 = tpu.matmul %7, %180, %cst_67 {dimension_numbers = #tpu.dot_dimension_numbers<[1], [0], [0], [1], [0, 0, 1, 1], [], []>} : vector<16x16xbf16>, vector<16x256xbf16>, vector<16x256xf32> -> vector<16x256xf32>
    %cst_68 = arith.constant dense<0.000000e+00> : vector<16x256xf32>
    %183 = tpu.matmul %10, %180, %cst_68 {dimension_numbers = #tpu.dot_dimension_numbers<[1], [0], [0], [1], [0, 0, 1, 1], [], []>} : vector<16x16xbf16>, vector<16x256xbf16>, vector<16x256xf32> -> vector<16x256xf32>
    %184 = tpu.concatenate %181, %182, %183 in 1 : vector<16x256xf32>, vector<16x256xf32>, vector<16x256xf32> -> vector<16x768xf32>
    %185 = arith.truncf %184 : vector<16x768xf32> to vector<16x768xbf16>
    %c4 = arith.constant 4 : index
    %c0_69 = arith.constant 0 : index
    %c0_70 = arith.constant 0 : index
    %186 = vector.load %arg3[%c4, %c0_69, %c0_70] : memref<6x768x256xbf16, #tpu.memory_space<vmem>>, vector<1x768x256xbf16>
    %187 = vector.shape_cast %186 : vector<1x768x256xbf16> to vector<768x256xbf16>
    %cst_71 = arith.constant dense<0.000000e+00> : vector<16x256xf32>
    %188 = tpu.matmul %185, %187, %cst_71 {dimension_numbers = #tpu.dot_dimension_numbers<[1], [0], [0], [1], [0, 0, 1, 1], [], []>} : vector<16x768xbf16>, vector<768x256xbf16>, vector<16x256xf32> -> vector<16x256xf32>
    %189 = vector.extract_strided_slice %11 {offsets = [4, 0], sizes = [1, 256], strides = [1, 1]} : vector<6x256xf32> to vector<1x256xf32>
    %190 = vector.broadcast %189 : vector<1x256xf32> to vector<16x256xf32>
    %191 = arith.addf %188, %190 : vector<16x256xf32>
    %192 = vector.extract_strided_slice %13 {offsets = [8, 0], sizes = [1, 256], strides = [1, 1]} : vector<12x256xf32> to vector<1x256xf32>
    %193 = vector.extract_strided_slice %13 {offsets = [9, 0], sizes = [1, 256], strides = [1, 1]} : vector<12x256xf32> to vector<1x256xf32>
    %194 = arith.mulf %191, %0 : vector<16x256xf32>
    %cst_72 = arith.constant dense<0.000000e+00> : vector<256xf32>
    %195 = vector.multi_reduction <add>, %194, %cst_72 [0] : vector<16x256xf32> to vector<256xf32>
    %196 = vector.shape_cast %195 : vector<256xf32> to vector<1x256xf32>
    %197 = arith.mulf %194, %191 : vector<16x256xf32>
    %cst_73 = arith.constant dense<0.000000e+00> : vector<256xf32>
    %198 = vector.multi_reduction <add>, %197, %cst_73 [0] : vector<16x256xf32> to vector<256xf32>
    %199 = vector.shape_cast %198 : vector<256xf32> to vector<1x256xf32>
    %200 = tpu.concatenate %196, %199 in 0 : vector<1x256xf32>, vector<1x256xf32> -> vector<2x256xf32>
    %cst_74 = arith.constant dense<0.000000e+00> : vector<2x256xf32>
    %201 = tpu.matmul %200, %1, %cst_74 {dimension_numbers = #tpu.dot_dimension_numbers<[1], [0], [0], [1], [0, 0, 1, 1], [], []>} : vector<2x256xf32>, vector<256x256xf32>, vector<2x256xf32> -> vector<2x256xf32>
    %cst_75 = arith.constant 1.562500e-02 : f32
    %202 = vector.broadcast %cst_75 : f32 to vector<2x256xf32>
    %203 = arith.mulf %201, %202 : vector<2x256xf32>
    %204 = vector.extract_strided_slice %203 {offsets = [0, 0], sizes = [1, 256], strides = [1, 1]} : vector<2x256xf32> to vector<1x256xf32>
    %205 = vector.extract_strided_slice %203 {offsets = [1, 0], sizes = [1, 256], strides = [1, 1]} : vector<2x256xf32> to vector<1x256xf32>
    %206 = arith.mulf %204, %204 : vector<1x256xf32>
    %207 = arith.subf %205, %206 : vector<1x256xf32>
    %208 = vector.broadcast %204 : vector<1x256xf32> to vector<16x256xf32>
    %209 = arith.subf %191, %208 : vector<16x256xf32>
    %cst_76 = arith.constant 9.99999974E-6 : f32
    %210 = vector.broadcast %cst_76 : f32 to vector<1x256xf32>
    %211 = arith.addf %207, %210 : vector<1x256xf32>
    %212 = math.rsqrt %211 : vector<1x256xf32>
    %213 = vector.broadcast %212 : vector<1x256xf32> to vector<16x256xf32>
    %214 = arith.mulf %209, %213 : vector<16x256xf32>
    %215 = vector.broadcast %192 : vector<1x256xf32> to vector<16x256xf32>
    %216 = arith.mulf %214, %215 : vector<16x256xf32>
    %217 = vector.broadcast %193 : vector<1x256xf32> to vector<16x256xf32>
    %218 = arith.addf %216, %217 : vector<16x256xf32>
    %cst_77 = arith.constant 0.000000e+00 : f32
    %219 = vector.broadcast %cst_77 : f32 to vector<16x256xf32>
    %220 = arith.maximumf %218, %219 : vector<16x256xf32>
    %221 = arith.truncf %220 : vector<16x256xf32> to vector<16x256xbf16>
    %cst_78 = arith.constant dense<0.000000e+00> : vector<16x256xf32>
    %222 = tpu.matmul %4, %221, %cst_78 {dimension_numbers = #tpu.dot_dimension_numbers<[1], [0], [0], [1], [0, 0, 1, 1], [], []>} : vector<16x16xbf16>, vector<16x256xbf16>, vector<16x256xf32> -> vector<16x256xf32>
    %cst_79 = arith.constant dense<0.000000e+00> : vector<16x256xf32>
    %223 = tpu.matmul %7, %221, %cst_79 {dimension_numbers = #tpu.dot_dimension_numbers<[1], [0], [0], [1], [0, 0, 1, 1], [], []>} : vector<16x16xbf16>, vector<16x256xbf16>, vector<16x256xf32> -> vector<16x256xf32>
    %cst_80 = arith.constant dense<0.000000e+00> : vector<16x256xf32>
    %224 = tpu.matmul %10, %221, %cst_80 {dimension_numbers = #tpu.dot_dimension_numbers<[1], [0], [0], [1], [0, 0, 1, 1], [], []>} : vector<16x16xbf16>, vector<16x256xbf16>, vector<16x256xf32> -> vector<16x256xf32>
    %225 = tpu.concatenate %222, %223, %224 in 1 : vector<16x256xf32>, vector<16x256xf32>, vector<16x256xf32> -> vector<16x768xf32>
    %226 = arith.truncf %225 : vector<16x768xf32> to vector<16x768xbf16>
    %c5 = arith.constant 5 : index
    %c0_81 = arith.constant 0 : index
    %c0_82 = arith.constant 0 : index
    %227 = vector.load %arg3[%c5, %c0_81, %c0_82] : memref<6x768x256xbf16, #tpu.memory_space<vmem>>, vector<1x768x256xbf16>
    %228 = vector.shape_cast %227 : vector<1x768x256xbf16> to vector<768x256xbf16>
    %cst_83 = arith.constant dense<0.000000e+00> : vector<16x256xf32>
    %229 = tpu.matmul %226, %228, %cst_83 {dimension_numbers = #tpu.dot_dimension_numbers<[1], [0], [0], [1], [0, 0, 1, 1], [], []>} : vector<16x768xbf16>, vector<768x256xbf16>, vector<16x256xf32> -> vector<16x256xf32>
    %230 = vector.extract_strided_slice %11 {offsets = [5, 0], sizes = [1, 256], strides = [1, 1]} : vector<6x256xf32> to vector<1x256xf32>
    %231 = vector.broadcast %230 : vector<1x256xf32> to vector<16x256xf32>
    %232 = arith.addf %229, %231 : vector<16x256xf32>
    %233 = vector.extract_strided_slice %13 {offsets = [10, 0], sizes = [1, 256], strides = [1, 1]} : vector<12x256xf32> to vector<1x256xf32>
    %234 = vector.extract_strided_slice %13 {offsets = [11, 0], sizes = [1, 256], strides = [1, 1]} : vector<12x256xf32> to vector<1x256xf32>
    %235 = arith.mulf %232, %0 : vector<16x256xf32>
    %cst_84 = arith.constant dense<0.000000e+00> : vector<256xf32>
    %236 = vector.multi_reduction <add>, %235, %cst_84 [0] : vector<16x256xf32> to vector<256xf32>
    %237 = vector.shape_cast %236 : vector<256xf32> to vector<1x256xf32>
    %238 = arith.mulf %235, %232 : vector<16x256xf32>
    %cst_85 = arith.constant dense<0.000000e+00> : vector<256xf32>
    %239 = vector.multi_reduction <add>, %238, %cst_85 [0] : vector<16x256xf32> to vector<256xf32>
    %240 = vector.shape_cast %239 : vector<256xf32> to vector<1x256xf32>
    %241 = tpu.concatenate %237, %240 in 0 : vector<1x256xf32>, vector<1x256xf32> -> vector<2x256xf32>
    %cst_86 = arith.constant dense<0.000000e+00> : vector<2x256xf32>
    %242 = tpu.matmul %241, %1, %cst_86 {dimension_numbers = #tpu.dot_dimension_numbers<[1], [0], [0], [1], [0, 0, 1, 1], [], []>} : vector<2x256xf32>, vector<256x256xf32>, vector<2x256xf32> -> vector<2x256xf32>
    %cst_87 = arith.constant 1.562500e-02 : f32
    %243 = vector.broadcast %cst_87 : f32 to vector<2x256xf32>
    %244 = arith.mulf %242, %243 : vector<2x256xf32>
    %245 = vector.extract_strided_slice %244 {offsets = [0, 0], sizes = [1, 256], strides = [1, 1]} : vector<2x256xf32> to vector<1x256xf32>
    %246 = vector.extract_strided_slice %244 {offsets = [1, 0], sizes = [1, 256], strides = [1, 1]} : vector<2x256xf32> to vector<1x256xf32>
    %247 = arith.mulf %245, %245 : vector<1x256xf32>
    %248 = arith.subf %246, %247 : vector<1x256xf32>
    %249 = vector.broadcast %245 : vector<1x256xf32> to vector<16x256xf32>
    %250 = arith.subf %232, %249 : vector<16x256xf32>
    %cst_88 = arith.constant 9.99999974E-6 : f32
    %251 = vector.broadcast %cst_88 : f32 to vector<1x256xf32>
    %252 = arith.addf %248, %251 : vector<1x256xf32>
    %253 = math.rsqrt %252 : vector<1x256xf32>
    %254 = vector.broadcast %253 : vector<1x256xf32> to vector<16x256xf32>
    %255 = arith.mulf %250, %254 : vector<16x256xf32>
    %256 = vector.broadcast %233 : vector<1x256xf32> to vector<16x256xf32>
    %257 = arith.mulf %255, %256 : vector<16x256xf32>
    %258 = vector.broadcast %234 : vector<1x256xf32> to vector<16x256xf32>
    %259 = arith.addf %257, %258 : vector<16x256xf32>
    %260 = arith.addf %179, %259 : vector<16x256xf32>
    %261 = arith.mulf %260, %0 : vector<16x256xf32>
    %c0_89 = arith.constant 0 : index
    %c0_90 = arith.constant 0 : index
    %c0_91 = arith.constant 0 : index
    %262 = vector.load %arg8[%c0_89, %c0_90, %c0_91] : memref<1x16x256xf32, #tpu.memory_space<vmem>>, vector<1x16x256xf32>
    %263 = vector.shape_cast %262 : vector<1x16x256xf32> to vector<16x256xf32>
    %264 = vector.shape_cast %261 : vector<16x256xf32> to vector<1x16x256xf32>
    tpu.vector_store %arg8[%c0_89, %c0_90, %c0_91], %264 {strides = array<i32>} : memref<1x16x256xf32, #tpu.memory_space<vmem>>, vector<1x16x256xf32>,
    return
  }
  func.func @transform_0(%arg0: i32) -> (i32, i32, i32) {
    %c0_i32 = arith.constant 0 : i32
    %c0_i32_0 = arith.constant 0 : i32
    %c0_i32_1 = arith.constant 0 : i32
    return %arg0, %c0_i32, %c0_i32_0 : i32, i32, i32
  }
  func.func @transform_1(%arg0: i32) -> (i32, i32, i32) {
    %c0_i32 = arith.constant 0 : i32
    %c0_i32_0 = arith.constant 0 : i32
    %c0_i32_1 = arith.constant 0 : i32
    %c0_i32_2 = arith.constant 0 : i32
    return %c0_i32, %c0_i32_0, %c0_i32_1 : i32, i32, i32
  }
  func.func @transform_2(%arg0: i32) -> (i32, i32, i32) {
    %c0_i32 = arith.constant 0 : i32
    %c0_i32_0 = arith.constant 0 : i32
    %c0_i32_1 = arith.constant 0 : i32
    %c0_i32_2 = arith.constant 0 : i32
    return %c0_i32, %c0_i32_0, %c0_i32_1 : i32, i32, i32
  }
  func.func @transform_3(%arg0: i32) -> (i32, i32) {
    %c0_i32 = arith.constant 0 : i32
    %c0_i32_0 = arith.constant 0 : i32
    %c0_i32_1 = arith.constant 0 : i32
    return %c0_i32, %c0_i32_0 : i32, i32
  }
  func.func @transform_4(%arg0: i32) -> (i32, i32, i32) {
    %c0_i32 = arith.constant 0 : i32
    %c0_i32_0 = arith.constant 0 : i32
    %c0_i32_1 = arith.constant 0 : i32
    return %arg0, %c0_i32, %c0_i32_0 : i32, i32, i32
  }
  func.func @transform_5(%arg0: i32) -> (i32, i32) {
    %c0_i32 = arith.constant 0 : i32
    %c0_i32_0 = arith.constant 0 : i32
    %c0_i32_1 = arith.constant 0 : i32
    return %c0_i32, %c0_i32_0 : i32, i32
  }
  func.func @transform_6(%arg0: i32) -> (i32, i32) {
    %c0_i32 = arith.constant 0 : i32
    %c0_i32_0 = arith.constant 0 : i32
    %c0_i32_1 = arith.constant 0 : i32
    return %c0_i32, %c0_i32_0 : i32, i32
  }
  func.func @transform_7(%arg0: i32) -> (i32, i32, i32) {
    %c0_i32 = arith.constant 0 : i32
    %c0_i32_0 = arith.constant 0 : i32
    %c0_i32_1 = arith.constant 0 : i32
    return %arg0, %c0_i32, %c0_i32_0 : i32, i32, i32
  }
}

</mosaic_0001>

<llo_original>
// kernel: tile.7
$region0: #{tile.7}
  %s0 = inlined_call_operand.vmem [shape: f32[2,12,16,16], index: 0, kind: input, shape index: {}]
  %s1 = inlined_call_operand.vmem [shape: f32[2,12,256], index: 1, kind: output, shape index: {}]
  $region1: #{tile.7} parent=0
    #allocation0 [shape = 'u8[98304]{0}', space=vmem, size = 0x18000, scoped, tag = 'scoped mem for output reshape']
    %v2 = vld [vmem:[%s0] ss:$8 sm:$0xf]
    %v3 = vld [vmem:[%s0] ss:$8 sm:$0xf0]
    %vm4 = vcmask 1047556
    %v5 = vsel %vm4, %v3, %v2
    %vm6 = vcmask 130048
    %7 = vst.msk [vmem:[#allocation0] ss:$8 sm:$0x3] %vm6, %v5
    %s8 = scalar_lea.vmem [#allocation0], 4294967281
    %9 = vst.msk [vmem:[%s8] ss:$8 sm:$0xc] %vm6, %v5
    %s10 = scalar_lea.vmem [#allocation0], 4294967280
    %11 = vst.msk [vmem:[%s10] ss:$8 sm:$0x30] %vm6, %v5
    %s12 = scalar_lea.vmem [#allocation0], 4294967265
    %13 = vst.msk [vmem:[%s12] ss:$8 sm:$0xc0] %vm6, %v5
    %s14 = scalar_lea.vmem %s0, 64
    %v15 = vld [vmem:[%s14] ss:$8 sm:$0xf]
    %s16 = scalar_lea.vmem %s0, 64
    %v17 = vld [vmem:[%s16] ss:$8 sm:$0xf0]
    %vm18 = vcmask 1047556
    %v19 = vsel %vm18, %v17, %v15
    %vm20 = vcmask 130048
    %s21 = scalar_lea.vmem [#allocation0], 32
    %22 = vst.msk [vmem:[%s21] ss:$8 sm:$0x3] %vm20, %v19
    %s23 = scalar_lea.vmem [#allocation0], 17
    %24 = vst.msk [vmem:[%s23] ss:$8 sm:$0xc] %vm20, %v19
    %s25 = scalar_lea.vmem [#allocation0], 16
    %26 = vst.msk [vmem:[%s25] ss:$8 sm:$0x30] %vm20, %v19
    %s27 = scalar_lea.vmem [#allocation0], 1
    %28 = vst.msk [vmem:[%s27] ss:$8 sm:$0xc0] %vm20, %v19
    %s29 = scalar_lea.vmem %s0, 128
    %v30 = vld [vmem:[%s29] ss:$8 sm:$0xf]
    %s31 = scalar_lea.vmem %s0, 128
    %v32 = vld [vmem:[%s31] ss:$8 sm:$0xf0]
    %vm33 = vcmask 1047556
    %v34 = vsel %vm33, %v32, %v30
    %vm35 = vcmask 130048
    %s36 = scalar_lea.vmem [#allocation0], 64
    %37 = vst.msk [vmem:[%s36] ss:$8 sm:$0x3] %vm35, %v34
    %s38 = scalar_lea.vmem [#allocation0], 49
    %39 = vst.msk [vmem:[%s38] ss:$8 sm:$0xc] %vm35, %v34
    %s40 = scalar_lea.vmem [#allocation0], 48
    %41 = vst.msk [vmem:[%s40] ss:$8 sm:$0x30] %vm35, %v34
    %s42 = scalar_lea.vmem [#allocation0], 33
    %43 = vst.msk [vmem:[%s42] ss:$8 sm:$0xc0] %vm35, %v34
    %s44 = scalar_lea.vmem %s0, 192
    %v45 = vld [vmem:[%s44] ss:$8 sm:$0xf]
    %s46 = scalar_lea.vmem %s0, 192
    %v47 = vld [vmem:[%s46] ss:$8 sm:$0xf0]
    %vm48 = vcmask 1047556
    %v49 = vsel %vm48, %v47, %v45
    %vm50 = vcmask 130048
    %s51 = scalar_lea.vmem [#allocation0], 96
    %52 = vst.msk [vmem:[%s51] ss:$8 sm:$0x3] %vm50, %v49
    %s53 = scalar_lea.vmem [#allocation0], 81
    %54 = vst.msk [vmem:[%s53] ss:$8 sm:$0xc] %vm50, %v49
    %s55 = scalar_lea.vmem [#allocation0], 80
    %56 = vst.msk [vmem:[%s55] ss:$8 sm:$0x30] %vm50, %v49
    %s57 = scalar_lea.vmem [#allocation0], 65
    %58 = vst.msk [vmem:[%s57] ss:$8 sm:$0xc0] %vm50, %v49
    %s59 = scalar_lea.vmem %s0, 256
    %v60 = vld [vmem:[%s59] ss:$8 sm:$0xf]
    %s61 = scalar_lea.vmem %s0, 256
    %v62 = vld [vmem:[%s61] ss:$8 sm:$0xf0]
    %vm63 = vcmask 1047556
    %v64 = vsel %vm63, %v62, %v60
    %vm65 = vcmask 130048
    %s66 = scalar_lea.vmem [#allocation0], 128
    %67 = vst.msk [vmem:[%s66] ss:$8 sm:$0x3] %vm65, %v64
    %s68 = scalar_lea.vmem [#allocation0], 113
    %69 = vst.msk [vmem:[%s68] ss:$8 sm:$0xc] %vm65, %v64
    %s70 = scalar_lea.vmem [#allocation0], 112
    %71 = vst.msk [vmem:[%s70] ss:$8 sm:$0x30] %vm65, %v64
    %s72 = scalar_lea.vmem [#allocation0], 97
    %73 = vst.msk [vmem:[%s72] ss:$8 sm:$0xc0] %vm65, %v64
    %s74 = scalar_lea.vmem %s0, 320
    %v75 = vld [vmem:[%s74] ss:$8 sm:$0xf]
    %s76 = scalar_lea.vmem %s0, 320
    %v77 = vld [vmem:[%s76] ss:$8 sm:$0xf0]
    %vm78 = vcmask 1047556
    %v79 = vsel %vm78, %v77, %v75
    %vm80 = vcmask 130048
    %s81 = scalar_lea.vmem [#allocation0], 160
    %82 = vst.msk [vmem:[%s81] ss:$8 sm:$0x3] %vm80, %v79
    %s83 = scalar_lea.vmem [#allocation0], 145
    %84 = vst.msk [vmem:[%s83] ss:$8 sm:$0xc] %vm80, %v79
    %s85 = scalar_lea.vmem [#allocation0], 144
    %86 = vst.msk [vmem:[%s85] ss:$8 sm:$0x30] %vm80, %v79
    %s87 = scalar_lea.vmem [#allocation0], 129
    %88 = vst.msk [vmem:[%s87] ss:$8 sm:$0xc0] %vm80, %v79
    %s89 = scalar_lea.vmem %s0, 7
    %s90 = smov 3
    %v91 = vld [vmem:[%s89] ss:$16 sm:%s90]
    %s92 = scalar_lea.vmem %s0, 4294967279
    %s93 = smov 12
    %v94 = vld [vmem:[%s92] ss:$16 sm:%s93]
    %vm95 = vcmask 1043458
    %v96 = vsel %vm95, %v94, %v91
    %s97 = scalar_lea.vmem %s0, 4294967271
    %s98 = smov 48
    %v99 = vld [vmem:[%s97] ss:$16 sm:%s98]
    %vm100 = vcmask 1045508
    %v101 = vsel %vm100, %v99, %v96
    %s102 = scalar_lea.vmem %s0, 4294967247
    %s103 = smov 192
    %v104 = vld [vmem:[%s102] ss:$16 sm:%s103]
    %vm105 = vcmask 1047558
    %v106 = vsel %vm105, %v104, %v101
    %107 = vrot.lane.b32.xlu0 %v106, 112
    %v108 = vpop.permute.xlu0 %107
    %vm109 = vcmask 1048448
    %110 = vst.msk [vmem:[#allocation0] sm:$0x3] %vm109, %v108
    %s111 = scalar_lea.vmem [#allocation0], 6
    %112 = vst.msk [vmem:[%s111] sm:$0xc] %vm109, %v108
    %s113 = scalar_lea.vmem [#allocation0], 12
    %114 = vst.msk [vmem:[%s113] sm:$0x30] %vm109, %v108
    %s115 = scalar_lea.vmem [#allocation0], 18
    %116 = vst.msk [vmem:[%s115] sm:$0xc0] %vm109, %v108
    %s117 = scalar_lea.vmem %s0, 71
    %s118 = smov 3
    %v119 = vld [vmem:[%s117] ss:$16 sm:%s118]
    %s120 = scalar_lea.vmem %s0, 47
    %s121 = smov 12
    %v122 = vld [vmem:[%s120] ss:$16 sm:%s121]
    %vm123 = vcmask 1043458
    %v124 = vsel %vm123, %v122, %v119
    %s125 = scalar_lea.vmem %s0, 39
    %s126 = smov 48
    %v127 = vld [vmem:[%s125] ss:$16 sm:%s126]
    %vm128 = vcmask 1045508
    %v129 = vsel %vm128, %v127, %v124
    %s130 = scalar_lea.vmem %s0, 15
    %s131 = smov 192
    %v132 = vld [vmem:[%s130] ss:$16 sm:%s131]
    %vm133 = vcmask 1047558
    %v134 = vsel %vm133, %v132, %v129
    %135 = vrot.lane.b32.xlu0 %v134, 112
    %v136 = vpop.permute.xlu0 %135
    %vm137 = vcmask 1048448
    %s138 = scalar_lea.vmem [#allocation0], 32
    %139 = vst.msk [vmem:[%s138] sm:$0x3] %vm137, %v136
    %s140 = scalar_lea.vmem [#allocation0], 38
    %141 = vst.msk [vmem:[%s140] sm:$0xc] %vm137, %v136
    %s142 = scalar_lea.vmem [#allocation0], 44
    %143 = vst.msk [vmem:[%s142] sm:$0x30] %vm137, %v136
    %s144 = scalar_lea.vmem [#allocation0], 50
    %145 = vst.msk [vmem:[%s144] sm:$0xc0] %vm137, %v136
    %s146 = scalar_lea.vmem %s0, 135
    %s147 = smov 3
    %v148 = vld [vmem:[%s146] ss:$16 sm:%s147]
    %s149 = scalar_lea.vmem %s0, 111
    %s150 = smov 12
    %v151 = vld [vmem:[%s149] ss:$16 sm:%s150]
    %vm152 = vcmask 1043458
    %v153 = vsel %vm152, %v151, %v148
    %s154 = scalar_lea.vmem %s0, 103
    %s155 = smov 48
    %v156 = vld [vmem:[%s154] ss:$16 sm:%s155]
    %vm157 = vcmask 1045508
    %v158 = vsel %vm157, %v156, %v153
    %s159 = scalar_lea.vmem %s0, 79
    %s160 = smov 192
    %v161 = vld [vmem:[%s159] ss:$16 sm:%s160]
    %vm162 = vcmask 1047558
    %v163 = vsel %vm162, %v161, %v158
    %164 = vrot.lane.b32.xlu0 %v163, 112
    %v165 = vpop.permute.xlu0 %164
    %vm166 = vcmask 1048448
    %s167 = scalar_lea.vmem [#allocation0], 64
    %168 = vst.msk [vmem:[%s167] sm:$0x3] %vm166, %v165
    %s169 = scalar_lea.vmem [#allocation0], 70
    %170 = vst.msk [vmem:[%s169] sm:$0xc] %vm166, %v165
    %s171 = scalar_lea.vmem [#allocation0], 76
    %172 = vst.msk [vmem:[%s171] sm:$0x30] %vm166, %v165
    %s173 = scalar_lea.vmem [#allocation0], 82
    %174 = vst.msk [vmem:[%s173] sm:$0xc0] %vm166, %v165
    %s175 = scalar_lea.vmem %s0, 199
    %s176 = smov 3
    %v177 = vld [vmem:[%s175] ss:$16 sm:%s176]
    %s178 = scalar_lea.vmem %s0, 175
    %s179 = smov 12
    %v180 = vld [vmem:[%s178] ss:$16 sm:%s179]
    %vm181 = vcmask 1043458
    %v182 = vsel %vm181, %v180, %v177
    %s183 = scalar_lea.vmem %s0, 167
    %s184 = smov 48
    %v185 = vld [vmem:[%s183] ss:$16 sm:%s184]
    %vm186 = vcmask 1045508
    %v187 = vsel %vm186, %v185, %v182
    %s188 = scalar_lea.vmem %s0, 143
    %s189 = smov 192
    %v190 = vld [vmem:[%s188] ss:$16 sm:%s189]
    %vm191 = vcmask 1047558
    %v192 = vsel %vm191, %v190, %v187
    %193 = vrot.lane.b32.xlu0 %v192, 112
    %v194 = vpop.permute.xlu0 %193
    %vm195 = vcmask 1048448
    %s196 = scalar_lea.vmem [#allocation0], 96
    %197 = vst.msk [vmem:[%s196] sm:$0x3] %vm195, %v194
    %s198 = scalar_lea.vmem [#allocation0], 102
    %199 = vst.msk [vmem:[%s198] sm:$0xc] %vm195, %v194
    %s200 = scalar_lea.vmem [#allocation0], 108
    %201 = vst.msk [vmem:[%s200] sm:$0x30] %vm195, %v194
    %s202 = scalar_lea.vmem [#allocation0], 114
    %203 = vst.msk [vmem:[%s202] sm:$0xc0] %vm195, %v194
    %s204 = scalar_lea.vmem %s0, 263
    %s205 = smov 3
    %v206 = vld [vmem:[%s204] ss:$16 sm:%s205]
    %s207 = scalar_lea.vmem %s0, 239
    %s208 = smov 12
    %v209 = vld [vmem:[%s207] ss:$16 sm:%s208]
    %vm210 = vcmask 1043458
    %v211 = vsel %vm210, %v209, %v206
    %s212 = scalar_lea.vmem %s0, 231
    %s213 = smov 48
    %v214 = vld [vmem:[%s212] ss:$16 sm:%s213]
    %vm215 = vcmask 1045508
    %v216 = vsel %vm215, %v214, %v211
    %s217 = scalar_lea.vmem %s0, 207
    %s218 = smov 192
    %v219 = vld [vmem:[%s217] ss:$16 sm:%s218]
    %vm220 = vcmask 1047558
    %v221 = vsel %vm220, %v219, %v216
    %222 = vrot.lane.b32.xlu0 %v221, 112
    %v223 = vpop.permute.xlu0 %222
    %vm224 = vcmask 1048448
    %s225 = scalar_lea.vmem [#allocation0], 128
    %226 = vst.msk [vmem:[%s225] sm:$0x3] %vm224, %v223
    %s227 = scalar_lea.vmem [#allocation0], 134
    %228 = vst.msk [vmem:[%s227] sm:$0xc] %vm224, %v223
    %s229 = scalar_lea.vmem [#allocation0], 140
    %230 = vst.msk [vmem:[%s229] sm:$0x30] %vm224, %v223
    %s231 = scalar_lea.vmem [#allocation0], 146
    %232 = vst.msk [vmem:[%s231] sm:$0xc0] %vm224, %v223
    %s233 = scalar_lea.vmem %s0, 327
    %s234 = smov 3
    %v235 = vld [vmem:[%s233] ss:$16 sm:%s234]
    %s236 = scalar_lea.vmem %s0, 303
    %s237 = smov 12
    %v238 = vld [vmem:[%s236] ss:$16 sm:%s237]
    %vm239 = vcmask 1043458
    %v240 = vsel %vm239, %v238, %v235
    %s241 = scalar_lea.vmem %s0, 295
    %s242 = smov 48
    %v243 = vld [vmem:[%s241] ss:$16 sm:%s242]
    %vm244 = vcmask 1045508
    %v245 = vsel %vm244, %v243, %v240
    %s246 = scalar_lea.vmem %s0, 271
    %s247 = smov 192
    %v248 = vld [vmem:[%s246] ss:$16 sm:%s247]
    %vm249 = vcmask 1047558
    %v250 = vsel %vm249, %v248, %v245
    %251 = vrot.lane.b32.xlu0 %v250, 112
    %v252 = vpop.permute.xlu0 %251
    %vm253 = vcmask 1048448
    %s254 = scalar_lea.vmem [#allocation0], 160
    %255 = vst.msk [vmem:[%s254] sm:$0x3] %vm253, %v252
    %s256 = scalar_lea.vmem [#allocation0], 166
    %257 = vst.msk [vmem:[%s256] sm:$0xc] %vm253, %v252
    %s258 = scalar_lea.vmem [#allocation0], 172
    %259 = vst.msk [vmem:[%s258] sm:$0x30] %vm253, %v252
    %s260 = scalar_lea.vmem [#allocation0], 178
    %261 = vst.msk [vmem:[%s260] sm:$0xc0] %vm253, %v252
    %s262 = scalar_lea.vmem %s0, 6
    %s263 = smov 3
    %v264 = vld [vmem:[%s262] ss:$16 sm:%s263]
    %s265 = scalar_lea.vmem %s0, 4294967278
    %s266 = smov 12
    %v267 = vld [vmem:[%s265] ss:$16 sm:%s266]
    %vm268 = vcmask 1043458
    %v269 = vsel %vm268, %v267, %v264
    %s270 = scalar_lea.vmem %s0, 4294967270
    %s271 = smov 48
    %v272 = vld [vmem:[%s270] ss:$16 sm:%s271]
    %vm273 = vcmask 1045508
    %v274 = vsel %vm273, %v272, %v269
    %s275 = scalar_lea.vmem %s0, 4294967246
    %s276 = smov 192
    %v277 = vld [vmem:[%s275] ss:$16 sm:%s276]
    %vm278 = vcmask 1047558
    %v279 = vsel %vm278, %v277, %v274
    %280 = vrot.lane.b32.xlu0 %v279, 96
    %v281 = vpop.permute.xlu0 %280
    %vm282 = vcmask 917248
    %283 = vst.msk [vmem:[#allocation0] sm:$0x3] %vm282, %v281
    %s284 = scalar_lea.vmem [#allocation0], 6
    %285 = vst.msk [vmem:[%s284] sm:$0xc] %vm282, %v281
    %s286 = scalar_lea.vmem [#allocation0], 12
    %287 = vst.msk [vmem:[%s286] sm:$0x30] %vm282, %v281
    %s288 = scalar_lea.vmem [#allocation0], 18
    %289 = vst.msk [vmem:[%s288] sm:$0xc0] %vm282, %v281
    %s290 = scalar_lea.vmem %s0, 70
    %s291 = smov 3
    %v292 = vld [vmem:[%s290] ss:$16 sm:%s291]
    %s293 = scalar_lea.vmem %s0, 46
    %s294 = smov 12
    %v295 = vld [vmem:[%s293] ss:$16 sm:%s294]
    %vm296 = vcmask 1043458
    %v297 = vsel %vm296, %v295, %v292
    %s298 = scalar_lea.vmem %s0, 38
    %s299 = smov 48
    %v300 = vld [vmem:[%s298] ss:$16 sm:%s299]
    %vm301 = vcmask 1045508
    %v302 = vsel %vm301, %v300, %v297
    %s303 = scalar_lea.vmem %s0, 14
    %s304 = smov 192
    %v305 = vld [vmem:[%s303] ss:$16 sm:%s304]
    %vm306 = vcmask 1047558
    %v307 = vsel %vm306, %v305, %v302
    %308 = vrot.lane.b32.xlu0 %v307, 96
    %v309 = vpop.permute.xlu0 %308
    %vm310 = vcmask 917248
    %s311 = scalar_lea.vmem [#allocation0], 32
    %312 = vst.msk [vmem:[%s311] sm:$0x3] %vm310, %v309
    %s313 = scalar_lea.vmem [#allocation0], 38
    %314 = vst.msk [vmem:[%s313] sm:$0xc] %vm310, %v309
    %s315 = scalar_lea.vmem [#allocation0], 44
    %316 = vst.msk [vmem:[%s315] sm:$0x30] %vm310, %v309
    %s317 = scalar_lea.vmem [#allocation0], 50
    %318 = vst.msk [vmem:[%s317] sm:$0xc0] %vm310, %v309
    %s319 = scalar_lea.vmem %s0, 134
    %s320 = smov 3
    %v321 = vld [vmem:[%s319] ss:$16 sm:%s320]
    %s322 = scalar_lea.vmem %s0, 110
    %s323 = smov 12
    %v324 = vld [vmem:[%s322] ss:$16 sm:%s323]
    %vm325 = vcmask 1043458
    %v326 = vsel %vm325, %v324, %v321
    %s327 = scalar_lea.vmem %s0, 102
    %s328 = smov 48
    %v329 = vld [vmem:[%s327] ss:$16 sm:%s328]
    %vm330 = vcmask 1045508
    %v331 = vsel %vm330, %v329, %v326
    %s332 = scalar_lea.vmem %s0, 78
    %s333 = smov 192
    %v334 = vld [vmem:[%s332] ss:$16 sm:%s333]
    %vm335 = vcmask 1047558
    %v336 = vsel %vm335, %v334, %v331
    %337 = vrot.lane.b32.xlu0 %v336, 96
    %v338 = vpop.permute.xlu0 %337
    %vm339 = vcmask 917248
    %s340 = scalar_lea.vmem [#allocation0], 64
    %341 = vst.msk [vmem:[%s340] sm:$0x3] %vm339, %v338
    %s342 = scalar_lea.vmem [#allocation0], 70
    %343 = vst.msk [vmem:[%s342] sm:$0xc] %vm339, %v338
    %s344 = scalar_lea.vmem [#allocation0], 76
    %345 = vst.msk [vmem:[%s344] sm:$0x30] %vm339, %v338
    %s346 = scalar_lea.vmem [#allocation0], 82
    %347 = vst.msk [vmem:[%s346] sm:$0xc0] %vm339, %v338
    %s348 = scalar_lea.vmem %s0, 198
    %s349 = smov 3
    %v350 = vld [vmem:[%s348] ss:$16 sm:%s349]
    %s351 = scalar_lea.vmem %s0, 174
    %s352 = smov 12
    %v353 = vld [vmem:[%s351] ss:$16 sm:%s352]
    %vm354 = vcmask 1043458
    %v355 = vsel %vm354, %v353, %v350
    %s356 = scalar_lea.vmem %s0, 166
    %s357 = smov 48
    %v358 = vld [vmem:[%s356] ss:$16 sm:%s357]
    %vm359 = vcmask 1045508
    %v360 = vsel %vm359, %v358, %v355
    %s361 = scalar_lea.vmem %s0, 142
    %s362 = smov 192
    %v363 = vld [vmem:[%s361] ss:$16 sm:%s362]
    %vm364 = vcmask 1047558
    %v365 = vsel %vm364, %v363, %v360
    %366 = vrot.lane.b32.xlu0 %v365, 96
    %v367 = vpop.permute.xlu0 %366
    %vm368 = vcmask 917248
    %s369 = scalar_lea.vmem [#allocation0], 96
    %370 = vst.msk [vmem:[%s369] sm:$0x3] %vm368, %v367
    %s371 = scalar_lea.vmem [#allocation0], 102
    %372 = vst.msk [vmem:[%s371] sm:$0xc] %vm368, %v367
    %s373 = scalar_lea.vmem [#allocation0], 108
    %374 = vst.msk [vmem:[%s373] sm:$0x30] %vm368, %v367
    %s375 = scalar_lea.vmem [#allocation0], 114
    %376 = vst.msk [vmem:[%s375] sm:$0xc0] %vm368, %v367
    %s377 = scalar_lea.vmem %s0, 262
    %s378 = smov 3
    %v379 = vld [vmem:[%s377] ss:$16 sm:%s378]
    %s380 = scalar_lea.vmem %s0, 238
    %s381 = smov 12
    %v382 = vld [vmem:[%s380] ss:$16 sm:%s381]
    %vm383 = vcmask 1043458
    %v384 = vsel %vm383, %v382, %v379
    %s385 = scalar_lea.vmem %s0, 230
    %s386 = smov 48
    %v387 = vld [vmem:[%s385] ss:$16 sm:%s386]
    %vm388 = vcmask 1045508
    %v389 = vsel %vm388, %v387, %v384
    %s390 = scalar_lea.vmem %s0, 206
    %s391 = smov 192
    %v392 = vld [vmem:[%s390] ss:$16 sm:%s391]
    %vm393 = vcmask 1047558
    %v394 = vsel %vm393, %v392, %v389
    %395 = vrot.lane.b32.xlu0 %v394, 96
    %v396 = vpop.permute.xlu0 %395
    %vm397 = vcmask 917248
    %s398 = scalar_lea.vmem [#allocation0], 128
    %399 = vst.msk [vmem:[%s398] sm:$0x3] %vm397, %v396
    %s400 = scalar_lea.vmem [#allocation0], 134
    %401 = vst.msk [vmem:[%s400] sm:$0xc] %vm397, %v396
    %s402 = scalar_lea.vmem [#allocation0], 140
    %403 = vst.msk [vmem:[%s402] sm:$0x30] %vm397, %v396
    %s404 = scalar_lea.vmem [#allocation0], 146
    %405 = vst.msk [vmem:[%s404] sm:$0xc0] %vm397, %v396
    %s406 = scalar_lea.vmem %s0, 326
    %s407 = smov 3
    %v408 = vld [vmem:[%s406] ss:$16 sm:%s407]
    %s409 = scalar_lea.vmem %s0, 302
    %s410 = smov 12
    %v411 = vld [vmem:[%s409] ss:$16 sm:%s410]
    %vm412 = vcmask 1043458
    %v413 = vsel %vm412, %v411, %v408
    %s414 = scalar_lea.vmem %s0, 294
    %s415 = smov 48
    %v416 = vld [vmem:[%s414] ss:$16 sm:%s415]
    %vm417 = vcmask 1045508
    %v418 = vsel %vm417, %v416, %v413
    %s419 = scalar_lea.vmem %s0, 270
    %s420 = smov 192
    %v421 = vld [vmem:[%s419] ss:$16 sm:%s420]
    %vm422 = vcmask 1047558
    %v423 = vsel %vm422, %v421, %v418
    %424 = vrot.lane.b32.xlu0 %v423, 96
    %v425 = vpop.permute.xlu0 %424
    %vm426 = vcmask 917248
    %s427 = scalar_lea.vmem [#allocation0], 160
    %428 = vst.msk [vmem:[%s427] sm:$0x3] %vm426, %v425
    %s429 = scalar_lea.vmem [#allocation0], 166
    %430 = vst.msk [vmem:[%s429] sm:$0xc] %vm426, %v425
    %s431 = scalar_lea.vmem [#allocation0], 172
    %432 = vst.msk [vmem:[%s431] sm:$0x30] %vm426, %v425
    %s433 = scalar_lea.vmem [#allocation0], 178
    %434 = vst.msk [vmem:[%s433] sm:$0xc0] %vm426, %v425
    %s435 = scalar_lea.vmem %s0, 5
    %s436 = smov 3
    %v437 = vld [vmem:[%s435] ss:$16 sm:%s436]
    %s438 = scalar_lea.vmem %s0, 4294967277
    %s439 = smov 12
    %v440 = vld [vmem:[%s438] ss:$16 sm:%s439]
    %vm441 = vcmask 1043458
    %v442 = vsel %vm441, %v440, %v437
    %s443 = scalar_lea.vmem %s0, 4294967269
    %s444 = smov 48
    %v445 = vld [vmem:[%s443] ss:$16 sm:%s444]
    %vm446 = vcmask 1045508
    %v447 = vsel %vm446, %v445, %v442
    %s448 = scalar_lea.vmem %s0, 4294967245
    %s449 = smov 192
    %v450 = vld [vmem:[%s448] ss:$16 sm:%s449]
    %vm451 = vcmask 1047558
    %v452 = vsel %vm451, %v450, %v447
    %453 = vrot.lane.b32.xlu0 %v452, 80
    %v454 = vpop.permute.xlu0 %453
    %vm455 = vcmask 786048
    %456 = vst.msk [vmem:[#allocation0] sm:$0x3] %vm455, %v454
    %s457 = scalar_lea.vmem [#allocation0], 6
    %458 = vst.msk [vmem:[%s457] sm:$0xc] %vm455, %v454
    %s459 = scalar_lea.vmem [#allocation0], 12
    %460 = vst.msk [vmem:[%s459] sm:$0x30] %vm455, %v454
    %s461 = scalar_lea.vmem [#allocation0], 18
    %462 = vst.msk [vmem:[%s461] sm:$0xc0] %vm455, %v454
    %s463 = scalar_lea.vmem %s0, 69
    %s464 = smov 3
    %v465 = vld [vmem:[%s463] ss:$16 sm:%s464]
    %s466 = scalar_lea.vmem %s0, 45
    %s467 = smov 12
    %v468 = vld [vmem:[%s466] ss:$16 sm:%s467]
    %vm469 = vcmask 1043458
    %v470 = vsel %vm469, %v468, %v465
    %s471 = scalar_lea.vmem %s0, 37
    %s472 = smov 48
    %v473 = vld [vmem:[%s471] ss:$16 sm:%s472]
    %vm474 = vcmask 1045508
    %v475 = vsel %vm474, %v473, %v470
    %s476 = scalar_lea.vmem %s0, 13
    %s477 = smov 192
    %v478 = vld [vmem:[%s476] ss:$16 sm:%s477]
    %vm479 = vcmask 1047558
    %v480 = vsel %vm479, %v478, %v475
    %481 = vrot.lane.b32.xlu0 %v480, 80
    %v482 = vpop.permute.xlu0 %481
    %vm483 = vcmask 786048
    %s484 = scalar_lea.vmem [#allocation0], 32
    %485 = vst.msk [vmem:[%s484] sm:$0x3] %vm483, %v482
    %s486 = scalar_lea.vmem [#allocation0], 38
    %487 = vst.msk [vmem:[%s486] sm:$0xc] %vm483, %v482
    %s488 = scalar_lea.vmem [#allocation0], 44
    %489 = vst.msk [vmem:[%s488] sm:$0x30] %vm483, %v482
    %s490 = scalar_lea.vmem [#allocation0], 50
    %491 = vst.msk [vmem:[%s490] sm:$0xc0] %vm483, %v482
    %s492 = scalar_lea.vmem %s0, 133
    %s493 = smov 3
    %v494 = vld [vmem:[%s492] ss:$16 sm:%s493]
    %s495 = scalar_lea.vmem %s0, 109
    %s496 = smov 12
    %v497 = vld [vmem:[%s495] ss:$16 sm:%s496]
    %vm498 = vcmask 1043458
    %v499 = vsel %vm498, %v497, %v494
    %s500 = scalar_lea.vmem %s0, 101
    %s501 = smov 48
    %v502 = vld [vmem:[%s500] ss:$16 sm:%s501]
    %vm503 = vcmask 1045508
    %v504 = vsel %vm503, %v502, %v499
    %s505 = scalar_lea.vmem %s0, 77
    %s506 = smov 192
    %v507 = vld [vmem:[%s505] ss:$16 sm:%s506]
    %vm508 = vcmask 1047558
    %v509 = vsel %vm508, %v507, %v504
    %510 = vrot.lane.b32.xlu0 %v509, 80
    %v511 = vpop.permute.xlu0 %510
    %vm512 = vcmask 786048
    %s513 = scalar_lea.vmem [#allocation0], 64
    %514 = vst.msk [vmem:[%s513] sm:$0x3] %vm512, %v511
    %s515 = scalar_lea.vmem [#allocation0], 70
    %516 = vst.msk [vmem:[%s515] sm:$0xc] %vm512, %v511
    %s517 = scalar_lea.vmem [#allocation0], 76
    %518 = vst.msk [vmem:[%s517] sm:$0x30] %vm512, %v511
    %s519 = scalar_lea.vmem [#allocation0], 82
    %520 = vst.msk [vmem:[%s519] sm:$0xc0] %vm512, %v511
    %s521 = scalar_lea.vmem %s0, 197
    %s522 = smov 3
    %v523 = vld [vmem:[%s521] ss:$16 sm:%s522]
    %s524 = scalar_lea.vmem %s0, 173
    %s525 = smov 12
    %v526 = vld [vmem:[%s524] ss:$16 sm:%s525]
    %vm527 = vcmask 1043458
    %v528 = vsel %vm527, %v526, %v523
    %s529 = scalar_lea.vmem %s0, 165
    %s530 = smov 48
    %v531 = vld [vmem:[%s529] ss:$16 sm:%s530]
    %vm532 = vcmask 1045508
    %v533 = vsel %vm532, %v531, %v528
    %s534 = scalar_lea.vmem %s0, 141
    %s535 = smov 192
    %v536 = vld [vmem:[%s534] ss:$16 sm:%s535]
    %vm537 = vcmask 1047558
    %v538 = vsel %vm537, %v536, %v533
    %539 = vrot.lane.b32.xlu0 %v538, 80
    %v540 = vpop.permute.xlu0 %539
    %vm541 = vcmask 786048
    %s542 = scalar_lea.vmem [#allocation0], 96
    %543 = vst.msk [vmem:[%s542] sm:$0x3] %vm541, %v540
    %s544 = scalar_lea.vmem [#allocation0], 102
    %545 = vst.msk [vmem:[%s544] sm:$0xc] %vm541, %v540
    %s546 = scalar_lea.vmem [#allocation0], 108
    %547 = vst.msk [vmem:[%s546] sm:$0x30] %vm541, %v540
    %s548 = scalar_lea.vmem [#allocation0], 114
    %549 = vst.msk [vmem:[%s548] sm:$0xc0] %vm541, %v540
    %s550 = scalar_lea.vmem %s0, 261
    %s551 = smov 3
    %v552 = vld [vmem:[%s550] ss:$16 sm:%s551]
    %s553 = scalar_lea.vmem %s0, 237
    %s554 = smov 12
    %v555 = vld [vmem:[%s553] ss:$16 sm:%s554]
    %vm556 = vcmask 1043458
    %v557 = vsel %vm556, %v555, %v552
    %s558 = scalar_lea.vmem %s0, 229
    %s559 = smov 48
    %v560 = vld [vmem:[%s558] ss:$16 sm:%s559]
    %vm561 = vcmask 1045508
    %v562 = vsel %vm561, %v560, %v557
    %s563 = scalar_lea.vmem %s0, 205
    %s564 = smov 192
    %v565 = vld [vmem:[%s563] ss:$16 sm:%s564]
    %vm566 = vcmask 1047558
    %v567 = vsel %vm566, %v565, %v562
    %568 = vrot.lane.b32.xlu0 %v567, 80
    %v569 = vpop.permute.xlu0 %568
    %vm570 = vcmask 786048
    %s571 = scalar_lea.vmem [#allocation0], 128
    %572 = vst.msk [vmem:[%s571] sm:$0x3] %vm570, %v569
    %s573 = scalar_lea.vmem [#allocation0], 134
    %574 = vst.msk [vmem:[%s573] sm:$0xc] %vm570, %v569
    %s575 = scalar_lea.vmem [#allocation0], 140
    %576 = vst.msk [vmem:[%s575] sm:$0x30] %vm570, %v569
    %s577 = scalar_lea.vmem [#allocation0], 146
    %578 = vst.msk [vmem:[%s577] sm:$0xc0] %vm570, %v569
    %s579 = scalar_lea.vmem %s0, 325
    %s580 = smov 3
    %v581 = vld [vmem:[%s579] ss:$16 sm:%s580]
    %s582 = scalar_lea.vmem %s0, 301
    %s583 = smov 12
    %v584 = vld [vmem:[%s582] ss:$16 sm:%s583]
    %vm585 = vcmask 1043458
    %v586 = vsel %vm585, %v584, %v581
    %s587 = scalar_lea.vmem %s0, 293
    %s588 = smov 48
    %v589 = vld [vmem:[%s587] ss:$16 sm:%s588]
    %vm590 = vcmask 1045508
    %v591 = vsel %vm590, %v589, %v586
    %s592 = scalar_lea.vmem %s0, 269
    %s593 = smov 192
    %v594 = vld [vmem:[%s592] ss:$16 sm:%s593]
    %vm595 = vcmask 1047558
    %v596 = vsel %vm595, %v594, %v591
    %597 = vrot.lane.b32.xlu0 %v596, 80
    %v598 = vpop.permute.xlu0 %597
    %vm599 = vcmask 786048
    %s600 = scalar_lea.vmem [#allocation0], 160
    %601 = vst.msk [vmem:[%s600] sm:$0x3] %vm599, %v598
    %s602 = scalar_lea.vmem [#allocation0], 166
    %603 = vst.msk [vmem:[%s602] sm:$0xc] %vm599, %v598
    %s604 = scalar_lea.vmem [#allocation0], 172
    %605 = vst.msk [vmem:[%s604] sm:$0x30] %vm599, %v598
    %s606 = scalar_lea.vmem [#allocation0], 178
    %607 = vst.msk [vmem:[%s606] sm:$0xc0] %vm599, %v598
    %s608 = scalar_lea.vmem %s0, 4
    %s609 = smov 3
    %v610 = vld [vmem:[%s608] ss:$16 sm:%s609]
    %s611 = scalar_lea.vmem %s0, 4294967276
    %s612 = smov 12
    %v613 = vld [vmem:[%s611] ss:$16 sm:%s612]
    %vm614 = vcmask 1043458
    %v615 = vsel %vm614, %v613, %v610
    %s616 = scalar_lea.vmem %s0, 4294967268
    %s617 = smov 48
    %v618 = vld [vmem:[%s616] ss:$16 sm:%s617]
    %vm619 = vcmask 1045508
    %v620 = vsel %vm619, %v618, %v615
    %s621 = scalar_lea.vmem %s0, 4294967244
    %s622 = smov 192
    %v623 = vld [vmem:[%s621] ss:$16 sm:%s622]
    %vm624 = vcmask 1047558
    %v625 = vsel %vm624, %v623, %v620
    %626 = vrot.lane.b32.xlu0 %v625, 64
    %v627 = vpop.permute.xlu0 %626
    %vm628 = vcmask 654848
    %629 = vst.msk [vmem:[#allocation0] sm:$0x3] %vm628, %v627
    %s630 = scalar_lea.vmem [#allocation0], 6
    %631 = vst.msk [vmem:[%s630] sm:$0xc] %vm628, %v627
    %s632 = scalar_lea.vmem [#allocation0], 12
    %633 = vst.msk [vmem:[%s632] sm:$0x30] %vm628, %v627
    %s634 = scalar_lea.vmem [#allocation0], 18
    %635 = vst.msk [vmem:[%s634] sm:$0xc0] %vm628, %v627
    %s636 = scalar_lea.vmem %s0, 68
    %s637 = smov 3
    %v638 = vld [vmem:[%s636] ss:$16 sm:%s637]
    %s639 = scalar_lea.vmem %s0, 44
    %s640 = smov 12
    %v641 = vld [vmem:[%s639] ss:$16 sm:%s640]
    %vm642 = vcmask 1043458
    %v643 = vsel %vm642, %v641, %v638
    %s644 = scalar_lea.vmem %s0, 36
    %s645 = smov 48
    %v646 = vld [vmem:[%s644] ss:$16 sm:%s645]
    %vm647 = vcmask 1045508
    %v648 = vsel %vm647, %v646, %v643
    %s649 = scalar_lea.vmem %s0, 12
    %s650 = smov 192
    %v651 = vld [vmem:[%s649] ss:$16 sm:%s650]
    %vm652 = vcmask 1047558
    %v653 = vsel %vm652, %v651, %v648
    %654 = vrot.lane.b32.xlu0 %v653, 64
    %v655 = vpop.permute.xlu0 %654
    %vm656 = vcmask 654848
    %s657 = scalar_lea.vmem [#allocation0], 32
    %658 = vst.msk [vmem:[%s657] sm:$0x3] %vm656, %v655
    %s659 = scalar_lea.vmem [#allocation0], 38
    %660 = vst.msk [vmem:[%s659] sm:$0xc] %vm656, %v655
    %s661 = scalar_lea.vmem [#allocation0], 44
    %662 = vst.msk [vmem:[%s661] sm:$0x30] %vm656, %v655
    %s663 = scalar_lea.vmem [#allocation0], 50
    %664 = vst.msk [vmem:[%s663] sm:$0xc0] %vm656, %v655
    %s665 = scalar_lea.vmem %s0, 132
    %s666 = smov 3
    %v667 = vld [vmem:[%s665] ss:$16 sm:%s666]
    %s668 = scalar_lea.vmem %s0, 108
    %s669 = smov 12
    %v670 = vld [vmem:[%s668] ss:$16 sm:%s669]
    %vm671 = vcmask 1043458
    %v672 = vsel %vm671, %v670, %v667
    %s673 = scalar_lea.vmem %s0, 100
    %s674 = smov 48
    %v675 = vld [vmem:[%s673] ss:$16 sm:%s674]
    %vm676 = vcmask 1045508
    %v677 = vsel %vm676, %v675, %v672
    %s678 = scalar_lea.vmem %s0, 76
    %s679 = smov 192
    %v680 = vld [vmem:[%s678] ss:$16 sm:%s679]
    %vm681 = vcmask 1047558
    %v682 = vsel %vm681, %v680, %v677
    %683 = vrot.lane.b32.xlu0 %v682, 64
    %v684 = vpop.permute.xlu0 %683
    %vm685 = vcmask 654848
    %s686 = scalar_lea.vmem [#allocation0], 64
    %687 = vst.msk [vmem:[%s686] sm:$0x3] %vm685, %v684
    %s688 = scalar_lea.vmem [#allocation0], 70
    %689 = vst.msk [vmem:[%s688] sm:$0xc] %vm685, %v684
    %s690 = scalar_lea.vmem [#allocation0], 76
    %691 = vst.msk [vmem:[%s690] sm:$0x30] %vm685, %v684
    %s692 = scalar_lea.vmem [#allocation0], 82
    %693 = vst.msk [vmem:[%s692] sm:$0xc0] %vm685, %v684
    %s694 = scalar_lea.vmem %s0, 196
    %s695 = smov 3
    %v696 = vld [vmem:[%s694] ss:$16 sm:%s695]
    %s697 = scalar_lea.vmem %s0, 172
    %s698 = smov 12
    %v699 = vld [vmem:[%s697] ss:$16 sm:%s698]
    %vm700 = vcmask 1043458
    %v701 = vsel %vm700, %v699, %v696
    %s702 = scalar_lea.vmem %s0, 164
    %s703 = smov 48
    %v704 = vld [vmem:[%s702] ss:$16 sm:%s703]
    %vm705 = vcmask 1045508
    %v706 = vsel %vm705, %v704, %v701
    %s707 = scalar_lea.vmem %s0, 140
    %s708 = smov 192
    %v709 = vld [vmem:[%s707] ss:$16 sm:%s708]
    %vm710 = vcmask 1047558
    %v711 = vsel %vm710, %v709, %v706
    %712 = vrot.lane.b32.xlu0 %v711, 64
    %v713 = vpop.permute.xlu0 %712
    %vm714 = vcmask 654848
    %s715 = scalar_lea.vmem [#allocation0], 96
    %716 = vst.msk [vmem:[%s715] sm:$0x3] %vm714, %v713
    %s717 = scalar_lea.vmem [#allocation0], 102
    %718 = vst.msk [vmem:[%s717] sm:$0xc] %vm714, %v713
    %s719 = scalar_lea.vmem [#allocation0], 108
    %720 = vst.msk [vmem:[%s719] sm:$0x30] %vm714, %v713
    %s721 = scalar_lea.vmem [#allocation0], 114
    %722 = vst.msk [vmem:[%s721] sm:$0xc0] %vm714, %v713
    %s723 = scalar_lea.vmem %s0, 260
    %s724 = smov 3
    %v725 = vld [vmem:[%s723] ss:$16 sm:%s724]
    %s726 = scalar_lea.vmem %s0, 236
    %s727 = smov 12
    %v728 = vld [vmem:[%s726] ss:$16 sm:%s727]
    %vm729 = vcmask 1043458
    %v730 = vsel %vm729, %v728, %v725
    %s731 = scalar_lea.vmem %s0, 228
    %s732 = smov 48
    %v733 = vld [vmem:[%s731] ss:$16 sm:%s732]
    %vm734 = vcmask 1045508
    %v735 = vsel %vm734, %v733, %v730
    %s736 = scalar_lea.vmem %s0, 204
    %s737 = smov 192
    %v738 = vld [vmem:[%s736] ss:$16 sm:%s737]
    %vm739 = vcmask 1047558
    %v740 = vsel %vm739, %v738, %v735
    %741 = vrot.lane.b32.xlu0 %v740, 64
    %v742 = vpop.permute.xlu0 %741
    %vm743 = vcmask 654848
    %s744 = scalar_lea.vmem [#allocation0], 128
    %745 = vst.msk [vmem:[%s744] sm:$0x3] %vm743, %v742
    %s746 = scalar_lea.vmem [#allocation0], 134
    %747 = vst.msk [vmem:[%s746] sm:$0xc] %vm743, %v742
    %s748 = scalar_lea.vmem [#allocation0], 140
    %749 = vst.msk [vmem:[%s748] sm:$0x30] %vm743, %v742
    %s750 = scalar_lea.vmem [#allocation0], 146
    %751 = vst.msk [vmem:[%s750] sm:$0xc0] %vm743, %v742
    %s752 = scalar_lea.vmem %s0, 324
    %s753 = smov 3
    %v754 = vld [vmem:[%s752] ss:$16 sm:%s753]
    %s755 = scalar_lea.vmem %s0, 300
    %s756 = smov 12
    %v757 = vld [vmem:[%s755] ss:$16 sm:%s756]
    %vm758 = vcmask 1043458
    %v759 = vsel %vm758, %v757, %v754
    %s760 = scalar_lea.vmem %s0, 292
    %s761 = smov 48
    %v762 = vld [vmem:[%s760] ss:$16 sm:%s761]
    %vm763 = vcmask 1045508
    %v764 = vsel %vm763, %v762, %v759
    %s765 = scalar_lea.vmem %s0, 268
    %s766 = smov 192
    %v767 = vld [vmem:[%s765] ss:$16 sm:%s766]
    %vm768 = vcmask 1047558
    %v769 = vsel %vm768, %v767, %v764
    %770 = vrot.lane.b32.xlu0 %v769, 64
    %v771 = vpop.permute.xlu0 %770
    %vm772 = vcmask 654848
    %s773 = scalar_lea.vmem [#allocation0], 160
    %774 = vst.msk [vmem:[%s773] sm:$0x3] %vm772, %v771
    %s775 = scalar_lea.vmem [#allocation0], 166
    %776 = vst.msk [vmem:[%s775] sm:$0xc] %vm772, %v771
    %s777 = scalar_lea.vmem [#allocation0], 172
    %778 = vst.msk [vmem:[%s777] sm:$0x30] %vm772, %v771
    %s779 = scalar_lea.vmem [#allocation0], 178
    %780 = vst.msk [vmem:[%s779] sm:$0xc0] %vm772, %v771
    %s781 = scalar_lea.vmem %s0, 3
    %s782 = smov 3
    %v783 = vld [vmem:[%s781] ss:$16 sm:%s782]
    %s784 = scalar_lea.vmem %s0, 4294967275
    %s785 = smov 12
    %v786 = vld [vmem:[%s784] ss:$16 sm:%s785]
    %vm787 = vcmask 1043458
    %v788 = vsel %vm787, %v786, %v783
    %s789 = scalar_lea.vmem %s0, 4294967267
    %s790 = smov 48
    %v791 = vld [vmem:[%s789] ss:$16 sm:%s790]
    %vm792 = vcmask 1045508
    %v793 = vsel %vm792, %v791, %v788
    %s794 = scalar_lea.vmem %s0, 4294967243
    %s795 = smov 192
    %v796 = vld [vmem:[%s794] ss:$16 sm:%s795]
    %vm797 = vcmask 1047558
    %v798 = vsel %vm797, %v796, %v793
    %799 = vrot.lane.b32.xlu0 %v798, 48
    %v800 = vpop.permute.xlu0 %799
    %vm801 = vcmask 523648
    %802 = vst.msk [vmem:[#allocation0] sm:$0x3] %vm801, %v800
    %s803 = scalar_lea.vmem [#allocation0], 6
    %804 = vst.msk [vmem:[%s803] sm:$0xc] %vm801, %v800
    %s805 = scalar_lea.vmem [#allocation0], 12
    %806 = vst.msk [vmem:[%s805] sm:$0x30] %vm801, %v800
    %s807 = scalar_lea.vmem [#allocation0], 18
    %808 = vst.msk [vmem:[%s807] sm:$0xc0] %vm801, %v800
    %s809 = scalar_lea.vmem %s0, 67
    %s810 = smov 3
    %v811 = vld [vmem:[%s809] ss:$16 sm:%s810]
    %s812 = scalar_lea.vmem %s0, 43
    %s813 = smov 12
    %v814 = vld [vmem:[%s812] ss:$16 sm:%s813]
    %vm815 = vcmask 1043458
    %v816 = vsel %vm815, %v814, %v811
    %s817 = scalar_lea.vmem %s0, 35
    %s818 = smov 48
    %v819 = vld [vmem:[%s817] ss:$16 sm:%s818]
    %vm820 = vcmask 1045508
    %v821 = vsel %vm820, %v819, %v816
    %s822 = scalar_lea.vmem %s0, 11
    %s823 = smov 192
    %v824 = vld [vmem:[%s822] ss:$16 sm:%s823]
    %vm825 = vcmask 1047558
    %v826 = vsel %vm825, %v824, %v821
    %827 = vrot.lane.b32.xlu0 %v826, 48
    %v828 = vpop.permute.xlu0 %827
    %vm829 = vcmask 523648
    %s830 = scalar_lea.vmem [#allocation0], 32
    %831 = vst.msk [vmem:[%s830] sm:$0x3] %vm829, %v828
    %s832 = scalar_lea.vmem [#allocation0], 38
    %833 = vst.msk [vmem:[%s832] sm:$0xc] %vm829, %v828
    %s834 = scalar_lea.vmem [#allocation0], 44
    %835 = vst.msk [vmem:[%s834] sm:$0x30] %vm829, %v828
    %s836 = scalar_lea.vmem [#allocation0], 50
    %837 = vst.msk [vmem:[%s836] sm:$0xc0] %vm829, %v828
    %s838 = scalar_lea.vmem %s0, 131
    %s839 = smov 3
    %v840 = vld [vmem:[%s838] ss:$16 sm:%s839]
    %s841 = scalar_lea.vmem %s0, 107
    %s842 = smov 12
    %v843 = vld [vmem:[%s841] ss:$16 sm:%s842]
    %vm844 = vcmask 1043458
    %v845 = vsel %vm844, %v843, %v840
    %s846 = scalar_lea.vmem %s0, 99
    %s847 = smov 48
    %v848 = vld [vmem:[%s846] ss:$16 sm:%s847]
    %vm849 = vcmask 1045508
    %v850 = vsel %vm849, %v848, %v845
    %s851 = scalar_lea.vmem %s0, 75
    %s852 = smov 192
    %v853 = vld [vmem:[%s851] ss:$16 sm:%s852]
    %vm854 = vcmask 1047558
    %v855 = vsel %vm854, %v853, %v850
    %856 = vrot.lane.b32.xlu0 %v855, 48
    %v857 = vpop.permute.xlu0 %856
    %vm858 = vcmask 523648
    %s859 = scalar_lea.vmem [#allocation0], 64
    %860 = vst.msk [vmem:[%s859] sm:$0x3] %vm858, %v857
    %s861 = scalar_lea.vmem [#allocation0], 70
    %862 = vst.msk [vmem:[%s861] sm:$0xc] %vm858, %v857
    %s863 = scalar_lea.vmem [#allocation0], 76
    %864 = vst.msk [vmem:[%s863] sm:$0x30] %vm858, %v857
    %s865 = scalar_lea.vmem [#allocation0], 82
    %866 = vst.msk [vmem:[%s865] sm:$0xc0] %vm858, %v857
    %s867 = scalar_lea.vmem %s0, 195
    %s868 = smov 3
    %v869 = vld [vmem:[%s867] ss:$16 sm:%s868]
    %s870 = scalar_lea.vmem %s0, 171
    %s871 = smov 12
    %v872 = vld [vmem:[%s870] ss:$16 sm:%s871]
    %vm873 = vcmask 1043458
    %v874 = vsel %vm873, %v872, %v869
    %s875 = scalar_lea.vmem %s0, 163
    %s876 = smov 48
    %v877 = vld [vmem:[%s875] ss:$16 sm:%s876]
    %vm878 = vcmask 1045508
    %v879 = vsel %vm878, %v877, %v874
    %s880 = scalar_lea.vmem %s0, 139
    %s881 = smov 192
    %v882 = vld [vmem:[%s880] ss:$16 sm:%s881]
    %vm883 = vcmask 1047558
    %v884 = vsel %vm883, %v882, %v879
    %885 = vrot.lane.b32.xlu0 %v884, 48
    %v886 = vpop.permute.xlu0 %885
    %vm887 = vcmask 523648
    %s888 = scalar_lea.vmem [#allocation0], 96
    %889 = vst.msk [vmem:[%s888] sm:$0x3] %vm887, %v886
    %s890 = scalar_lea.vmem [#allocation0], 102
    %891 = vst.msk [vmem:[%s890] sm:$0xc] %vm887, %v886
    %s892 = scalar_lea.vmem [#allocation0], 108
    %893 = vst.msk [vmem:[%s892] sm:$0x30] %vm887, %v886
    %s894 = scalar_lea.vmem [#allocation0], 114
    %895 = vst.msk [vmem:[%s894] sm:$0xc0] %vm887, %v886
    %s896 = scalar_lea.vmem %s0, 259
    %s897 = smov 3
    %v898 = vld [vmem:[%s896] ss:$16 sm:%s897]
    %s899 = scalar_lea.vmem %s0, 235
    %s900 = smov 12
    %v901 = vld [vmem:[%s899] ss:$16 sm:%s900]
    %vm902 = vcmask 1043458
    %v903 = vsel %vm902, %v901, %v898
    %s904 = scalar_lea.vmem %s0, 227
    %s905 = smov 48
    %v906 = vld [vmem:[%s904] ss:$16 sm:%s905]
    %vm907 = vcmask 1045508
    %v908 = vsel %vm907, %v906, %v903
    %s909 = scalar_lea.vmem %s0, 203
    %s910 = smov 192
    %v911 = vld [vmem:[%s909] ss:$16 sm:%s910]
    %vm912 = vcmask 1047558
    %v913 = vsel %vm912, %v911, %v908
    %914 = vrot.lane.b32.xlu0 %v913, 48
    %v915 = vpop.permute.xlu0 %914
    %vm916 = vcmask 523648
    %s917 = scalar_lea.vmem [#allocation0], 128
    %918 = vst.msk [vmem:[%s917] sm:$0x3] %vm916, %v915
    %s919 = scalar_lea.vmem [#allocation0], 134
    %920 = vst.msk [vmem:[%s919] sm:$0xc] %vm916, %v915
    %s921 = scalar_lea.vmem [#allocation0], 140
    %922 = vst.msk [vmem:[%s921] sm:$0x30] %vm916, %v915
    %s923 = scalar_lea.vmem [#allocation0], 146
    %924 = vst.msk [vmem:[%s923] sm:$0xc0] %vm916, %v915
    %s925 = scalar_lea.vmem %s0, 323
    %s926 = smov 3
    %v927 = vld [vmem:[%s925] ss:$16 sm:%s926]
    %s928 = scalar_lea.vmem %s0, 299
    %s929 = smov 12
    %v930 = vld [vmem:[%s928] ss:$16 sm:%s929]
    %vm931 = vcmask 1043458
    %v932 = vsel %vm931, %v930, %v927
    %s933 = scalar_lea.vmem %s0, 291
    %s934 = smov 48
    %v935 = vld [vmem:[%s933] ss:$16 sm:%s934]
    %vm936 = vcmask 1045508
    %v937 = vsel %vm936, %v935, %v932
    %s938 = scalar_lea.vmem %s0, 267
    %s939 = smov 192
    %v940 = vld [vmem:[%s938] ss:$16 sm:%s939]
    %vm941 = vcmask 1047558
    %v942 = vsel %vm941, %v940, %v937
    %943 = vrot.lane.b32.xlu0 %v942, 48
    %v944 = vpop.permute.xlu0 %943
    %vm945 = vcmask 523648
    %s946 = scalar_lea.vmem [#allocation0], 160
    %947 = vst.msk [vmem:[%s946] sm:$0x3] %vm945, %v944
    %s948 = scalar_lea.vmem [#allocation0], 166
    %949 = vst.msk [vmem:[%s948] sm:$0xc] %vm945, %v944
    %s950 = scalar_lea.vmem [#allocation0], 172
    %951 = vst.msk [vmem:[%s950] sm:$0x30] %vm945, %v944
    %s952 = scalar_lea.vmem [#allocation0], 178
    %953 = vst.msk [vmem:[%s952] sm:$0xc0] %vm945, %v944
    %s954 = scalar_lea.vmem %s0, 2
    %s955 = smov 3
    %v956 = vld [vmem:[%s954] ss:$16 sm:%s955]
    %s957 = scalar_lea.vmem %s0, 4294967274
    %s958 = smov 12
    %v959 = vld [vmem:[%s957] ss:$16 sm:%s958]
    %vm960 = vcmask 1043458
    %v961 = vsel %vm960, %v959, %v956
    %s962 = scalar_lea.vmem %s0, 4294967266
    %s963 = smov 48
    %v964 = vld [vmem:[%s962] ss:$16 sm:%s963]
    %vm965 = vcmask 1045508
    %v966 = vsel %vm965, %v964, %v961
    %s967 = scalar_lea.vmem %s0, 4294967242
    %s968 = smov 192
    %v969 = vld [vmem:[%s967] ss:$16 sm:%s968]
    %vm970 = vcmask 1047558
    %v971 = vsel %vm970, %v969, %v966
    %972 = vrot.lane.b32.xlu0 %v971, 32
    %v973 = vpop.permute.xlu0 %972
    %vm974 = vcmask 392448
    %975 = vst.msk [vmem:[#allocation0] sm:$0x3] %vm974, %v973
    %s976 = scalar_lea.vmem [#allocation0], 6
    %977 = vst.msk [vmem:[%s976] sm:$0xc] %vm974, %v973
    %s978 = scalar_lea.vmem [#allocation0], 12
    %979 = vst.msk [vmem:[%s978] sm:$0x30] %vm974, %v973
    %s980 = scalar_lea.vmem [#allocation0], 18
    %981 = vst.msk [vmem:[%s980] sm:$0xc0] %vm974, %v973
    %s982 = scalar_lea.vmem %s0, 66
    %s983 = smov 3
    %v984 = vld [vmem:[%s982] ss:$16 sm:%s983]
    %s985 = scalar_lea.vmem %s0, 42
    %s986 = smov 12
    %v987 = vld [vmem:[%s985] ss:$16 sm:%s986]
    %vm988 = vcmask 1043458
    %v989 = vsel %vm988, %v987, %v984
    %s990 = scalar_lea.vmem %s0, 34
    %s991 = smov 48
    %v992 = vld [vmem:[%s990] ss:$16 sm:%s991]
    %vm993 = vcmask 1045508
    %v994 = vsel %vm993, %v992, %v989
    %s995 = scalar_lea.vmem %s0, 10
    %s996 = smov 192
    %v997 = vld [vmem:[%s995] ss:$16 sm:%s996]
    %vm998 = vcmask 1047558
    %v999 = vsel %vm998, %v997, %v994
    %1000 = vrot.lane.b32.xlu0 %v999, 32
    %v1001 = vpop.permute.xlu0 %1000
    %vm1002 = vcmask 392448
    %s1003 = scalar_lea.vmem [#allocation0], 32
    %1004 = vst.msk [vmem:[%s1003] sm:$0x3] %vm1002, %v1001
    %s1005 = scalar_lea.vmem [#allocation0], 38
    %1006 = vst.msk [vmem:[%s1005] sm:$0xc] %vm1002, %v1001
    %s1007 = scalar_lea.vmem [#allocation0], 44
    %1008 = vst.msk [vmem:[%s1007] sm:$0x30] %vm1002, %v1001
    %s1009 = scalar_lea.vmem [#allocation0], 50
    %1010 = vst.msk [vmem:[%s1009] sm:$0xc0] %vm1002, %v1001
    %s1011 = scalar_lea.vmem %s0, 130
    %s1012 = smov 3
    %v1013 = vld [vmem:[%s1011] ss:$16 sm:%s1012]
    %s1014 = scalar_lea.vmem %s0, 106
    %s1015 = smov 12
    %v1016 = vld [vmem:[%s1014] ss:$16 sm:%s1015]
    %vm1017 = vcmask 1043458
    %v1018 = vsel %vm1017, %v1016, %v1013
    %s1019 = scalar_lea.vmem %s0, 98
    %s1020 = smov 48
    %v1021 = vld [vmem:[%s1019] ss:$16 sm:%s1020]
    %vm1022 = vcmask 1045508
    %v1023 = vsel %vm1022, %v1021, %v1018
    %s1024 = scalar_lea.vmem %s0, 74
    %s1025 = smov 192
    %v1026 = vld [vmem:[%s1024] ss:$16 sm:%s1025]
    %vm1027 = vcmask 1047558
    %v1028 = vsel %vm1027, %v1026, %v1023
    %1029 = vrot.lane.b32.xlu0 %v1028, 32
    %v1030 = vpop.permute.xlu0 %1029
    %vm1031 = vcmask 392448
    %s1032 = scalar_lea.vmem [#allocation0], 64
    %1033 = vst.msk [vmem:[%s1032] sm:$0x3] %vm1031, %v1030
    %s1034 = scalar_lea.vmem [#allocation0], 70
    %1035 = vst.msk [vmem:[%s1034] sm:$0xc] %vm1031, %v1030
    %s1036 = scalar_lea.vmem [#allocation0], 76
    %1037 = vst.msk [vmem:[%s1036] sm:$0x30] %vm1031, %v1030
    %s1038 = scalar_lea.vmem [#allocation0], 82
    %1039 = vst.msk [vmem:[%s1038] sm:$0xc0] %vm1031, %v1030
    %s1040 = scalar_lea.vmem %s0, 194
    %s1041 = smov 3
    %v1042 = vld [vmem:[%s1040] ss:$16 sm:%s1041]
    %s1043 = scalar_lea.vmem %s0, 170
    %s1044 = smov 12
    %v1045 = vld [vmem:[%s1043] ss:$16 sm:%s1044]
    %vm1046 = vcmask 1043458
    %v1047 = vsel %vm1046, %v1045, %v1042
    %s1048 = scalar_lea.vmem %s0, 162
    %s1049 = smov 48
    %v1050 = vld [vmem:[%s1048] ss:$16 sm:%s1049]
    %vm1051 = vcmask 1045508
    %v1052 = vsel %vm1051, %v1050, %v1047
    %s1053 = scalar_lea.vmem %s0, 138
    %s1054 = smov 192
    %v1055 = vld [vmem:[%s1053] ss:$16 sm:%s1054]
    %vm1056 = vcmask 1047558
    %v1057 = vsel %vm1056, %v1055, %v1052
    %1058 = vrot.lane.b32.xlu0 %v1057, 32
    %v1059 = vpop.permute.xlu0 %1058
    %vm1060 = vcmask 392448
    %s1061 = scalar_lea.vmem [#allocation0], 96
    %1062 = vst.msk [vmem:[%s1061] sm:$0x3] %vm1060, %v1059
    %s1063 = scalar_lea.vmem [#allocation0], 102
    %1064 = vst.msk [vmem:[%s1063] sm:$0xc] %vm1060, %v1059
    %s1065 = scalar_lea.vmem [#allocation0], 108
    %1066 = vst.msk [vmem:[%s1065] sm:$0x30] %vm1060, %v1059
    %s1067 = scalar_lea.vmem [#allocation0], 114
    %1068 = vst.msk [vmem:[%s1067] sm:$0xc0] %vm1060, %v1059
    %s1069 = scalar_lea.vmem %s0, 258
    %s1070 = smov 3
    %v1071 = vld [vmem:[%s1069] ss:$16 sm:%s1070]
    %s1072 = scalar_lea.vmem %s0, 234
    %s1073 = smov 12
    %v1074 = vld [vmem:[%s1072] ss:$16 sm:%s1073]
    %vm1075 = vcmask 1043458
    %v1076 = vsel %vm1075, %v1074, %v1071
    %s1077 = scalar_lea.vmem %s0, 226
    %s1078 = smov 48
    %v1079 = vld [vmem:[%s1077] ss:$16 sm:%s1078]
    %vm1080 = vcmask 1045508
    %v1081 = vsel %vm1080, %v1079, %v1076
    %s1082 = scalar_lea.vmem %s0, 202
    %s1083 = smov 192
    %v1084 = vld [vmem:[%s1082] ss:$16 sm:%s1083]
    %vm1085 = vcmask 1047558
    %v1086 = vsel %vm1085, %v1084, %v1081
    %1087 = vrot.lane.b32.xlu0 %v1086, 32
    %v1088 = vpop.permute.xlu0 %1087
    %vm1089 = vcmask 392448
    %s1090 = scalar_lea.vmem [#allocation0], 128
    %1091 = vst.msk [vmem:[%s1090] sm:$0x3] %vm1089, %v1088
    %s1092 = scalar_lea.vmem [#allocation0], 134
    %1093 = vst.msk [vmem:[%s1092] sm:$0xc] %vm1089, %v1088
    %s1094 = scalar_lea.vmem [#allocation0], 140
    %1095 = vst.msk [vmem:[%s1094] sm:$0x30] %vm1089, %v1088
    %s1096 = scalar_lea.vmem [#allocation0], 146
    %1097 = vst.msk [vmem:[%s1096] sm:$0xc0] %vm1089, %v1088
    %s1098 = scalar_lea.vmem %s0, 322
    %s1099 = smov 3
    %v1100 = vld [vmem:[%s1098] ss:$16 sm:%s1099]
    %s1101 = scalar_lea.vmem %s0, 298
    %s1102 = smov 12
    %v1103 = vld [vmem:[%s1101] ss:$16 sm:%s1102]
    %vm1104 = vcmask 1043458
    %v1105 = vsel %vm1104, %v1103, %v1100
    %s1106 = scalar_lea.vmem %s0, 290
    %s1107 = smov 48
    %v1108 = vld [vmem:[%s1106] ss:$16 sm:%s1107]
    %vm1109 = vcmask 1045508
    %v1110 = vsel %vm1109, %v1108, %v1105
    %s1111 = scalar_lea.vmem %s0, 266
    %s1112 = smov 192
    %v1113 = vld [vmem:[%s1111] ss:$16 sm:%s1112]
    %vm1114 = vcmask 1047558
    %v1115 = vsel %vm1114, %v1113, %v1110
    %1116 = vrot.lane.b32.xlu0 %v1115, 32
    %v1117 = vpop.permute.xlu0 %1116
    %vm1118 = vcmask 392448
    %s1119 = scalar_lea.vmem [#allocation0], 160
    %1120 = vst.msk [vmem:[%s1119] sm:$0x3] %vm1118, %v1117
    %s1121 = scalar_lea.vmem [#allocation0], 166
    %1122 = vst.msk [vmem:[%s1121] sm:$0xc] %vm1118, %v1117
    %s1123 = scalar_lea.vmem [#allocation0], 172
    %1124 = vst.msk [vmem:[%s1123] sm:$0x30] %vm1118, %v1117
    %s1125 = scalar_lea.vmem [#allocation0], 178
    %1126 = vst.msk [vmem:[%s1125] sm:$0xc0] %vm1118, %v1117
    %s1127 = scalar_lea.vmem %s0, 1
    %s1128 = smov 3
    %v1129 = vld [vmem:[%s1127] ss:$16 sm:%s1128]
    %s1130 = scalar_lea.vmem %s0, 4294967273
    %s1131 = smov 12
    %v1132 = vld [vmem:[%s1130] ss:$16 sm:%s1131]
    %vm1133 = vcmask 1043458
    %v1134 = vsel %vm1133, %v1132, %v1129
    %s1135 = scalar_lea.vmem %s0, 4294967265
    %s1136 = smov 48
    %v1137 = vld [vmem:[%s1135] ss:$16 sm:%s1136]
    %vm1138 = vcmask 1045508
    %v1139 = vsel %vm1138, %v1137, %v1134
    %s1140 = scalar_lea.vmem %s0, 4294967241
    %s1141 = smov 192
    %v1142 = vld [vmem:[%s1140] ss:$16 sm:%s1141]
    %vm1143 = vcmask 1047558
    %v1144 = vsel %vm1143, %v1142, %v1139
    %1145 = vrot.lane.b32.xlu0 %v1144, 16
    %v1146 = vpop.permute.xlu0 %1145
    %vm1147 = vcmask 261248
    %1148 = vst.msk [vmem:[#allocation0] sm:$0x3] %vm1147, %v1146
    %s1149 = scalar_lea.vmem [#allocation0], 6
    %1150 = vst.msk [vmem:[%s1149] sm:$0xc] %vm1147, %v1146
    %s1151 = scalar_lea.vmem [#allocation0], 12
    %1152 = vst.msk [vmem:[%s1151] sm:$0x30] %vm1147, %v1146
    %s1153 = scalar_lea.vmem [#allocation0], 18
    %1154 = vst.msk [vmem:[%s1153] sm:$0xc0] %vm1147, %v1146
    %s1155 = scalar_lea.vmem %s0, 65
    %s1156 = smov 3
    %v1157 = vld [vmem:[%s1155] ss:$16 sm:%s1156]
    %s1158 = scalar_lea.vmem %s0, 41
    %s1159 = smov 12
    %v1160 = vld [vmem:[%s1158] ss:$16 sm:%s1159]
    %vm1161 = vcmask 1043458
    %v1162 = vsel %vm1161, %v1160, %v1157
    %s1163 = scalar_lea.vmem %s0, 33
    %s1164 = smov 48
    %v1165 = vld [vmem:[%s1163] ss:$16 sm:%s1164]
    %vm1166 = vcmask 1045508
    %v1167 = vsel %vm1166, %v1165, %v1162
    %s1168 = scalar_lea.vmem %s0, 9
    %s1169 = smov 192
    %v1170 = vld [vmem:[%s1168] ss:$16 sm:%s1169]
    %vm1171 = vcmask 1047558
    %v1172 = vsel %vm1171, %v1170, %v1167
    %1173 = vrot.lane.b32.xlu0 %v1172, 16
    %v1174 = vpop.permute.xlu0 %1173
    %vm1175 = vcmask 261248
    %s1176 = scalar_lea.vmem [#allocation0], 32
    %1177 = vst.msk [vmem:[%s1176] sm:$0x3] %vm1175, %v1174
    %s1178 = scalar_lea.vmem [#allocation0], 38
    %1179 = vst.msk [vmem:[%s1178] sm:$0xc] %vm1175, %v1174
    %s1180 = scalar_lea.vmem [#allocation0], 44
    %1181 = vst.msk [vmem:[%s1180] sm:$0x30] %vm1175, %v1174
    %s1182 = scalar_lea.vmem [#allocation0], 50
    %1183 = vst.msk [vmem:[%s1182] sm:$0xc0] %vm1175, %v1174
    %s1184 = scalar_lea.vmem %s0, 129
    %s1185 = smov 3
    %v1186 = vld [vmem:[%s1184] ss:$16 sm:%s1185]
    %s1187 = scalar_lea.vmem %s0, 105
    %s1188 = smov 12
    %v1189 = vld [vmem:[%s1187] ss:$16 sm:%s1188]
    %vm1190 = vcmask 1043458
    %v1191 = vsel %vm1190, %v1189, %v1186
    %s1192 = scalar_lea.vmem %s0, 97
    %s1193 = smov 48
    %v1194 = vld [vmem:[%s1192] ss:$16 sm:%s1193]
    %vm1195 = vcmask 1045508
    %v1196 = vsel %vm1195, %v1194, %v1191
    %s1197 = scalar_lea.vmem %s0, 73
    %s1198 = smov 192
    %v1199 = vld [vmem:[%s1197] ss:$16 sm:%s1198]
    %vm1200 = vcmask 1047558
    %v1201 = vsel %vm1200, %v1199, %v1196
    %1202 = vrot.lane.b32.xlu0 %v1201, 16
    %v1203 = vpop.permute.xlu0 %1202
    %vm1204 = vcmask 261248
    %s1205 = scalar_lea.vmem [#allocation0], 64
    %1206 = vst.msk [vmem:[%s1205] sm:$0x3] %vm1204, %v1203
    %s1207 = scalar_lea.vmem [#allocation0], 70
    %1208 = vst.msk [vmem:[%s1207] sm:$0xc] %vm1204, %v1203
    %s1209 = scalar_lea.vmem [#allocation0], 76
    %1210 = vst.msk [vmem:[%s1209] sm:$0x30] %vm1204, %v1203
    %s1211 = scalar_lea.vmem [#allocation0], 82
    %1212 = vst.msk [vmem:[%s1211] sm:$0xc0] %vm1204, %v1203
    %s1213 = scalar_lea.vmem %s0, 193
    %s1214 = smov 3
    %v1215 = vld [vmem:[%s1213] ss:$16 sm:%s1214]
    %s1216 = scalar_lea.vmem %s0, 169
    %s1217 = smov 12
    %v1218 = vld [vmem:[%s1216] ss:$16 sm:%s1217]
    %vm1219 = vcmask 1043458
    %v1220 = vsel %vm1219, %v1218, %v1215
    %s1221 = scalar_lea.vmem %s0, 161
    %s1222 = smov 48
    %v1223 = vld [vmem:[%s1221] ss:$16 sm:%s1222]
    %vm1224 = vcmask 1045508
    %v1225 = vsel %vm1224, %v1223, %v1220
    %s1226 = scalar_lea.vmem %s0, 137
    %s1227 = smov 192
    %v1228 = vld [vmem:[%s1226] ss:$16 sm:%s1227]
    %vm1229 = vcmask 1047558
    %v1230 = vsel %vm1229, %v1228, %v1225
    %1231 = vrot.lane.b32.xlu0 %v1230, 16
    %v1232 = vpop.permute.xlu0 %1231
    %vm1233 = vcmask 261248
    %s1234 = scalar_lea.vmem [#allocation0], 96
    %1235 = vst.msk [vmem:[%s1234] sm:$0x3] %vm1233, %v1232
    %s1236 = scalar_lea.vmem [#allocation0], 102
    %1237 = vst.msk [vmem:[%s1236] sm:$0xc] %vm1233, %v1232
    %s1238 = scalar_lea.vmem [#allocation0], 108
    %1239 = vst.msk [vmem:[%s1238] sm:$0x30] %vm1233, %v1232
    %s1240 = scalar_lea.vmem [#allocation0], 114
    %1241 = vst.msk [vmem:[%s1240] sm:$0xc0] %vm1233, %v1232
    %s1242 = scalar_lea.vmem %s0, 257
    %s1243 = smov 3
    %v1244 = vld [vmem:[%s1242] ss:$16 sm:%s1243]
    %s1245 = scalar_lea.vmem %s0, 233
    %s1246 = smov 12
    %v1247 = vld [vmem:[%s1245] ss:$16 sm:%s1246]
    %vm1248 = vcmask 1043458
    %v1249 = vsel %vm1248, %v1247, %v1244
    %s1250 = scalar_lea.vmem %s0, 225
    %s1251 = smov 48
    %v1252 = vld [vmem:[%s1250] ss:$16 sm:%s1251]
    %vm1253 = vcmask 1045508
    %v1254 = vsel %vm1253, %v1252, %v1249
    %s1255 = scalar_lea.vmem %s0, 201
    %s1256 = smov 192
    %v1257 = vld [vmem:[%s1255] ss:$16 sm:%s1256]
    %vm1258 = vcmask 1047558
    %v1259 = vsel %vm1258, %v1257, %v1254
    %1260 = vrot.lane.b32.xlu0 %v1259, 16
    %v1261 = vpop.permute.xlu0 %1260
    %vm1262 = vcmask 261248
    %s1263 = scalar_lea.vmem [#allocation0], 128
    %1264 = vst.msk [vmem:[%s1263] sm:$0x3] %vm1262, %v1261
    %s1265 = scalar_lea.vmem [#allocation0], 134
    %1266 = vst.msk [vmem:[%s1265] sm:$0xc] %vm1262, %v1261
    %s1267 = scalar_lea.vmem [#allocation0], 140
    %1268 = vst.msk [vmem:[%s1267] sm:$0x30] %vm1262, %v1261
    %s1269 = scalar_lea.vmem [#allocation0], 146
    %1270 = vst.msk [vmem:[%s1269] sm:$0xc0] %vm1262, %v1261
    %s1271 = scalar_lea.vmem %s0, 321
    %s1272 = smov 3
    %v1273 = vld [vmem:[%s1271] ss:$16 sm:%s1272]
    %s1274 = scalar_lea.vmem %s0, 297
    %s1275 = smov 12
    %v1276 = vld [vmem:[%s1274] ss:$16 sm:%s1275]
    %vm1277 = vcmask 1043458
    %v1278 = vsel %vm1277, %v1276, %v1273
    %s1279 = scalar_lea.vmem %s0, 289
    %s1280 = smov 48
    %v1281 = vld [vmem:[%s1279] ss:$16 sm:%s1280]
    %vm1282 = vcmask 1045508
    %v1283 = vsel %vm1282, %v1281, %v1278
    %s1284 = scalar_lea.vmem %s0, 265
    %s1285 = smov 192
    %v1286 = vld [vmem:[%s1284] ss:$16 sm:%s1285]
    %vm1287 = vcmask 1047558
    %v1288 = vsel %vm1287, %v1286, %v1283
    %1289 = vrot.lane.b32.xlu0 %v1288, 16
    %v1290 = vpop.permute.xlu0 %1289
    %vm1291 = vcmask 261248
    %s1292 = scalar_lea.vmem [#allocation0], 160
    %1293 = vst.msk [vmem:[%s1292] sm:$0x3] %vm1291, %v1290
    %s1294 = scalar_lea.vmem [#allocation0], 166
    %1295 = vst.msk [vmem:[%s1294] sm:$0xc] %vm1291, %v1290
    %s1296 = scalar_lea.vmem [#allocation0], 172
    %1297 = vst.msk [vmem:[%s1296] sm:$0x30] %vm1291, %v1290
    %s1298 = scalar_lea.vmem [#allocation0], 178
    %1299 = vst.msk [vmem:[%s1298] sm:$0xc0] %vm1291, %v1290
    %s1301 = ssub.s32 4, 1
    %v1302 = vld [vmem:[#allocation0] sm:%s1301]
    %s1304 = ssub.s32 4, 1
    %1305 = vst [vmem:[%s1] sm:%s1304] %v1302
    %s1306 = scalar_lea.vmem [#allocation0], 8
    %v1307 = vld [vmem:[%s1306] sm:%s1301]
    %s1309 = ssub.s32 4, 1
    %s1310 = scalar_lea.vmem %s1, 2
    %1311 = vst [vmem:[%s1310] sm:%s1309] %v1307
    %s1312 = scalar_lea.vmem [#allocation0], 16
    %v1313 = vld [vmem:[%s1312] sm:%s1301]
    %s1315 = ssub.s32 4, 1
    %s1316 = scalar_lea.vmem %s1, 4
    %1317 = vst [vmem:[%s1316] sm:%s1315] %v1313
    %s1318 = scalar_lea.vmem [#allocation0], 24
    %v1319 = vld [vmem:[%s1318] sm:%s1301]
    %s1321 = ssub.s32 4, 1
    %s1322 = scalar_lea.vmem %s1, 6
    %1323 = vst [vmem:[%s1322] sm:%s1321] %v1319
    %s1324 = scalar_lea.vmem [#allocation0], 32
    %v1325 = vld [vmem:[%s1324] sm:%s1301]
    %s1327 = ssub.s32 4, 1
    %s1328 = scalar_lea.vmem %s1, 8
    %1329 = vst [vmem:[%s1328] sm:%s1327] %v1325
    %s1330 = scalar_lea.vmem [#allocation0], 40
    %v1331 = vld [vmem:[%s1330] sm:%s1301]
    %s1333 = ssub.s32 4, 1
    %s1334 = scalar_lea.vmem %s1, 10
    %1335 = vst [vmem:[%s1334] sm:%s1333] %v1331
    %s1336 = scalar_lea.vmem [#allocation0], 48
    %v1337 = vld [vmem:[%s1336] sm:%s1301]
    %s1339 = ssub.s32 4, 1
    %s1340 = scalar_lea.vmem %s1, 12
    %1341 = vst [vmem:[%s1340] sm:%s1339] %v1337
    %s1342 = scalar_lea.vmem [#allocation0], 56
    %v1343 = vld [vmem:[%s1342] sm:%s1301]
    %s1345 = ssub.s32 4, 1
    %s1346 = scalar_lea.vmem %s1, 14
    %1347 = vst [vmem:[%s1346] sm:%s1345] %v1343
    %s1348 = scalar_lea.vmem [#allocation0], 64
    %v1349 = vld [vmem:[%s1348] sm:%s1301]
    %s1351 = ssub.s32 4, 1
    %s1352 = scalar_lea.vmem %s1, 16
    %1353 = vst [vmem:[%s1352] sm:%s1351] %v1349
    %s1354 = scalar_lea.vmem [#allocation0], 72
    %v1355 = vld [vmem:[%s1354] sm:%s1301]
    %s1357 = ssub.s32 4, 1
    %s1358 = scalar_lea.vmem %s1, 18
    %1359 = vst [vmem:[%s1358] sm:%s1357] %v1355
    %s1360 = scalar_lea.vmem [#allocation0], 80
    %v1361 = vld [vmem:[%s1360] sm:%s1301]
    %s1363 = ssub.s32 4, 1
    %s1364 = scalar_lea.vmem %s1, 20
    %1365 = vst [vmem:[%s1364] sm:%s1363] %v1361
    %s1366 = scalar_lea.vmem [#allocation0], 88
    %v1367 = vld [vmem:[%s1366] sm:%s1301]
    %s1369 = ssub.s32 4, 1
    %s1370 = scalar_lea.vmem %s1, 22
    %1371 = vst [vmem:[%s1370] sm:%s1369] %v1367
    %s1372 = scalar_lea.vmem [#allocation0], 96
    %v1373 = vld [vmem:[%s1372] sm:%s1301]
    %s1375 = ssub.s32 4, 1
    %s1376 = scalar_lea.vmem %s1, 24
    %1377 = vst [vmem:[%s1376] sm:%s1375] %v1373
    %s1378 = scalar_lea.vmem [#allocation0], 104
    %v1379 = vld [vmem:[%s1378] sm:%s1301]
    %s1381 = ssub.s32 4, 1
    %s1382 = scalar_lea.vmem %s1, 26
    %1383 = vst [vmem:[%s1382] sm:%s1381] %v1379
    %s1384 = scalar_lea.vmem [#allocation0], 112
    %v1385 = vld [vmem:[%s1384] sm:%s1301]
    %s1387 = ssub.s32 4, 1
    %s1388 = scalar_lea.vmem %s1, 28
    %1389 = vst [vmem:[%s1388] sm:%s1387] %v1385
    %s1390 = scalar_lea.vmem [#allocation0], 120
    %v1391 = vld [vmem:[%s1390] sm:%s1301]
    %s1393 = ssub.s32 4, 1
    %s1394 = scalar_lea.vmem %s1, 30
    %1395 = vst [vmem:[%s1394] sm:%s1393] %v1391
    %s1396 = scalar_lea.vmem [#allocation0], 128
    %v1397 = vld [vmem:[%s1396] sm:%s1301]
    %s1399 = ssub.s32 4, 1
    %s1400 = scalar_lea.vmem %s1, 32
    %1401 = vst [vmem:[%s1400] sm:%s1399] %v1397
    %s1402 = scalar_lea.vmem [#allocation0], 136
    %v1403 = vld [vmem:[%s1402] sm:%s1301]
    %s1405 = ssub.s32 4, 1
    %s1406 = scalar_lea.vmem %s1, 34
    %1407 = vst [vmem:[%s1406] sm:%s1405] %v1403
    %s1408 = scalar_lea.vmem [#allocation0], 144
    %v1409 = vld [vmem:[%s1408] sm:%s1301]
    %s1411 = ssub.s32 4, 1
    %s1412 = scalar_lea.vmem %s1, 36
    %1413 = vst [vmem:[%s1412] sm:%s1411] %v1409
    %s1414 = scalar_lea.vmem [#allocation0], 152
    %v1415 = vld [vmem:[%s1414] sm:%s1301]
    %s1417 = ssub.s32 4, 1
    %s1418 = scalar_lea.vmem %s1, 38
    %1419 = vst [vmem:[%s1418] sm:%s1417] %v1415
    %s1420 = scalar_lea.vmem [#allocation0], 160
    %v1421 = vld [vmem:[%s1420] sm:%s1301]
    %s1423 = ssub.s32 4, 1
    %s1424 = scalar_lea.vmem %s1, 40
    %1425 = vst [vmem:[%s1424] sm:%s1423] %v1421
    %s1426 = scalar_lea.vmem [#allocation0], 168
    %v1427 = vld [vmem:[%s1426] sm:%s1301]
    %s1429 = ssub.s32 4, 1
    %s1430 = scalar_lea.vmem %s1, 42
    %1431 = vst [vmem:[%s1430] sm:%s1429] %v1427
    %s1432 = scalar_lea.vmem [#allocation0], 176
    %v1433 = vld [vmem:[%s1432] sm:%s1301]
    %s1435 = ssub.s32 4, 1
    %s1436 = scalar_lea.vmem %s1, 44
    %1437 = vst [vmem:[%s1436] sm:%s1435] %v1433
    %s1438 = scalar_lea.vmem [#allocation0], 184
    %v1439 = vld [vmem:[%s1438] sm:%s1301]
    %s1441 = ssub.s32 4, 1
    %s1442 = scalar_lea.vmem %s1, 46
    %1443 = vst [vmem:[%s1442] sm:%s1441] %v1439

// kernel: decoder_forward.1
$region0: #{decoder_forward.1}
  #allocation0 [shape = 'u32[]', space=smem, size = 0x4, offset = 0x4, fixed_abs, tag = 'smem constant byte address 0x4 - core index']
  #allocation1 [shape = 'u32[72,128]{1,0:T(1,128)}', space=vmem, size = 0x9000, scoped, tag = 'internal scratch']
  %s0 = inlined_call_operand.vmem [shape: f32[2,16,256], index: 0, kind: input, shape index: {}]
  %s1 = inlined_call_operand.vmem [shape: f32[3,16,16], index: 1, kind: input, shape index: {}]
  %s2 = inlined_call_operand.hbm [shape: bf16[6,768,256], index: 2, kind: input, shape index: {}]
  %s3 = inlined_call_operand.vmem [shape: f32[6,256], index: 3, kind: input, shape index: {}]
  %s4 = inlined_call_operand.vmem [shape: f32[2,12,256], index: 4, kind: input, shape index: {}]
  %s5 = inlined_call_operand.vmem [shape: f32[16,256], index: 5, kind: input, shape index: {}]
  %s6 = inlined_call_operand.vmem [shape: f32[256,256], index: 6, kind: input, shape index: {}]
  %s7 = inlined_call_operand.vmem [shape: f32[2,16,256], index: 7, kind: output, shape index: {}]
  %s8 = sld [smem:[#allocation0]]
  $region65: #{decoder_forward.1} parent=0
    _
  %s10 = ssub.s32 1, %s8
  %s11 = scalar_select 0, %s10, %s8
  $region1: #{decoder_forward.1} parent=0
    #allocation2 [shape = 'u8[2359296]{0}', space=vmem, size = 0x240000, scoped, tag = 'input window, operand 2, single buffered']
    #allocation3 [shape = 's32[2]{0}', space=sflag, size = 0x8, scoped, tag = 'scoped memory for decoder_forward.1']
    %12 = vsyncpa [#allocation3], 0
    loop: start=0, step=1, limit=4
    $region2: #{decoder_forward.1} parent=1 // loop_pre_header
      _
    $region3: #{decoder_forward.1} parent=1 // loop_header
      %s14 = sphi 0, %s18
      %p15 = scmp.ge.s32.totalorder %s14, 4
      %s24 = sphi 0, %s26
      %s27 = sphi 0, %s24
      %s28 = sphi 0, %s27
      %s44 = sphi 0, %s28
      %s48 = sphi 0, %s48
      %s50 = sphi 0, %s48
      %s51 = sphi 0, %s50
      %s65 = sphi 0, %s51
      %s69 = sphi 0, %s69
      %s71 = sphi 0, %s69
      %s72 = sphi 0, %s71
      %s86 = sphi 0, %s72
      %s90 = sphi 0, %s90
      %s92 = sphi 0, %s90
      %s93 = sphi 0, %s92
      %s107 = sphi 0, %s93
      %s113 = sphi 0, %s115
      %s116 = sphi 0, %s113
      %s117 = sphi 0, %s116
      %s133 = sphi 0, %s117
      %s137 = sphi 0, %s137
      %s139 = sphi 0, %s137
      %s140 = sphi 0, %s139
      %s154 = sphi 0, %s140
      %s158 = sphi 0, %s158
      %s160 = sphi 0, %s158
      %s161 = sphi 0, %s160
      %s175 = sphi 0, %s161
      %s181 = sphi 0, %s183
      %s184 = sphi 0, %s181
      %s185 = sphi 0, %s184
      %s201 = sphi 0, %s185
    $region4: #{decoder_forward.1} parent=1 // loop_header_branch
      %17 = sbr.rel (%p15) target = $region8
    $region5: #{decoder_forward.1} parent=1 // loop_body
      %s19 = ssub.s32 %s14, 1
      %s20 = ssub.s32 %s14, 2
      %s21 = sadd.s32 %s14, 1
      %s22 = ssub.s32 %s14, %s21
      %p23 = scmp.eq.s32.totalorder %s22, 0
      %s25 = sadd.s32 %s24, 1
      %s26 = scalar_select %p23, %s24, %s25
      %p29 = pneg %p23
      %p30 = scmp.eq.s32.totalorder %s14, 1
      %p31 = por %p29, %p30
      %p32 = scmp.ne.s32.totalorder %s24, %s27
      %p33 = scmp.eq.s32.totalorder %s14, 0
      %p34 = por %p32, %p33
      %p35 = scmp.ne.s32.totalorder %s24, %s27
      %p36 = scmp.eq.s32.totalorder %s19, 1
      %p37 = por %p35, %p36
      %p38 = scmp.ne.s32.totalorder %s27, %s28
      %p39 = scmp.eq.s32.totalorder %s19, 0
      %p40 = por %p38, %p39
      %p41 = scmp.ne.s32.totalorder %s27, %s28
      %p42 = scmp.eq.s32.totalorder %s20, 1
      %p43 = por %p41, %p42
      %p45 = scmp.ne.s32.totalorder %s28, %s44
      %p46 = scmp.eq.s32.totalorder %s20, 0
      %p47 = por %p45, %p46
      %s49 = sadd.s32 %s48, 1
      %p52 = scmp.eq.s32.totalorder %s14, 1
      %p53 = scmp.ne.s32.totalorder %s48, %s50
      %p54 = scmp.eq.s32.totalorder %s14, 0
      %p55 = por %p53, %p54
      %p56 = scmp.ne.s32.totalorder %s48, %s50
      %p57 = scmp.eq.s32.totalorder %s19, 1
      %p58 = por %p56, %p57
      %p59 = scmp.ne.s32.totalorder %s50, %s51
      %p60 = scmp.eq.s32.totalorder %s19, 0
      %p61 = por %p59, %p60
      %p62 = scmp.ne.s32.totalorder %s50, %s51
      %p63 = scmp.eq.s32.totalorder %s20, 1
      %p64 = por %p62, %p63
      %p66 = scmp.ne.s32.totalorder %s51, %s65
      %p67 = scmp.eq.s32.totalorder %s20, 0
      %p68 = por %p66, %p67
      %s70 = sadd.s32 %s69, 1
      %p73 = scmp.eq.s32.totalorder %s14, 1
      %p74 = scmp.ne.s32.totalorder %s69, %s71
      %p75 = scmp.eq.s32.totalorder %s14, 0
      %p76 = por %p74, %p75
      %p77 = scmp.ne.s32.totalorder %s69, %s71
      %p78 = scmp.eq.s32.totalorder %s19, 1
      %p79 = por %p77, %p78
      %p80 = scmp.ne.s32.totalorder %s71, %s72
      %p81 = scmp.eq.s32.totalorder %s19, 0
      %p82 = por %p80, %p81
      %p83 = scmp.ne.s32.totalorder %s71, %s72
      %p84 = scmp.eq.s32.totalorder %s20, 1
      %p85 = por %p83, %p84
      %p87 = scmp.ne.s32.totalorder %s72, %s86
      %p88 = scmp.eq.s32.totalorder %s20, 0
      %p89 = por %p87, %p88
      %s91 = sadd.s32 %s90, 1
      %p94 = scmp.eq.s32.totalorder %s14, 1
      %p95 = scmp.ne.s32.totalorder %s90, %s92
      %p96 = scmp.eq.s32.totalorder %s14, 0
      %p97 = por %p95, %p96
      %p98 = scmp.ne.s32.totalorder %s90, %s92
      %p99 = scmp.eq.s32.totalorder %s19, 1
      %p100 = por %p98, %p99
      %p101 = scmp.ne.s32.totalorder %s92, %s93
      %p102 = scmp.eq.s32.totalorder %s19, 0
      %p103 = por %p101, %p102
      %p104 = scmp.ne.s32.totalorder %s92, %s93
      %p105 = scmp.eq.s32.totalorder %s20, 1
      %p106 = por %p104, %p105
      %p108 = scmp.ne.s32.totalorder %s93, %s107
      %p109 = scmp.eq.s32.totalorder %s20, 0
      %p110 = por %p108, %p109
      %s111 = ssub.s32 %s14, %s21
      %p112 = scmp.eq.s32.totalorder %s111, 0
      %s114 = sadd.s32 %s113, 1
      %s115 = scalar_select %p112, %s113, %s114
      %p118 = pneg %p112
      %p119 = scmp.eq.s32.totalorder %s14, 1
      %p120 = por %p118, %p119
      %p121 = scmp.ne.s32.totalorder %s113, %s116
      %p122 = scmp.eq.s32.totalorder %s14, 0
      %p123 = por %p121, %p122
      %p124 = scmp.ne.s32.totalorder %s113, %s116
      %p125 = scmp.eq.s32.totalorder %s19, 1
      %p126 = por %p124, %p125
      %p127 = scmp.ne.s32.totalorder %s116, %s117
      %p128 = scmp.eq.s32.totalorder %s19, 0
      %p129 = por %p127, %p128
      %p130 = scmp.ne.s32.totalorder %s116, %s117
      %p131 = scmp.eq.s32.totalorder %s20, 1
      %p132 = por %p130, %p131
      %p134 = scmp.ne.s32.totalorder %s117, %s133
      %p135 = scmp.eq.s32.totalorder %s20, 0
      %p136 = por %p134, %p135
      %s138 = sadd.s32 %s137, 1
      %p141 = scmp.eq.s32.totalorder %s14, 1
      %p142 = scmp.ne.s32.totalorder %s137, %s139
      %p143 = scmp.eq.s32.totalorder %s14, 0
      %p144 = por %p142, %p143
      %p145 = scmp.ne.s32.totalorder %s137, %s139
      %p146 = scmp.eq.s32.totalorder %s19, 1
      %p147 = por %p145, %p146
      %p148 = scmp.ne.s32.totalorder %s139, %s140
      %p149 = scmp.eq.s32.totalorder %s19, 0
      %p150 = por %p148, %p149
      %p151 = scmp.ne.s32.totalorder %s139, %s140
      %p152 = scmp.eq.s32.totalorder %s20, 1
      %p153 = por %p151, %p152
      %p155 = scmp.ne.s32.totalorder %s140, %s154
      %p156 = scmp.eq.s32.totalorder %s20, 0
      %p157 = por %p155, %p156
      %s159 = sadd.s32 %s158, 1
      %p162 = scmp.eq.s32.totalorder %s14, 1
      %p163 = scmp.ne.s32.totalorder %s158, %s160
      %p164 = scmp.eq.s32.totalorder %s14, 0
      %p165 = por %p163, %p164
      %p166 = scmp.ne.s32.totalorder %s158, %s160
      %p167 = scmp.eq.s32.totalorder %s19, 1
      %p168 = por %p166, %p167
      %p169 = scmp.ne.s32.totalorder %s160, %s161
      %p170 = scmp.eq.s32.totalorder %s19, 0
      %p171 = por %p169, %p170
      %p172 = scmp.ne.s32.totalorder %s160, %s161
      %p173 = scmp.eq.s32.totalorder %s20, 1
      %p174 = por %p172, %p173
      %p176 = scmp.ne.s32.totalorder %s161, %s175
      %p177 = scmp.eq.s32.totalorder %s20, 0
      %p178 = por %p176, %p177
      %s179 = ssub.s32 %s14, %s21
      %p180 = scmp.eq.s32.totalorder %s179, 0
      %s182 = sadd.s32 %s181, 1
      %s183 = scalar_select %p180, %s181, %s182
      %p186 = pneg %p180
      %p187 = scmp.eq.s32.totalorder %s14, 1
      %p188 = por %p186, %p187
      %p189 = scmp.ne.s32.totalorder %s181, %s184
      %p190 = scmp.eq.s32.totalorder %s14, 0
      %p191 = por %p189, %p190
      %p192 = scmp.ne.s32.totalorder %s181, %s184
      %p193 = scmp.eq.s32.totalorder %s19, 1
      %p194 = por %p192, %p193
      %p195 = scmp.ne.s32.totalorder %s184, %s185
      %p196 = scmp.eq.s32.totalorder %s19, 0
      %p197 = por %p195, %p196
      %p198 = scmp.ne.s32.totalorder %s184, %s185
      %p199 = scmp.eq.s32.totalorder %s20, 1
      %p200 = por %p198, %p199
      %p202 = scmp.ne.s32.totalorder %s185, %s201
      %p203 = scmp.eq.s32.totalorder %s20, 0
      %p204 = por %p202, %p203
      %p205 = scmp.le.s32.totalorder 1, %s14
      %p206 = scmp.lt.s32.totalorder %s14, 3
      %p207 = pnand %p205, %p206
      %p208 = pneg %p207
      // Predicated region
      $region9: #{decoder_forward.1} parent=5 // pred_check
        _
      $region10: #{decoder_forward.1} parent=5 // pred_check_branch
        %210 = sbr.rel (%p207) target = $region12
      $region11: #{decoder_forward.1} parent=5 // pred_region
        %s211 = ssub.s32 %s14, 1
        // Predicated region
        $region13: #{decoder_forward.1} parent=11 // pred_check
          %p212 = pneg %p61
        $region14: #{decoder_forward.1} parent=11 // pred_check_branch
          %214 = sbr.rel (%p212) target = $region16
        $region15: #{decoder_forward.1} parent=11 // pred_region
          _
        $region16: #{decoder_forward.1} parent=11 // pred_fallthru
          _
        // Predicated region
        $region17: #{decoder_forward.1} parent=11 // pred_check
          %p215 = pneg %p82
        $region18: #{decoder_forward.1} parent=11 // pred_check_branch
          %217 = sbr.rel (%p215) target = $region20
        $region19: #{decoder_forward.1} parent=11 // pred_region
          %219 = vsyncadd [#allocation3], 0
          %s220 = sshll.u32 %s2, 4
          %s221 = int_to_ptr.hbm [resolvable:$true] %s220
          %s222 = sshll.u32 [#allocation2], 4
          %s223 = int_to_ptr.vmem [resolvable:$true] %s222
          %228 = dma.hbm_to_vmem [thread:$0]  %s221, 73728, %s223, [#allocation3], 128, 128, 8
        $region20: #{decoder_forward.1} parent=11 // pred_fallthru
          _
        // Predicated region
        $region21: #{decoder_forward.1} parent=11 // pred_check
          %p229 = pneg %p103
        $region22: #{decoder_forward.1} parent=11 // pred_check_branch
          %231 = sbr.rel (%p229) target = $region24
        $region23: #{decoder_forward.1} parent=11 // pred_region
          _
        $region24: #{decoder_forward.1} parent=11 // pred_fallthru
          _
        // Predicated region
        $region25: #{decoder_forward.1} parent=11 // pred_check
          %p232 = pneg %p150
        $region26: #{decoder_forward.1} parent=11 // pred_check_branch
          %234 = sbr.rel (%p232) target = $region28
        $region27: #{decoder_forward.1} parent=11 // pred_region
          _
        $region28: #{decoder_forward.1} parent=11 // pred_fallthru
          _
        // Predicated region
        $region29: #{decoder_forward.1} parent=11 // pred_check
          %p235 = pneg %p171
        $region30: #{decoder_forward.1} parent=11 // pred_check_branch
          %237 = sbr.rel (%p235) target = $region32
        $region31: #{decoder_forward.1} parent=11 // pred_region
          _
        $region32: #{decoder_forward.1} parent=11 // pred_fallthru
          _
      $region12: #{decoder_forward.1} parent=5 // pred_fallthru
        _
      %p238 = scmp.lt.s32.totalorder %s14, 2
      // Predicated region
      $region33: #{decoder_forward.1} parent=5 // pred_check
        %p239 = pneg %p238
      $region34: #{decoder_forward.1} parent=5 // pred_check_branch
        %241 = sbr.rel (%p239) target = $region36
      $region35: #{decoder_forward.1} parent=5 // pred_region
        // Predicated region
        $region37: #{decoder_forward.1} parent=35 // pred_check
          %p242 = pneg %p34
        $region38: #{decoder_forward.1} parent=35 // pred_check_branch
          %244 = sbr.rel (%p242) target = $region40
        $region39: #{decoder_forward.1} parent=35 // pred_region
          %p245 = scmp.lt.s32.totalorder %s14, 1
          %s246 = scalar_select %p245, %s14, 1
          %s247 = smul.addr %s246, 4
          %s248 = smul.addr %s247, 8
          %s249 = scalar_lea.vmem %s0, %s248
        $region40: #{decoder_forward.1} parent=35 // pred_fallthru
          _
        // Predicated region
        $region41: #{decoder_forward.1} parent=35 // pred_check
          %p250 = pneg %p123
        $region42: #{decoder_forward.1} parent=35 // pred_check_branch
          %252 = sbr.rel (%p250) target = $region44
        $region43: #{decoder_forward.1} parent=35 // pred_region
          %p253 = scmp.lt.s32.totalorder %s14, 1
          %s254 = scalar_select %p253, %s14, 1
          %s255 = smul.addr %s254, 4
          %s256 = smul.addr %s255, 8
          %s257 = scalar_lea.vmem %s4, %s256
        $region44: #{decoder_forward.1} parent=35 // pred_fallthru
          _
      $region36: #{decoder_forward.1} parent=5 // pred_fallthru
        _
      %p258 = scmp.le.s32.totalorder 1, %s14
      %p259 = scmp.lt.s32.totalorder %s14, 3
      %p260 = pnand %p258, %p259
      %p261 = pneg %p260
      // Predicated region
      $region45: #{decoder_forward.1} parent=5 // pred_check
        _
      $region46: #{decoder_forward.1} parent=5 // pred_check_branch
        %263 = sbr.rel (%p260) target = $region48
      $region47: #{decoder_forward.1} parent=5 // pred_region
        %s264 = ssub.s32 %s14, 1
        // Predicated region
        $region49: #{decoder_forward.1} parent=47 // pred_check
          %p265 = pneg %p82
        $region50: #{decoder_forward.1} parent=47 // pred_check_branch
          %267 = sbr.rel (%p265) target = $region52
        $region51: #{decoder_forward.1} parent=47 // pred_region
          %269 = dma.done [#allocation3], 73728
        $region52: #{decoder_forward.1} parent=47 // pred_fallthru
          _
        %p270 = scmp.lt.s32.totalorder %s19, 1
        %s271 = scalar_select %p270, %s19, 1
        %s272 = smul.addr %s271, 4
        %s273 = smul.addr %s272, 8
        %s274 = scalar_lea.vmem %s0, %s273
        %p275 = pneg %p40
        %p276 = pneg %p37
        %p277 = pneg %p61
        %p278 = pneg %p58
        %p279 = pneg %p82
        %p280 = pneg %p79
        %p281 = pneg %p103
        %p282 = pneg %p100
        %p283 = scmp.lt.s32.totalorder %s19, 1
        %s284 = scalar_select %p283, %s19, 1
        %s285 = smul.addr %s284, 4
        %s286 = smul.addr %s285, 8
        %s287 = scalar_lea.vmem %s4, %s286
        %p288 = pneg %p129
        %p289 = pneg %p126
        %p290 = pneg %p150
        %p291 = pneg %p147
        %p292 = pneg %p171
        %p293 = pneg %p168
        %p294 = pneg %p197
        %p295 = pneg %p194
        %p296 = scmp.lt.s32.totalorder %s19, 1
        %s297 = scalar_select %p296, %s19, 1
        %s298 = smul.addr %s297, 4
        %s299 = smul.addr %s298, 8
        %s300 = scalar_lea.vmem %s7, %s299
        %p301 = scmp.lt.s32.totalorder %s19, 1
        %s302 = scalar_select %p301, %s19, 1
        %s303 = smul.addr %s302, 4
        %s304 = smul.addr %s303, 8
        %s305 = scalar_lea.vmem %s0, %s304
        %p306 = scmp.lt.s32.totalorder %s19, 1
        %s307 = scalar_select %p306, %s19, 1
        %s308 = smul.addr %s307, 4
        %s309 = smul.addr %s308, 8
        %s310 = scalar_lea.vmem %s4, %s309
        %p311 = scmp.lt.s32.totalorder %s19, 1
        %s312 = scalar_select %p311, %s19, 1
        %s313 = smul.addr %s312, 4
        %s314 = smul.addr %s313, 8
        %s315 = scalar_lea.vmem %s7, %s314
        %v317 = vld [vmem:[%s5] sm:$0xff]
        %v318 = vld [vmem:[%s5 + $0x8] sm:$0xff]
        %v319 = vld [vmem:[%s5 + $0x10] sm:$0xff]
        %v320 = vld [vmem:[%s5 + $0x18] sm:$0xff]
        %v321 = vld [vmem:[%s6] sm:$0xff]
        %v322 = vld [vmem:[%s6 + $0x8] sm:$0xff]
        %v323 = vld [vmem:[%s6 + $0x10] sm:$0xff]
        %v324 = vld [vmem:[%s6 + $0x18] sm:$0xff]
        %v325 = vld [vmem:[%s6 + $0x20] sm:$0xff]
        %v326 = vld [vmem:[%s6 + $0x28] sm:$0xff]
        %v327 = vld [vmem:[%s6 + $0x30] sm:$0xff]
        %v328 = vld [vmem:[%s6 + $0x38] sm:$0xff]
        %v329 = vld [vmem:[%s6 + $0x40] sm:$0xff]
        %v330 = vld [vmem:[%s6 + $0x48] sm:$0xff]
        %v331 = vld [vmem:[%s6 + $0x50] sm:$0xff]
        %v332 = vld [vmem:[%s6 + $0x58] sm:$0xff]
        %v333 = vld [vmem:[%s6 + $0x60] sm:$0xff]
        %v334 = vld [vmem:[%s6 + $0x68] sm:$0xff]
        %v335 = vld [vmem:[%s6 + $0x70] sm:$0xff]
        %v336 = vld [vmem:[%s6 + $0x78] sm:$0xff]
        %v337 = vld [vmem:[%s6 + $0x80] sm:$0xff]
        %v338 = vld [vmem:[%s6 + $0x88] sm:$0xff]
        %v339 = vld [vmem:[%s6 + $0x90] sm:$0xff]
        %v340 = vld [vmem:[%s6 + $0x98] sm:$0xff]
        %v341 = vld [vmem:[%s6 + $0xa0] sm:$0xff]
        %v342 = vld [vmem:[%s6 + $0xa8] sm:$0xff]
        %v343 = vld [vmem:[%s6 + $0xb0] sm:$0xff]
        %v344 = vld [vmem:[%s6 + $0xb8] sm:$0xff]
        %v345 = vld [vmem:[%s6 + $0xc0] sm:$0xff]
        %v346 = vld [vmem:[%s6 + $0xc8] sm:$0xff]
        %v347 = vld [vmem:[%s6 + $0xd0] sm:$0xff]
        %v348 = vld [vmem:[%s6 + $0xd8] sm:$0xff]
        %v349 = vld [vmem:[%s6 + $0xe0] sm:$0xff]
        %v350 = vld [vmem:[%s6 + $0xe8] sm:$0xff]
        %v351 = vld [vmem:[%s6 + $0xf0] sm:$0xff]
        %v352 = vld [vmem:[%s6 + $0xf8] sm:$0xff]
        %v353 = vld [vmem:[%s6 + $0x100] sm:$0xff]
        %v354 = vld [vmem:[%s6 + $0x108] sm:$0xff]
        %v355 = vld [vmem:[%s6 + $0x110] sm:$0xff]
        %v356 = vld [vmem:[%s6 + $0x118] sm:$0xff]
        %v357 = vld [vmem:[%s6 + $0x120] sm:$0xff]
        %v358 = vld [vmem:[%s6 + $0x128] sm:$0xff]
        %v359 = vld [vmem:[%s6 + $0x130] sm:$0xff]
        %v360 = vld [vmem:[%s6 + $0x138] sm:$0xff]
        %v361 = vld [vmem:[%s6 + $0x140] sm:$0xff]
        %v362 = vld [vmem:[%s6 + $0x148] sm:$0xff]
        %v363 = vld [vmem:[%s6 + $0x150] sm:$0xff]
        %v364 = vld [vmem:[%s6 + $0x158] sm:$0xff]
        %v365 = vld [vmem:[%s6 + $0x160] sm:$0xff]
        %v366 = vld [vmem:[%s6 + $0x168] sm:$0xff]
        %v367 = vld [vmem:[%s6 + $0x170] sm:$0xff]
        %v368 = vld [vmem:[%s6 + $0x178] sm:$0xff]
        %v369 = vld [vmem:[%s6 + $0x180] sm:$0xff]
        %v370 = vld [vmem:[%s6 + $0x188] sm:$0xff]
        %v371 = vld [vmem:[%s6 + $0x190] sm:$0xff]
        %v372 = vld [vmem:[%s6 + $0x198] sm:$0xff]
        %v373 = vld [vmem:[%s6 + $0x1a0] sm:$0xff]
        %v374 = vld [vmem:[%s6 + $0x1a8] sm:$0xff]
        %v375 = vld [vmem:[%s6 + $0x1b0] sm:$0xff]
        %v376 = vld [vmem:[%s6 + $0x1b8] sm:$0xff]
        %v377 = vld [vmem:[%s6 + $0x1c0] sm:$0xff]
        %v378 = vld [vmem:[%s6 + $0x1c8] sm:$0xff]
        %v379 = vld [vmem:[%s6 + $0x1d0] sm:$0xff]
        %v380 = vld [vmem:[%s6 + $0x1d8] sm:$0xff]
        %v381 = vld [vmem:[%s6 + $0x1e0] sm:$0xff]
        %v382 = vld [vmem:[%s6 + $0x1e8] sm:$0xff]
        %v383 = vld [vmem:[%s6 + $0x1f0] sm:$0xff]
        %v384 = vld [vmem:[%s6 + $0x1f8] sm:$0xff]
        %v385 = vld [vmem:[%s1] sm:$0xff]
        %v386 = vld [vmem:[%s1 + $0x8] sm:$0xff]
        %v387 = vpack.c.bf16 %v386, %v385
        %s388 = scalar_lea.vmem %s1, 16
        %v389 = vld [vmem:[%s388] sm:$0xff]
        %v390 = vld [vmem:[%s388 + $0x8] sm:$0xff]
        %v391 = vpack.c.bf16 %v390, %v389
        %s392 = scalar_lea.vmem %s1, 32
        %v393 = vld [vmem:[%s392] sm:$0xff]
        %v394 = vld [vmem:[%s392 + $0x8] sm:$0xff]
        %v395 = vpack.c.bf16 %v394, %v393
        %v396 = vld [vmem:[%s3] sm:$0x3f]
        %v397 = vld [vmem:[%s3 + $0x8] sm:$0x3f]
        %v398 = vld [vmem:[%s310] sm:$0xff]
        %v399 = vld [vmem:[%s310 + $0x8] sm:$0xff]
        %v400 = vld [vmem:[%s310 + $0x10] sm:$0xf]
        %v401 = vld [vmem:[%s310 + $0x18] sm:$0xf]
        %v402 = vld [vmem:[%s305] sm:$0xff]
        %v403 = vld [vmem:[%s305 + $0x8] sm:$0xff]
        %v404 = vld [vmem:[%s305 + $0x10] sm:$0xff]
        %v405 = vld [vmem:[%s305 + $0x18] sm:$0xff]
        %v406 = vpack.c.bf16 %v404, %v402
        %v407 = vpack.c.bf16 %v405, %v403
        %vm408 = vcmask 130048
        %v410 = vsel %vm408, %v387, 0
        %412 = vmatpush.bf16.msra.mxu0 0
        %413 = vmatpush.bf16.msra.mxu0 0
        %414 = vmatpush.bf16.msra.mxu0 0
        %415 = vmatpush.bf16.msra.mxu0 0
        %416 = vmatpush.bf16.msra.mxu0 0
        %417 = vmatpush.bf16.msra.mxu0 0
        %418 = vmatpush.bf16.msra.mxu0 0
        %419 = vmatpush.bf16.msra.mxu0 %v406
        %420 = vmatmul.bf16.gmra.mxu0 %v410
        %v421 = vpop.f32.mrf.mxu0
        %v422 = vadd.f32 0.0, %v421
        %v423 = vpop.f32.mrf.mxu0
        %v424 = vadd.f32 0.0, %v423
        %425 = vdwg.mxu0
        %426 = vmatpush.bf16.msra.mxu0 0
        %427 = vmatpush.bf16.msra.mxu0 0
        %428 = vmatpush.bf16.msra.mxu0 0
        %429 = vmatpush.bf16.msra.mxu0 0
        %430 = vmatpush.bf16.msra.mxu0 0
        %431 = vmatpush.bf16.msra.mxu0 0
        %432 = vmatpush.bf16.msra.mxu0 0
        %433 = vmatpush.bf16.msra.mxu0 %v407
        %434 = vmatmul.bf16.gmra.mxu0 %v410
        %v435 = vpop.f32.mrf.mxu0
        %v436 = vadd.f32 0.0, %v435
        %v437 = vpop.f32.mrf.mxu0
        %v438 = vadd.f32 0.0, %v437
        %439 = vdwg.mxu0
        %v441 = vsel %vm408, %v391, 0
        %443 = vmatpush.bf16.msra.mxu0 0
        %444 = vmatpush.bf16.msra.mxu0 0
        %445 = vmatpush.bf16.msra.mxu0 0
        %446 = vmatpush.bf16.msra.mxu0 0
        %447 = vmatpush.bf16.msra.mxu0 0
        %448 = vmatpush.bf16.msra.mxu0 0
        %449 = vmatpush.bf16.msra.mxu0 0
        %450 = vmatpush.bf16.msra.mxu0 %v406
        %451 = vmatmul.bf16.gmra.mxu0 %v441
        %v452 = vpop.f32.mrf.mxu0
        %v453 = vadd.f32 0.0, %v452
        %v454 = vpop.f32.mrf.mxu0
        %v455 = vadd.f32 0.0, %v454
        %456 = vdwg.mxu0
        %457 = vmatpush.bf16.msra.mxu0 0
        %458 = vmatpush.bf16.msra.mxu0 0
        %459 = vmatpush.bf16.msra.mxu0 0
        %460 = vmatpush.bf16.msra.mxu0 0
        %461 = vmatpush.bf16.msra.mxu0 0
        %462 = vmatpush.bf16.msra.mxu0 0
        %463 = vmatpush.bf16.msra.mxu0 0
        %464 = vmatpush.bf16.msra.mxu0 %v407
        %465 = vmatmul.bf16.gmra.mxu0 %v441
        %v466 = vpop.f32.mrf.mxu0
        %v467 = vadd.f32 0.0, %v466
        %v468 = vpop.f32.mrf.mxu0
        %v469 = vadd.f32 0.0, %v468
        %470 = vdwg.mxu0
        %v472 = vsel %vm408, %v395, 0
        %474 = vmatpush.bf16.msra.mxu0 0
        %475 = vmatpush.bf16.msra.mxu0 0
        %476 = vmatpush.bf16.msra.mxu0 0
        %477 = vmatpush.bf16.msra.mxu0 0
        %478 = vmatpush.bf16.msra.mxu0 0
        %479 = vmatpush.bf16.msra.mxu0 0
        %480 = vmatpush.bf16.msra.mxu0 0
        %481 = vmatpush.bf16.msra.mxu0 %v406
        %482 = vmatmul.bf16.gmra.mxu0 %v472
        %v483 = vpop.f32.mrf.mxu0
        %v484 = vadd.f32 0.0, %v483
        %v485 = vpop.f32.mrf.mxu0
        %v486 = vadd.f32 0.0, %v485
        %487 = vdwg.mxu0
        %488 = vmatpush.bf16.msra.mxu0 0
        %489 = vmatpush.bf16.msra.mxu0 0
        %490 = vmatpush.bf16.msra.mxu0 0
        %491 = vmatpush.bf16.msra.mxu0 0
        %492 = vmatpush.bf16.msra.mxu0 0
        %493 = vmatpush.bf16.msra.mxu0 0
        %494 = vmatpush.bf16.msra.mxu0 0
        %495 = vmatpush.bf16.msra.mxu0 %v407
        %496 = vmatmul.bf16.gmra.mxu0 %v472
        %v497 = vpop.f32.mrf.mxu0
        %v498 = vadd.f32 0.0, %v497
        %v499 = vpop.f32.mrf.mxu0
        %v500 = vadd.f32 0.0, %v499
        %501 = vdwg.mxu0
        %v502 = vpack.c.bf16 %v424, %v422
        %v503 = vpack.c.bf16 %v438, %v436
        %v504 = vpack.c.bf16 %v455, %v453
        %v505 = vpack.c.bf16 %v469, %v467
        %v506 = vpack.c.bf16 %v486, %v484
        %v507 = vpack.c.bf16 %v500, %v498
        %v508 = vld [vmem:[#allocation2] sm:$0xff]
        %v509 = vld [vmem:[#allocation2 + $0x8] sm:$0xff]
        %v510 = vld [vmem:[#allocation2 + $0x10] sm:$0xff]
        %v511 = vld [vmem:[#allocation2 + $0x18] sm:$0xff]
        %v512 = vld [vmem:[#allocation2 + $0x20] sm:$0xff]
        %v513 = vld [vmem:[#allocation2 + $0x28] sm:$0xff]
        %v514 = vld [vmem:[#allocation2 + $0x30] sm:$0xff]
        %v515 = vld [vmem:[#allocation2 + $0x38] sm:$0xff]
        %v516 = vld [vmem:[#allocation2 + $0x40] sm:$0xff]
        %v517 = vld [vmem:[#allocation2 + $0x48] sm:$0xff]
        %v518 = vld [vmem:[#allocation2 + $0x50] sm:$0xff]
        %v519 = vld [vmem:[#allocation2 + $0x58] sm:$0xff]
        %v520 = vld [vmem:[#allocation2 + $0x60] sm:$0xff]
        %v521 = vld [vmem:[#allocation2 + $0x68] sm:$0xff]
        %v522 = vld [vmem:[#allocation2 + $0x70] sm:$0xff]
        %v523 = vld [vmem:[#allocation2 + $0x78] sm:$0xff]
        %v524 = vld [vmem:[#allocation2 + $0x80] sm:$0xff]
        %v525 = vld [vmem:[#allocation2 + $0x88] sm:$0xff]
        %v526 = vld [vmem:[#allocation2 + $0x90] sm:$0xff]
        %v527 = vld [vmem:[#allocation2 + $0x98] sm:$0xff]
        %v528 = vld [vmem:[#allocation2 + $0xa0] sm:$0xff]
        %v529 = vld [vmem:[#allocation2 + $0xa8] sm:$0xff]
        %v530 = vld [vmem:[#allocation2 + $0xb0] sm:$0xff]
        %v531 = vld [vmem:[#allocation2 + $0xb8] sm:$0xff]
        %v532 = vld [vmem:[#allocation2 + $0xc0] sm:$0xff]
        %v533 = vld [vmem:[#allocation2 + $0xc8] sm:$0xff]
        %v534 = vld [vmem:[#allocation2 + $0xd0] sm:$0xff]
        %v535 = vld [vmem:[#allocation2 + $0xd8] sm:$0xff]
        %v536 = vld [vmem:[#allocation2 + $0xe0] sm:$0xff]
        %v537 = vld [vmem:[#allocation2 + $0xe8] sm:$0xff]
        %v538 = vld [vmem:[#allocation2 + $0xf0] sm:$0xff]
        %v539 = vld [vmem:[#allocation2 + $0xf8] sm:$0xff]
        %v540 = vld [vmem:[#allocation2 + $0x100] sm:$0xff]
        %v541 = vld [vmem:[#allocation2 + $0x108] sm:$0xff]
        %v542 = vld [vmem:[#allocation2 + $0x110] sm:$0xff]
        %v543 = vld [vmem:[#allocation2 + $0x118] sm:$0xff]
        %v544 = vld [vmem:[#allocation2 + $0x120] sm:$0xff]
        %v545 = vld [vmem:[#allocation2 + $0x128] sm:$0xff]
        %v546 = vld [vmem:[#allocation2 + $0x130] sm:$0xff]
        %v547 = vld [vmem:[#allocation2 + $0x138] sm:$0xff]
        %v548 = vld [vmem:[#allocation2 + $0x140] sm:$0xff]
        %v549 = vld [vmem:[#allocation2 + $0x148] sm:$0xff]
        %v550 = vld [vmem:[#allocation2 + $0x150] sm:$0xff]
        %v551 = vld [vmem:[#allocation2 + $0x158] sm:$0xff]
        %v552 = vld [vmem:[#allocation2 + $0x160] sm:$0xff]
        %v553 = vld [vmem:[#allocation2 + $0x168] sm:$0xff]
        %v554 = vld [vmem:[#allocation2 + $0x170] sm:$0xff]
        %v555 = vld [vmem:[#allocation2 + $0x178] sm:$0xff]
        %v556 = vld [vmem:[#allocation2 + $0x180] sm:$0xff]
        %v557 = vld [vmem:[#allocation2 + $0x188] sm:$0xff]
        %v558 = vld [vmem:[#allocation2 + $0x190] sm:$0xff]
        %v559 = vld [vmem:[#allocation2 + $0x198] sm:$0xff]
        %v560 = vld [vmem:[#allocation2 + $0x1a0] sm:$0xff]
        %v561 = vld [vmem:[#allocation2 + $0x1a8] sm:$0xff]
        %v562 = vld [vmem:[#allocation2 + $0x1b0] sm:$0xff]
        %v563 = vld [vmem:[#allocation2 + $0x1b8] sm:$0xff]
        %v564 = vld [vmem:[#allocation2 + $0x1c0] sm:$0xff]
        %v565 = vld [vmem:[#allocation2 + $0x1c8] sm:$0xff]
        %v566 = vld [vmem:[#allocation2 + $0x1d0] sm:$0xff]
        %v567 = vld [vmem:[#allocation2 + $0x1d8] sm:$0xff]
        %v568 = vld [vmem:[#allocation2 + $0x1e0] sm:$0xff]
        %v569 = vld [vmem:[#allocation2 + $0x1e8] sm:$0xff]
        %v570 = vld [vmem:[#allocation2 + $0x1f0] sm:$0xff]
        %v571 = vld [vmem:[#allocation2 + $0x1f8] sm:$0xff]
        %v572 = vld [vmem:[#allocation2 + $0x200] sm:$0xff]
        %v573 = vld [vmem:[#allocation2 + $0x208] sm:$0xff]
        %v574 = vld [vmem:[#allocation2 + $0x210] sm:$0xff]
        %v575 = vld [vmem:[#allocation2 + $0x218] sm:$0xff]
        %v576 = vld [vmem:[#allocation2 + $0x220] sm:$0xff]
        %v577 = vld [vmem:[#allocation2 + $0x228] sm:$0xff]
        %v578 = vld [vmem:[#allocation2 + $0x230] sm:$0xff]
        %v579 = vld [vmem:[#allocation2 + $0x238] sm:$0xff]
        %v580 = vld [vmem:[#allocation2 + $0x240] sm:$0xff]
        %v581 = vld [vmem:[#allocation2 + $0x248] sm:$0xff]
        %v582 = vld [vmem:[#allocation2 + $0x250] sm:$0xff]
        %v583 = vld [vmem:[#allocation2 + $0x258] sm:$0xff]
        %v584 = vld [vmem:[#allocation2 + $0x260] sm:$0xff]
        %v585 = vld [vmem:[#allocation2 + $0x268] sm:$0xff]
        %v586 = vld [vmem:[#allocation2 + $0x270] sm:$0xff]
        %v587 = vld [vmem:[#allocation2 + $0x278] sm:$0xff]
        %v588 = vld [vmem:[#allocation2 + $0x280] sm:$0xff]
        %v589 = vld [vmem:[#allocation2 + $0x288] sm:$0xff]
        %v590 = vld [vmem:[#allocation2 + $0x290] sm:$0xff]
        %v591 = vld [vmem:[#allocation2 + $0x298] sm:$0xff]
        %v592 = vld [vmem:[#allocation2 + $0x2a0] sm:$0xff]
        %v593 = vld [vmem:[#allocation2 + $0x2a8] sm:$0xff]
        %v594 = vld [vmem:[#allocation2 + $0x2b0] sm:$0xff]
        %v595 = vld [vmem:[#allocation2 + $0x2b8] sm:$0xff]
        %v596 = vld [vmem:[#allocation2 + $0x2c0] sm:$0xff]
        %v597 = vld [vmem:[#allocation2 + $0x2c8] sm:$0xff]
        %v598 = vld [vmem:[#allocation2 + $0x2d0] sm:$0xff]
        %v599 = vld [vmem:[#allocation2 + $0x2d8] sm:$0xff]
        %v600 = vld [vmem:[#allocation2 + $0x2e0] sm:$0xff]
        %v601 = vld [vmem:[#allocation2 + $0x2e8] sm:$0xff]
        %v602 = vld [vmem:[#allocation2 + $0x2f0] sm:$0xff]
        %v603 = vld [vmem:[#allocation2 + $0x2f8] sm:$0xff]
        %v604 = vperm.slane %v396, 0
        %v605 = vperm.slane %v397, 0
        %v702 = vunpack.c.l.b16 %v508
        %v703 = vunpack.c.h.b16 %v508
        %v704 = vunpack.c.l.b16 %v509
        %v705 = vunpack.c.h.b16 %v509
        %v706 = vunpack.c.l.b16 %v510
        %v707 = vunpack.c.h.b16 %v510
        %v708 = vunpack.c.l.b16 %v511
        %v709 = vunpack.c.h.b16 %v511
        %v710 = vunpack.c.l.b16 %v512
        %v711 = vunpack.c.h.b16 %v512
        %v712 = vunpack.c.l.b16 %v513
        %v713 = vunpack.c.h.b16 %v513
        %v714 = vunpack.c.l.b16 %v514
        %v715 = vunpack.c.h.b16 %v514
        %v716 = vunpack.c.l.b16 %v515
        %v717 = vunpack.c.h.b16 %v515
        %v718 = vunpack.c.l.b16 %v516
        %v719 = vunpack.c.h.b16 %v516
        %v720 = vunpack.c.l.b16 %v517
        %v721 = vunpack.c.h.b16 %v517
        %v722 = vunpack.c.l.b16 %v518
        %v723 = vunpack.c.h.b16 %v518
        %v724 = vunpack.c.l.b16 %v519
        %v725 = vunpack.c.h.b16 %v519
        %v726 = vunpack.c.l.b16 %v520
        %v727 = vunpack.c.h.b16 %v520
        %v728 = vunpack.c.l.b16 %v521
        %v729 = vunpack.c.h.b16 %v521
        %v730 = vunpack.c.l.b16 %v522
        %v731 = vunpack.c.h.b16 %v522
        %v732 = vunpack.c.l.b16 %v523
        %v733 = vunpack.c.h.b16 %v523
        %v734 = vunpack.c.l.b16 %v524
        %v735 = vunpack.c.h.b16 %v524
        %v736 = vunpack.c.l.b16 %v525
        %v737 = vunpack.c.h.b16 %v525
        %v738 = vunpack.c.l.b16 %v526
        %v739 = vunpack.c.h.b16 %v526
        %v740 = vunpack.c.l.b16 %v527
        %v741 = vunpack.c.h.b16 %v527
        %v742 = vunpack.c.l.b16 %v528
        %v743 = vunpack.c.h.b16 %v528
        %v744 = vunpack.c.l.b16 %v529
        %v745 = vunpack.c.h.b16 %v529
        %v746 = vunpack.c.l.b16 %v530
        %v747 = vunpack.c.h.b16 %v530
        %v748 = vunpack.c.l.b16 %v531
        %v749 = vunpack.c.h.b16 %v531
        %v750 = vunpack.c.l.b16 %v532
        %v751 = vunpack.c.h.b16 %v532
        %v752 = vunpack.c.l.b16 %v533
        %v753 = vunpack.c.h.b16 %v533
        %v754 = vunpack.c.l.b16 %v534
        %v755 = vunpack.c.h.b16 %v534
        %v756 = vunpack.c.l.b16 %v535
        %v757 = vunpack.c.h.b16 %v535
        %v758 = vunpack.c.l.b16 %v536
        %v759 = vunpack.c.h.b16 %v536
        %v760 = vunpack.c.l.b16 %v537
        %v761 = vunpack.c.h.b16 %v537
        %v762 = vunpack.c.l.b16 %v538
        %v763 = vunpack.c.h.b16 %v538
        %v764 = vunpack.c.l.b16 %v539
        %v765 = vunpack.c.h.b16 %v539
        %v766 = vunpack.c.l.b16 %v540
        %v767 = vunpack.c.h.b16 %v540
        %v768 = vunpack.c.l.b16 %v541
        %v769 = vunpack.c.h.b16 %v541
        %v770 = vunpack.c.l.b16 %v542
        %v771 = vunpack.c.h.b16 %v542
        %v772 = vunpack.c.l.b16 %v543
        %v773 = vunpack.c.h.b16 %v543
        %v774 = vunpack.c.l.b16 %v544
        %v775 = vunpack.c.h.b16 %v544
        %v776 = vunpack.c.l.b16 %v545
        %v777 = vunpack.c.h.b16 %v545
        %v778 = vunpack.c.l.b16 %v546
        %v779 = vunpack.c.h.b16 %v546
        %v780 = vunpack.c.l.b16 %v547
        %v781 = vunpack.c.h.b16 %v547
        %v782 = vunpack.c.l.b16 %v548
        %v783 = vunpack.c.h.b16 %v548
        %v784 = vunpack.c.l.b16 %v549
        %v785 = vunpack.c.h.b16 %v549
        %v786 = vunpack.c.l.b16 %v550
        %v787 = vunpack.c.h.b16 %v550
        %v788 = vunpack.c.l.b16 %v551
        %v789 = vunpack.c.h.b16 %v551
        %v790 = vunpack.c.l.b16 %v552
        %v791 = vunpack.c.h.b16 %v552
        %v792 = vunpack.c.l.b16 %v553
        %v793 = vunpack.c.h.b16 %v553
        %v794 = vunpack.c.l.b16 %v554
        %v795 = vunpack.c.h.b16 %v554
        %v796 = vunpack.c.l.b16 %v555
        %v797 = vunpack.c.h.b16 %v555
        %v798 = vunpack.c.l.b16 %v556
        %v799 = vunpack.c.h.b16 %v556
        %v800 = vunpack.c.l.b16 %v557
        %v801 = vunpack.c.h.b16 %v557
        %v802 = vunpack.c.l.b16 %v558
        %v803 = vunpack.c.h.b16 %v558
        %v804 = vunpack.c.l.b16 %v559
        %v805 = vunpack.c.h.b16 %v559
        %v806 = vunpack.c.l.b16 %v560
        %v807 = vunpack.c.h.b16 %v560
        %v808 = vunpack.c.l.b16 %v561
        %v809 = vunpack.c.h.b16 %v561
        %v810 = vunpack.c.l.b16 %v562
        %v811 = vunpack.c.h.b16 %v562
        %v812 = vunpack.c.l.b16 %v563
        %v813 = vunpack.c.h.b16 %v563
        %v814 = vunpack.c.l.b16 %v564
        %v815 = vunpack.c.h.b16 %v564
        %v816 = vunpack.c.l.b16 %v565
        %v817 = vunpack.c.h.b16 %v565
        %v818 = vunpack.c.l.b16 %v566
        %v819 = vunpack.c.h.b16 %v566
        %v820 = vunpack.c.l.b16 %v567
        %v821 = vunpack.c.h.b16 %v567
        %v822 = vunpack.c.l.b16 %v568
        %v823 = vunpack.c.h.b16 %v568
        %v824 = vunpack.c.l.b16 %v569
        %v825 = vunpack.c.h.b16 %v569
        %v826 = vunpack.c.l.b16 %v570
        %v827 = vunpack.c.h.b16 %v570
        %v828 = vunpack.c.l.b16 %v571
        %v829 = vunpack.c.h.b16 %v571
        %v830 = vunpack.c.l.b16 %v572
        %v831 = vunpack.c.h.b16 %v572
        %v832 = vunpack.c.l.b16 %v573
        %v833 = vunpack.c.h.b16 %v573
        %v834 = vunpack.c.l.b16 %v574
        %v835 = vunpack.c.h.b16 %v574
        %v836 = vunpack.c.l.b16 %v575
        %v837 = vunpack.c.h.b16 %v575
        %v838 = vunpack.c.l.b16 %v576
        %v839 = vunpack.c.h.b16 %v576
        %v840 = vunpack.c.l.b16 %v577
        %v841 = vunpack.c.h.b16 %v577
        %v842 = vunpack.c.l.b16 %v578
        %v843 = vunpack.c.h.b16 %v578
        %v844 = vunpack.c.l.b16 %v579
        %v845 = vunpack.c.h.b16 %v579
        %v846 = vunpack.c.l.b16 %v580
        %v847 = vunpack.c.h.b16 %v580
        %v848 = vunpack.c.l.b16 %v581
        %v849 = vunpack.c.h.b16 %v581
        %v850 = vunpack.c.l.b16 %v582
        %v851 = vunpack.c.h.b16 %v582
        %v852 = vunpack.c.l.b16 %v583
        %v853 = vunpack.c.h.b16 %v583
        %v854 = vunpack.c.l.b16 %v584
        %v855 = vunpack.c.h.b16 %v584
        %v856 = vunpack.c.l.b16 %v585
        %v857 = vunpack.c.h.b16 %v585
        %v858 = vunpack.c.l.b16 %v586
        %v859 = vunpack.c.h.b16 %v586
        %v860 = vunpack.c.l.b16 %v587
        %v861 = vunpack.c.h.b16 %v587
        %v862 = vunpack.c.l.b16 %v588
        %v863 = vunpack.c.h.b16 %v588
        %v864 = vunpack.c.l.b16 %v589
        %v865 = vunpack.c.h.b16 %v589
        %v866 = vunpack.c.l.b16 %v590
        %v867 = vunpack.c.h.b16 %v590
        %v868 = vunpack.c.l.b16 %v591
        %v869 = vunpack.c.h.b16 %v591
        %v870 = vunpack.c.l.b16 %v592
        %v871 = vunpack.c.h.b16 %v592
        %v872 = vunpack.c.l.b16 %v593
        %v873 = vunpack.c.h.b16 %v593
        %v874 = vunpack.c.l.b16 %v594
        %v875 = vunpack.c.h.b16 %v594
        %v876 = vunpack.c.l.b16 %v595
        %v877 = vunpack.c.h.b16 %v595
        %v878 = vunpack.c.l.b16 %v596
        %v879 = vunpack.c.h.b16 %v596
        %v880 = vunpack.c.l.b16 %v597
        %v881 = vunpack.c.h.b16 %v597
        %v882 = vunpack.c.l.b16 %v598
        %v883 = vunpack.c.h.b16 %v598
        %v884 = vunpack.c.l.b16 %v599
        %v885 = vunpack.c.h.b16 %v599
        %v886 = vunpack.c.l.b16 %v600
        %v887 = vunpack.c.h.b16 %v600
        %v888 = vunpack.c.l.b16 %v601
        %v889 = vunpack.c.h.b16 %v601
        %v890 = vunpack.c.l.b16 %v602
        %v891 = vunpack.c.h.b16 %v602
        %v892 = vunpack.c.l.b16 %v603
        %v893 = vunpack.c.h.b16 %v603
        %v894 = vpack.c.b16 %v704, %v702
        %v895 = vpack.c.b16 %v705, %v703
        %v896 = vpack.c.b16 %v708, %v706
        %v897 = vpack.c.b16 %v709, %v707
        %v898 = vpack.c.b16 %v712, %v710
        %v899 = vpack.c.b16 %v713, %v711
        %v900 = vpack.c.b16 %v716, %v714
        %v901 = vpack.c.b16 %v717, %v715
        %v902 = vpack.c.b16 %v720, %v718
        %v903 = vpack.c.b16 %v721, %v719
        %v904 = vpack.c.b16 %v724, %v722
        %v905 = vpack.c.b16 %v725, %v723
        %v906 = vpack.c.b16 %v728, %v726
        %v907 = vpack.c.b16 %v729, %v727
        %v908 = vpack.c.b16 %v732, %v730
        %v909 = vpack.c.b16 %v733, %v731
        %v910 = vpack.c.b16 %v736, %v734
        %v911 = vpack.c.b16 %v737, %v735
        %v912 = vpack.c.b16 %v740, %v738
        %v913 = vpack.c.b16 %v741, %v739
        %v914 = vpack.c.b16 %v744, %v742
        %v915 = vpack.c.b16 %v745, %v743
        %v916 = vpack.c.b16 %v748, %v746
        %v917 = vpack.c.b16 %v749, %v747
        %v918 = vpack.c.b16 %v752, %v750
        %v919 = vpack.c.b16 %v753, %v751
        %v920 = vpack.c.b16 %v756, %v754
        %v921 = vpack.c.b16 %v757, %v755
        %v922 = vpack.c.b16 %v760, %v758
        %v923 = vpack.c.b16 %v761, %v759
        %v924 = vpack.c.b16 %v764, %v762
        %v925 = vpack.c.b16 %v765, %v763
        %v926 = vpack.c.b16 %v768, %v766
        %v927 = vpack.c.b16 %v769, %v767
        %v928 = vpack.c.b16 %v772, %v770
        %v929 = vpack.c.b16 %v773, %v771
        %v930 = vpack.c.b16 %v776, %v774
        %v931 = vpack.c.b16 %v777, %v775
        %v932 = vpack.c.b16 %v780, %v778
        %v933 = vpack.c.b16 %v781, %v779
        %v934 = vpack.c.b16 %v784, %v782
        %v935 = vpack.c.b16 %v785, %v783
        %v936 = vpack.c.b16 %v788, %v786
        %v937 = vpack.c.b16 %v789, %v787
        %v938 = vpack.c.b16 %v792, %v790
        %v939 = vpack.c.b16 %v793, %v791
        %v940 = vpack.c.b16 %v796, %v794
        %v941 = vpack.c.b16 %v797, %v795
        %v942 = vpack.c.b16 %v800, %v798
        %v943 = vpack.c.b16 %v801, %v799
        %v944 = vpack.c.b16 %v804, %v802
        %v945 = vpack.c.b16 %v805, %v803
        %v946 = vpack.c.b16 %v808, %v806
        %v947 = vpack.c.b16 %v809, %v807
        %v948 = vpack.c.b16 %v812, %v810
        %v949 = vpack.c.b16 %v813, %v811
        %v950 = vpack.c.b16 %v816, %v814
        %v951 = vpack.c.b16 %v817, %v815
        %v952 = vpack.c.b16 %v820, %v818
        %v953 = vpack.c.b16 %v821, %v819
        %v954 = vpack.c.b16 %v824, %v822
        %v955 = vpack.c.b16 %v825, %v823
        %v956 = vpack.c.b16 %v828, %v826
        %v957 = vpack.c.b16 %v829, %v827
        %v958 = vpack.c.b16 %v832, %v830
        %v959 = vpack.c.b16 %v833, %v831
        %v960 = vpack.c.b16 %v836, %v834
        %v961 = vpack.c.b16 %v837, %v835
        %v962 = vpack.c.b16 %v840, %v838
        %v963 = vpack.c.b16 %v841, %v839
        %v964 = vpack.c.b16 %v844, %v842
        %v965 = vpack.c.b16 %v845, %v843
        %v966 = vpack.c.b16 %v848, %v846
        %v967 = vpack.c.b16 %v849, %v847
        %v968 = vpack.c.b16 %v852, %v850
        %v969 = vpack.c.b16 %v853, %v851
        %v970 = vpack.c.b16 %v856, %v854
        %v971 = vpack.c.b16 %v857, %v855
        %v972 = vpack.c.b16 %v860, %v858
        %v973 = vpack.c.b16 %v861, %v859
        %v974 = vpack.c.b16 %v864, %v862
        %v975 = vpack.c.b16 %v865, %v863
        %v976 = vpack.c.b16 %v868, %v866
        %v977 = vpack.c.b16 %v869, %v867
        %v978 = vpack.c.b16 %v872, %v870
        %v979 = vpack.c.b16 %v873, %v871
        %v980 = vpack.c.b16 %v876, %v874
        %v981 = vpack.c.b16 %v877, %v875
        %v982 = vpack.c.b16 %v880, %v878
        %v983 = vpack.c.b16 %v881, %v879
        %v984 = vpack.c.b16 %v884, %v882
        %v985 = vpack.c.b16 %v885, %v883
        %v986 = vpack.c.b16 %v888, %v886
        %v987 = vpack.c.b16 %v889, %v887
        %v988 = vpack.c.b16 %v892, %v890
        %v989 = vpack.c.b16 %v893, %v891
        %1086 = vmatpush.bf16.msra.mxu0 %v908
        %1087 = vmatpush.bf16.msra.mxu0 %v906
        %1088 = vmatpush.bf16.msra.mxu0 %v904
        %1089 = vmatpush.bf16.msra.mxu0 %v902
        %1090 = vmatpush.bf16.msra.mxu0 %v900
        %1091 = vmatpush.bf16.msra.mxu0 %v898
        %1092 = vmatpush.bf16.msra.mxu0 %v896
        %1093 = vmatpush.bf16.msra.mxu0 %v894
        %1094 = vmatmul.bf16.gmra.mxu0 %v502
        %v1095 = vpop.f32.mrf.mxu0
        %v1096 = vadd.f32 %v604, %v1095
        %v1097 = vpop.f32.mrf.mxu0
        %v1098 = vadd.f32 %v604, %v1097
        %1099 = vdwg.mxu0
        %1100 = vmatpush.bf16.msra.mxu0 %v924
        %1101 = vmatpush.bf16.msra.mxu0 %v922
        %1102 = vmatpush.bf16.msra.mxu0 %v920
        %1103 = vmatpush.bf16.msra.mxu0 %v918
        %1104 = vmatpush.bf16.msra.mxu0 %v916
        %1105 = vmatpush.bf16.msra.mxu0 %v914
        %1106 = vmatpush.bf16.msra.mxu0 %v912
        %1107 = vmatpush.bf16.msra.mxu0 %v910
        %1108 = vmatmul.bf16.gmra.mxu0 %v503
        %v1109 = vpop.f32.mrf.mxu0
        %v1110 = vadd.f32 %v1096, %v1109
        %v1111 = vpop.f32.mrf.mxu0
        %v1112 = vadd.f32 %v1098, %v1111
        %1113 = vdwg.mxu0
        %1114 = vmatpush.bf16.msra.mxu0 %v940
        %1115 = vmatpush.bf16.msra.mxu0 %v938
        %1116 = vmatpush.bf16.msra.mxu0 %v936
        %1117 = vmatpush.bf16.msra.mxu0 %v934
        %1118 = vmatpush.bf16.msra.mxu0 %v932
        %1119 = vmatpush.bf16.msra.mxu0 %v930
        %1120 = vmatpush.bf16.msra.mxu0 %v928
        %1121 = vmatpush.bf16.msra.mxu0 %v926
        %1122 = vmatmul.bf16.gmra.mxu0 %v504
        %v1123 = vpop.f32.mrf.mxu0
        %v1124 = vadd.f32 %v1110, %v1123
        %v1125 = vpop.f32.mrf.mxu0
        %v1126 = vadd.f32 %v1112, %v1125
        %1127 = vdwg.mxu0
        %1128 = vmatpush.bf16.msra.mxu0 %v956
        %1129 = vmatpush.bf16.msra.mxu0 %v954
        %1130 = vmatpush.bf16.msra.mxu0 %v952
        %1131 = vmatpush.bf16.msra.mxu0 %v950
        %1132 = vmatpush.bf16.msra.mxu0 %v948
        %1133 = vmatpush.bf16.msra.mxu0 %v946
        %1134 = vmatpush.bf16.msra.mxu0 %v944
        %1135 = vmatpush.bf16.msra.mxu0 %v942
        %1136 = vmatmul.bf16.gmra.mxu0 %v505
        %v1137 = vpop.f32.mrf.mxu0
        %v1138 = vadd.f32 %v1124, %v1137
        %v1139 = vpop.f32.mrf.mxu0
        %v1140 = vadd.f32 %v1126, %v1139
        %1141 = vdwg.mxu0
        %1142 = vmatpush.bf16.msra.mxu0 %v972
        %1143 = vmatpush.bf16.msra.mxu0 %v970
        %1144 = vmatpush.bf16.msra.mxu0 %v968
        %1145 = vmatpush.bf16.msra.mxu0 %v966
        %1146 = vmatpush.bf16.msra.mxu0 %v964
        %1147 = vmatpush.bf16.msra.mxu0 %v962
        %1148 = vmatpush.bf16.msra.mxu0 %v960
        %1149 = vmatpush.bf16.msra.mxu0 %v958
        %1150 = vmatmul.bf16.gmra.mxu0 %v506
        %v1151 = vpop.f32.mrf.mxu0
        %v1152 = vadd.f32 %v1138, %v1151
        %v1153 = vpop.f32.mrf.mxu0
        %v1154 = vadd.f32 %v1140, %v1153
        %1155 = vdwg.mxu0
        %1156 = vmatpush.bf16.msra.mxu0 %v988
        %1157 = vmatpush.bf16.msra.mxu0 %v986
        %1158 = vmatpush.bf16.msra.mxu0 %v984
        %1159 = vmatpush.bf16.msra.mxu0 %v982
        %1160 = vmatpush.bf16.msra.mxu0 %v980
        %1161 = vmatpush.bf16.msra.mxu0 %v978
        %1162 = vmatpush.bf16.msra.mxu0 %v976
        %1163 = vmatpush.bf16.msra.mxu0 %v974
        %1164 = vmatmul.bf16.gmra.mxu0 %v507
        %v1165 = vpop.f32.mrf.mxu0
        %v1166 = vadd.f32 %v1152, %v1165
        %v1167 = vpop.f32.mrf.mxu0
        %v1168 = vadd.f32 %v1154, %v1167
        %1169 = vdwg.mxu0
        %1170 = vmatpush.bf16.msra.mxu0 %v909
        %1171 = vmatpush.bf16.msra.mxu0 %v907
        %1172 = vmatpush.bf16.msra.mxu0 %v905
        %1173 = vmatpush.bf16.msra.mxu0 %v903
        %1174 = vmatpush.bf16.msra.mxu0 %v901
        %1175 = vmatpush.bf16.msra.mxu0 %v899
        %1176 = vmatpush.bf16.msra.mxu0 %v897
        %1177 = vmatpush.bf16.msra.mxu0 %v895
        %1178 = vmatmul.bf16.gmra.mxu0 %v502
        %v1179 = vpop.f32.mrf.mxu0
        %v1180 = vadd.f32 %v605, %v1179
        %v1181 = vpop.f32.mrf.mxu0
        %v1182 = vadd.f32 %v605, %v1181
        %1183 = vdwg.mxu0
        %1184 = vmatpush.bf16.msra.mxu0 %v925
        %1185 = vmatpush.bf16.msra.mxu0 %v923
        %1186 = vmatpush.bf16.msra.mxu0 %v921
        %1187 = vmatpush.bf16.msra.mxu0 %v919
        %1188 = vmatpush.bf16.msra.mxu0 %v917
        %1189 = vmatpush.bf16.msra.mxu0 %v915
        %1190 = vmatpush.bf16.msra.mxu0 %v913
        %1191 = vmatpush.bf16.msra.mxu0 %v911
        %1192 = vmatmul.bf16.gmra.mxu0 %v503
        %v1193 = vpop.f32.mrf.mxu0
        %v1194 = vadd.f32 %v1180, %v1193
        %v1195 = vpop.f32.mrf.mxu0
        %v1196 = vadd.f32 %v1182, %v1195
        %1197 = vdwg.mxu0
        %1198 = vmatpush.bf16.msra.mxu0 %v941
        %1199 = vmatpush.bf16.msra.mxu0 %v939
        %1200 = vmatpush.bf16.msra.mxu0 %v937
        %1201 = vmatpush.bf16.msra.mxu0 %v935
        %1202 = vmatpush.bf16.msra.mxu0 %v933
        %1203 = vmatpush.bf16.msra.mxu0 %v931
        %1204 = vmatpush.bf16.msra.mxu0 %v929
        %1205 = vmatpush.bf16.msra.mxu0 %v927
        %1206 = vmatmul.bf16.gmra.mxu0 %v504
        %v1207 = vpop.f32.mrf.mxu0
        %v1208 = vadd.f32 %v1194, %v1207
        %v1209 = vpop.f32.mrf.mxu0
        %v1210 = vadd.f32 %v1196, %v1209
        %1211 = vdwg.mxu0
        %1212 = vmatpush.bf16.msra.mxu0 %v957
        %1213 = vmatpush.bf16.msra.mxu0 %v955
        %1214 = vmatpush.bf16.msra.mxu0 %v953
        %1215 = vmatpush.bf16.msra.mxu0 %v951
        %1216 = vmatpush.bf16.msra.mxu0 %v949
        %1217 = vmatpush.bf16.msra.mxu0 %v947
        %1218 = vmatpush.bf16.msra.mxu0 %v945
        %1219 = vmatpush.bf16.msra.mxu0 %v943
        %1220 = vmatmul.bf16.gmra.mxu0 %v505
        %v1221 = vpop.f32.mrf.mxu0
        %v1222 = vadd.f32 %v1208, %v1221
        %v1223 = vpop.f32.mrf.mxu0
        %v1224 = vadd.f32 %v1210, %v1223
        %1225 = vdwg.mxu0
        %1226 = vmatpush.bf16.msra.mxu0 %v973
        %1227 = vmatpush.bf16.msra.mxu0 %v971
        %1228 = vmatpush.bf16.msra.mxu0 %v969
        %1229 = vmatpush.bf16.msra.mxu0 %v967
        %1230 = vmatpush.bf16.msra.mxu0 %v965
        %1231 = vmatpush.bf16.msra.mxu0 %v963
        %1232 = vmatpush.bf16.msra.mxu0 %v961
        %1233 = vmatpush.bf16.msra.mxu0 %v959
        %1234 = vmatmul.bf16.gmra.mxu0 %v506
        %v1235 = vpop.f32.mrf.mxu0
        %v1236 = vadd.f32 %v1222, %v1235
        %v1237 = vpop.f32.mrf.mxu0
        %v1238 = vadd.f32 %v1224, %v1237
        %1239 = vdwg.mxu0
        %1240 = vmatpush.bf16.msra.mxu0 %v989
        %1241 = vmatpush.bf16.msra.mxu0 %v987
        %1242 = vmatpush.bf16.msra.mxu0 %v985
        %1243 = vmatpush.bf16.msra.mxu0 %v983
        %1244 = vmatpush.bf16.msra.mxu0 %v981
        %1245 = vmatpush.bf16.msra.mxu0 %v979
        %1246 = vmatpush.bf16.msra.mxu0 %v977
        %1247 = vmatpush.bf16.msra.mxu0 %v975
        %1248 = vmatmul.bf16.gmra.mxu0 %v507
        %v1249 = vpop.f32.mrf.mxu0
        %v1250 = vadd.f32 %v1236, %v1249
        %v1251 = vpop.f32.mrf.mxu0
        %v1252 = vadd.f32 %v1238, %v1251
        %1253 = vdwg.mxu0
        %v1254 = vmul.f32 %v1166, %v317
        %v1255 = vmul.f32 %v1250, %v318
        %v1256 = vmul.f32 %v1168, %v319
        %v1257 = vmul.f32 %v1252, %v320
        %v1258 = vadd.f32 %v1254, %v1256
        %v1259 = vrot.slane %v1258, 4
        %v1260 = vadd.f32 %v1258, %v1259
        %v1261 = vrot.slane %v1260, 2
        %v1262 = vadd.f32 %v1260, %v1261
        %v1263 = vrot.slane %v1262, 1
        %v1264 = vadd.f32 %v1262, %v1263
        %v1265 = vadd.f32 %v1255, %v1257
        %v1266 = vrot.slane %v1265, 4
        %v1267 = vadd.f32 %v1265, %v1266
        %v1268 = vrot.slane %v1267, 2
        %v1269 = vadd.f32 %v1267, %v1268
        %v1270 = vrot.slane %v1269, 1
        %v1271 = vadd.f32 %v1269, %v1270
        %v1272 = vmul.f32 %v1254, %v1166
        %v1273 = vmul.f32 %v1255, %v1250
        %v1274 = vmul.f32 %v1256, %v1168
        %v1275 = vmul.f32 %v1257, %v1252
        %v1276 = vadd.f32 %v1272, %v1274
        %v1277 = vrot.slane %v1276, 4
        %v1278 = vadd.f32 %v1276, %v1277
        %v1279 = vrot.slane %v1278, 2
        %v1280 = vadd.f32 %v1278, %v1279
        %v1281 = vrot.slane %v1280, 1
        %v1282 = vadd.f32 %v1280, %v1281
        %v1283 = vadd.f32 %v1273, %v1275
        %v1284 = vrot.slane %v1283, 4
        %v1285 = vadd.f32 %v1283, %v1284
        %v1286 = vrot.slane %v1285, 2
        %v1287 = vadd.f32 %v1285, %v1286
        %v1288 = vrot.slane %v1287, 1
        %v1289 = vadd.f32 %v1287, %v1288
        %vm1290 = vcmask 1040384
        %v1291 = vsel %vm1290, %v1264, %v1282
        %v1292 = vsel %vm1290, %v1271, %v1289
        %1293 = vmatpush.msra.mxu0 %v351
        %1294 = vmatpush.msra.mxu0 %v349
        %1295 = vmatpush.msra.mxu0 %v347
        %1296 = vmatpush.msra.mxu0 %v345
        %1297 = vmatpush.msra.mxu0 %v343
        %1298 = vmatpush.msra.mxu0 %v341
        %1299 = vmatpush.msra.mxu0 %v339
        %1300 = vmatpush.msra.mxu0 %v337
        %1301 = vmatpush.msra.mxu0 %v335
        %1302 = vmatpush.msra.mxu0 %v333
        %1303 = vmatpush.msra.mxu0 %v331
        %1304 = vmatpush.msra.mxu0 %v329
        %1305 = vmatpush.msra.mxu0 %v327
        %1306 = vmatpush.msra.mxu0 %v325
        %1307 = vmatpush.msra.mxu0 %v323
        %1308 = vmatpush.msra.mxu0 %v321
        %1309 = vmatmul.f32.gmra.mxu0 %v1291
        %v1310 = vpop.f32.mrf.mxu0
        %v1311 = vadd.f32 0.0, %v1310
        %1312 = vdwg.mxu0
        %1313 = vmatpush.msra.mxu0 %v383
        %1314 = vmatpush.msra.mxu0 %v381
        %1315 = vmatpush.msra.mxu0 %v379
        %1316 = vmatpush.msra.mxu0 %v377
        %1317 = vmatpush.msra.mxu0 %v375
        %1318 = vmatpush.msra.mxu0 %v373
        %1319 = vmatpush.msra.mxu0 %v371
        %1320 = vmatpush.msra.mxu0 %v369
        %1321 = vmatpush.msra.mxu0 %v367
        %1322 = vmatpush.msra.mxu0 %v365
        %1323 = vmatpush.msra.mxu0 %v363
        %1324 = vmatpush.msra.mxu0 %v361
        %1325 = vmatpush.msra.mxu0 %v359
        %1326 = vmatpush.msra.mxu0 %v357
        %1327 = vmatpush.msra.mxu0 %v355
        %1328 = vmatpush.msra.mxu0 %v353
        %1329 = vmatmul.f32.gmra.mxu0 %v1292
        %v1330 = vpop.f32.mrf.mxu0
        %v1331 = vadd.f32 %v1311, %v1330
        %1332 = vdwg.mxu0
        %1333 = vmatpush.msra.mxu0 %v352
        %1334 = vmatpush.msra.mxu0 %v350
        %1335 = vmatpush.msra.mxu0 %v348
        %1336 = vmatpush.msra.mxu0 %v346
        %1337 = vmatpush.msra.mxu0 %v344
        %1338 = vmatpush.msra.mxu0 %v342
        %1339 = vmatpush.msra.mxu0 %v340
        %1340 = vmatpush.msra.mxu0 %v338
        %1341 = vmatpush.msra.mxu0 %v336
        %1342 = vmatpush.msra.mxu0 %v334
        %1343 = vmatpush.msra.mxu0 %v332
        %1344 = vmatpush.msra.mxu0 %v330
        %1345 = vmatpush.msra.mxu0 %v328
        %1346 = vmatpush.msra.mxu0 %v326
        %1347 = vmatpush.msra.mxu0 %v324
        %1348 = vmatpush.msra.mxu0 %v322
        %1349 = vmatmul.f32.gmra.mxu0 %v1291
        %v1350 = vpop.f32.mrf.mxu0
        %v1351 = vadd.f32 0.0, %v1350
        %1352 = vdwg.mxu0
        %1353 = vmatpush.msra.mxu0 %v384
        %1354 = vmatpush.msra.mxu0 %v382
        %1355 = vmatpush.msra.mxu0 %v380
        %1356 = vmatpush.msra.mxu0 %v378
        %1357 = vmatpush.msra.mxu0 %v376
        %1358 = vmatpush.msra.mxu0 %v374
        %1359 = vmatpush.msra.mxu0 %v372
        %1360 = vmatpush.msra.mxu0 %v370
        %1361 = vmatpush.msra.mxu0 %v368
        %1362 = vmatpush.msra.mxu0 %v366
        %1363 = vmatpush.msra.mxu0 %v364
        %1364 = vmatpush.msra.mxu0 %v362
        %1365 = vmatpush.msra.mxu0 %v360
        %1366 = vmatpush.msra.mxu0 %v358
        %1367 = vmatpush.msra.mxu0 %v356
        %1368 = vmatpush.msra.mxu0 %v354
        %1369 = vmatmul.f32.gmra.mxu0 %v1292
        %v1370 = vpop.f32.mrf.mxu0
        %v1371 = vadd.f32 %v1351, %v1370
        %1372 = vdwg.mxu0
        %v1373 = vmul.f32 %v1331, 0.015625
        %v1374 = vmul.f32 %v1371, 0.015625
        %v1375 = vmul.f32 %v1373, %v1373
        %v1376 = vmul.f32 %v1374, %v1374
        %v1379 = vrot.slane %v1375, 7
        %v1380 = vrot.slane %v1376, 7
        %v1383 = vsub.f32 %v1373, %v1379
        %v1384 = vsub.f32 %v1374, %v1380
        %v1385 = vperm.slane %v1373, 0
        %v1386 = vperm.slane %v1374, 0
        %v1387 = vsub.f32 %v1166, %v1385
        %v1388 = vsub.f32 %v1250, %v1386
        %v1389 = vsub.f32 %v1168, %v1385
        %v1390 = vsub.f32 %v1252, %v1386
        %v1391 = vadd.f32 %v1383, 1e-05
        %v1392 = vadd.f32 %v1384, 1e-05
        %v1393 = vrsqrt.pop %v1391
        %v1394 = vmul.f32 %v1393, %v1391
        %v1395 = vmul.f32 %v1394, %v1393
        %v1396 = vmul.f32 0.5, %v1395
        %v1397 = vsub.f32 1.5, %v1396
        %v1398 = vmul.f32 %v1393, %v1397
        %vm1399 = vweird.f32 %v1391
        %vm1400 = vweird.f32 %v1393
        %vm1401 = vmor %vm1399, %vm1400
        %v1402 = vsel %vm1401, %v1393, %v1398
        %v1403 = vrsqrt.pop %v1392
        %v1404 = vmul.f32 %v1403, %v1392
        %v1405 = vmul.f32 %v1404, %v1403
        %v1406 = vmul.f32 0.5, %v1405
        %v1407 = vsub.f32 1.5, %v1406
        %v1408 = vmul.f32 %v1403, %v1407
        %vm1409 = vweird.f32 %v1392
        %vm1410 = vweird.f32 %v1403
        %vm1411 = vmor %vm1409, %vm1410
        %v1412 = vsel %vm1411, %v1403, %v1408
        %v1413 = vperm.slane %v1402, 1
        %v1414 = vperm.slane %v1412, 1
        %v1415 = vmul.f32 %v1387, %v1413
        %v1416 = vmul.f32 %v1388, %v1414
        %v1417 = vmul.f32 %v1389, %v1413
        %v1418 = vmul.f32 %v1390, %v1414
        %v1419 = vperm.slane %v398, 0
        %v1420 = vperm.slane %v399, 0
        %v1421 = vmul.f32 %v1415, %v1419
        %v1422 = vmul.f32 %v1416, %v1420
        %v1423 = vmul.f32 %v1417, %v1419
        %v1424 = vmul.f32 %v1418, %v1420
        %v1425 = vperm.slane %v398, 1
        %v1426 = vperm.slane %v399, 1
        %v1427 = vadd.f32 %v1421, %v1425
        %v1428 = vadd.f32 %v1422, %v1426
        %v1429 = vadd.f32 %v1423, %v1425
        %v1430 = vadd.f32 %v1424, %v1426
        %v1431 = vmax.f32 %v1427, 0.0
        %v1432 = vmax.f32 %v1428, 0.0
        %v1433 = vmax.f32 %v1429, 0.0
        %v1434 = vmax.f32 %v1430, 0.0
        %v1435 = vpack.c.bf16 %v1433, %v1431
        %v1436 = vpack.c.bf16 %v1434, %v1432
        %1437 = vmatpush.bf16.msra.mxu0 0
        %1438 = vmatpush.bf16.msra.mxu0 0
        %1439 = vmatpush.bf16.msra.mxu0 0
        %1440 = vmatpush.bf16.msra.mxu0 0
        %1441 = vmatpush.bf16.msra.mxu0 0
        %1442 = vmatpush.bf16.msra.mxu0 0
        %1443 = vmatpush.bf16.msra.mxu0 0
        %1444 = vmatpush.bf16.msra.mxu0 %v1435
        %1445 = vmatmul.bf16.gmra.mxu0 %v410
        %v1446 = vpop.f32.mrf.mxu0
        %v1447 = vadd.f32 0.0, %v1446
        %v1448 = vpop.f32.mrf.mxu0
        %v1449 = vadd.f32 0.0, %v1448
        %1450 = vdwg.mxu0
        %1451 = vmatpush.bf16.msra.mxu0 0
        %1452 = vmatpush.bf16.msra.mxu0 0
        %1453 = vmatpush.bf16.msra.mxu0 0
        %1454 = vmatpush.bf16.msra.mxu0 0
        %1455 = vmatpush.bf16.msra.mxu0 0
        %1456 = vmatpush.bf16.msra.mxu0 0
        %1457 = vmatpush.bf16.msra.mxu0 0
        %1458 = vmatpush.bf16.msra.mxu0 %v1436
        %1459 = vmatmul.bf16.gmra.mxu0 %v410
        %v1460 = vpop.f32.mrf.mxu0
        %v1461 = vadd.f32 0.0, %v1460
        %v1462 = vpop.f32.mrf.mxu0
        %v1463 = vadd.f32 0.0, %v1462
        %1464 = vdwg.mxu0
        %1465 = vmatpush.bf16.msra.mxu0 0
        %1466 = vmatpush.bf16.msra.mxu0 0
        %1467 = vmatpush.bf16.msra.mxu0 0
        %1468 = vmatpush.bf16.msra.mxu0 0
        %1469 = vmatpush.bf16.msra.mxu0 0
        %1470 = vmatpush.bf16.msra.mxu0 0
        %1471 = vmatpush.bf16.msra.mxu0 0
        %1472 = vmatpush.bf16.msra.mxu0 %v1435
        %1473 = vmatmul.bf16.gmra.mxu0 %v441
        %v1474 = vpop.f32.mrf.mxu0
        %v1475 = vadd.f32 0.0, %v1474
        %v1476 = vpop.f32.mrf.mxu0
        %v1477 = vadd.f32 0.0, %v1476
        %1478 = vdwg.mxu0
        %1479 = vmatpush.bf16.msra.mxu0 0
        %1480 = vmatpush.bf16.msra.mxu0 0
        %1481 = vmatpush.bf16.msra.mxu0 0
        %1482 = vmatpush.bf16.msra.mxu0 0
        %1483 = vmatpush.bf16.msra.mxu0 0
        %1484 = vmatpush.bf16.msra.mxu0 0
        %1485 = vmatpush.bf16.msra.mxu0 0
        %1486 = vmatpush.bf16.msra.mxu0 %v1436
        %1487 = vmatmul.bf16.gmra.mxu0 %v441
        %v1488 = vpop.f32.mrf.mxu0
        %v1489 = vadd.f32 0.0, %v1488
        %v1490 = vpop.f32.mrf.mxu0
        %v1491 = vadd.f32 0.0, %v1490
        %1492 = vdwg.mxu0
        %1493 = vmatpush.bf16.msra.mxu0 0
        %1494 = vmatpush.bf16.msra.mxu0 0
        %1495 = vmatpush.bf16.msra.mxu0 0
        %1496 = vmatpush.bf16.msra.mxu0 0
        %1497 = vmatpush.bf16.msra.mxu0 0
        %1498 = vmatpush.bf16.msra.mxu0 0
        %1499 = vmatpush.bf16.msra.mxu0 0
        %1500 = vmatpush.bf16.msra.mxu0 %v1435
        %1501 = vmatmul.bf16.gmra.mxu0 %v472
        %v1502 = vpop.f32.mrf.mxu0
        %v1503 = vadd.f32 0.0, %v1502
        %v1504 = vpop.f32.mrf.mxu0
        %v1505 = vadd.f32 0.0, %v1504
        %1506 = vdwg.mxu0
        %1507 = vmatpush.bf16.msra.mxu0 0
        %1508 = vmatpush.bf16.msra.mxu0 0
        %1509 = vmatpush.bf16.msra.mxu0 0
        %1510 = vmatpush.bf16.msra.mxu0 0
        %1511 = vmatpush.bf16.msra.mxu0 0
        %1512 = vmatpush.bf16.msra.mxu0 0
        %1513 = vmatpush.bf16.msra.mxu0 0
        %1514 = vmatpush.bf16.msra.mxu0 %v1436
        %1515 = vmatmul.bf16.gmra.mxu0 %v472
        %v1516 = vpop.f32.mrf.mxu0
        %v1517 = vadd.f32 0.0, %v1516
        %v1518 = vpop.f32.mrf.mxu0
        %v1519 = vadd.f32 0.0, %v1518
        %1520 = vdwg.mxu0
        %v1521 = vpack.c.bf16 %v1449, %v1447
        %v1522 = vpack.c.bf16 %v1463, %v1461
        %v1523 = vpack.c.bf16 %v1477, %v1475
        %v1524 = vpack.c.bf16 %v1491, %v1489
        %v1525 = vpack.c.bf16 %v1505, %v1503
        %v1526 = vpack.c.bf16 %v1519, %v1517
        %s1527 = scalar_lea.vmem [#allocation2], 768
        %v1528 = vld [vmem:[%s1527] sm:$0xff]
        %v1529 = vld [vmem:[%s1527 + $0x8] sm:$0xff]
        %v1530 = vld [vmem:[%s1527 + $0x10] sm:$0xff]
        %v1531 = vld [vmem:[%s1527 + $0x18] sm:$0xff]
        %v1532 = vld [vmem:[%s1527 + $0x20] sm:$0xff]
        %v1533 = vld [vmem:[%s1527 + $0x28] sm:$0xff]
        %v1534 = vld [vmem:[%s1527 + $0x30] sm:$0xff]
        %v1535 = vld [vmem:[%s1527 + $0x38] sm:$0xff]
        %v1536 = vld [vmem:[%s1527 + $0x40] sm:$0xff]
        %v1537 = vld [vmem:[%s1527 + $0x48] sm:$0xff]
        %v1538 = vld [vmem:[%s1527 + $0x50] sm:$0xff]
        %v1539 = vld [vmem:[%s1527 + $0x58] sm:$0xff]
        %v1540 = vld [vmem:[%s1527 + $0x60] sm:$0xff]
        %v1541 = vld [vmem:[%s1527 + $0x68] sm:$0xff]
        %v1542 = vld [vmem:[%s1527 + $0x70] sm:$0xff]
        %v1543 = vld [vmem:[%s1527 + $0x78] sm:$0xff]
        %v1544 = vld [vmem:[%s1527 + $0x80] sm:$0xff]
        %v1545 = vld [vmem:[%s1527 + $0x88] sm:$0xff]
        %v1546 = vld [vmem:[%s1527 + $0x90] sm:$0xff]
        %v1547 = vld [vmem:[%s1527 + $0x98] sm:$0xff]
        %v1548 = vld [vmem:[%s1527 + $0xa0] sm:$0xff]
        %v1549 = vld [vmem:[%s1527 + $0xa8] sm:$0xff]
        %v1550 = vld [vmem:[%s1527 + $0xb0] sm:$0xff]
        %v1551 = vld [vmem:[%s1527 + $0xb8] sm:$0xff]
        %v1552 = vld [vmem:[%s1527 + $0xc0] sm:$0xff]
        %v1553 = vld [vmem:[%s1527 + $0xc8] sm:$0xff]
        %v1554 = vld [vmem:[%s1527 + $0xd0] sm:$0xff]
        %v1555 = vld [vmem:[%s1527 + $0xd8] sm:$0xff]
        %v1556 = vld [vmem:[%s1527 + $0xe0] sm:$0xff]
        %v1557 = vld [vmem:[%s1527 + $0xe8] sm:$0xff]
        %v1558 = vld [vmem:[%s1527 + $0xf0] sm:$0xff]
        %v1559 = vld [vmem:[%s1527 + $0xf8] sm:$0xff]
        %v1560 = vld [vmem:[%s1527 + $0x100] sm:$0xff]
        %v1561 = vld [vmem:[%s1527 + $0x108] sm:$0xff]
        %v1562 = vld [vmem:[%s1527 + $0x110] sm:$0xff]
        %v1563 = vld [vmem:[%s1527 + $0x118] sm:$0xff]
        %v1564 = vld [vmem:[%s1527 + $0x120] sm:$0xff]
        %v1565 = vld [vmem:[%s1527 + $0x128] sm:$0xff]
        %v1566 = vld [vmem:[%s1527 + $0x130] sm:$0xff]
        %v1567 = vld [vmem:[%s1527 + $0x138] sm:$0xff]
        %v1568 = vld [vmem:[%s1527 + $0x140] sm:$0xff]
        %v1569 = vld [vmem:[%s1527 + $0x148] sm:$0xff]
        %v1570 = vld [vmem:[%s1527 + $0x150] sm:$0xff]
        %v1571 = vld [vmem:[%s1527 + $0x158] sm:$0xff]
        %v1572 = vld [vmem:[%s1527 + $0x160] sm:$0xff]
        %v1573 = vld [vmem:[%s1527 + $0x168] sm:$0xff]
        %v1574 = vld [vmem:[%s1527 + $0x170] sm:$0xff]
        %v1575 = vld [vmem:[%s1527 + $0x178] sm:$0xff]
        %v1576 = vld [vmem:[%s1527 + $0x180] sm:$0xff]
        %v1577 = vld [vmem:[%s1527 + $0x188] sm:$0xff]
        %v1578 = vld [vmem:[%s1527 + $0x190] sm:$0xff]
        %v1579 = vld [vmem:[%s1527 + $0x198] sm:$0xff]
        %v1580 = vld [vmem:[%s1527 + $0x1a0] sm:$0xff]
        %v1581 = vld [vmem:[%s1527 + $0x1a8] sm:$0xff]
        %v1582 = vld [vmem:[%s1527 + $0x1b0] sm:$0xff]
        %v1583 = vld [vmem:[%s1527 + $0x1b8] sm:$0xff]
        %v1584 = vld [vmem:[%s1527 + $0x1c0] sm:$0xff]
        %v1585 = vld [vmem:[%s1527 + $0x1c8] sm:$0xff]
        %v1586 = vld [vmem:[%s1527 + $0x1d0] sm:$0xff]
        %v1587 = vld [vmem:[%s1527 + $0x1d8] sm:$0xff]
        %v1588 = vld [vmem:[%s1527 + $0x1e0] sm:$0xff]
        %v1589 = vld [vmem:[%s1527 + $0x1e8] sm:$0xff]
        %v1590 = vld [vmem:[%s1527 + $0x1f0] sm:$0xff]
        %v1591 = vld [vmem:[%s1527 + $0x1f8] sm:$0xff]
        %v1592 = vld [vmem:[%s1527 + $0x200] sm:$0xff]
        %v1593 = vld [vmem:[%s1527 + $0x208] sm:$0xff]
        %v1594 = vld [vmem:[%s1527 + $0x210] sm:$0xff]
        %v1595 = vld [vmem:[%s1527 + $0x218] sm:$0xff]
        %v1596 = vld [vmem:[%s1527 + $0x220] sm:$0xff]
        %v1597 = vld [vmem:[%s1527 + $0x228] sm:$0xff]
        %v1598 = vld [vmem:[%s1527 + $0x230] sm:$0xff]
        %v1599 = vld [vmem:[%s1527 + $0x238] sm:$0xff]
        %v1600 = vld [vmem:[%s1527 + $0x240] sm:$0xff]
        %v1601 = vld [vmem:[%s1527 + $0x248] sm:$0xff]
        %v1602 = vld [vmem:[%s1527 + $0x250] sm:$0xff]
        %v1603 = vld [vmem:[%s1527 + $0x258] sm:$0xff]
        %v1604 = vld [vmem:[%s1527 + $0x260] sm:$0xff]
        %v1605 = vld [vmem:[%s1527 + $0x268] sm:$0xff]
        %v1606 = vld [vmem:[%s1527 + $0x270] sm:$0xff]
        %v1607 = vld [vmem:[%s1527 + $0x278] sm:$0xff]
        %v1608 = vld [vmem:[%s1527 + $0x280] sm:$0xff]
        %v1609 = vld [vmem:[%s1527 + $0x288] sm:$0xff]
        %v1610 = vld [vmem:[%s1527 + $0x290] sm:$0xff]
        %v1611 = vld [vmem:[%s1527 + $0x298] sm:$0xff]
        %v1612 = vld [vmem:[%s1527 + $0x2a0] sm:$0xff]
        %v1613 = vld [vmem:[%s1527 + $0x2a8] sm:$0xff]
        %v1614 = vld [vmem:[%s1527 + $0x2b0] sm:$0xff]
        %v1615 = vld [vmem:[%s1527 + $0x2b8] sm:$0xff]
        %v1616 = vld [vmem:[%s1527 + $0x2c0] sm:$0xff]
        %v1617 = vld [vmem:[%s1527 + $0x2c8] sm:$0xff]
        %v1618 = vld [vmem:[%s1527 + $0x2d0] sm:$0xff]
        %v1619 = vld [vmem:[%s1527 + $0x2d8] sm:$0xff]
        %v1620 = vld [vmem:[%s1527 + $0x2e0] sm:$0xff]
        %v1621 = vld [vmem:[%s1527 + $0x2e8] sm:$0xff]
        %v1622 = vld [vmem:[%s1527 + $0x2f0] sm:$0xff]
        %v1623 = vld [vmem:[%s1527 + $0x2f8] sm:$0xff]
        %v1624 = vperm.slane %v396, 1
        %v1625 = vperm.slane %v397, 1
        %v1722 = vunpack.c.l.b16 %v1528
        %v1723 = vunpack.c.h.b16 %v1528
        %v1724 = vunpack.c.l.b16 %v1529
        %v1725 = vunpack.c.h.b16 %v1529
        %v1726 = vunpack.c.l.b16 %v1530
        %v1727 = vunpack.c.h.b16 %v1530
        %v1728 = vunpack.c.l.b16 %v1531
        %v1729 = vunpack.c.h.b16 %v1531
        %v1730 = vunpack.c.l.b16 %v1532
        %v1731 = vunpack.c.h.b16 %v1532
        %v1732 = vunpack.c.l.b16 %v1533
        %v1733 = vunpack.c.h.b16 %v1533
        %v1734 = vunpack.c.l.b16 %v1534
        %v1735 = vunpack.c.h.b16 %v1534
        %v1736 = vunpack.c.l.b16 %v1535
        %v1737 = vunpack.c.h.b16 %v1535
        %v1738 = vunpack.c.l.b16 %v1536
        %v1739 = vunpack.c.h.b16 %v1536
        %v1740 = vunpack.c.l.b16 %v1537
        %v1741 = vunpack.c.h.b16 %v1537
        %v1742 = vunpack.c.l.b16 %v1538
        %v1743 = vunpack.c.h.b16 %v1538
        %v1744 = vunpack.c.l.b16 %v1539
        %v1745 = vunpack.c.h.b16 %v1539
        %v1746 = vunpack.c.l.b16 %v1540
        %v1747 = vunpack.c.h.b16 %v1540
        %v1748 = vunpack.c.l.b16 %v1541
        %v1749 = vunpack.c.h.b16 %v1541
        %v1750 = vunpack.c.l.b16 %v1542
        %v1751 = vunpack.c.h.b16 %v1542
        %v1752 = vunpack.c.l.b16 %v1543
        %v1753 = vunpack.c.h.b16 %v1543
        %v1754 = vunpack.c.l.b16 %v1544
        %v1755 = vunpack.c.h.b16 %v1544
        %v1756 = vunpack.c.l.b16 %v1545
        %v1757 = vunpack.c.h.b16 %v1545
        %v1758 = vunpack.c.l.b16 %v1546
        %v1759 = vunpack.c.h.b16 %v1546
        %v1760 = vunpack.c.l.b16 %v1547
        %v1761 = vunpack.c.h.b16 %v1547
        %v1762 = vunpack.c.l.b16 %v1548
        %v1763 = vunpack.c.h.b16 %v1548
        %v1764 = vunpack.c.l.b16 %v1549
        %v1765 = vunpack.c.h.b16 %v1549
        %v1766 = vunpack.c.l.b16 %v1550
        %v1767 = vunpack.c.h.b16 %v1550
        %v1768 = vunpack.c.l.b16 %v1551
        %v1769 = vunpack.c.h.b16 %v1551
        %v1770 = vunpack.c.l.b16 %v1552
        %v1771 = vunpack.c.h.b16 %v1552
        %v1772 = vunpack.c.l.b16 %v1553
        %v1773 = vunpack.c.h.b16 %v1553
        %v1774 = vunpack.c.l.b16 %v1554
        %v1775 = vunpack.c.h.b16 %v1554
        %v1776 = vunpack.c.l.b16 %v1555
        %v1777 = vunpack.c.h.b16 %v1555
        %v1778 = vunpack.c.l.b16 %v1556
        %v1779 = vunpack.c.h.b16 %v1556
        %v1780 = vunpack.c.l.b16 %v1557
        %v1781 = vunpack.c.h.b16 %v1557
        %v1782 = vunpack.c.l.b16 %v1558
        %v1783 = vunpack.c.h.b16 %v1558
        %v1784 = vunpack.c.l.b16 %v1559
        %v1785 = vunpack.c.h.b16 %v1559
        %v1786 = vunpack.c.l.b16 %v1560
        %v1787 = vunpack.c.h.b16 %v1560
        %v1788 = vunpack.c.l.b16 %v1561
        %v1789 = vunpack.c.h.b16 %v1561
        %v1790 = vunpack.c.l.b16 %v1562
        %v1791 = vunpack.c.h.b16 %v1562
        %v1792 = vunpack.c.l.b16 %v1563
        %v1793 = vunpack.c.h.b16 %v1563
        %v1794 = vunpack.c.l.b16 %v1564
        %v1795 = vunpack.c.h.b16 %v1564
        %v1796 = vunpack.c.l.b16 %v1565
        %v1797 = vunpack.c.h.b16 %v1565
        %v1798 = vunpack.c.l.b16 %v1566
        %v1799 = vunpack.c.h.b16 %v1566
        %v1800 = vunpack.c.l.b16 %v1567
        %v1801 = vunpack.c.h.b16 %v1567
        %v1802 = vunpack.c.l.b16 %v1568
        %v1803 = vunpack.c.h.b16 %v1568
        %v1804 = vunpack.c.l.b16 %v1569
        %v1805 = vunpack.c.h.b16 %v1569
        %v1806 = vunpack.c.l.b16 %v1570
        %v1807 = vunpack.c.h.b16 %v1570
        %v1808 = vunpack.c.l.b16 %v1571
        %v1809 = vunpack.c.h.b16 %v1571
        %v1810 = vunpack.c.l.b16 %v1572
        %v1811 = vunpack.c.h.b16 %v1572
        %v1812 = vunpack.c.l.b16 %v1573
        %v1813 = vunpack.c.h.b16 %v1573
        %v1814 = vunpack.c.l.b16 %v1574
        %v1815 = vunpack.c.h.b16 %v1574
        %v1816 = vunpack.c.l.b16 %v1575
        %v1817 = vunpack.c.h.b16 %v1575
        %v1818 = vunpack.c.l.b16 %v1576
        %v1819 = vunpack.c.h.b16 %v1576
        %v1820 = vunpack.c.l.b16 %v1577
        %v1821 = vunpack.c.h.b16 %v1577
        %v1822 = vunpack.c.l.b16 %v1578
        %v1823 = vunpack.c.h.b16 %v1578
        %v1824 = vunpack.c.l.b16 %v1579
        %v1825 = vunpack.c.h.b16 %v1579
        %v1826 = vunpack.c.l.b16 %v1580
        %v1827 = vunpack.c.h.b16 %v1580
        %v1828 = vunpack.c.l.b16 %v1581
        %v1829 = vunpack.c.h.b16 %v1581
        %v1830 = vunpack.c.l.b16 %v1582
        %v1831 = vunpack.c.h.b16 %v1582
        %v1832 = vunpack.c.l.b16 %v1583
        %v1833 = vunpack.c.h.b16 %v1583
        %v1834 = vunpack.c.l.b16 %v1584
        %v1835 = vunpack.c.h.b16 %v1584
        %v1836 = vunpack.c.l.b16 %v1585
        %v1837 = vunpack.c.h.b16 %v1585
        %v1838 = vunpack.c.l.b16 %v1586
        %v1839 = vunpack.c.h.b16 %v1586
        %v1840 = vunpack.c.l.b16 %v1587
        %v1841 = vunpack.c.h.b16 %v1587
        %v1842 = vunpack.c.l.b16 %v1588
        %v1843 = vunpack.c.h.b16 %v1588
        %v1844 = vunpack.c.l.b16 %v1589
        %v1845 = vunpack.c.h.b16 %v1589
        %v1846 = vunpack.c.l.b16 %v1590
        %v1847 = vunpack.c.h.b16 %v1590
        %v1848 = vunpack.c.l.b16 %v1591
        %v1849 = vunpack.c.h.b16 %v1591
        %v1850 = vunpack.c.l.b16 %v1592
        %v1851 = vunpack.c.h.b16 %v1592
        %v1852 = vunpack.c.l.b16 %v1593
        %v1853 = vunpack.c.h.b16 %v1593
        %v1854 = vunpack.c.l.b16 %v1594
        %v1855 = vunpack.c.h.b16 %v1594
        %v1856 = vunpack.c.l.b16 %v1595
        %v1857 = vunpack.c.h.b16 %v1595
        %v1858 = vunpack.c.l.b16 %v1596
        %v1859 = vunpack.c.h.b16 %v1596
        %v1860 = vunpack.c.l.b16 %v1597
        %v1861 = vunpack.c.h.b16 %v1597
        %v1862 = vunpack.c.l.b16 %v1598
        %v1863 = vunpack.c.h.b16 %v1598
        %v1864 = vunpack.c.l.b16 %v1599
        %v1865 = vunpack.c.h.b16 %v1599
        %v1866 = vunpack.c.l.b16 %v1600
        %v1867 = vunpack.c.h.b16 %v1600
        %v1868 = vunpack.c.l.b16 %v1601
        %v1869 = vunpack.c.h.b16 %v1601
        %v1870 = vunpack.c.l.b16 %v1602
        %v1871 = vunpack.c.h.b16 %v1602
        %v1872 = vunpack.c.l.b16 %v1603
        %v1873 = vunpack.c.h.b16 %v1603
        %v1874 = vunpack.c.l.b16 %v1604
        %v1875 = vunpack.c.h.b16 %v1604
        %v1876 = vunpack.c.l.b16 %v1605
        %v1877 = vunpack.c.h.b16 %v1605
        %v1878 = vunpack.c.l.b16 %v1606
        %v1879 = vunpack.c.h.b16 %v1606
        %v1880 = vunpack.c.l.b16 %v1607
        %v1881 = vunpack.c.h.b16 %v1607
        %v1882 = vunpack.c.l.b16 %v1608
        %v1883 = vunpack.c.h.b16 %v1608
        %v1884 = vunpack.c.l.b16 %v1609
        %v1885 = vunpack.c.h.b16 %v1609
        %v1886 = vunpack.c.l.b16 %v1610
        %v1887 = vunpack.c.h.b16 %v1610
        %v1888 = vunpack.c.l.b16 %v1611
        %v1889 = vunpack.c.h.b16 %v1611
        %v1890 = vunpack.c.l.b16 %v1612
        %v1891 = vunpack.c.h.b16 %v1612
        %v1892 = vunpack.c.l.b16 %v1613
        %v1893 = vunpack.c.h.b16 %v1613
        %v1894 = vunpack.c.l.b16 %v1614
        %v1895 = vunpack.c.h.b16 %v1614
        %v1896 = vunpack.c.l.b16 %v1615
        %v1897 = vunpack.c.h.b16 %v1615
        %v1898 = vunpack.c.l.b16 %v1616
        %v1899 = vunpack.c.h.b16 %v1616
        %v1900 = vunpack.c.l.b16 %v1617
        %v1901 = vunpack.c.h.b16 %v1617
        %v1902 = vunpack.c.l.b16 %v1618
        %v1903 = vunpack.c.h.b16 %v1618
        %v1904 = vunpack.c.l.b16 %v1619
        %v1905 = vunpack.c.h.b16 %v1619
        %v1906 = vunpack.c.l.b16 %v1620
        %v1907 = vunpack.c.h.b16 %v1620
        %v1908 = vunpack.c.l.b16 %v1621
        %v1909 = vunpack.c.h.b16 %v1621
        %v1910 = vunpack.c.l.b16 %v1622
        %v1911 = vunpack.c.h.b16 %v1622
        %v1912 = vunpack.c.l.b16 %v1623
        %v1913 = vunpack.c.h.b16 %v1623
        %v1914 = vpack.c.b16 %v1724, %v1722
        %v1915 = vpack.c.b16 %v1725, %v1723
        %v1916 = vpack.c.b16 %v1728, %v1726
        %v1917 = vpack.c.b16 %v1729, %v1727
        %v1918 = vpack.c.b16 %v1732, %v1730
        %v1919 = vpack.c.b16 %v1733, %v1731
        %v1920 = vpack.c.b16 %v1736, %v1734
        %v1921 = vpack.c.b16 %v1737, %v1735
        %v1922 = vpack.c.b16 %v1740, %v1738
        %v1923 = vpack.c.b16 %v1741, %v1739
        %v1924 = vpack.c.b16 %v1744, %v1742
        %v1925 = vpack.c.b16 %v1745, %v1743
        %v1926 = vpack.c.b16 %v1748, %v1746
        %v1927 = vpack.c.b16 %v1749, %v1747
        %v1928 = vpack.c.b16 %v1752, %v1750
        %v1929 = vpack.c.b16 %v1753, %v1751
        %v1930 = vpack.c.b16 %v1756, %v1754
        %v1931 = vpack.c.b16 %v1757, %v1755
        %v1932 = vpack.c.b16 %v1760, %v1758
        %v1933 = vpack.c.b16 %v1761, %v1759
        %v1934 = vpack.c.b16 %v1764, %v1762
        %v1935 = vpack.c.b16 %v1765, %v1763
        %v1936 = vpack.c.b16 %v1768, %v1766
        %v1937 = vpack.c.b16 %v1769, %v1767
        %v1938 = vpack.c.b16 %v1772, %v1770
        %v1939 = vpack.c.b16 %v1773, %v1771
        %v1940 = vpack.c.b16 %v1776, %v1774
        %v1941 = vpack.c.b16 %v1777, %v1775
        %v1942 = vpack.c.b16 %v1780, %v1778
        %v1943 = vpack.c.b16 %v1781, %v1779
        %v1944 = vpack.c.b16 %v1784, %v1782
        %v1945 = vpack.c.b16 %v1785, %v1783
        %v1946 = vpack.c.b16 %v1788, %v1786
        %v1947 = vpack.c.b16 %v1789, %v1787
        %v1948 = vpack.c.b16 %v1792, %v1790
        %v1949 = vpack.c.b16 %v1793, %v1791
        %v1950 = vpack.c.b16 %v1796, %v1794
        %v1951 = vpack.c.b16 %v1797, %v1795
        %v1952 = vpack.c.b16 %v1800, %v1798
        %v1953 = vpack.c.b16 %v1801, %v1799
        %v1954 = vpack.c.b16 %v1804, %v1802
        %v1955 = vpack.c.b16 %v1805, %v1803
        %v1956 = vpack.c.b16 %v1808, %v1806
        %v1957 = vpack.c.b16 %v1809, %v1807
        %v1958 = vpack.c.b16 %v1812, %v1810
        %v1959 = vpack.c.b16 %v1813, %v1811
        %v1960 = vpack.c.b16 %v1816, %v1814
        %v1961 = vpack.c.b16 %v1817, %v1815
        %v1962 = vpack.c.b16 %v1820, %v1818
        %v1963 = vpack.c.b16 %v1821, %v1819
        %v1964 = vpack.c.b16 %v1824, %v1822
        %v1965 = vpack.c.b16 %v1825, %v1823
        %v1966 = vpack.c.b16 %v1828, %v1826
        %v1967 = vpack.c.b16 %v1829, %v1827
        %v1968 = vpack.c.b16 %v1832, %v1830
        %v1969 = vpack.c.b16 %v1833, %v1831
        %v1970 = vpack.c.b16 %v1836, %v1834
        %v1971 = vpack.c.b16 %v1837, %v1835
        %v1972 = vpack.c.b16 %v1840, %v1838
        %v1973 = vpack.c.b16 %v1841, %v1839
        %v1974 = vpack.c.b16 %v1844, %v1842
        %v1975 = vpack.c.b16 %v1845, %v1843
        %v1976 = vpack.c.b16 %v1848, %v1846
        %v1977 = vpack.c.b16 %v1849, %v1847
        %v1978 = vpack.c.b16 %v1852, %v1850
        %v1979 = vpack.c.b16 %v1853, %v1851
        %v1980 = vpack.c.b16 %v1856, %v1854
        %v1981 = vpack.c.b16 %v1857, %v1855
        %v1982 = vpack.c.b16 %v1860, %v1858
        %v1983 = vpack.c.b16 %v1861, %v1859
        %v1984 = vpack.c.b16 %v1864, %v1862
        %v1985 = vpack.c.b16 %v1865, %v1863
        %v1986 = vpack.c.b16 %v1868, %v1866
        %v1987 = vpack.c.b16 %v1869, %v1867
        %v1988 = vpack.c.b16 %v1872, %v1870
        %v1989 = vpack.c.b16 %v1873, %v1871
        %v1990 = vpack.c.b16 %v1876, %v1874
        %v1991 = vpack.c.b16 %v1877, %v1875
        %v1992 = vpack.c.b16 %v1880, %v1878
        %v1993 = vpack.c.b16 %v1881, %v1879
        %v1994 = vpack.c.b16 %v1884, %v1882
        %v1995 = vpack.c.b16 %v1885, %v1883
        %v1996 = vpack.c.b16 %v1888, %v1886
        %v1997 = vpack.c.b16 %v1889, %v1887
        %v1998 = vpack.c.b16 %v1892, %v1890
        %v1999 = vpack.c.b16 %v1893, %v1891
        %v2000 = vpack.c.b16 %v1896, %v1894
        %v2001 = vpack.c.b16 %v1897, %v1895
        %v2002 = vpack.c.b16 %v1900, %v1898
        %v2003 = vpack.c.b16 %v1901, %v1899
        %v2004 = vpack.c.b16 %v1904, %v1902
        %v2005 = vpack.c.b16 %v1905, %v1903
        %v2006 = vpack.c.b16 %v1908, %v1906
        %v2007 = vpack.c.b16 %v1909, %v1907
        %v2008 = vpack.c.b16 %v1912, %v1910
        %v2009 = vpack.c.b16 %v1913, %v1911
        %2106 = vmatpush.bf16.msra.mxu0 %v1928
        %2107 = vmatpush.bf16.msra.mxu0 %v1926
        %2108 = vmatpush.bf16.msra.mxu0 %v1924
        %2109 = vmatpush.bf16.msra.mxu0 %v1922
        %2110 = vmatpush.bf16.msra.mxu0 %v1920
        %2111 = vmatpush.bf16.msra.mxu0 %v1918
        %2112 = vmatpush.bf16.msra.mxu0 %v1916
        %2113 = vmatpush.bf16.msra.mxu0 %v1914
        %2114 = vmatmul.bf16.gmra.mxu0 %v1521
        %v2115 = vpop.f32.mrf.mxu0
        %v2116 = vadd.f32 %v1624, %v2115
        %v2117 = vpop.f32.mrf.mxu0
        %v2118 = vadd.f32 %v1624, %v2117
        %2119 = vdwg.mxu0
        %2120 = vmatpush.bf16.msra.mxu0 %v1944
        %2121 = vmatpush.bf16.msra.mxu0 %v1942
        %2122 = vmatpush.bf16.msra.mxu0 %v1940
        %2123 = vmatpush.bf16.msra.mxu0 %v1938
        %2124 = vmatpush.bf16.msra.mxu0 %v1936
        %2125 = vmatpush.bf16.msra.mxu0 %v1934
        %2126 = vmatpush.bf16.msra.mxu0 %v1932
        %2127 = vmatpush.bf16.msra.mxu0 %v1930
        %2128 = vmatmul.bf16.gmra.mxu0 %v1522
        %v2129 = vpop.f32.mrf.mxu0
        %v2130 = vadd.f32 %v2116, %v2129
        %v2131 = vpop.f32.mrf.mxu0
        %v2132 = vadd.f32 %v2118, %v2131
        %2133 = vdwg.mxu0
        %2134 = vmatpush.bf16.msra.mxu0 %v1960
        %2135 = vmatpush.bf16.msra.mxu0 %v1958
        %2136 = vmatpush.bf16.msra.mxu0 %v1956
        %2137 = vmatpush.bf16.msra.mxu0 %v1954
        %2138 = vmatpush.bf16.msra.mxu0 %v1952
        %2139 = vmatpush.bf16.msra.mxu0 %v1950
        %2140 = vmatpush.bf16.msra.mxu0 %v1948
        %2141 = vmatpush.bf16.msra.mxu0 %v1946
        %2142 = vmatmul.bf16.gmra.mxu0 %v1523
        %v2143 = vpop.f32.mrf.mxu0
        %v2144 = vadd.f32 %v2130, %v2143
        %v2145 = vpop.f32.mrf.mxu0
        %v2146 = vadd.f32 %v2132, %v2145
        %2147 = vdwg.mxu0
        %2148 = vmatpush.bf16.msra.mxu0 %v1976
        %2149 = vmatpush.bf16.msra.mxu0 %v1974
        %2150 = vmatpush.bf16.msra.mxu0 %v1972
        %2151 = vmatpush.bf16.msra.mxu0 %v1970
        %2152 = vmatpush.bf16.msra.mxu0 %v1968
        %2153 = vmatpush.bf16.msra.mxu0 %v1966
        %2154 = vmatpush.bf16.msra.mxu0 %v1964
        %2155 = vmatpush.bf16.msra.mxu0 %v1962
        %2156 = vmatmul.bf16.gmra.mxu0 %v1524
        %v2157 = vpop.f32.mrf.mxu0
        %v2158 = vadd.f32 %v2144, %v2157
        %v2159 = vpop.f32.mrf.mxu0
        %v2160 = vadd.f32 %v2146, %v2159
        %2161 = vdwg.mxu0
        %2162 = vmatpush.bf16.msra.mxu0 %v1992
        %2163 = vmatpush.bf16.msra.mxu0 %v1990
        %2164 = vmatpush.bf16.msra.mxu0 %v1988
        %2165 = vmatpush.bf16.msra.mxu0 %v1986
        %2166 = vmatpush.bf16.msra.mxu0 %v1984
        %2167 = vmatpush.bf16.msra.mxu0 %v1982
        %2168 = vmatpush.bf16.msra.mxu0 %v1980
        %2169 = vmatpush.bf16.msra.mxu0 %v1978
        %2170 = vmatmul.bf16.gmra.mxu0 %v1525
        %v2171 = vpop.f32.mrf.mxu0
        %v2172 = vadd.f32 %v2158, %v2171
        %v2173 = vpop.f32.mrf.mxu0
        %v2174 = vadd.f32 %v2160, %v2173
        %2175 = vdwg.mxu0
        %2176 = vmatpush.bf16.msra.mxu0 %v2008
        %2177 = vmatpush.bf16.msra.mxu0 %v2006
        %2178 = vmatpush.bf16.msra.mxu0 %v2004
        %2179 = vmatpush.bf16.msra.mxu0 %v2002
        %2180 = vmatpush.bf16.msra.mxu0 %v2000
        %2181 = vmatpush.bf16.msra.mxu0 %v1998
        %2182 = vmatpush.bf16.msra.mxu0 %v1996
        %2183 = vmatpush.bf16.msra.mxu0 %v1994
        %2184 = vmatmul.bf16.gmra.mxu0 %v1526
        %v2185 = vpop.f32.mrf.mxu0
        %v2186 = vadd.f32 %v2172, %v2185
        %v2187 = vpop.f32.mrf.mxu0
        %v2188 = vadd.f32 %v2174, %v2187
        %2189 = vdwg.mxu0
        %2190 = vmatpush.bf16.msra.mxu0 %v1929
        %2191 = vmatpush.bf16.msra.mxu0 %v1927
        %2192 = vmatpush.bf16.msra.mxu0 %v1925
        %2193 = vmatpush.bf16.msra.mxu0 %v1923
        %2194 = vmatpush.bf16.msra.mxu0 %v1921
        %2195 = vmatpush.bf16.msra.mxu0 %v1919
        %2196 = vmatpush.bf16.msra.mxu0 %v1917
        %2197 = vmatpush.bf16.msra.mxu0 %v1915
        %2198 = vmatmul.bf16.gmra.mxu0 %v1521
        %v2199 = vpop.f32.mrf.mxu0
        %v2200 = vadd.f32 %v1625, %v2199
        %v2201 = vpop.f32.mrf.mxu0
        %v2202 = vadd.f32 %v1625, %v2201
        %2203 = vdwg.mxu0
        %2204 = vmatpush.bf16.msra.mxu0 %v1945
        %2205 = vmatpush.bf16.msra.mxu0 %v1943
        %2206 = vmatpush.bf16.msra.mxu0 %v1941
        %2207 = vmatpush.bf16.msra.mxu0 %v1939
        %2208 = vmatpush.bf16.msra.mxu0 %v1937
        %2209 = vmatpush.bf16.msra.mxu0 %v1935
        %2210 = vmatpush.bf16.msra.mxu0 %v1933
        %2211 = vmatpush.bf16.msra.mxu0 %v1931
        %2212 = vmatmul.bf16.gmra.mxu0 %v1522
        %v2213 = vpop.f32.mrf.mxu0
        %v2214 = vadd.f32 %v2200, %v2213
        %v2215 = vpop.f32.mrf.mxu0
        %v2216 = vadd.f32 %v2202, %v2215
        %2217 = vdwg.mxu0
        %2218 = vmatpush.bf16.msra.mxu0 %v1961
        %2219 = vmatpush.bf16.msra.mxu0 %v1959
        %2220 = vmatpush.bf16.msra.mxu0 %v1957
        %2221 = vmatpush.bf16.msra.mxu0 %v1955
        %2222 = vmatpush.bf16.msra.mxu0 %v1953
        %2223 = vmatpush.bf16.msra.mxu0 %v1951
        %2224 = vmatpush.bf16.msra.mxu0 %v1949
        %2225 = vmatpush.bf16.msra.mxu0 %v1947
        %2226 = vmatmul.bf16.gmra.mxu0 %v1523
        %v2227 = vpop.f32.mrf.mxu0
        %v2228 = vadd.f32 %v2214, %v2227
        %v2229 = vpop.f32.mrf.mxu0
        %v2230 = vadd.f32 %v2216, %v2229
        %2231 = vdwg.mxu0
        %2232 = vmatpush.bf16.msra.mxu0 %v1977
        %2233 = vmatpush.bf16.msra.mxu0 %v1975
        %2234 = vmatpush.bf16.msra.mxu0 %v1973
        %2235 = vmatpush.bf16.msra.mxu0 %v1971
        %2236 = vmatpush.bf16.msra.mxu0 %v1969
        %2237 = vmatpush.bf16.msra.mxu0 %v1967
        %2238 = vmatpush.bf16.msra.mxu0 %v1965
        %2239 = vmatpush.bf16.msra.mxu0 %v1963
        %2240 = vmatmul.bf16.gmra.mxu0 %v1524
        %v2241 = vpop.f32.mrf.mxu0
        %v2242 = vadd.f32 %v2228, %v2241
        %v2243 = vpop.f32.mrf.mxu0
        %v2244 = vadd.f32 %v2230, %v2243
        %2245 = vdwg.mxu0
        %2246 = vmatpush.bf16.msra.mxu0 %v1993
        %2247 = vmatpush.bf16.msra.mxu0 %v1991
        %2248 = vmatpush.bf16.msra.mxu0 %v1989
        %2249 = vmatpush.bf16.msra.mxu0 %v1987
        %2250 = vmatpush.bf16.msra.mxu0 %v1985
        %2251 = vmatpush.bf16.msra.mxu0 %v1983
        %2252 = vmatpush.bf16.msra.mxu0 %v1981
        %2253 = vmatpush.bf16.msra.mxu0 %v1979
        %2254 = vmatmul.bf16.gmra.mxu0 %v1525
        %v2255 = vpop.f32.mrf.mxu0
        %v2256 = vadd.f32 %v2242, %v2255
        %v2257 = vpop.f32.mrf.mxu0
        %v2258 = vadd.f32 %v2244, %v2257
        %2259 = vdwg.mxu0
        %2260 = vmatpush.bf16.msra.mxu0 %v2009
        %2261 = vmatpush.bf16.msra.mxu0 %v2007
        %2262 = vmatpush.bf16.msra.mxu0 %v2005
        %2263 = vmatpush.bf16.msra.mxu0 %v2003
        %2264 = vmatpush.bf16.msra.mxu0 %v2001
        %2265 = vmatpush.bf16.msra.mxu0 %v1999
        %2266 = vmatpush.bf16.msra.mxu0 %v1997
        %2267 = vmatpush.bf16.msra.mxu0 %v1995
        %2268 = vmatmul.bf16.gmra.mxu0 %v1526
        %v2269 = vpop.f32.mrf.mxu0
        %v2270 = vadd.f32 %v2256, %v2269
        %v2271 = vpop.f32.mrf.mxu0
        %v2272 = vadd.f32 %v2258, %v2271
        %2273 = vdwg.mxu0
        %v2274 = vmul.f32 %v2186, %v317
        %v2275 = vmul.f32 %v2270, %v318
        %v2276 = vmul.f32 %v2188, %v319
        %v2277 = vmul.f32 %v2272, %v320
        %v2278 = vadd.f32 %v2274, %v2276
        %v2279 = vrot.slane %v2278, 4
        %v2280 = vadd.f32 %v2278, %v2279
        %v2281 = vrot.slane %v2280, 2
        %v2282 = vadd.f32 %v2280, %v2281
        %v2283 = vrot.slane %v2282, 1
        %v2284 = vadd.f32 %v2282, %v2283
        %v2285 = vadd.f32 %v2275, %v2277
        %v2286 = vrot.slane %v2285, 4
        %v2287 = vadd.f32 %v2285, %v2286
        %v2288 = vrot.slane %v2287, 2
        %v2289 = vadd.f32 %v2287, %v2288
        %v2290 = vrot.slane %v2289, 1
        %v2291 = vadd.f32 %v2289, %v2290
        %v2292 = vmul.f32 %v2274, %v2186
        %v2293 = vmul.f32 %v2275, %v2270
        %v2294 = vmul.f32 %v2276, %v2188
        %v2295 = vmul.f32 %v2277, %v2272
        %v2296 = vadd.f32 %v2292, %v2294
        %v2297 = vrot.slane %v2296, 4
        %v2298 = vadd.f32 %v2296, %v2297
        %v2299 = vrot.slane %v2298, 2
        %v2300 = vadd.f32 %v2298, %v2299
        %v2301 = vrot.slane %v2300, 1
        %v2302 = vadd.f32 %v2300, %v2301
        %v2303 = vadd.f32 %v2293, %v2295
        %v2304 = vrot.slane %v2303, 4
        %v2305 = vadd.f32 %v2303, %v2304
        %v2306 = vrot.slane %v2305, 2
        %v2307 = vadd.f32 %v2305, %v2306
        %v2308 = vrot.slane %v2307, 1
        %v2309 = vadd.f32 %v2307, %v2308
        %v2310 = vsel %vm1290, %v2284, %v2302
        %v2311 = vsel %vm1290, %v2291, %v2309
        %2312 = vmatpush.msra.mxu0 %v351
        %2313 = vmatpush.msra.mxu0 %v349
        %2314 = vmatpush.msra.mxu0 %v347
        %2315 = vmatpush.msra.mxu0 %v345
        %2316 = vmatpush.msra.mxu0 %v343
        %2317 = vmatpush.msra.mxu0 %v341
        %2318 = vmatpush.msra.mxu0 %v339
        %2319 = vmatpush.msra.mxu0 %v337
        %2320 = vmatpush.msra.mxu0 %v335
        %2321 = vmatpush.msra.mxu0 %v333
        %2322 = vmatpush.msra.mxu0 %v331
        %2323 = vmatpush.msra.mxu0 %v329
        %2324 = vmatpush.msra.mxu0 %v327
        %2325 = vmatpush.msra.mxu0 %v325
        %2326 = vmatpush.msra.mxu0 %v323
        %2327 = vmatpush.msra.mxu0 %v321
        %2328 = vmatmul.f32.gmra.mxu0 %v2310
        %v2329 = vpop.f32.mrf.mxu0
        %v2330 = vadd.f32 0.0, %v2329
        %2331 = vdwg.mxu0
        %2332 = vmatpush.msra.mxu0 %v383
        %2333 = vmatpush.msra.mxu0 %v381
        %2334 = vmatpush.msra.mxu0 %v379
        %2335 = vmatpush.msra.mxu0 %v377
        %2336 = vmatpush.msra.mxu0 %v375
        %2337 = vmatpush.msra.mxu0 %v373
        %2338 = vmatpush.msra.mxu0 %v371
        %2339 = vmatpush.msra.mxu0 %v369
        %2340 = vmatpush.msra.mxu0 %v367
        %2341 = vmatpush.msra.mxu0 %v365
        %2342 = vmatpush.msra.mxu0 %v363
        %2343 = vmatpush.msra.mxu0 %v361
        %2344 = vmatpush.msra.mxu0 %v359
        %2345 = vmatpush.msra.mxu0 %v357
        %2346 = vmatpush.msra.mxu0 %v355
        %2347 = vmatpush.msra.mxu0 %v353
        %2348 = vmatmul.f32.gmra.mxu0 %v2311
        %v2349 = vpop.f32.mrf.mxu0
        %v2350 = vadd.f32 %v2330, %v2349
        %2351 = vdwg.mxu0
        %2352 = vmatpush.msra.mxu0 %v352
        %2353 = vmatpush.msra.mxu0 %v350
        %2354 = vmatpush.msra.mxu0 %v348
        %2355 = vmatpush.msra.mxu0 %v346
        %2356 = vmatpush.msra.mxu0 %v344
        %2357 = vmatpush.msra.mxu0 %v342
        %2358 = vmatpush.msra.mxu0 %v340
        %2359 = vmatpush.msra.mxu0 %v338
        %2360 = vmatpush.msra.mxu0 %v336
        %2361 = vmatpush.msra.mxu0 %v334
        %2362 = vmatpush.msra.mxu0 %v332
        %2363 = vmatpush.msra.mxu0 %v330
        %2364 = vmatpush.msra.mxu0 %v328
        %2365 = vmatpush.msra.mxu0 %v326
        %2366 = vmatpush.msra.mxu0 %v324
        %2367 = vmatpush.msra.mxu0 %v322
        %2368 = vmatmul.f32.gmra.mxu0 %v2310
        %v2369 = vpop.f32.mrf.mxu0
        %v2370 = vadd.f32 0.0, %v2369
        %2371 = vdwg.mxu0
        %2372 = vmatpush.msra.mxu0 %v384
        %2373 = vmatpush.msra.mxu0 %v382
        %2374 = vmatpush.msra.mxu0 %v380
        %2375 = vmatpush.msra.mxu0 %v378
        %2376 = vmatpush.msra.mxu0 %v376
        %2377 = vmatpush.msra.mxu0 %v374
        %2378 = vmatpush.msra.mxu0 %v372
        %2379 = vmatpush.msra.mxu0 %v370
        %2380 = vmatpush.msra.mxu0 %v368
        %2381 = vmatpush.msra.mxu0 %v366
        %2382 = vmatpush.msra.mxu0 %v364
        %2383 = vmatpush.msra.mxu0 %v362
        %2384 = vmatpush.msra.mxu0 %v360
        %2385 = vmatpush.msra.mxu0 %v358
        %2386 = vmatpush.msra.mxu0 %v356
        %2387 = vmatpush.msra.mxu0 %v354
        %2388 = vmatmul.f32.gmra.mxu0 %v2311
        %v2389 = vpop.f32.mrf.mxu0
        %v2390 = vadd.f32 %v2370, %v2389
        %2391 = vdwg.mxu0
        %v2392 = vmul.f32 %v2350, 0.015625
        %v2393 = vmul.f32 %v2390, 0.015625
        %v2394 = vmul.f32 %v2392, %v2392
        %v2395 = vmul.f32 %v2393, %v2393
        %v2398 = vrot.slane %v2394, 7
        %v2399 = vrot.slane %v2395, 7
        %v2402 = vsub.f32 %v2392, %v2398
        %v2403 = vsub.f32 %v2393, %v2399
        %v2404 = vperm.slane %v2392, 0
        %v2405 = vperm.slane %v2393, 0
        %v2406 = vsub.f32 %v2186, %v2404
        %v2407 = vsub.f32 %v2270, %v2405
        %v2408 = vsub.f32 %v2188, %v2404
        %v2409 = vsub.f32 %v2272, %v2405
        %v2410 = vadd.f32 %v2402, 1e-05
        %v2411 = vadd.f32 %v2403, 1e-05
        %v2412 = vrsqrt.pop %v2410
        %v2413 = vmul.f32 %v2412, %v2410
        %v2414 = vmul.f32 %v2413, %v2412
        %v2415 = vmul.f32 0.5, %v2414
        %v2416 = vsub.f32 1.5, %v2415
        %v2417 = vmul.f32 %v2412, %v2416
        %vm2418 = vweird.f32 %v2410
        %vm2419 = vweird.f32 %v2412
        %vm2420 = vmor %vm2418, %vm2419
        %v2421 = vsel %vm2420, %v2412, %v2417
        %v2422 = vrsqrt.pop %v2411
        %v2423 = vmul.f32 %v2422, %v2411
        %v2424 = vmul.f32 %v2423, %v2422
        %v2425 = vmul.f32 0.5, %v2424
        %v2426 = vsub.f32 1.5, %v2425
        %v2427 = vmul.f32 %v2422, %v2426
        %vm2428 = vweird.f32 %v2411
        %vm2429 = vweird.f32 %v2422
        %vm2430 = vmor %vm2428, %vm2429
        %v2431 = vsel %vm2430, %v2422, %v2427
        %v2432 = vperm.slane %v2421, 1
        %v2433 = vperm.slane %v2431, 1
        %v2434 = vmul.f32 %v2406, %v2432
        %v2435 = vmul.f32 %v2407, %v2433
        %v2436 = vmul.f32 %v2408, %v2432
        %v2437 = vmul.f32 %v2409, %v2433
        %v2438 = vperm.slane %v398, 2
        %v2439 = vperm.slane %v399, 2
        %v2440 = vmul.f32 %v2434, %v2438
        %v2441 = vmul.f32 %v2435, %v2439
        %v2442 = vmul.f32 %v2436, %v2438
        %v2443 = vmul.f32 %v2437, %v2439
        %v2444 = vperm.slane %v398, 3
        %v2445 = vperm.slane %v399, 3
        %v2446 = vadd.f32 %v2440, %v2444
        %v2447 = vadd.f32 %v2441, %v2445
        %v2448 = vadd.f32 %v2442, %v2444
        %v2449 = vadd.f32 %v2443, %v2445
        %v2450 = vadd.f32 %v402, %v2446
        %v2451 = vadd.f32 %v403, %v2447
        %v2452 = vadd.f32 %v404, %v2448
        %v2453 = vadd.f32 %v405, %v2449
        %v2454 = vmul.f32 %v2450, %v317
        %v2455 = vmul.f32 %v2451, %v318
        %v2456 = vmul.f32 %v2452, %v319
        %v2457 = vmul.f32 %v2453, %v320
        %v2458 = vpack.c.bf16 %v2456, %v2454
        %v2459 = vpack.c.bf16 %v2457, %v2455
        %2460 = vmatpush.bf16.msra.mxu0 0
        %2461 = vmatpush.bf16.msra.mxu0 0
        %2462 = vmatpush.bf16.msra.mxu0 0
        %2463 = vmatpush.bf16.msra.mxu0 0
        %2464 = vmatpush.bf16.msra.mxu0 0
        %2465 = vmatpush.bf16.msra.mxu0 0
        %2466 = vmatpush.bf16.msra.mxu0 0
        %2467 = vmatpush.bf16.msra.mxu0 %v2458
        %2468 = vmatmul.bf16.gmra.mxu0 %v410
        %v2469 = vpop.f32.mrf.mxu0
        %v2470 = vadd.f32 0.0, %v2469
        %v2471 = vpop.f32.mrf.mxu0
        %v2472 = vadd.f32 0.0, %v2471
        %2473 = vdwg.mxu0
        %2474 = vmatpush.bf16.msra.mxu0 0
        %2475 = vmatpush.bf16.msra.mxu0 0
        %2476 = vmatpush.bf16.msra.mxu0 0
        %2477 = vmatpush.bf16.msra.mxu0 0
        %2478 = vmatpush.bf16.msra.mxu0 0
        %2479 = vmatpush.bf16.msra.mxu0 0
        %2480 = vmatpush.bf16.msra.mxu0 0
        %2481 = vmatpush.bf16.msra.mxu0 %v2459
        %2482 = vmatmul.bf16.gmra.mxu0 %v410
        %v2483 = vpop.f32.mrf.mxu0
        %v2484 = vadd.f32 0.0, %v2483
        %v2485 = vpop.f32.mrf.mxu0
        %v2486 = vadd.f32 0.0, %v2485
        %2487 = vdwg.mxu0
        %2488 = vmatpush.bf16.msra.mxu0 0
        %2489 = vmatpush.bf16.msra.mxu0 0
        %2490 = vmatpush.bf16.msra.mxu0 0
        %2491 = vmatpush.bf16.msra.mxu0 0
        %2492 = vmatpush.bf16.msra.mxu0 0
        %2493 = vmatpush.bf16.msra.mxu0 0
        %2494 = vmatpush.bf16.msra.mxu0 0
        %2495 = vmatpush.bf16.msra.mxu0 %v2458
        %2496 = vmatmul.bf16.gmra.mxu0 %v441
        %v2497 = vpop.f32.mrf.mxu0
        %v2498 = vadd.f32 0.0, %v2497
        %v2499 = vpop.f32.mrf.mxu0
        %v2500 = vadd.f32 0.0, %v2499
        %2501 = vdwg.mxu0
        %2502 = vmatpush.bf16.msra.mxu0 0
        %2503 = vmatpush.bf16.msra.mxu0 0
        %2504 = vmatpush.bf16.msra.mxu0 0
        %2505 = vmatpush.bf16.msra.mxu0 0
        %2506 = vmatpush.bf16.msra.mxu0 0
        %2507 = vmatpush.bf16.msra.mxu0 0
        %2508 = vmatpush.bf16.msra.mxu0 0
        %2509 = vmatpush.bf16.msra.mxu0 %v2459
        %2510 = vmatmul.bf16.gmra.mxu0 %v441
        %v2511 = vpop.f32.mrf.mxu0
        %v2512 = vadd.f32 0.0, %v2511
        %v2513 = vpop.f32.mrf.mxu0
        %v2514 = vadd.f32 0.0, %v2513
        %2515 = vdwg.mxu0
        %2516 = vmatpush.bf16.msra.mxu0 0
        %2517 = vmatpush.bf16.msra.mxu0 0
        %2518 = vmatpush.bf16.msra.mxu0 0
        %2519 = vmatpush.bf16.msra.mxu0 0
        %2520 = vmatpush.bf16.msra.mxu0 0
        %2521 = vmatpush.bf16.msra.mxu0 0
        %2522 = vmatpush.bf16.msra.mxu0 0
        %2523 = vmatpush.bf16.msra.mxu0 %v2458
        %2524 = vmatmul.bf16.gmra.mxu0 %v472
        %v2525 = vpop.f32.mrf.mxu0
        %v2526 = vadd.f32 0.0, %v2525
        %v2527 = vpop.f32.mrf.mxu0
        %v2528 = vadd.f32 0.0, %v2527
        %2529 = vdwg.mxu0
        %2530 = vmatpush.bf16.msra.mxu0 0
        %2531 = vmatpush.bf16.msra.mxu0 0
        %2532 = vmatpush.bf16.msra.mxu0 0
        %2533 = vmatpush.bf16.msra.mxu0 0
        %2534 = vmatpush.bf16.msra.mxu0 0
        %2535 = vmatpush.bf16.msra.mxu0 0
        %2536 = vmatpush.bf16.msra.mxu0 0
        %2537 = vmatpush.bf16.msra.mxu0 %v2459
        %2538 = vmatmul.bf16.gmra.mxu0 %v472
        %v2539 = vpop.f32.mrf.mxu0
        %v2540 = vadd.f32 0.0, %v2539
        %v2541 = vpop.f32.mrf.mxu0
        %v2542 = vadd.f32 0.0, %v2541
        %2543 = vdwg.mxu0
        %v2544 = vpack.c.bf16 %v2472, %v2470
        %v2545 = vpack.c.bf16 %v2486, %v2484
        %v2546 = vpack.c.bf16 %v2500, %v2498
        %v2547 = vpack.c.bf16 %v2514, %v2512
        %v2548 = vpack.c.bf16 %v2528, %v2526
        %v2549 = vpack.c.bf16 %v2542, %v2540
        %s2550 = scalar_lea.vmem [#allocation2], 1536
        %v2551 = vld [vmem:[%s2550] sm:$0xff]
        %v2552 = vld [vmem:[%s2550 + $0x8] sm:$0xff]
        %v2553 = vld [vmem:[%s2550 + $0x10] sm:$0xff]
        %v2554 = vld [vmem:[%s2550 + $0x18] sm:$0xff]
        %v2555 = vld [vmem:[%s2550 + $0x20] sm:$0xff]
        %v2556 = vld [vmem:[%s2550 + $0x28] sm:$0xff]
        %v2557 = vld [vmem:[%s2550 + $0x30] sm:$0xff]
        %v2558 = vld [vmem:[%s2550 + $0x38] sm:$0xff]
        %v2559 = vld [vmem:[%s2550 + $0x40] sm:$0xff]
        %v2560 = vld [vmem:[%s2550 + $0x48] sm:$0xff]
        %v2561 = vld [vmem:[%s2550 + $0x50] sm:$0xff]
        %v2562 = vld [vmem:[%s2550 + $0x58] sm:$0xff]
        %v2563 = vld [vmem:[%s2550 + $0x60] sm:$0xff]
        %v2564 = vld [vmem:[%s2550 + $0x68] sm:$0xff]
        %v2565 = vld [vmem:[%s2550 + $0x70] sm:$0xff]
        %v2566 = vld [vmem:[%s2550 + $0x78] sm:$0xff]
        %v2567 = vld [vmem:[%s2550 + $0x80] sm:$0xff]
        %v2568 = vld [vmem:[%s2550 + $0x88] sm:$0xff]
        %v2569 = vld [vmem:[%s2550 + $0x90] sm:$0xff]
        %v2570 = vld [vmem:[%s2550 + $0x98] sm:$0xff]
        %v2571 = vld [vmem:[%s2550 + $0xa0] sm:$0xff]
        %v2572 = vld [vmem:[%s2550 + $0xa8] sm:$0xff]
        %v2573 = vld [vmem:[%s2550 + $0xb0] sm:$0xff]
        %v2574 = vld [vmem:[%s2550 + $0xb8] sm:$0xff]
        %v2575 = vld [vmem:[%s2550 + $0xc0] sm:$0xff]
        %v2576 = vld [vmem:[%s2550 + $0xc8] sm:$0xff]
        %v2577 = vld [vmem:[%s2550 + $0xd0] sm:$0xff]
        %v2578 = vld [vmem:[%s2550 + $0xd8] sm:$0xff]
        %v2579 = vld [vmem:[%s2550 + $0xe0] sm:$0xff]
        %v2580 = vld [vmem:[%s2550 + $0xe8] sm:$0xff]
        %v2581 = vld [vmem:[%s2550 + $0xf0] sm:$0xff]
        %v2582 = vld [vmem:[%s2550 + $0xf8] sm:$0xff]
        %v2583 = vld [vmem:[%s2550 + $0x100] sm:$0xff]
        %v2584 = vld [vmem:[%s2550 + $0x108] sm:$0xff]
        %v2585 = vld [vmem:[%s2550 + $0x110] sm:$0xff]
        %v2586 = vld [vmem:[%s2550 + $0x118] sm:$0xff]
        %v2587 = vld [vmem:[%s2550 + $0x120] sm:$0xff]
        %v2588 = vld [vmem:[%s2550 + $0x128] sm:$0xff]
        %v2589 = vld [vmem:[%s2550 + $0x130] sm:$0xff]
        %v2590 = vld [vmem:[%s2550 + $0x138] sm:$0xff]
        %v2591 = vld [vmem:[%s2550 + $0x140] sm:$0xff]
        %v2592 = vld [vmem:[%s2550 + $0x148] sm:$0xff]
        %v2593 = vld [vmem:[%s2550 + $0x150] sm:$0xff]
        %v2594 = vld [vmem:[%s2550 + $0x158] sm:$0xff]
        %v2595 = vld [vmem:[%s2550 + $0x160] sm:$0xff]
        %v2596 = vld [vmem:[%s2550 + $0x168] sm:$0xff]
        %v2597 = vld [vmem:[%s2550 + $0x170] sm:$0xff]
        %v2598 = vld [vmem:[%s2550 + $0x178] sm:$0xff]
        %v2599 = vld [vmem:[%s2550 + $0x180] sm:$0xff]
        %v2600 = vld [vmem:[%s2550 + $0x188] sm:$0xff]
        %v2601 = vld [vmem:[%s2550 + $0x190] sm:$0xff]
        %v2602 = vld [vmem:[%s2550 + $0x198] sm:$0xff]
        %v2603 = vld [vmem:[%s2550 + $0x1a0] sm:$0xff]
        %v2604 = vld [vmem:[%s2550 + $0x1a8] sm:$0xff]
        %v2605 = vld [vmem:[%s2550 + $0x1b0] sm:$0xff]
        %v2606 = vld [vmem:[%s2550 + $0x1b8] sm:$0xff]
        %v2607 = vld [vmem:[%s2550 + $0x1c0] sm:$0xff]
        %v2608 = vld [vmem:[%s2550 + $0x1c8] sm:$0xff]
        %v2609 = vld [vmem:[%s2550 + $0x1d0] sm:$0xff]
        %v2610 = vld [vmem:[%s2550 + $0x1d8] sm:$0xff]
        %v2611 = vld [vmem:[%s2550 + $0x1e0] sm:$0xff]
        %v2612 = vld [vmem:[%s2550 + $0x1e8] sm:$0xff]
        %v2613 = vld [vmem:[%s2550 + $0x1f0] sm:$0xff]
        %v2614 = vld [vmem:[%s2550 + $0x1f8] sm:$0xff]
        %v2615 = vld [vmem:[%s2550 + $0x200] sm:$0xff]
        %v2616 = vld [vmem:[%s2550 + $0x208] sm:$0xff]
        %v2617 = vld [vmem:[%s2550 + $0x210] sm:$0xff]
        %v2618 = vld [vmem:[%s2550 + $0x218] sm:$0xff]
        %v2619 = vld [vmem:[%s2550 + $0x220] sm:$0xff]
        %v2620 = vld [vmem:[%s2550 + $0x228] sm:$0xff]
        %v2621 = vld [vmem:[%s2550 + $0x230] sm:$0xff]
        %v2622 = vld [vmem:[%s2550 + $0x238] sm:$0xff]
        %v2623 = vld [vmem:[%s2550 + $0x240] sm:$0xff]
        %v2624 = vld [vmem:[%s2550 + $0x248] sm:$0xff]
        %v2625 = vld [vmem:[%s2550 + $0x250] sm:$0xff]
        %v2626 = vld [vmem:[%s2550 + $0x258] sm:$0xff]
        %v2627 = vld [vmem:[%s2550 + $0x260] sm:$0xff]
        %v2628 = vld [vmem:[%s2550 + $0x268] sm:$0xff]
        %v2629 = vld [vmem:[%s2550 + $0x270] sm:$0xff]
        %v2630 = vld [vmem:[%s2550 + $0x278] sm:$0xff]
        %v2631 = vld [vmem:[%s2550 + $0x280] sm:$0xff]
        %v2632 = vld [vmem:[%s2550 + $0x288] sm:$0xff]
        %v2633 = vld [vmem:[%s2550 + $0x290] sm:$0xff]
        %v2634 = vld [vmem:[%s2550 + $0x298] sm:$0xff]
        %v2635 = vld [vmem:[%s2550 + $0x2a0] sm:$0xff]
        %v2636 = vld [vmem:[%s2550 + $0x2a8] sm:$0xff]
        %v2637 = vld [vmem:[%s2550 + $0x2b0] sm:$0xff]
        %v2638 = vld [vmem:[%s2550 + $0x2b8] sm:$0xff]
        %v2639 = vld [vmem:[%s2550 + $0x2c0] sm:$0xff]
        %v2640 = vld [vmem:[%s2550 + $0x2c8] sm:$0xff]
        %v2641 = vld [vmem:[%s2550 + $0x2d0] sm:$0xff]
        %v2642 = vld [vmem:[%s2550 + $0x2d8] sm:$0xff]
        %v2643 = vld [vmem:[%s2550 + $0x2e0] sm:$0xff]
        %v2644 = vld [vmem:[%s2550 + $0x2e8] sm:$0xff]
        %v2645 = vld [vmem:[%s2550 + $0x2f0] sm:$0xff]
        %v2646 = vld [vmem:[%s2550 + $0x2f8] sm:$0xff]
        %v2647 = vperm.slane %v396, 2
        %v2648 = vperm.slane %v397, 2
        %v2745 = vunpack.c.l.b16 %v2551
        %v2746 = vunpack.c.h.b16 %v2551
        %v2747 = vunpack.c.l.b16 %v2552
        %v2748 = vunpack.c.h.b16 %v2552
        %v2749 = vunpack.c.l.b16 %v2553
        %v2750 = vunpack.c.h.b16 %v2553
        %v2751 = vunpack.c.l.b16 %v2554
        %v2752 = vunpack.c.h.b16 %v2554
        %v2753 = vunpack.c.l.b16 %v2555
        %v2754 = vunpack.c.h.b16 %v2555
        %v2755 = vunpack.c.l.b16 %v2556
        %v2756 = vunpack.c.h.b16 %v2556
        %v2757 = vunpack.c.l.b16 %v2557
        %v2758 = vunpack.c.h.b16 %v2557
        %v2759 = vunpack.c.l.b16 %v2558
        %v2760 = vunpack.c.h.b16 %v2558
        %v2761 = vunpack.c.l.b16 %v2559
        %v2762 = vunpack.c.h.b16 %v2559
        %v2763 = vunpack.c.l.b16 %v2560
        %v2764 = vunpack.c.h.b16 %v2560
        %v2765 = vunpack.c.l.b16 %v2561
        %v2766 = vunpack.c.h.b16 %v2561
        %v2767 = vunpack.c.l.b16 %v2562
        %v2768 = vunpack.c.h.b16 %v2562
        %v2769 = vunpack.c.l.b16 %v2563
        %v2770 = vunpack.c.h.b16 %v2563
        %v2771 = vunpack.c.l.b16 %v2564
        %v2772 = vunpack.c.h.b16 %v2564
        %v2773 = vunpack.c.l.b16 %v2565
        %v2774 = vunpack.c.h.b16 %v2565
        %v2775 = vunpack.c.l.b16 %v2566
        %v2776 = vunpack.c.h.b16 %v2566
        %v2777 = vunpack.c.l.b16 %v2567
        %v2778 = vunpack.c.h.b16 %v2567
        %v2779 = vunpack.c.l.b16 %v2568
        %v2780 = vunpack.c.h.b16 %v2568
        %v2781 = vunpack.c.l.b16 %v2569
        %v2782 = vunpack.c.h.b16 %v2569
        %v2783 = vunpack.c.l.b16 %v2570
        %v2784 = vunpack.c.h.b16 %v2570
        %v2785 = vunpack.c.l.b16 %v2571
        %v2786 = vunpack.c.h.b16 %v2571
        %v2787 = vunpack.c.l.b16 %v2572
        %v2788 = vunpack.c.h.b16 %v2572
        %v2789 = vunpack.c.l.b16 %v2573
        %v2790 = vunpack.c.h.b16 %v2573
        %v2791 = vunpack.c.l.b16 %v2574
        %v2792 = vunpack.c.h.b16 %v2574
        %v2793 = vunpack.c.l.b16 %v2575
        %v2794 = vunpack.c.h.b16 %v2575
        %v2795 = vunpack.c.l.b16 %v2576
        %v2796 = vunpack.c.h.b16 %v2576
        %v2797 = vunpack.c.l.b16 %v2577
        %v2798 = vunpack.c.h.b16 %v2577
        %v2799 = vunpack.c.l.b16 %v2578
        %v2800 = vunpack.c.h.b16 %v2578
        %v2801 = vunpack.c.l.b16 %v2579
        %v2802 = vunpack.c.h.b16 %v2579
        %v2803 = vunpack.c.l.b16 %v2580
        %v2804 = vunpack.c.h.b16 %v2580
        %v2805 = vunpack.c.l.b16 %v2581
        %v2806 = vunpack.c.h.b16 %v2581
        %v2807 = vunpack.c.l.b16 %v2582
        %v2808 = vunpack.c.h.b16 %v2582
        %v2809 = vunpack.c.l.b16 %v2583
        %v2810 = vunpack.c.h.b16 %v2583
        %v2811 = vunpack.c.l.b16 %v2584
        %v2812 = vunpack.c.h.b16 %v2584
        %v2813 = vunpack.c.l.b16 %v2585
        %v2814 = vunpack.c.h.b16 %v2585
        %v2815 = vunpack.c.l.b16 %v2586
        %v2816 = vunpack.c.h.b16 %v2586
        %v2817 = vunpack.c.l.b16 %v2587
        %v2818 = vunpack.c.h.b16 %v2587
        %v2819 = vunpack.c.l.b16 %v2588
        %v2820 = vunpack.c.h.b16 %v2588
        %v2821 = vunpack.c.l.b16 %v2589
        %v2822 = vunpack.c.h.b16 %v2589
        %v2823 = vunpack.c.l.b16 %v2590
        %v2824 = vunpack.c.h.b16 %v2590
        %v2825 = vunpack.c.l.b16 %v2591
        %v2826 = vunpack.c.h.b16 %v2591
        %v2827 = vunpack.c.l.b16 %v2592
        %v2828 = vunpack.c.h.b16 %v2592
        %v2829 = vunpack.c.l.b16 %v2593
        %v2830 = vunpack.c.h.b16 %v2593
        %v2831 = vunpack.c.l.b16 %v2594
        %v2832 = vunpack.c.h.b16 %v2594
        %v2833 = vunpack.c.l.b16 %v2595
        %v2834 = vunpack.c.h.b16 %v2595
        %v2835 = vunpack.c.l.b16 %v2596
        %v2836 = vunpack.c.h.b16 %v2596
        %v2837 = vunpack.c.l.b16 %v2597
        %v2838 = vunpack.c.h.b16 %v2597
        %v2839 = vunpack.c.l.b16 %v2598
        %v2840 = vunpack.c.h.b16 %v2598
        %v2841 = vunpack.c.l.b16 %v2599
        %v2842 = vunpack.c.h.b16 %v2599
        %v2843 = vunpack.c.l.b16 %v2600
        %v2844 = vunpack.c.h.b16 %v2600
        %v2845 = vunpack.c.l.b16 %v2601
        %v2846 = vunpack.c.h.b16 %v2601
        %v2847 = vunpack.c.l.b16 %v2602
        %v2848 = vunpack.c.h.b16 %v2602
        %v2849 = vunpack.c.l.b16 %v2603
        %v2850 = vunpack.c.h.b16 %v2603
        %v2851 = vunpack.c.l.b16 %v2604
        %v2852 = vunpack.c.h.b16 %v2604
        %v2853 = vunpack.c.l.b16 %v2605
        %v2854 = vunpack.c.h.b16 %v2605
        %v2855 = vunpack.c.l.b16 %v2606
        %v2856 = vunpack.c.h.b16 %v2606
        %v2857 = vunpack.c.l.b16 %v2607
        %v2858 = vunpack.c.h.b16 %v2607
        %v2859 = vunpack.c.l.b16 %v2608
        %v2860 = vunpack.c.h.b16 %v2608
        %v2861 = vunpack.c.l.b16 %v2609
        %v2862 = vunpack.c.h.b16 %v2609
        %v2863 = vunpack.c.l.b16 %v2610
        %v2864 = vunpack.c.h.b16 %v2610
        %v2865 = vunpack.c.l.b16 %v2611
        %v2866 = vunpack.c.h.b16 %v2611
        %v2867 = vunpack.c.l.b16 %v2612
        %v2868 = vunpack.c.h.b16 %v2612
        %v2869 = vunpack.c.l.b16 %v2613
        %v2870 = vunpack.c.h.b16 %v2613
        %v2871 = vunpack.c.l.b16 %v2614
        %v2872 = vunpack.c.h.b16 %v2614
        %v2873 = vunpack.c.l.b16 %v2615
        %v2874 = vunpack.c.h.b16 %v2615
        %v2875 = vunpack.c.l.b16 %v2616
        %v2876 = vunpack.c.h.b16 %v2616
        %v2877 = vunpack.c.l.b16 %v2617
        %v2878 = vunpack.c.h.b16 %v2617
        %v2879 = vunpack.c.l.b16 %v2618
        %v2880 = vunpack.c.h.b16 %v2618
        %v2881 = vunpack.c.l.b16 %v2619
        %v2882 = vunpack.c.h.b16 %v2619
        %v2883 = vunpack.c.l.b16 %v2620
        %v2884 = vunpack.c.h.b16 %v2620
        %v2885 = vunpack.c.l.b16 %v2621
        %v2886 = vunpack.c.h.b16 %v2621
        %v2887 = vunpack.c.l.b16 %v2622
        %v2888 = vunpack.c.h.b16 %v2622
        %v2889 = vunpack.c.l.b16 %v2623
        %v2890 = vunpack.c.h.b16 %v2623
        %v2891 = vunpack.c.l.b16 %v2624
        %v2892 = vunpack.c.h.b16 %v2624
        %v2893 = vunpack.c.l.b16 %v2625
        %v2894 = vunpack.c.h.b16 %v2625
        %v2895 = vunpack.c.l.b16 %v2626
        %v2896 = vunpack.c.h.b16 %v2626
        %v2897 = vunpack.c.l.b16 %v2627
        %v2898 = vunpack.c.h.b16 %v2627
        %v2899 = vunpack.c.l.b16 %v2628
        %v2900 = vunpack.c.h.b16 %v2628
        %v2901 = vunpack.c.l.b16 %v2629
        %v2902 = vunpack.c.h.b16 %v2629
        %v2903 = vunpack.c.l.b16 %v2630
        %v2904 = vunpack.c.h.b16 %v2630
        %v2905 = vunpack.c.l.b16 %v2631
        %v2906 = vunpack.c.h.b16 %v2631
        %v2907 = vunpack.c.l.b16 %v2632
        %v2908 = vunpack.c.h.b16 %v2632
        %v2909 = vunpack.c.l.b16 %v2633
        %v2910 = vunpack.c.h.b16 %v2633
        %v2911 = vunpack.c.l.b16 %v2634
        %v2912 = vunpack.c.h.b16 %v2634
        %v2913 = vunpack.c.l.b16 %v2635
        %v2914 = vunpack.c.h.b16 %v2635
        %v2915 = vunpack.c.l.b16 %v2636
        %v2916 = vunpack.c.h.b16 %v2636
        %v2917 = vunpack.c.l.b16 %v2637
        %v2918 = vunpack.c.h.b16 %v2637
        %v2919 = vunpack.c.l.b16 %v2638
        %v2920 = vunpack.c.h.b16 %v2638
        %v2921 = vunpack.c.l.b16 %v2639
        %v2922 = vunpack.c.h.b16 %v2639
        %v2923 = vunpack.c.l.b16 %v2640
        %v2924 = vunpack.c.h.b16 %v2640
        %v2925 = vunpack.c.l.b16 %v2641
        %v2926 = vunpack.c.h.b16 %v2641
        %v2927 = vunpack.c.l.b16 %v2642
        %v2928 = vunpack.c.h.b16 %v2642
        %v2929 = vunpack.c.l.b16 %v2643
        %v2930 = vunpack.c.h.b16 %v2643
        %v2931 = vunpack.c.l.b16 %v2644
        %v2932 = vunpack.c.h.b16 %v2644
        %v2933 = vunpack.c.l.b16 %v2645
        %v2934 = vunpack.c.h.b16 %v2645
        %v2935 = vunpack.c.l.b16 %v2646
        %v2936 = vunpack.c.h.b16 %v2646
        %v2937 = vpack.c.b16 %v2747, %v2745
        %v2938 = vpack.c.b16 %v2748, %v2746
        %v2939 = vpack.c.b16 %v2751, %v2749
        %v2940 = vpack.c.b16 %v2752, %v2750
        %v2941 = vpack.c.b16 %v2755, %v2753
        %v2942 = vpack.c.b16 %v2756, %v2754
        %v2943 = vpack.c.b16 %v2759, %v2757
        %v2944 = vpack.c.b16 %v2760, %v2758
        %v2945 = vpack.c.b16 %v2763, %v2761
        %v2946 = vpack.c.b16 %v2764, %v2762
        %v2947 = vpack.c.b16 %v2767, %v2765
        %v2948 = vpack.c.b16 %v2768, %v2766
        %v2949 = vpack.c.b16 %v2771, %v2769
        %v2950 = vpack.c.b16 %v2772, %v2770
        %v2951 = vpack.c.b16 %v2775, %v2773
        %v2952 = vpack.c.b16 %v2776, %v2774
        %v2953 = vpack.c.b16 %v2779, %v2777
        %v2954 = vpack.c.b16 %v2780, %v2778
        %v2955 = vpack.c.b16 %v2783, %v2781
        %v2956 = vpack.c.b16 %v2784, %v2782
        %v2957 = vpack.c.b16 %v2787, %v2785
        %v2958 = vpack.c.b16 %v2788, %v2786
        %v2959 = vpack.c.b16 %v2791, %v2789
        %v2960 = vpack.c.b16 %v2792, %v2790
        %v2961 = vpack.c.b16 %v2795, %v2793
        %v2962 = vpack.c.b16 %v2796, %v2794
        %v2963 = vpack.c.b16 %v2799, %v2797
        %v2964 = vpack.c.b16 %v2800, %v2798
        %v2965 = vpack.c.b16 %v2803, %v2801
        %v2966 = vpack.c.b16 %v2804, %v2802
        %v2967 = vpack.c.b16 %v2807, %v2805
        %v2968 = vpack.c.b16 %v2808, %v2806
        %v2969 = vpack.c.b16 %v2811, %v2809
        %v2970 = vpack.c.b16 %v2812, %v2810
        %v2971 = vpack.c.b16 %v2815, %v2813
        %v2972 = vpack.c.b16 %v2816, %v2814
        %v2973 = vpack.c.b16 %v2819, %v2817
        %v2974 = vpack.c.b16 %v2820, %v2818
        %v2975 = vpack.c.b16 %v2823, %v2821
        %v2976 = vpack.c.b16 %v2824, %v2822
        %v2977 = vpack.c.b16 %v2827, %v2825
        %v2978 = vpack.c.b16 %v2828, %v2826
        %v2979 = vpack.c.b16 %v2831, %v2829
        %v2980 = vpack.c.b16 %v2832, %v2830
        %v2981 = vpack.c.b16 %v2835, %v2833
        %v2982 = vpack.c.b16 %v2836, %v2834
        %v2983 = vpack.c.b16 %v2839, %v2837
        %v2984 = vpack.c.b16 %v2840, %v2838
        %v2985 = vpack.c.b16 %v2843, %v2841
        %v2986 = vpack.c.b16 %v2844, %v2842
        %v2987 = vpack.c.b16 %v2847, %v2845
        %v2988 = vpack.c.b16 %v2848, %v2846
        %v2989 = vpack.c.b16 %v2851, %v2849
        %v2990 = vpack.c.b16 %v2852, %v2850
        %v2991 = vpack.c.b16 %v2855, %v2853
        %v2992 = vpack.c.b16 %v2856, %v2854
        %v2993 = vpack.c.b16 %v2859, %v2857
        %v2994 = vpack.c.b16 %v2860, %v2858
        %v2995 = vpack.c.b16 %v2863, %v2861
        %v2996 = vpack.c.b16 %v2864, %v2862
        %v2997 = vpack.c.b16 %v2867, %v2865
        %v2998 = vpack.c.b16 %v2868, %v2866
        %v2999 = vpack.c.b16 %v2871, %v2869
        %v3000 = vpack.c.b16 %v2872, %v2870
        %v3001 = vpack.c.b16 %v2875, %v2873
        %v3002 = vpack.c.b16 %v2876, %v2874
        %v3003 = vpack.c.b16 %v2879, %v2877
        %v3004 = vpack.c.b16 %v2880, %v2878
        %v3005 = vpack.c.b16 %v2883, %v2881
        %v3006 = vpack.c.b16 %v2884, %v2882
        %v3007 = vpack.c.b16 %v2887, %v2885
        %v3008 = vpack.c.b16 %v2888, %v2886
        %v3009 = vpack.c.b16 %v2891, %v2889
        %v3010 = vpack.c.b16 %v2892, %v2890
        %v3011 = vpack.c.b16 %v2895, %v2893
        %v3012 = vpack.c.b16 %v2896, %v2894
        %v3013 = vpack.c.b16 %v2899, %v2897
        %v3014 = vpack.c.b16 %v2900, %v2898
        %v3015 = vpack.c.b16 %v2903, %v2901
        %v3016 = vpack.c.b16 %v2904, %v2902
        %v3017 = vpack.c.b16 %v2907, %v2905
        %v3018 = vpack.c.b16 %v2908, %v2906
        %v3019 = vpack.c.b16 %v2911, %v2909
        %v3020 = vpack.c.b16 %v2912, %v2910
        %v3021 = vpack.c.b16 %v2915, %v2913
        %v3022 = vpack.c.b16 %v2916, %v2914
        %v3023 = vpack.c.b16 %v2919, %v2917
        %v3024 = vpack.c.b16 %v2920, %v2918
        %v3025 = vpack.c.b16 %v2923, %v2921
        %v3026 = vpack.c.b16 %v2924, %v2922
        %v3027 = vpack.c.b16 %v2927, %v2925
        %v3028 = vpack.c.b16 %v2928, %v2926
        %v3029 = vpack.c.b16 %v2931, %v2929
        %v3030 = vpack.c.b16 %v2932, %v2930
        %v3031 = vpack.c.b16 %v2935, %v2933
        %v3032 = vpack.c.b16 %v2936, %v2934
        %3129 = vmatpush.bf16.msra.mxu0 %v2951
        %3130 = vmatpush.bf16.msra.mxu0 %v2949
        %3131 = vmatpush.bf16.msra.mxu0 %v2947
        %3132 = vmatpush.bf16.msra.mxu0 %v2945
        %3133 = vmatpush.bf16.msra.mxu0 %v2943
        %3134 = vmatpush.bf16.msra.mxu0 %v2941
        %3135 = vmatpush.bf16.msra.mxu0 %v2939
        %3136 = vmatpush.bf16.msra.mxu0 %v2937
        %3137 = vmatmul.bf16.gmra.mxu0 %v2544
        %v3138 = vpop.f32.mrf.mxu0
        %v3139 = vadd.f32 %v2647, %v3138
        %v3140 = vpop.f32.mrf.mxu0
        %v3141 = vadd.f32 %v2647, %v3140
        %3142 = vdwg.mxu0
        %3143 = vmatpush.bf16.msra.mxu0 %v2967
        %3144 = vmatpush.bf16.msra.mxu0 %v2965
        %3145 = vmatpush.bf16.msra.mxu0 %v2963
        %3146 = vmatpush.bf16.msra.mxu0 %v2961
        %3147 = vmatpush.bf16.msra.mxu0 %v2959
        %3148 = vmatpush.bf16.msra.mxu0 %v2957
        %3149 = vmatpush.bf16.msra.mxu0 %v2955
        %3150 = vmatpush.bf16.msra.mxu0 %v2953
        %3151 = vmatmul.bf16.gmra.mxu0 %v2545
        %v3152 = vpop.f32.mrf.mxu0
        %v3153 = vadd.f32 %v3139, %v3152
        %v3154 = vpop.f32.mrf.mxu0
        %v3155 = vadd.f32 %v3141, %v3154
        %3156 = vdwg.mxu0
        %3157 = vmatpush.bf16.msra.mxu0 %v2983
        %3158 = vmatpush.bf16.msra.mxu0 %v2981
        %3159 = vmatpush.bf16.msra.mxu0 %v2979
        %3160 = vmatpush.bf16.msra.mxu0 %v2977
        %3161 = vmatpush.bf16.msra.mxu0 %v2975
        %3162 = vmatpush.bf16.msra.mxu0 %v2973
        %3163 = vmatpush.bf16.msra.mxu0 %v2971
        %3164 = vmatpush.bf16.msra.mxu0 %v2969
        %3165 = vmatmul.bf16.gmra.mxu0 %v2546
        %v3166 = vpop.f32.mrf.mxu0
        %v3167 = vadd.f32 %v3153, %v3166
        %v3168 = vpop.f32.mrf.mxu0
        %v3169 = vadd.f32 %v3155, %v3168
        %3170 = vdwg.mxu0
        %3171 = vmatpush.bf16.msra.mxu0 %v2999
        %3172 = vmatpush.bf16.msra.mxu0 %v2997
        %3173 = vmatpush.bf16.msra.mxu0 %v2995
        %3174 = vmatpush.bf16.msra.mxu0 %v2993
        %3175 = vmatpush.bf16.msra.mxu0 %v2991
        %3176 = vmatpush.bf16.msra.mxu0 %v2989
        %3177 = vmatpush.bf16.msra.mxu0 %v2987
        %3178 = vmatpush.bf16.msra.mxu0 %v2985
        %3179 = vmatmul.bf16.gmra.mxu0 %v2547
        %v3180 = vpop.f32.mrf.mxu0
        %v3181 = vadd.f32 %v3167, %v3180
        %v3182 = vpop.f32.mrf.mxu0
        %v3183 = vadd.f32 %v3169, %v3182
        %3184 = vdwg.mxu0
        %3185 = vmatpush.bf16.msra.mxu0 %v3015
        %3186 = vmatpush.bf16.msra.mxu0 %v3013
        %3187 = vmatpush.bf16.msra.mxu0 %v3011
        %3188 = vmatpush.bf16.msra.mxu0 %v3009
        %3189 = vmatpush.bf16.msra.mxu0 %v3007
        %3190 = vmatpush.bf16.msra.mxu0 %v3005
        %3191 = vmatpush.bf16.msra.mxu0 %v3003
        %3192 = vmatpush.bf16.msra.mxu0 %v3001
        %3193 = vmatmul.bf16.gmra.mxu0 %v2548
        %v3194 = vpop.f32.mrf.mxu0
        %v3195 = vadd.f32 %v3181, %v3194
        %v3196 = vpop.f32.mrf.mxu0
        %v3197 = vadd.f32 %v3183, %v3196
        %3198 = vdwg.mxu0
        %3199 = vmatpush.bf16.msra.mxu0 %v3031
        %3200 = vmatpush.bf16.msra.mxu0 %v3029
        %3201 = vmatpush.bf16.msra.mxu0 %v3027
        %3202 = vmatpush.bf16.msra.mxu0 %v3025
        %3203 = vmatpush.bf16.msra.mxu0 %v3023
        %3204 = vmatpush.bf16.msra.mxu0 %v3021
        %3205 = vmatpush.bf16.msra.mxu0 %v3019
        %3206 = vmatpush.bf16.msra.mxu0 %v3017
        %3207 = vmatmul.bf16.gmra.mxu0 %v2549
        %v3208 = vpop.f32.mrf.mxu0
        %v3209 = vadd.f32 %v3195, %v3208
        %v3210 = vpop.f32.mrf.mxu0
        %v3211 = vadd.f32 %v3197, %v3210
        %3212 = vdwg.mxu0
        %3213 = vmatpush.bf16.msra.mxu0 %v2952
        %3214 = vmatpush.bf16.msra.mxu0 %v2950
        %3215 = vmatpush.bf16.msra.mxu0 %v2948
        %3216 = vmatpush.bf16.msra.mxu0 %v2946
        %3217 = vmatpush.bf16.msra.mxu0 %v2944
        %3218 = vmatpush.bf16.msra.mxu0 %v2942
        %3219 = vmatpush.bf16.msra.mxu0 %v2940
        %3220 = vmatpush.bf16.msra.mxu0 %v2938
        %3221 = vmatmul.bf16.gmra.mxu0 %v2544
        %v3222 = vpop.f32.mrf.mxu0
        %v3223 = vadd.f32 %v2648, %v3222
        %v3224 = vpop.f32.mrf.mxu0
        %v3225 = vadd.f32 %v2648, %v3224
        %3226 = vdwg.mxu0
        %3227 = vmatpush.bf16.msra.mxu0 %v2968
        %3228 = vmatpush.bf16.msra.mxu0 %v2966
        %3229 = vmatpush.bf16.msra.mxu0 %v2964
        %3230 = vmatpush.bf16.msra.mxu0 %v2962
        %3231 = vmatpush.bf16.msra.mxu0 %v2960
        %3232 = vmatpush.bf16.msra.mxu0 %v2958
        %3233 = vmatpush.bf16.msra.mxu0 %v2956
        %3234 = vmatpush.bf16.msra.mxu0 %v2954
        %3235 = vmatmul.bf16.gmra.mxu0 %v2545
        %v3236 = vpop.f32.mrf.mxu0
        %v3237 = vadd.f32 %v3223, %v3236
        %v3238 = vpop.f32.mrf.mxu0
        %v3239 = vadd.f32 %v3225, %v3238
        %3240 = vdwg.mxu0
        %3241 = vmatpush.bf16.msra.mxu0 %v2984
        %3242 = vmatpush.bf16.msra.mxu0 %v2982
        %3243 = vmatpush.bf16.msra.mxu0 %v2980
        %3244 = vmatpush.bf16.msra.mxu0 %v2978
        %3245 = vmatpush.bf16.msra.mxu0 %v2976
        %3246 = vmatpush.bf16.msra.mxu0 %v2974
        %3247 = vmatpush.bf16.msra.mxu0 %v2972
        %3248 = vmatpush.bf16.msra.mxu0 %v2970
        %3249 = vmatmul.bf16.gmra.mxu0 %v2546
        %v3250 = vpop.f32.mrf.mxu0
        %v3251 = vadd.f32 %v3237, %v3250
        %v3252 = vpop.f32.mrf.mxu0
        %v3253 = vadd.f32 %v3239, %v3252
        %3254 = vdwg.mxu0
        %3255 = vmatpush.bf16.msra.mxu0 %v3000
        %3256 = vmatpush.bf16.msra.mxu0 %v2998
        %3257 = vmatpush.bf16.msra.mxu0 %v2996
        %3258 = vmatpush.bf16.msra.mxu0 %v2994
        %3259 = vmatpush.bf16.msra.mxu0 %v2992
        %3260 = vmatpush.bf16.msra.mxu0 %v2990
        %3261 = vmatpush.bf16.msra.mxu0 %v2988
        %3262 = vmatpush.bf16.msra.mxu0 %v2986
        %3263 = vmatmul.bf16.gmra.mxu0 %v2547
        %v3264 = vpop.f32.mrf.mxu0
        %v3265 = vadd.f32 %v3251, %v3264
        %v3266 = vpop.f32.mrf.mxu0
        %v3267 = vadd.f32 %v3253, %v3266
        %3268 = vdwg.mxu0
        %3269 = vmatpush.bf16.msra.mxu0 %v3016
        %3270 = vmatpush.bf16.msra.mxu0 %v3014
        %3271 = vmatpush.bf16.msra.mxu0 %v3012
        %3272 = vmatpush.bf16.msra.mxu0 %v3010
        %3273 = vmatpush.bf16.msra.mxu0 %v3008
        %3274 = vmatpush.bf16.msra.mxu0 %v3006
        %3275 = vmatpush.bf16.msra.mxu0 %v3004
        %3276 = vmatpush.bf16.msra.mxu0 %v3002
        %3277 = vmatmul.bf16.gmra.mxu0 %v2548
        %v3278 = vpop.f32.mrf.mxu0
        %v3279 = vadd.f32 %v3265, %v3278
        %v3280 = vpop.f32.mrf.mxu0
        %v3281 = vadd.f32 %v3267, %v3280
        %3282 = vdwg.mxu0
        %3283 = vmatpush.bf16.msra.mxu0 %v3032
        %3284 = vmatpush.bf16.msra.mxu0 %v3030
        %3285 = vmatpush.bf16.msra.mxu0 %v3028
        %3286 = vmatpush.bf16.msra.mxu0 %v3026
        %3287 = vmatpush.bf16.msra.mxu0 %v3024
        %3288 = vmatpush.bf16.msra.mxu0 %v3022
        %3289 = vmatpush.bf16.msra.mxu0 %v3020
        %3290 = vmatpush.bf16.msra.mxu0 %v3018
        %3291 = vmatmul.bf16.gmra.mxu0 %v2549
        %v3292 = vpop.f32.mrf.mxu0
        %v3293 = vadd.f32 %v3279, %v3292
        %v3294 = vpop.f32.mrf.mxu0
        %v3295 = vadd.f32 %v3281, %v3294
        %3296 = vdwg.mxu0
        %v3297 = vmul.f32 %v3209, %v317
        %v3298 = vmul.f32 %v3293, %v318
        %v3299 = vmul.f32 %v3211, %v319
        %v3300 = vmul.f32 %v3295, %v320
        %v3301 = vadd.f32 %v3297, %v3299
        %v3302 = vrot.slane %v3301, 4
        %v3303 = vadd.f32 %v3301, %v3302
        %v3304 = vrot.slane %v3303, 2
        %v3305 = vadd.f32 %v3303, %v3304
        %v3306 = vrot.slane %v3305, 1
        %v3307 = vadd.f32 %v3305, %v3306
        %v3308 = vadd.f32 %v3298, %v3300
        %v3309 = vrot.slane %v3308, 4
        %v3310 = vadd.f32 %v3308, %v3309
        %v3311 = vrot.slane %v3310, 2
        %v3312 = vadd.f32 %v3310, %v3311
        %v3313 = vrot.slane %v3312, 1
        %v3314 = vadd.f32 %v3312, %v3313
        %v3315 = vmul.f32 %v3297, %v3209
        %v3316 = vmul.f32 %v3298, %v3293
        %v3317 = vmul.f32 %v3299, %v3211
        %v3318 = vmul.f32 %v3300, %v3295
        %v3319 = vadd.f32 %v3315, %v3317
        %v3320 = vrot.slane %v3319, 4
        %v3321 = vadd.f32 %v3319, %v3320
        %v3322 = vrot.slane %v3321, 2
        %v3323 = vadd.f32 %v3321, %v3322
        %v3324 = vrot.slane %v3323, 1
        %v3325 = vadd.f32 %v3323, %v3324
        %v3326 = vadd.f32 %v3316, %v3318
        %v3327 = vrot.slane %v3326, 4
        %v3328 = vadd.f32 %v3326, %v3327
        %v3329 = vrot.slane %v3328, 2
        %v3330 = vadd.f32 %v3328, %v3329
        %v3331 = vrot.slane %v3330, 1
        %v3332 = vadd.f32 %v3330, %v3331
        %v3333 = vsel %vm1290, %v3307, %v3325
        %v3334 = vsel %vm1290, %v3314, %v3332
        %3335 = vmatpush.msra.mxu0 %v351
        %3336 = vmatpush.msra.mxu0 %v349
        %3337 = vmatpush.msra.mxu0 %v347
        %3338 = vmatpush.msra.mxu0 %v345
        %3339 = vmatpush.msra.mxu0 %v343
        %3340 = vmatpush.msra.mxu0 %v341
        %3341 = vmatpush.msra.mxu0 %v339
        %3342 = vmatpush.msra.mxu0 %v337
        %3343 = vmatpush.msra.mxu0 %v335
        %3344 = vmatpush.msra.mxu0 %v333
        %3345 = vmatpush.msra.mxu0 %v331
        %3346 = vmatpush.msra.mxu0 %v329
        %3347 = vmatpush.msra.mxu0 %v327
        %3348 = vmatpush.msra.mxu0 %v325
        %3349 = vmatpush.msra.mxu0 %v323
        %3350 = vmatpush.msra.mxu0 %v321
        %3351 = vmatmul.f32.gmra.mxu0 %v3333
        %v3352 = vpop.f32.mrf.mxu0
        %v3353 = vadd.f32 0.0, %v3352
        %3354 = vdwg.mxu0
        %3355 = vmatpush.msra.mxu0 %v383
        %3356 = vmatpush.msra.mxu0 %v381
        %3357 = vmatpush.msra.mxu0 %v379
        %3358 = vmatpush.msra.mxu0 %v377
        %3359 = vmatpush.msra.mxu0 %v375
        %3360 = vmatpush.msra.mxu0 %v373
        %3361 = vmatpush.msra.mxu0 %v371
        %3362 = vmatpush.msra.mxu0 %v369
        %3363 = vmatpush.msra.mxu0 %v367
        %3364 = vmatpush.msra.mxu0 %v365
        %3365 = vmatpush.msra.mxu0 %v363
        %3366 = vmatpush.msra.mxu0 %v361
        %3367 = vmatpush.msra.mxu0 %v359
        %3368 = vmatpush.msra.mxu0 %v357
        %3369 = vmatpush.msra.mxu0 %v355
        %3370 = vmatpush.msra.mxu0 %v353
        %3371 = vmatmul.f32.gmra.mxu0 %v3334
        %v3372 = vpop.f32.mrf.mxu0
        %v3373 = vadd.f32 %v3353, %v3372
        %3374 = vdwg.mxu0
        %3375 = vmatpush.msra.mxu0 %v352
        %3376 = vmatpush.msra.mxu0 %v350
        %3377 = vmatpush.msra.mxu0 %v348
        %3378 = vmatpush.msra.mxu0 %v346
        %3379 = vmatpush.msra.mxu0 %v344
        %3380 = vmatpush.msra.mxu0 %v342
        %3381 = vmatpush.msra.mxu0 %v340
        %3382 = vmatpush.msra.mxu0 %v338
        %3383 = vmatpush.msra.mxu0 %v336
        %3384 = vmatpush.msra.mxu0 %v334
        %3385 = vmatpush.msra.mxu0 %v332
        %3386 = vmatpush.msra.mxu0 %v330
        %3387 = vmatpush.msra.mxu0 %v328
        %3388 = vmatpush.msra.mxu0 %v326
        %3389 = vmatpush.msra.mxu0 %v324
        %3390 = vmatpush.msra.mxu0 %v322
        %3391 = vmatmul.f32.gmra.mxu0 %v3333
        %v3392 = vpop.f32.mrf.mxu0
        %v3393 = vadd.f32 0.0, %v3392
        %3394 = vdwg.mxu0
        %3395 = vmatpush.msra.mxu0 %v384
        %3396 = vmatpush.msra.mxu0 %v382
        %3397 = vmatpush.msra.mxu0 %v380
        %3398 = vmatpush.msra.mxu0 %v378
        %3399 = vmatpush.msra.mxu0 %v376
        %3400 = vmatpush.msra.mxu0 %v374
        %3401 = vmatpush.msra.mxu0 %v372
        %3402 = vmatpush.msra.mxu0 %v370
        %3403 = vmatpush.msra.mxu0 %v368
        %3404 = vmatpush.msra.mxu0 %v366
        %3405 = vmatpush.msra.mxu0 %v364
        %3406 = vmatpush.msra.mxu0 %v362
        %3407 = vmatpush.msra.mxu0 %v360
        %3408 = vmatpush.msra.mxu0 %v358
        %3409 = vmatpush.msra.mxu0 %v356
        %3410 = vmatpush.msra.mxu0 %v354
        %3411 = vmatmul.f32.gmra.mxu0 %v3334
        %v3412 = vpop.f32.mrf.mxu0
        %v3413 = vadd.f32 %v3393, %v3412
        %3414 = vdwg.mxu0
        %v3415 = vmul.f32 %v3373, 0.015625
        %v3416 = vmul.f32 %v3413, 0.015625
        %v3417 = vmul.f32 %v3415, %v3415
        %v3418 = vmul.f32 %v3416, %v3416
        %v3421 = vrot.slane %v3417, 7
        %v3422 = vrot.slane %v3418, 7
        %v3425 = vsub.f32 %v3415, %v3421
        %v3426 = vsub.f32 %v3416, %v3422
        %v3427 = vperm.slane %v3415, 0
        %v3428 = vperm.slane %v3416, 0
        %v3429 = vsub.f32 %v3209, %v3427
        %v3430 = vsub.f32 %v3293, %v3428
        %v3431 = vsub.f32 %v3211, %v3427
        %v3432 = vsub.f32 %v3295, %v3428
        %v3433 = vadd.f32 %v3425, 1e-05
        %v3434 = vadd.f32 %v3426, 1e-05
        %v3435 = vrsqrt.pop %v3433
        %v3436 = vmul.f32 %v3435, %v3433
        %v3437 = vmul.f32 %v3436, %v3435
        %v3438 = vmul.f32 0.5, %v3437
        %v3439 = vsub.f32 1.5, %v3438
        %v3440 = vmul.f32 %v3435, %v3439
        %vm3441 = vweird.f32 %v3433
        %vm3442 = vweird.f32 %v3435
        %vm3443 = vmor %vm3441, %vm3442
        %v3444 = vsel %vm3443, %v3435, %v3440
        %v3445 = vrsqrt.pop %v3434
        %v3446 = vmul.f32 %v3445, %v3434
        %v3447 = vmul.f32 %v3446, %v3445
        %v3448 = vmul.f32 0.5, %v3447
        %v3449 = vsub.f32 1.5, %v3448
        %v3450 = vmul.f32 %v3445, %v3449
        %vm3451 = vweird.f32 %v3434
        %vm3452 = vweird.f32 %v3445
        %vm3453 = vmor %vm3451, %vm3452
        %v3454 = vsel %vm3453, %v3445, %v3450
        %v3455 = vperm.slane %v3444, 1
        %v3456 = vperm.slane %v3454, 1
        %v3457 = vmul.f32 %v3429, %v3455
        %v3458 = vmul.f32 %v3430, %v3456
        %v3459 = vmul.f32 %v3431, %v3455
        %v3460 = vmul.f32 %v3432, %v3456
        %v3461 = vperm.slane %v398, 4
        %v3462 = vperm.slane %v399, 4
        %v3463 = vmul.f32 %v3457, %v3461
        %v3464 = vmul.f32 %v3458, %v3462
        %v3465 = vmul.f32 %v3459, %v3461
        %v3466 = vmul.f32 %v3460, %v3462
        %v3467 = vperm.slane %v398, 5
        %v3468 = vperm.slane %v399, 5
        %v3469 = vadd.f32 %v3463, %v3467
        %v3470 = vadd.f32 %v3464, %v3468
        %v3471 = vadd.f32 %v3465, %v3467
        %v3472 = vadd.f32 %v3466, %v3468
        %v3473 = vmax.f32 %v3469, 0.0
        %v3474 = vmax.f32 %v3470, 0.0
        %v3475 = vmax.f32 %v3471, 0.0
        %v3476 = vmax.f32 %v3472, 0.0
        %v3477 = vpack.c.bf16 %v3475, %v3473
        %v3478 = vpack.c.bf16 %v3476, %v3474
        %3479 = vmatpush.bf16.msra.mxu0 0
        %3480 = vmatpush.bf16.msra.mxu0 0
        %3481 = vmatpush.bf16.msra.mxu0 0
        %3482 = vmatpush.bf16.msra.mxu0 0
        %3483 = vmatpush.bf16.msra.mxu0 0
        %3484 = vmatpush.bf16.msra.mxu0 0
        %3485 = vmatpush.bf16.msra.mxu0 0
        %3486 = vmatpush.bf16.msra.mxu0 %v3477
        %3487 = vmatmul.bf16.gmra.mxu0 %v410
        %v3488 = vpop.f32.mrf.mxu0
        %v3489 = vadd.f32 0.0, %v3488
        %v3490 = vpop.f32.mrf.mxu0
        %v3491 = vadd.f32 0.0, %v3490
        %3492 = vdwg.mxu0
        %3493 = vmatpush.bf16.msra.mxu0 0
        %3494 = vmatpush.bf16.msra.mxu0 0
        %3495 = vmatpush.bf16.msra.mxu0 0
        %3496 = vmatpush.bf16.msra.mxu0 0
        %3497 = vmatpush.bf16.msra.mxu0 0
        %3498 = vmatpush.bf16.msra.mxu0 0
        %3499 = vmatpush.bf16.msra.mxu0 0
        %3500 = vmatpush.bf16.msra.mxu0 %v3478
        %3501 = vmatmul.bf16.gmra.mxu0 %v410
        %v3502 = vpop.f32.mrf.mxu0
        %v3503 = vadd.f32 0.0, %v3502
        %v3504 = vpop.f32.mrf.mxu0
        %v3505 = vadd.f32 0.0, %v3504
        %3506 = vdwg.mxu0
        %3507 = vmatpush.bf16.msra.mxu0 0
        %3508 = vmatpush.bf16.msra.mxu0 0
        %3509 = vmatpush.bf16.msra.mxu0 0
        %3510 = vmatpush.bf16.msra.mxu0 0
        %3511 = vmatpush.bf16.msra.mxu0 0
        %3512 = vmatpush.bf16.msra.mxu0 0
        %3513 = vmatpush.bf16.msra.mxu0 0
        %3514 = vmatpush.bf16.msra.mxu0 %v3477
        %3515 = vmatmul.bf16.gmra.mxu0 %v441
        %v3516 = vpop.f32.mrf.mxu0
        %v3517 = vadd.f32 0.0, %v3516
        %v3518 = vpop.f32.mrf.mxu0
        %v3519 = vadd.f32 0.0, %v3518
        %3520 = vdwg.mxu0
        %3521 = vmatpush.bf16.msra.mxu0 0
        %3522 = vmatpush.bf16.msra.mxu0 0
        %3523 = vmatpush.bf16.msra.mxu0 0
        %3524 = vmatpush.bf16.msra.mxu0 0
        %3525 = vmatpush.bf16.msra.mxu0 0
        %3526 = vmatpush.bf16.msra.mxu0 0
        %3527 = vmatpush.bf16.msra.mxu0 0
        %3528 = vmatpush.bf16.msra.mxu0 %v3478
        %3529 = vmatmul.bf16.gmra.mxu0 %v441
        %v3530 = vpop.f32.mrf.mxu0
        %v3531 = vadd.f32 0.0, %v3530
        %v3532 = vpop.f32.mrf.mxu0
        %v3533 = vadd.f32 0.0, %v3532
        %3534 = vdwg.mxu0
        %3535 = vmatpush.bf16.msra.mxu0 0
        %3536 = vmatpush.bf16.msra.mxu0 0
        %3537 = vmatpush.bf16.msra.mxu0 0
        %3538 = vmatpush.bf16.msra.mxu0 0
        %3539 = vmatpush.bf16.msra.mxu0 0
        %3540 = vmatpush.bf16.msra.mxu0 0
        %3541 = vmatpush.bf16.msra.mxu0 0
        %3542 = vmatpush.bf16.msra.mxu0 %v3477
        %3543 = vmatmul.bf16.gmra.mxu0 %v472
        %v3544 = vpop.f32.mrf.mxu0
        %v3545 = vadd.f32 0.0, %v3544
        %v3546 = vpop.f32.mrf.mxu0
        %v3547 = vadd.f32 0.0, %v3546
        %3548 = vdwg.mxu0
        %3549 = vmatpush.bf16.msra.mxu0 0
        %3550 = vmatpush.bf16.msra.mxu0 0
        %3551 = vmatpush.bf16.msra.mxu0 0
        %3552 = vmatpush.bf16.msra.mxu0 0
        %3553 = vmatpush.bf16.msra.mxu0 0
        %3554 = vmatpush.bf16.msra.mxu0 0
        %3555 = vmatpush.bf16.msra.mxu0 0
        %3556 = vmatpush.bf16.msra.mxu0 %v3478
        %3557 = vmatmul.bf16.gmra.mxu0 %v472
        %v3558 = vpop.f32.mrf.mxu0
        %v3559 = vadd.f32 0.0, %v3558
        %v3560 = vpop.f32.mrf.mxu0
        %v3561 = vadd.f32 0.0, %v3560
        %3562 = vdwg.mxu0
        %v3563 = vpack.c.bf16 %v3491, %v3489
        %v3564 = vpack.c.bf16 %v3505, %v3503
        %v3565 = vpack.c.bf16 %v3519, %v3517
        %v3566 = vpack.c.bf16 %v3533, %v3531
        %v3567 = vpack.c.bf16 %v3547, %v3545
        %v3568 = vpack.c.bf16 %v3561, %v3559
        %s3569 = scalar_lea.vmem [#allocation2], 2304
        %v3570 = vld [vmem:[%s3569] sm:$0xff]
        %v3571 = vld [vmem:[%s3569 + $0x8] sm:$0xff]
        %v3572 = vld [vmem:[%s3569 + $0x10] sm:$0xff]
        %v3573 = vld [vmem:[%s3569 + $0x18] sm:$0xff]
        %v3574 = vld [vmem:[%s3569 + $0x20] sm:$0xff]
        %v3575 = vld [vmem:[%s3569 + $0x28] sm:$0xff]
        %v3576 = vld [vmem:[%s3569 + $0x30] sm:$0xff]
        %v3577 = vld [vmem:[%s3569 + $0x38] sm:$0xff]
        %v3578 = vld [vmem:[%s3569 + $0x40] sm:$0xff]
        %v3579 = vld [vmem:[%s3569 + $0x48] sm:$0xff]
        %v3580 = vld [vmem:[%s3569 + $0x50] sm:$0xff]
        %v3581 = vld [vmem:[%s3569 + $0x58] sm:$0xff]
        %v3582 = vld [vmem:[%s3569 + $0x60] sm:$0xff]
        %v3583 = vld [vmem:[%s3569 + $0x68] sm:$0xff]
        %v3584 = vld [vmem:[%s3569 + $0x70] sm:$0xff]
        %v3585 = vld [vmem:[%s3569 + $0x78] sm:$0xff]
        %v3586 = vld [vmem:[%s3569 + $0x80] sm:$0xff]
        %v3587 = vld [vmem:[%s3569 + $0x88] sm:$0xff]
        %v3588 = vld [vmem:[%s3569 + $0x90] sm:$0xff]
        %v3589 = vld [vmem:[%s3569 + $0x98] sm:$0xff]
        %v3590 = vld [vmem:[%s3569 + $0xa0] sm:$0xff]
        %v3591 = vld [vmem:[%s3569 + $0xa8] sm:$0xff]
        %v3592 = vld [vmem:[%s3569 + $0xb0] sm:$0xff]
        %v3593 = vld [vmem:[%s3569 + $0xb8] sm:$0xff]
        %v3594 = vld [vmem:[%s3569 + $0xc0] sm:$0xff]
        %v3595 = vld [vmem:[%s3569 + $0xc8] sm:$0xff]
        %v3596 = vld [vmem:[%s3569 + $0xd0] sm:$0xff]
        %v3597 = vld [vmem:[%s3569 + $0xd8] sm:$0xff]
        %v3598 = vld [vmem:[%s3569 + $0xe0] sm:$0xff]
        %v3599 = vld [vmem:[%s3569 + $0xe8] sm:$0xff]
        %v3600 = vld [vmem:[%s3569 + $0xf0] sm:$0xff]
        %v3601 = vld [vmem:[%s3569 + $0xf8] sm:$0xff]
        %v3602 = vld [vmem:[%s3569 + $0x100] sm:$0xff]
        %v3603 = vld [vmem:[%s3569 + $0x108] sm:$0xff]
        %v3604 = vld [vmem:[%s3569 + $0x110] sm:$0xff]
        %v3605 = vld [vmem:[%s3569 + $0x118] sm:$0xff]
        %v3606 = vld [vmem:[%s3569 + $0x120] sm:$0xff]
        %v3607 = vld [vmem:[%s3569 + $0x128] sm:$0xff]
        %v3608 = vld [vmem:[%s3569 + $0x130] sm:$0xff]
        %v3609 = vld [vmem:[%s3569 + $0x138] sm:$0xff]
        %v3610 = vld [vmem:[%s3569 + $0x140] sm:$0xff]
        %v3611 = vld [vmem:[%s3569 + $0x148] sm:$0xff]
        %v3612 = vld [vmem:[%s3569 + $0x150] sm:$0xff]
        %v3613 = vld [vmem:[%s3569 + $0x158] sm:$0xff]
        %v3614 = vld [vmem:[%s3569 + $0x160] sm:$0xff]
        %v3615 = vld [vmem:[%s3569 + $0x168] sm:$0xff]
        %v3616 = vld [vmem:[%s3569 + $0x170] sm:$0xff]
        %v3617 = vld [vmem:[%s3569 + $0x178] sm:$0xff]
        %v3618 = vld [vmem:[%s3569 + $0x180] sm:$0xff]
        %v3619 = vld [vmem:[%s3569 + $0x188] sm:$0xff]
        %v3620 = vld [vmem:[%s3569 + $0x190] sm:$0xff]
        %v3621 = vld [vmem:[%s3569 + $0x198] sm:$0xff]
        %v3622 = vld [vmem:[%s3569 + $0x1a0] sm:$0xff]
        %v3623 = vld [vmem:[%s3569 + $0x1a8] sm:$0xff]
        %v3624 = vld [vmem:[%s3569 + $0x1b0] sm:$0xff]
        %v3625 = vld [vmem:[%s3569 + $0x1b8] sm:$0xff]
        %v3626 = vld [vmem:[%s3569 + $0x1c0] sm:$0xff]
        %v3627 = vld [vmem:[%s3569 + $0x1c8] sm:$0xff]
        %v3628 = vld [vmem:[%s3569 + $0x1d0] sm:$0xff]
        %v3629 = vld [vmem:[%s3569 + $0x1d8] sm:$0xff]
        %v3630 = vld [vmem:[%s3569 + $0x1e0] sm:$0xff]
        %v3631 = vld [vmem:[%s3569 + $0x1e8] sm:$0xff]
        %v3632 = vld [vmem:[%s3569 + $0x1f0] sm:$0xff]
        %v3633 = vld [vmem:[%s3569 + $0x1f8] sm:$0xff]
        %v3634 = vld [vmem:[%s3569 + $0x200] sm:$0xff]
        %v3635 = vld [vmem:[%s3569 + $0x208] sm:$0xff]
        %v3636 = vld [vmem:[%s3569 + $0x210] sm:$0xff]
        %v3637 = vld [vmem:[%s3569 + $0x218] sm:$0xff]
        %v3638 = vld [vmem:[%s3569 + $0x220] sm:$0xff]
        %v3639 = vld [vmem:[%s3569 + $0x228] sm:$0xff]
        %v3640 = vld [vmem:[%s3569 + $0x230] sm:$0xff]
        %v3641 = vld [vmem:[%s3569 + $0x238] sm:$0xff]
        %v3642 = vld [vmem:[%s3569 + $0x240] sm:$0xff]
        %v3643 = vld [vmem:[%s3569 + $0x248] sm:$0xff]
        %v3644 = vld [vmem:[%s3569 + $0x250] sm:$0xff]
        %v3645 = vld [vmem:[%s3569 + $0x258] sm:$0xff]
        %v3646 = vld [vmem:[%s3569 + $0x260] sm:$0xff]
        %v3647 = vld [vmem:[%s3569 + $0x268] sm:$0xff]
        %v3648 = vld [vmem:[%s3569 + $0x270] sm:$0xff]
        %v3649 = vld [vmem:[%s3569 + $0x278] sm:$0xff]
        %v3650 = vld [vmem:[%s3569 + $0x280] sm:$0xff]
        %v3651 = vld [vmem:[%s3569 + $0x288] sm:$0xff]
        %v3652 = vld [vmem:[%s3569 + $0x290] sm:$0xff]
        %v3653 = vld [vmem:[%s3569 + $0x298] sm:$0xff]
        %v3654 = vld [vmem:[%s3569 + $0x2a0] sm:$0xff]
        %v3655 = vld [vmem:[%s3569 + $0x2a8] sm:$0xff]
        %v3656 = vld [vmem:[%s3569 + $0x2b0] sm:$0xff]
        %v3657 = vld [vmem:[%s3569 + $0x2b8] sm:$0xff]
        %v3658 = vld [vmem:[%s3569 + $0x2c0] sm:$0xff]
        %v3659 = vld [vmem:[%s3569 + $0x2c8] sm:$0xff]
        %v3660 = vld [vmem:[%s3569 + $0x2d0] sm:$0xff]
        %v3661 = vld [vmem:[%s3569 + $0x2d8] sm:$0xff]
        %v3662 = vld [vmem:[%s3569 + $0x2e0] sm:$0xff]
        %v3663 = vld [vmem:[%s3569 + $0x2e8] sm:$0xff]
        %v3664 = vld [vmem:[%s3569 + $0x2f0] sm:$0xff]
        %v3665 = vld [vmem:[%s3569 + $0x2f8] sm:$0xff]
        %v3666 = vperm.slane %v396, 3
        %v3667 = vperm.slane %v397, 3
        %v3764 = vunpack.c.l.b16 %v3570
        %v3765 = vunpack.c.h.b16 %v3570
        %v3766 = vunpack.c.l.b16 %v3571
        %v3767 = vunpack.c.h.b16 %v3571
        %v3768 = vunpack.c.l.b16 %v3572
        %v3769 = vunpack.c.h.b16 %v3572
        %v3770 = vunpack.c.l.b16 %v3573
        %v3771 = vunpack.c.h.b16 %v3573
        %v3772 = vunpack.c.l.b16 %v3574
        %v3773 = vunpack.c.h.b16 %v3574
        %v3774 = vunpack.c.l.b16 %v3575
        %v3775 = vunpack.c.h.b16 %v3575
        %v3776 = vunpack.c.l.b16 %v3576
        %v3777 = vunpack.c.h.b16 %v3576
        %v3778 = vunpack.c.l.b16 %v3577
        %v3779 = vunpack.c.h.b16 %v3577
        %v3780 = vunpack.c.l.b16 %v3578
        %v3781 = vunpack.c.h.b16 %v3578
        %v3782 = vunpack.c.l.b16 %v3579
        %v3783 = vunpack.c.h.b16 %v3579
        %v3784 = vunpack.c.l.b16 %v3580
        %v3785 = vunpack.c.h.b16 %v3580
        %v3786 = vunpack.c.l.b16 %v3581
        %v3787 = vunpack.c.h.b16 %v3581
        %v3788 = vunpack.c.l.b16 %v3582
        %v3789 = vunpack.c.h.b16 %v3582
        %v3790 = vunpack.c.l.b16 %v3583
        %v3791 = vunpack.c.h.b16 %v3583
        %v3792 = vunpack.c.l.b16 %v3584
        %v3793 = vunpack.c.h.b16 %v3584
        %v3794 = vunpack.c.l.b16 %v3585
        %v3795 = vunpack.c.h.b16 %v3585
        %v3796 = vunpack.c.l.b16 %v3586
        %v3797 = vunpack.c.h.b16 %v3586
        %v3798 = vunpack.c.l.b16 %v3587
        %v3799 = vunpack.c.h.b16 %v3587
        %v3800 = vunpack.c.l.b16 %v3588
        %v3801 = vunpack.c.h.b16 %v3588
        %v3802 = vunpack.c.l.b16 %v3589
        %v3803 = vunpack.c.h.b16 %v3589
        %v3804 = vunpack.c.l.b16 %v3590
        %v3805 = vunpack.c.h.b16 %v3590
        %v3806 = vunpack.c.l.b16 %v3591
        %v3807 = vunpack.c.h.b16 %v3591
        %v3808 = vunpack.c.l.b16 %v3592
        %v3809 = vunpack.c.h.b16 %v3592
        %v3810 = vunpack.c.l.b16 %v3593
        %v3811 = vunpack.c.h.b16 %v3593
        %v3812 = vunpack.c.l.b16 %v3594
        %v3813 = vunpack.c.h.b16 %v3594
        %v3814 = vunpack.c.l.b16 %v3595
        %v3815 = vunpack.c.h.b16 %v3595
        %v3816 = vunpack.c.l.b16 %v3596
        %v3817 = vunpack.c.h.b16 %v3596
        %v3818 = vunpack.c.l.b16 %v3597
        %v3819 = vunpack.c.h.b16 %v3597
        %v3820 = vunpack.c.l.b16 %v3598
        %v3821 = vunpack.c.h.b16 %v3598
        %v3822 = vunpack.c.l.b16 %v3599
        %v3823 = vunpack.c.h.b16 %v3599
        %v3824 = vunpack.c.l.b16 %v3600
        %v3825 = vunpack.c.h.b16 %v3600
        %v3826 = vunpack.c.l.b16 %v3601
        %v3827 = vunpack.c.h.b16 %v3601
        %v3828 = vunpack.c.l.b16 %v3602
        %v3829 = vunpack.c.h.b16 %v3602
        %v3830 = vunpack.c.l.b16 %v3603
        %v3831 = vunpack.c.h.b16 %v3603
        %v3832 = vunpack.c.l.b16 %v3604
        %v3833 = vunpack.c.h.b16 %v3604
        %v3834 = vunpack.c.l.b16 %v3605
        %v3835 = vunpack.c.h.b16 %v3605
        %v3836 = vunpack.c.l.b16 %v3606
        %v3837 = vunpack.c.h.b16 %v3606
        %v3838 = vunpack.c.l.b16 %v3607
        %v3839 = vunpack.c.h.b16 %v3607
        %v3840 = vunpack.c.l.b16 %v3608
        %v3841 = vunpack.c.h.b16 %v3608
        %v3842 = vunpack.c.l.b16 %v3609
        %v3843 = vunpack.c.h.b16 %v3609
        %v3844 = vunpack.c.l.b16 %v3610
        %v3845 = vunpack.c.h.b16 %v3610
        %v3846 = vunpack.c.l.b16 %v3611
        %v3847 = vunpack.c.h.b16 %v3611
        %v3848 = vunpack.c.l.b16 %v3612
        %v3849 = vunpack.c.h.b16 %v3612
        %v3850 = vunpack.c.l.b16 %v3613
        %v3851 = vunpack.c.h.b16 %v3613
        %v3852 = vunpack.c.l.b16 %v3614
        %v3853 = vunpack.c.h.b16 %v3614
        %v3854 = vunpack.c.l.b16 %v3615
        %v3855 = vunpack.c.h.b16 %v3615
        %v3856 = vunpack.c.l.b16 %v3616
        %v3857 = vunpack.c.h.b16 %v3616
        %v3858 = vunpack.c.l.b16 %v3617
        %v3859 = vunpack.c.h.b16 %v3617
        %v3860 = vunpack.c.l.b16 %v3618
        %v3861 = vunpack.c.h.b16 %v3618
        %v3862 = vunpack.c.l.b16 %v3619
        %v3863 = vunpack.c.h.b16 %v3619
        %v3864 = vunpack.c.l.b16 %v3620
        %v3865 = vunpack.c.h.b16 %v3620
        %v3866 = vunpack.c.l.b16 %v3621
        %v3867 = vunpack.c.h.b16 %v3621
        %v3868 = vunpack.c.l.b16 %v3622
        %v3869 = vunpack.c.h.b16 %v3622
        %v3870 = vunpack.c.l.b16 %v3623
        %v3871 = vunpack.c.h.b16 %v3623
        %v3872 = vunpack.c.l.b16 %v3624
        %v3873 = vunpack.c.h.b16 %v3624
        %v3874 = vunpack.c.l.b16 %v3625
        %v3875 = vunpack.c.h.b16 %v3625
        %v3876 = vunpack.c.l.b16 %v3626
        %v3877 = vunpack.c.h.b16 %v3626
        %v3878 = vunpack.c.l.b16 %v3627
        %v3879 = vunpack.c.h.b16 %v3627
        %v3880 = vunpack.c.l.b16 %v3628
        %v3881 = vunpack.c.h.b16 %v3628
        %v3882 = vunpack.c.l.b16 %v3629
        %v3883 = vunpack.c.h.b16 %v3629
        %v3884 = vunpack.c.l.b16 %v3630
        %v3885 = vunpack.c.h.b16 %v3630
        %v3886 = vunpack.c.l.b16 %v3631
        %v3887 = vunpack.c.h.b16 %v3631
        %v3888 = vunpack.c.l.b16 %v3632
        %v3889 = vunpack.c.h.b16 %v3632
        %v3890 = vunpack.c.l.b16 %v3633
        %v3891 = vunpack.c.h.b16 %v3633
        %v3892 = vunpack.c.l.b16 %v3634
        %v3893 = vunpack.c.h.b16 %v3634
        %v3894 = vunpack.c.l.b16 %v3635
        %v3895 = vunpack.c.h.b16 %v3635
        %v3896 = vunpack.c.l.b16 %v3636
        %v3897 = vunpack.c.h.b16 %v3636
        %v3898 = vunpack.c.l.b16 %v3637
        %v3899 = vunpack.c.h.b16 %v3637
        %v3900 = vunpack.c.l.b16 %v3638
        %v3901 = vunpack.c.h.b16 %v3638
        %v3902 = vunpack.c.l.b16 %v3639
        %v3903 = vunpack.c.h.b16 %v3639
        %v3904 = vunpack.c.l.b16 %v3640
        %v3905 = vunpack.c.h.b16 %v3640
        %v3906 = vunpack.c.l.b16 %v3641
        %v3907 = vunpack.c.h.b16 %v3641
        %v3908 = vunpack.c.l.b16 %v3642
        %v3909 = vunpack.c.h.b16 %v3642
        %v3910 = vunpack.c.l.b16 %v3643
        %v3911 = vunpack.c.h.b16 %v3643
        %v3912 = vunpack.c.l.b16 %v3644
        %v3913 = vunpack.c.h.b16 %v3644
        %v3914 = vunpack.c.l.b16 %v3645
        %v3915 = vunpack.c.h.b16 %v3645
        %v3916 = vunpack.c.l.b16 %v3646
        %v3917 = vunpack.c.h.b16 %v3646
        %v3918 = vunpack.c.l.b16 %v3647
        %v3919 = vunpack.c.h.b16 %v3647
        %v3920 = vunpack.c.l.b16 %v3648
        %v3921 = vunpack.c.h.b16 %v3648
        %v3922 = vunpack.c.l.b16 %v3649
        %v3923 = vunpack.c.h.b16 %v3649
        %v3924 = vunpack.c.l.b16 %v3650
        %v3925 = vunpack.c.h.b16 %v3650
        %v3926 = vunpack.c.l.b16 %v3651
        %v3927 = vunpack.c.h.b16 %v3651
        %v3928 = vunpack.c.l.b16 %v3652
        %v3929 = vunpack.c.h.b16 %v3652
        %v3930 = vunpack.c.l.b16 %v3653
        %v3931 = vunpack.c.h.b16 %v3653
        %v3932 = vunpack.c.l.b16 %v3654
        %v3933 = vunpack.c.h.b16 %v3654
        %v3934 = vunpack.c.l.b16 %v3655
        %v3935 = vunpack.c.h.b16 %v3655
        %v3936 = vunpack.c.l.b16 %v3656
        %v3937 = vunpack.c.h.b16 %v3656
        %v3938 = vunpack.c.l.b16 %v3657
        %v3939 = vunpack.c.h.b16 %v3657
        %v3940 = vunpack.c.l.b16 %v3658
        %v3941 = vunpack.c.h.b16 %v3658
        %v3942 = vunpack.c.l.b16 %v3659
        %v3943 = vunpack.c.h.b16 %v3659
        %v3944 = vunpack.c.l.b16 %v3660
        %v3945 = vunpack.c.h.b16 %v3660
        %v3946 = vunpack.c.l.b16 %v3661
        %v3947 = vunpack.c.h.b16 %v3661
        %v3948 = vunpack.c.l.b16 %v3662
        %v3949 = vunpack.c.h.b16 %v3662
        %v3950 = vunpack.c.l.b16 %v3663
        %v3951 = vunpack.c.h.b16 %v3663
        %v3952 = vunpack.c.l.b16 %v3664
        %v3953 = vunpack.c.h.b16 %v3664
        %v3954 = vunpack.c.l.b16 %v3665
        %v3955 = vunpack.c.h.b16 %v3665
        %v3956 = vpack.c.b16 %v3766, %v3764
        %v3957 = vpack.c.b16 %v3767, %v3765
        %v3958 = vpack.c.b16 %v3770, %v3768
        %v3959 = vpack.c.b16 %v3771, %v3769
        %v3960 = vpack.c.b16 %v3774, %v3772
        %v3961 = vpack.c.b16 %v3775, %v3773
        %v3962 = vpack.c.b16 %v3778, %v3776
        %v3963 = vpack.c.b16 %v3779, %v3777
        %v3964 = vpack.c.b16 %v3782, %v3780
        %v3965 = vpack.c.b16 %v3783, %v3781
        %v3966 = vpack.c.b16 %v3786, %v3784
        %v3967 = vpack.c.b16 %v3787, %v3785
        %v3968 = vpack.c.b16 %v3790, %v3788
        %v3969 = vpack.c.b16 %v3791, %v3789
        %v3970 = vpack.c.b16 %v3794, %v3792
        %v3971 = vpack.c.b16 %v3795, %v3793
        %v3972 = vpack.c.b16 %v3798, %v3796
        %v3973 = vpack.c.b16 %v3799, %v3797
        %v3974 = vpack.c.b16 %v3802, %v3800
        %v3975 = vpack.c.b16 %v3803, %v3801
        %v3976 = vpack.c.b16 %v3806, %v3804
        %v3977 = vpack.c.b16 %v3807, %v3805
        %v3978 = vpack.c.b16 %v3810, %v3808
        %v3979 = vpack.c.b16 %v3811, %v3809
        %v3980 = vpack.c.b16 %v3814, %v3812
        %v3981 = vpack.c.b16 %v3815, %v3813
        %v3982 = vpack.c.b16 %v3818, %v3816
        %v3983 = vpack.c.b16 %v3819, %v3817
        %v3984 = vpack.c.b16 %v3822, %v3820
        %v3985 = vpack.c.b16 %v3823, %v3821
        %v3986 = vpack.c.b16 %v3826, %v3824
        %v3987 = vpack.c.b16 %v3827, %v3825
        %v3988 = vpack.c.b16 %v3830, %v3828
        %v3989 = vpack.c.b16 %v3831, %v3829
        %v3990 = vpack.c.b16 %v3834, %v3832
        %v3991 = vpack.c.b16 %v3835, %v3833
        %v3992 = vpack.c.b16 %v3838, %v3836
        %v3993 = vpack.c.b16 %v3839, %v3837
        %v3994 = vpack.c.b16 %v3842, %v3840
        %v3995 = vpack.c.b16 %v3843, %v3841
        %v3996 = vpack.c.b16 %v3846, %v3844
        %v3997 = vpack.c.b16 %v3847, %v3845
        %v3998 = vpack.c.b16 %v3850, %v3848
        %v3999 = vpack.c.b16 %v3851, %v3849
        %v4000 = vpack.c.b16 %v3854, %v3852
        %v4001 = vpack.c.b16 %v3855, %v3853
        %v4002 = vpack.c.b16 %v3858, %v3856
        %v4003 = vpack.c.b16 %v3859, %v3857
        %v4004 = vpack.c.b16 %v3862, %v3860
        %v4005 = vpack.c.b16 %v3863, %v3861
        %v4006 = vpack.c.b16 %v3866, %v3864
        %v4007 = vpack.c.b16 %v3867, %v3865
        %v4008 = vpack.c.b16 %v3870, %v3868
        %v4009 = vpack.c.b16 %v3871, %v3869
        %v4010 = vpack.c.b16 %v3874, %v3872
        %v4011 = vpack.c.b16 %v3875, %v3873
        %v4012 = vpack.c.b16 %v3878, %v3876
        %v4013 = vpack.c.b16 %v3879, %v3877
        %v4014 = vpack.c.b16 %v3882, %v3880
        %v4015 = vpack.c.b16 %v3883, %v3881
        %v4016 = vpack.c.b16 %v3886, %v3884
        %v4017 = vpack.c.b16 %v3887, %v3885
        %v4018 = vpack.c.b16 %v3890, %v3888
        %v4019 = vpack.c.b16 %v3891, %v3889
        %v4020 = vpack.c.b16 %v3894, %v3892
        %v4021 = vpack.c.b16 %v3895, %v3893
        %v4022 = vpack.c.b16 %v3898, %v3896
        %v4023 = vpack.c.b16 %v3899, %v3897
        %v4024 = vpack.c.b16 %v3902, %v3900
        %v4025 = vpack.c.b16 %v3903, %v3901
        %v4026 = vpack.c.b16 %v3906, %v3904
        %v4027 = vpack.c.b16 %v3907, %v3905
        %v4028 = vpack.c.b16 %v3910, %v3908
        %v4029 = vpack.c.b16 %v3911, %v3909
        %v4030 = vpack.c.b16 %v3914, %v3912
        %v4031 = vpack.c.b16 %v3915, %v3913
        %v4032 = vpack.c.b16 %v3918, %v3916
        %v4033 = vpack.c.b16 %v3919, %v3917
        %v4034 = vpack.c.b16 %v3922, %v3920
        %v4035 = vpack.c.b16 %v3923, %v3921
        %v4036 = vpack.c.b16 %v3926, %v3924
        %v4037 = vpack.c.b16 %v3927, %v3925
        %v4038 = vpack.c.b16 %v3930, %v3928
        %v4039 = vpack.c.b16 %v3931, %v3929
        %v4040 = vpack.c.b16 %v3934, %v3932
        %v4041 = vpack.c.b16 %v3935, %v3933
        %v4042 = vpack.c.b16 %v3938, %v3936
        %v4043 = vpack.c.b16 %v3939, %v3937
        %v4044 = vpack.c.b16 %v3942, %v3940
        %v4045 = vpack.c.b16 %v3943, %v3941
        %v4046 = vpack.c.b16 %v3946, %v3944
        %v4047 = vpack.c.b16 %v3947, %v3945
        %v4048 = vpack.c.b16 %v3950, %v3948
        %v4049 = vpack.c.b16 %v3951, %v3949
        %v4050 = vpack.c.b16 %v3954, %v3952
        %v4051 = vpack.c.b16 %v3955, %v3953
        %4148 = vmatpush.bf16.msra.mxu0 %v3970
        %4149 = vmatpush.bf16.msra.mxu0 %v3968
        %4150 = vmatpush.bf16.msra.mxu0 %v3966
        %4151 = vmatpush.bf16.msra.mxu0 %v3964
        %4152 = vmatpush.bf16.msra.mxu0 %v3962
        %4153 = vmatpush.bf16.msra.mxu0 %v3960
        %4154 = vmatpush.bf16.msra.mxu0 %v3958
        %4155 = vmatpush.bf16.msra.mxu0 %v3956
        %4156 = vmatmul.bf16.gmra.mxu0 %v3563
        %v4157 = vpop.f32.mrf.mxu0
        %v4158 = vadd.f32 %v3666, %v4157
        %v4159 = vpop.f32.mrf.mxu0
        %v4160 = vadd.f32 %v3666, %v4159
        %4161 = vdwg.mxu0
        %4162 = vmatpush.bf16.msra.mxu0 %v3986
        %4163 = vmatpush.bf16.msra.mxu0 %v3984
        %4164 = vmatpush.bf16.msra.mxu0 %v3982
        %4165 = vmatpush.bf16.msra.mxu0 %v3980
        %4166 = vmatpush.bf16.msra.mxu0 %v3978
        %4167 = vmatpush.bf16.msra.mxu0 %v3976
        %4168 = vmatpush.bf16.msra.mxu0 %v3974
        %4169 = vmatpush.bf16.msra.mxu0 %v3972
        %4170 = vmatmul.bf16.gmra.mxu0 %v3564
        %v4171 = vpop.f32.mrf.mxu0
        %v4172 = vadd.f32 %v4158, %v4171
        %v4173 = vpop.f32.mrf.mxu0
        %v4174 = vadd.f32 %v4160, %v4173
        %4175 = vdwg.mxu0
        %4176 = vmatpush.bf16.msra.mxu0 %v4002
        %4177 = vmatpush.bf16.msra.mxu0 %v4000
        %4178 = vmatpush.bf16.msra.mxu0 %v3998
        %4179 = vmatpush.bf16.msra.mxu0 %v3996
        %4180 = vmatpush.bf16.msra.mxu0 %v3994
        %4181 = vmatpush.bf16.msra.mxu0 %v3992
        %4182 = vmatpush.bf16.msra.mxu0 %v3990
        %4183 = vmatpush.bf16.msra.mxu0 %v3988
        %4184 = vmatmul.bf16.gmra.mxu0 %v3565
        %v4185 = vpop.f32.mrf.mxu0
        %v4186 = vadd.f32 %v4172, %v4185
        %v4187 = vpop.f32.mrf.mxu0
        %v4188 = vadd.f32 %v4174, %v4187
        %4189 = vdwg.mxu0
        %4190 = vmatpush.bf16.msra.mxu0 %v4018
        %4191 = vmatpush.bf16.msra.mxu0 %v4016
        %4192 = vmatpush.bf16.msra.mxu0 %v4014
        %4193 = vmatpush.bf16.msra.mxu0 %v4012
        %4194 = vmatpush.bf16.msra.mxu0 %v4010
        %4195 = vmatpush.bf16.msra.mxu0 %v4008
        %4196 = vmatpush.bf16.msra.mxu0 %v4006
        %4197 = vmatpush.bf16.msra.mxu0 %v4004
        %4198 = vmatmul.bf16.gmra.mxu0 %v3566
        %v4199 = vpop.f32.mrf.mxu0
        %v4200 = vadd.f32 %v4186, %v4199
        %v4201 = vpop.f32.mrf.mxu0
        %v4202 = vadd.f32 %v4188, %v4201
        %4203 = vdwg.mxu0
        %4204 = vmatpush.bf16.msra.mxu0 %v4034
        %4205 = vmatpush.bf16.msra.mxu0 %v4032
        %4206 = vmatpush.bf16.msra.mxu0 %v4030
        %4207 = vmatpush.bf16.msra.mxu0 %v4028
        %4208 = vmatpush.bf16.msra.mxu0 %v4026
        %4209 = vmatpush.bf16.msra.mxu0 %v4024
        %4210 = vmatpush.bf16.msra.mxu0 %v4022
        %4211 = vmatpush.bf16.msra.mxu0 %v4020
        %4212 = vmatmul.bf16.gmra.mxu0 %v3567
        %v4213 = vpop.f32.mrf.mxu0
        %v4214 = vadd.f32 %v4200, %v4213
        %v4215 = vpop.f32.mrf.mxu0
        %v4216 = vadd.f32 %v4202, %v4215
        %4217 = vdwg.mxu0
        %4218 = vmatpush.bf16.msra.mxu0 %v4050
        %4219 = vmatpush.bf16.msra.mxu0 %v4048
        %4220 = vmatpush.bf16.msra.mxu0 %v4046
        %4221 = vmatpush.bf16.msra.mxu0 %v4044
        %4222 = vmatpush.bf16.msra.mxu0 %v4042
        %4223 = vmatpush.bf16.msra.mxu0 %v4040
        %4224 = vmatpush.bf16.msra.mxu0 %v4038
        %4225 = vmatpush.bf16.msra.mxu0 %v4036
        %4226 = vmatmul.bf16.gmra.mxu0 %v3568
        %v4227 = vpop.f32.mrf.mxu0
        %v4228 = vadd.f32 %v4214, %v4227
        %v4229 = vpop.f32.mrf.mxu0
        %v4230 = vadd.f32 %v4216, %v4229
        %4231 = vdwg.mxu0
        %4232 = vmatpush.bf16.msra.mxu0 %v3971
        %4233 = vmatpush.bf16.msra.mxu0 %v3969
        %4234 = vmatpush.bf16.msra.mxu0 %v3967
        %4235 = vmatpush.bf16.msra.mxu0 %v3965
        %4236 = vmatpush.bf16.msra.mxu0 %v3963
        %4237 = vmatpush.bf16.msra.mxu0 %v3961
        %4238 = vmatpush.bf16.msra.mxu0 %v3959
        %4239 = vmatpush.bf16.msra.mxu0 %v3957
        %4240 = vmatmul.bf16.gmra.mxu0 %v3563
        %v4241 = vpop.f32.mrf.mxu0
        %v4242 = vadd.f32 %v3667, %v4241
        %v4243 = vpop.f32.mrf.mxu0
        %v4244 = vadd.f32 %v3667, %v4243
        %4245 = vdwg.mxu0
        %4246 = vmatpush.bf16.msra.mxu0 %v3987
        %4247 = vmatpush.bf16.msra.mxu0 %v3985
        %4248 = vmatpush.bf16.msra.mxu0 %v3983
        %4249 = vmatpush.bf16.msra.mxu0 %v3981
        %4250 = vmatpush.bf16.msra.mxu0 %v3979
        %4251 = vmatpush.bf16.msra.mxu0 %v3977
        %4252 = vmatpush.bf16.msra.mxu0 %v3975
        %4253 = vmatpush.bf16.msra.mxu0 %v3973
        %4254 = vmatmul.bf16.gmra.mxu0 %v3564
        %v4255 = vpop.f32.mrf.mxu0
        %v4256 = vadd.f32 %v4242, %v4255
        %v4257 = vpop.f32.mrf.mxu0
        %v4258 = vadd.f32 %v4244, %v4257
        %4259 = vdwg.mxu0
        %4260 = vmatpush.bf16.msra.mxu0 %v4003
        %4261 = vmatpush.bf16.msra.mxu0 %v4001
        %4262 = vmatpush.bf16.msra.mxu0 %v3999
        %4263 = vmatpush.bf16.msra.mxu0 %v3997
        %4264 = vmatpush.bf16.msra.mxu0 %v3995
        %4265 = vmatpush.bf16.msra.mxu0 %v3993
        %4266 = vmatpush.bf16.msra.mxu0 %v3991
        %4267 = vmatpush.bf16.msra.mxu0 %v3989
        %4268 = vmatmul.bf16.gmra.mxu0 %v3565
        %v4269 = vpop.f32.mrf.mxu0
        %v4270 = vadd.f32 %v4256, %v4269
        %v4271 = vpop.f32.mrf.mxu0
        %v4272 = vadd.f32 %v4258, %v4271
        %4273 = vdwg.mxu0
        %4274 = vmatpush.bf16.msra.mxu0 %v4019
        %4275 = vmatpush.bf16.msra.mxu0 %v4017
        %4276 = vmatpush.bf16.msra.mxu0 %v4015
        %4277 = vmatpush.bf16.msra.mxu0 %v4013
        %4278 = vmatpush.bf16.msra.mxu0 %v4011
        %4279 = vmatpush.bf16.msra.mxu0 %v4009
        %4280 = vmatpush.bf16.msra.mxu0 %v4007
        %4281 = vmatpush.bf16.msra.mxu0 %v4005
        %4282 = vmatmul.bf16.gmra.mxu0 %v3566
        %v4283 = vpop.f32.mrf.mxu0
        %v4284 = vadd.f32 %v4270, %v4283
        %v4285 = vpop.f32.mrf.mxu0
        %v4286 = vadd.f32 %v4272, %v4285
        %4287 = vdwg.mxu0
        %4288 = vmatpush.bf16.msra.mxu0 %v4035
        %4289 = vmatpush.bf16.msra.mxu0 %v4033
        %4290 = vmatpush.bf16.msra.mxu0 %v4031
        %4291 = vmatpush.bf16.msra.mxu0 %v4029
        %4292 = vmatpush.bf16.msra.mxu0 %v4027
        %4293 = vmatpush.bf16.msra.mxu0 %v4025
        %4294 = vmatpush.bf16.msra.mxu0 %v4023
        %4295 = vmatpush.bf16.msra.mxu0 %v4021
        %4296 = vmatmul.bf16.gmra.mxu0 %v3567
        %v4297 = vpop.f32.mrf.mxu0
        %v4298 = vadd.f32 %v4284, %v4297
        %v4299 = vpop.f32.mrf.mxu0
        %v4300 = vadd.f32 %v4286, %v4299
        %4301 = vdwg.mxu0
        %4302 = vmatpush.bf16.msra.mxu0 %v4051
        %4303 = vmatpush.bf16.msra.mxu0 %v4049
        %4304 = vmatpush.bf16.msra.mxu0 %v4047
        %4305 = vmatpush.bf16.msra.mxu0 %v4045
        %4306 = vmatpush.bf16.msra.mxu0 %v4043
        %4307 = vmatpush.bf16.msra.mxu0 %v4041
        %4308 = vmatpush.bf16.msra.mxu0 %v4039
        %4309 = vmatpush.bf16.msra.mxu0 %v4037
        %4310 = vmatmul.bf16.gmra.mxu0 %v3568
        %v4311 = vpop.f32.mrf.mxu0
        %v4312 = vadd.f32 %v4298, %v4311
        %v4313 = vpop.f32.mrf.mxu0
        %v4314 = vadd.f32 %v4300, %v4313
        %4315 = vdwg.mxu0
        %v4316 = vmul.f32 %v4228, %v317
        %v4317 = vmul.f32 %v4312, %v318
        %v4318 = vmul.f32 %v4230, %v319
        %v4319 = vmul.f32 %v4314, %v320
        %v4320 = vadd.f32 %v4316, %v4318
        %v4321 = vrot.slane %v4320, 4
        %v4322 = vadd.f32 %v4320, %v4321
        %v4323 = vrot.slane %v4322, 2
        %v4324 = vadd.f32 %v4322, %v4323
        %v4325 = vrot.slane %v4324, 1
        %v4326 = vadd.f32 %v4324, %v4325
        %v4327 = vadd.f32 %v4317, %v4319
        %v4328 = vrot.slane %v4327, 4
        %v4329 = vadd.f32 %v4327, %v4328
        %v4330 = vrot.slane %v4329, 2
        %v4331 = vadd.f32 %v4329, %v4330
        %v4332 = vrot.slane %v4331, 1
        %v4333 = vadd.f32 %v4331, %v4332
        %v4334 = vmul.f32 %v4316, %v4228
        %v4335 = vmul.f32 %v4317, %v4312
        %v4336 = vmul.f32 %v4318, %v4230
        %v4337 = vmul.f32 %v4319, %v4314
        %v4338 = vadd.f32 %v4334, %v4336
        %v4339 = vrot.slane %v4338, 4
        %v4340 = vadd.f32 %v4338, %v4339
        %v4341 = vrot.slane %v4340, 2
        %v4342 = vadd.f32 %v4340, %v4341
        %v4343 = vrot.slane %v4342, 1
        %v4344 = vadd.f32 %v4342, %v4343
        %v4345 = vadd.f32 %v4335, %v4337
        %v4346 = vrot.slane %v4345, 4
        %v4347 = vadd.f32 %v4345, %v4346
        %v4348 = vrot.slane %v4347, 2
        %v4349 = vadd.f32 %v4347, %v4348
        %v4350 = vrot.slane %v4349, 1
        %v4351 = vadd.f32 %v4349, %v4350
        %v4352 = vsel %vm1290, %v4326, %v4344
        %v4353 = vsel %vm1290, %v4333, %v4351
        %4354 = vmatpush.msra.mxu0 %v351
        %4355 = vmatpush.msra.mxu0 %v349
        %4356 = vmatpush.msra.mxu0 %v347
        %4357 = vmatpush.msra.mxu0 %v345
        %4358 = vmatpush.msra.mxu0 %v343
        %4359 = vmatpush.msra.mxu0 %v341
        %4360 = vmatpush.msra.mxu0 %v339
        %4361 = vmatpush.msra.mxu0 %v337
        %4362 = vmatpush.msra.mxu0 %v335
        %4363 = vmatpush.msra.mxu0 %v333
        %4364 = vmatpush.msra.mxu0 %v331
        %4365 = vmatpush.msra.mxu0 %v329
        %4366 = vmatpush.msra.mxu0 %v327
        %4367 = vmatpush.msra.mxu0 %v325
        %4368 = vmatpush.msra.mxu0 %v323
        %4369 = vmatpush.msra.mxu0 %v321
        %4370 = vmatmul.f32.gmra.mxu0 %v4352
        %v4371 = vpop.f32.mrf.mxu0
        %v4372 = vadd.f32 0.0, %v4371
        %4373 = vdwg.mxu0
        %4374 = vmatpush.msra.mxu0 %v383
        %4375 = vmatpush.msra.mxu0 %v381
        %4376 = vmatpush.msra.mxu0 %v379
        %4377 = vmatpush.msra.mxu0 %v377
        %4378 = vmatpush.msra.mxu0 %v375
        %4379 = vmatpush.msra.mxu0 %v373
        %4380 = vmatpush.msra.mxu0 %v371
        %4381 = vmatpush.msra.mxu0 %v369
        %4382 = vmatpush.msra.mxu0 %v367
        %4383 = vmatpush.msra.mxu0 %v365
        %4384 = vmatpush.msra.mxu0 %v363
        %4385 = vmatpush.msra.mxu0 %v361
        %4386 = vmatpush.msra.mxu0 %v359
        %4387 = vmatpush.msra.mxu0 %v357
        %4388 = vmatpush.msra.mxu0 %v355
        %4389 = vmatpush.msra.mxu0 %v353
        %4390 = vmatmul.f32.gmra.mxu0 %v4353
        %v4391 = vpop.f32.mrf.mxu0
        %v4392 = vadd.f32 %v4372, %v4391
        %4393 = vdwg.mxu0
        %4394 = vmatpush.msra.mxu0 %v352
        %4395 = vmatpush.msra.mxu0 %v350
        %4396 = vmatpush.msra.mxu0 %v348
        %4397 = vmatpush.msra.mxu0 %v346
        %4398 = vmatpush.msra.mxu0 %v344
        %4399 = vmatpush.msra.mxu0 %v342
        %4400 = vmatpush.msra.mxu0 %v340
        %4401 = vmatpush.msra.mxu0 %v338
        %4402 = vmatpush.msra.mxu0 %v336
        %4403 = vmatpush.msra.mxu0 %v334
        %4404 = vmatpush.msra.mxu0 %v332
        %4405 = vmatpush.msra.mxu0 %v330
        %4406 = vmatpush.msra.mxu0 %v328
        %4407 = vmatpush.msra.mxu0 %v326
        %4408 = vmatpush.msra.mxu0 %v324
        %4409 = vmatpush.msra.mxu0 %v322
        %4410 = vmatmul.f32.gmra.mxu0 %v4352
        %v4411 = vpop.f32.mrf.mxu0
        %v4412 = vadd.f32 0.0, %v4411
        %4413 = vdwg.mxu0
        %4414 = vmatpush.msra.mxu0 %v384
        %4415 = vmatpush.msra.mxu0 %v382
        %4416 = vmatpush.msra.mxu0 %v380
        %4417 = vmatpush.msra.mxu0 %v378
        %4418 = vmatpush.msra.mxu0 %v376
        %4419 = vmatpush.msra.mxu0 %v374
        %4420 = vmatpush.msra.mxu0 %v372
        %4421 = vmatpush.msra.mxu0 %v370
        %4422 = vmatpush.msra.mxu0 %v368
        %4423 = vmatpush.msra.mxu0 %v366
        %4424 = vmatpush.msra.mxu0 %v364
        %4425 = vmatpush.msra.mxu0 %v362
        %4426 = vmatpush.msra.mxu0 %v360
        %4427 = vmatpush.msra.mxu0 %v358
        %4428 = vmatpush.msra.mxu0 %v356
        %4429 = vmatpush.msra.mxu0 %v354
        %4430 = vmatmul.f32.gmra.mxu0 %v4353
        %v4431 = vpop.f32.mrf.mxu0
        %v4432 = vadd.f32 %v4412, %v4431
        %4433 = vdwg.mxu0
        %v4434 = vmul.f32 %v4392, 0.015625
        %v4435 = vmul.f32 %v4432, 0.015625
        %v4436 = vmul.f32 %v4434, %v4434
        %v4437 = vmul.f32 %v4435, %v4435
        %v4440 = vrot.slane %v4436, 7
        %v4441 = vrot.slane %v4437, 7
        %v4444 = vsub.f32 %v4434, %v4440
        %v4445 = vsub.f32 %v4435, %v4441
        %v4446 = vperm.slane %v4434, 0
        %v4447 = vperm.slane %v4435, 0
        %v4448 = vsub.f32 %v4228, %v4446
        %v4449 = vsub.f32 %v4312, %v4447
        %v4450 = vsub.f32 %v4230, %v4446
        %v4451 = vsub.f32 %v4314, %v4447
        %v4452 = vadd.f32 %v4444, 1e-05
        %v4453 = vadd.f32 %v4445, 1e-05
        %v4454 = vrsqrt.pop %v4452
        %v4455 = vmul.f32 %v4454, %v4452
        %v4456 = vmul.f32 %v4455, %v4454
        %v4457 = vmul.f32 0.5, %v4456
        %v4458 = vsub.f32 1.5, %v4457
        %v4459 = vmul.f32 %v4454, %v4458
        %vm4460 = vweird.f32 %v4452
        %vm4461 = vweird.f32 %v4454
        %vm4462 = vmor %vm4460, %vm4461
        %v4463 = vsel %vm4462, %v4454, %v4459
        %v4464 = vrsqrt.pop %v4453
        %v4465 = vmul.f32 %v4464, %v4453
        %v4466 = vmul.f32 %v4465, %v4464
        %v4467 = vmul.f32 0.5, %v4466
        %v4468 = vsub.f32 1.5, %v4467
        %v4469 = vmul.f32 %v4464, %v4468
        %vm4470 = vweird.f32 %v4453
        %vm4471 = vweird.f32 %v4464
        %vm4472 = vmor %vm4470, %vm4471
        %v4473 = vsel %vm4472, %v4464, %v4469
        %v4474 = vperm.slane %v4463, 1
        %v4475 = vperm.slane %v4473, 1
        %v4476 = vmul.f32 %v4448, %v4474
        %v4477 = vmul.f32 %v4449, %v4475
        %v4478 = vmul.f32 %v4450, %v4474
        %v4479 = vmul.f32 %v4451, %v4475
        %v4480 = vperm.slane %v398, 6
        %v4481 = vperm.slane %v399, 6
        %v4482 = vmul.f32 %v4476, %v4480
        %v4483 = vmul.f32 %v4477, %v4481
        %v4484 = vmul.f32 %v4478, %v4480
        %v4485 = vmul.f32 %v4479, %v4481
        %v4486 = vperm.slane %v398, 7
        %v4487 = vperm.slane %v399, 7
        %v4488 = vadd.f32 %v4482, %v4486
        %v4489 = vadd.f32 %v4483, %v4487
        %v4490 = vadd.f32 %v4484, %v4486
        %v4491 = vadd.f32 %v4485, %v4487
        %v4492 = vadd.f32 %v2454, %v4488
        %v4493 = vadd.f32 %v2455, %v4489
        %v4494 = vadd.f32 %v2456, %v4490
        %v4495 = vadd.f32 %v2457, %v4491
        %v4496 = vmul.f32 %v4492, %v317
        %v4497 = vmul.f32 %v4493, %v318
        %v4498 = vmul.f32 %v4494, %v319
        %v4499 = vmul.f32 %v4495, %v320
        %v4500 = vpack.c.bf16 %v4498, %v4496
        %v4501 = vpack.c.bf16 %v4499, %v4497
        %4502 = vmatpush.bf16.msra.mxu0 0
        %4503 = vmatpush.bf16.msra.mxu0 0
        %4504 = vmatpush.bf16.msra.mxu0 0
        %4505 = vmatpush.bf16.msra.mxu0 0
        %4506 = vmatpush.bf16.msra.mxu0 0
        %4507 = vmatpush.bf16.msra.mxu0 0
        %4508 = vmatpush.bf16.msra.mxu0 0
        %4509 = vmatpush.bf16.msra.mxu0 %v4500
        %4510 = vmatmul.bf16.gmra.mxu0 %v410
        %v4511 = vpop.f32.mrf.mxu0
        %v4512 = vadd.f32 0.0, %v4511
        %v4513 = vpop.f32.mrf.mxu0
        %v4514 = vadd.f32 0.0, %v4513
        %4515 = vdwg.mxu0
        %4516 = vmatpush.bf16.msra.mxu0 0
        %4517 = vmatpush.bf16.msra.mxu0 0
        %4518 = vmatpush.bf16.msra.mxu0 0
        %4519 = vmatpush.bf16.msra.mxu0 0
        %4520 = vmatpush.bf16.msra.mxu0 0
        %4521 = vmatpush.bf16.msra.mxu0 0
        %4522 = vmatpush.bf16.msra.mxu0 0
        %4523 = vmatpush.bf16.msra.mxu0 %v4501
        %4524 = vmatmul.bf16.gmra.mxu0 %v410
        %v4525 = vpop.f32.mrf.mxu0
        %v4526 = vadd.f32 0.0, %v4525
        %v4527 = vpop.f32.mrf.mxu0
        %v4528 = vadd.f32 0.0, %v4527
        %4529 = vdwg.mxu0
        %4530 = vmatpush.bf16.msra.mxu0 0
        %4531 = vmatpush.bf16.msra.mxu0 0
        %4532 = vmatpush.bf16.msra.mxu0 0
        %4533 = vmatpush.bf16.msra.mxu0 0
        %4534 = vmatpush.bf16.msra.mxu0 0
        %4535 = vmatpush.bf16.msra.mxu0 0
        %4536 = vmatpush.bf16.msra.mxu0 0
        %4537 = vmatpush.bf16.msra.mxu0 %v4500
        %4538 = vmatmul.bf16.gmra.mxu0 %v441
        %v4539 = vpop.f32.mrf.mxu0
        %v4540 = vadd.f32 0.0, %v4539
        %v4541 = vpop.f32.mrf.mxu0
        %v4542 = vadd.f32 0.0, %v4541
        %4543 = vdwg.mxu0
        %4544 = vmatpush.bf16.msra.mxu0 0
        %4545 = vmatpush.bf16.msra.mxu0 0
        %4546 = vmatpush.bf16.msra.mxu0 0
        %4547 = vmatpush.bf16.msra.mxu0 0
        %4548 = vmatpush.bf16.msra.mxu0 0
        %4549 = vmatpush.bf16.msra.mxu0 0
        %4550 = vmatpush.bf16.msra.mxu0 0
        %4551 = vmatpush.bf16.msra.mxu0 %v4501
        %4552 = vmatmul.bf16.gmra.mxu0 %v441
        %v4553 = vpop.f32.mrf.mxu0
        %v4554 = vadd.f32 0.0, %v4553
        %v4555 = vpop.f32.mrf.mxu0
        %v4556 = vadd.f32 0.0, %v4555
        %4557 = vdwg.mxu0
        %4558 = vmatpush.bf16.msra.mxu0 0
        %4559 = vmatpush.bf16.msra.mxu0 0
        %4560 = vmatpush.bf16.msra.mxu0 0
        %4561 = vmatpush.bf16.msra.mxu0 0
        %4562 = vmatpush.bf16.msra.mxu0 0
        %4563 = vmatpush.bf16.msra.mxu0 0
        %4564 = vmatpush.bf16.msra.mxu0 0
        %4565 = vmatpush.bf16.msra.mxu0 %v4500
        %4566 = vmatmul.bf16.gmra.mxu0 %v472
        %v4567 = vpop.f32.mrf.mxu0
        %v4568 = vadd.f32 0.0, %v4567
        %v4569 = vpop.f32.mrf.mxu0
        %v4570 = vadd.f32 0.0, %v4569
        %4571 = vdwg.mxu0
        %4572 = vmatpush.bf16.msra.mxu0 0
        %4573 = vmatpush.bf16.msra.mxu0 0
        %4574 = vmatpush.bf16.msra.mxu0 0
        %4575 = vmatpush.bf16.msra.mxu0 0
        %4576 = vmatpush.bf16.msra.mxu0 0
        %4577 = vmatpush.bf16.msra.mxu0 0
        %4578 = vmatpush.bf16.msra.mxu0 0
        %4579 = vmatpush.bf16.msra.mxu0 %v4501
        %4580 = vmatmul.bf16.gmra.mxu0 %v472
        %v4581 = vpop.f32.mrf.mxu0
        %v4582 = vadd.f32 0.0, %v4581
        %v4583 = vpop.f32.mrf.mxu0
        %v4584 = vadd.f32 0.0, %v4583
        %4585 = vdwg.mxu0
        %v4586 = vpack.c.bf16 %v4514, %v4512
        %v4587 = vpack.c.bf16 %v4528, %v4526
        %v4588 = vpack.c.bf16 %v4542, %v4540
        %v4589 = vpack.c.bf16 %v4556, %v4554
        %v4590 = vpack.c.bf16 %v4570, %v4568
        %v4591 = vpack.c.bf16 %v4584, %v4582
        %s4592 = scalar_lea.vmem [#allocation2], 3072
        %v4593 = vld [vmem:[%s4592] sm:$0xff]
        %v4594 = vld [vmem:[%s4592 + $0x8] sm:$0xff]
        %v4595 = vld [vmem:[%s4592 + $0x10] sm:$0xff]
        %v4596 = vld [vmem:[%s4592 + $0x18] sm:$0xff]
        %v4597 = vld [vmem:[%s4592 + $0x20] sm:$0xff]
        %v4598 = vld [vmem:[%s4592 + $0x28] sm:$0xff]
        %v4599 = vld [vmem:[%s4592 + $0x30] sm:$0xff]
        %v4600 = vld [vmem:[%s4592 + $0x38] sm:$0xff]
        %v4601 = vld [vmem:[%s4592 + $0x40] sm:$0xff]
        %v4602 = vld [vmem:[%s4592 + $0x48] sm:$0xff]
        %v4603 = vld [vmem:[%s4592 + $0x50] sm:$0xff]
        %v4604 = vld [vmem:[%s4592 + $0x58] sm:$0xff]
        %v4605 = vld [vmem:[%s4592 + $0x60] sm:$0xff]
        %v4606 = vld [vmem:[%s4592 + $0x68] sm:$0xff]
        %v4607 = vld [vmem:[%s4592 + $0x70] sm:$0xff]
        %v4608 = vld [vmem:[%s4592 + $0x78] sm:$0xff]
        %v4609 = vld [vmem:[%s4592 + $0x80] sm:$0xff]
        %v4610 = vld [vmem:[%s4592 + $0x88] sm:$0xff]
        %v4611 = vld [vmem:[%s4592 + $0x90] sm:$0xff]
        %v4612 = vld [vmem:[%s4592 + $0x98] sm:$0xff]
        %v4613 = vld [vmem:[%s4592 + $0xa0] sm:$0xff]
        %v4614 = vld [vmem:[%s4592 + $0xa8] sm:$0xff]
        %v4615 = vld [vmem:[%s4592 + $0xb0] sm:$0xff]
        %v4616 = vld [vmem:[%s4592 + $0xb8] sm:$0xff]
        %v4617 = vld [vmem:[%s4592 + $0xc0] sm:$0xff]
        %v4618 = vld [vmem:[%s4592 + $0xc8] sm:$0xff]
        %v4619 = vld [vmem:[%s4592 + $0xd0] sm:$0xff]
        %v4620 = vld [vmem:[%s4592 + $0xd8] sm:$0xff]
        %v4621 = vld [vmem:[%s4592 + $0xe0] sm:$0xff]
        %v4622 = vld [vmem:[%s4592 + $0xe8] sm:$0xff]
        %v4623 = vld [vmem:[%s4592 + $0xf0] sm:$0xff]
        %v4624 = vld [vmem:[%s4592 + $0xf8] sm:$0xff]
        %v4625 = vld [vmem:[%s4592 + $0x100] sm:$0xff]
        %v4626 = vld [vmem:[%s4592 + $0x108] sm:$0xff]
        %v4627 = vld [vmem:[%s4592 + $0x110] sm:$0xff]
        %v4628 = vld [vmem:[%s4592 + $0x118] sm:$0xff]
        %v4629 = vld [vmem:[%s4592 + $0x120] sm:$0xff]
        %v4630 = vld [vmem:[%s4592 + $0x128] sm:$0xff]
        %v4631 = vld [vmem:[%s4592 + $0x130] sm:$0xff]
        %v4632 = vld [vmem:[%s4592 + $0x138] sm:$0xff]
        %v4633 = vld [vmem:[%s4592 + $0x140] sm:$0xff]
        %v4634 = vld [vmem:[%s4592 + $0x148] sm:$0xff]
        %v4635 = vld [vmem:[%s4592 + $0x150] sm:$0xff]
        %v4636 = vld [vmem:[%s4592 + $0x158] sm:$0xff]
        %v4637 = vld [vmem:[%s4592 + $0x160] sm:$0xff]
        %v4638 = vld [vmem:[%s4592 + $0x168] sm:$0xff]
        %v4639 = vld [vmem:[%s4592 + $0x170] sm:$0xff]
        %v4640 = vld [vmem:[%s4592 + $0x178] sm:$0xff]
        %v4641 = vld [vmem:[%s4592 + $0x180] sm:$0xff]
        %v4642 = vld [vmem:[%s4592 + $0x188] sm:$0xff]
        %v4643 = vld [vmem:[%s4592 + $0x190] sm:$0xff]
        %v4644 = vld [vmem:[%s4592 + $0x198] sm:$0xff]
        %v4645 = vld [vmem:[%s4592 + $0x1a0] sm:$0xff]
        %v4646 = vld [vmem:[%s4592 + $0x1a8] sm:$0xff]
        %v4647 = vld [vmem:[%s4592 + $0x1b0] sm:$0xff]
        %v4648 = vld [vmem:[%s4592 + $0x1b8] sm:$0xff]
        %v4649 = vld [vmem:[%s4592 + $0x1c0] sm:$0xff]
        %v4650 = vld [vmem:[%s4592 + $0x1c8] sm:$0xff]
        %v4651 = vld [vmem:[%s4592 + $0x1d0] sm:$0xff]
        %v4652 = vld [vmem:[%s4592 + $0x1d8] sm:$0xff]
        %v4653 = vld [vmem:[%s4592 + $0x1e0] sm:$0xff]
        %v4654 = vld [vmem:[%s4592 + $0x1e8] sm:$0xff]
        %v4655 = vld [vmem:[%s4592 + $0x1f0] sm:$0xff]
        %v4656 = vld [vmem:[%s4592 + $0x1f8] sm:$0xff]
        %v4657 = vld [vmem:[%s4592 + $0x200] sm:$0xff]
        %v4658 = vld [vmem:[%s4592 + $0x208] sm:$0xff]
        %v4659 = vld [vmem:[%s4592 + $0x210] sm:$0xff]
        %v4660 = vld [vmem:[%s4592 + $0x218] sm:$0xff]
        %v4661 = vld [vmem:[%s4592 + $0x220] sm:$0xff]
        %v4662 = vld [vmem:[%s4592 + $0x228] sm:$0xff]
        %v4663 = vld [vmem:[%s4592 + $0x230] sm:$0xff]
        %v4664 = vld [vmem:[%s4592 + $0x238] sm:$0xff]
        %v4665 = vld [vmem:[%s4592 + $0x240] sm:$0xff]
        %v4666 = vld [vmem:[%s4592 + $0x248] sm:$0xff]
        %v4667 = vld [vmem:[%s4592 + $0x250] sm:$0xff]
        %v4668 = vld [vmem:[%s4592 + $0x258] sm:$0xff]
        %v4669 = vld [vmem:[%s4592 + $0x260] sm:$0xff]
        %v4670 = vld [vmem:[%s4592 + $0x268] sm:$0xff]
        %v4671 = vld [vmem:[%s4592 + $0x270] sm:$0xff]
        %v4672 = vld [vmem:[%s4592 + $0x278] sm:$0xff]
        %v4673 = vld [vmem:[%s4592 + $0x280] sm:$0xff]
        %v4674 = vld [vmem:[%s4592 + $0x288] sm:$0xff]
        %v4675 = vld [vmem:[%s4592 + $0x290] sm:$0xff]
        %v4676 = vld [vmem:[%s4592 + $0x298] sm:$0xff]
        %v4677 = vld [vmem:[%s4592 + $0x2a0] sm:$0xff]
        %v4678 = vld [vmem:[%s4592 + $0x2a8] sm:$0xff]
        %v4679 = vld [vmem:[%s4592 + $0x2b0] sm:$0xff]
        %v4680 = vld [vmem:[%s4592 + $0x2b8] sm:$0xff]
        %v4681 = vld [vmem:[%s4592 + $0x2c0] sm:$0xff]
        %v4682 = vld [vmem:[%s4592 + $0x2c8] sm:$0xff]
        %v4683 = vld [vmem:[%s4592 + $0x2d0] sm:$0xff]
        %v4684 = vld [vmem:[%s4592 + $0x2d8] sm:$0xff]
        %v4685 = vld [vmem:[%s4592 + $0x2e0] sm:$0xff]
        %v4686 = vld [vmem:[%s4592 + $0x2e8] sm:$0xff]
        %v4687 = vld [vmem:[%s4592 + $0x2f0] sm:$0xff]
        %v4688 = vld [vmem:[%s4592 + $0x2f8] sm:$0xff]
        %v4689 = vperm.slane %v396, 4
        %v4690 = vperm.slane %v397, 4
        %v4787 = vunpack.c.l.b16 %v4593
        %v4788 = vunpack.c.h.b16 %v4593
        %v4789 = vunpack.c.l.b16 %v4594
        %v4790 = vunpack.c.h.b16 %v4594
        %v4791 = vunpack.c.l.b16 %v4595
        %v4792 = vunpack.c.h.b16 %v4595
        %v4793 = vunpack.c.l.b16 %v4596
        %v4794 = vunpack.c.h.b16 %v4596
        %v4795 = vunpack.c.l.b16 %v4597
        %v4796 = vunpack.c.h.b16 %v4597
        %v4797 = vunpack.c.l.b16 %v4598
        %v4798 = vunpack.c.h.b16 %v4598
        %v4799 = vunpack.c.l.b16 %v4599
        %v4800 = vunpack.c.h.b16 %v4599
        %v4801 = vunpack.c.l.b16 %v4600
        %v4802 = vunpack.c.h.b16 %v4600
        %v4803 = vunpack.c.l.b16 %v4601
        %v4804 = vunpack.c.h.b16 %v4601
        %v4805 = vunpack.c.l.b16 %v4602
        %v4806 = vunpack.c.h.b16 %v4602
        %v4807 = vunpack.c.l.b16 %v4603
        %v4808 = vunpack.c.h.b16 %v4603
        %v4809 = vunpack.c.l.b16 %v4604
        %v4810 = vunpack.c.h.b16 %v4604
        %v4811 = vunpack.c.l.b16 %v4605
        %v4812 = vunpack.c.h.b16 %v4605
        %v4813 = vunpack.c.l.b16 %v4606
        %v4814 = vunpack.c.h.b16 %v4606
        %v4815 = vunpack.c.l.b16 %v4607
        %v4816 = vunpack.c.h.b16 %v4607
        %v4817 = vunpack.c.l.b16 %v4608
        %v4818 = vunpack.c.h.b16 %v4608
        %v4819 = vunpack.c.l.b16 %v4609
        %v4820 = vunpack.c.h.b16 %v4609
        %v4821 = vunpack.c.l.b16 %v4610
        %v4822 = vunpack.c.h.b16 %v4610
        %v4823 = vunpack.c.l.b16 %v4611
        %v4824 = vunpack.c.h.b16 %v4611
        %v4825 = vunpack.c.l.b16 %v4612
        %v4826 = vunpack.c.h.b16 %v4612
        %v4827 = vunpack.c.l.b16 %v4613
        %v4828 = vunpack.c.h.b16 %v4613
        %v4829 = vunpack.c.l.b16 %v4614
        %v4830 = vunpack.c.h.b16 %v4614
        %v4831 = vunpack.c.l.b16 %v4615
        %v4832 = vunpack.c.h.b16 %v4615
        %v4833 = vunpack.c.l.b16 %v4616
        %v4834 = vunpack.c.h.b16 %v4616
        %v4835 = vunpack.c.l.b16 %v4617
        %v4836 = vunpack.c.h.b16 %v4617
        %v4837 = vunpack.c.l.b16 %v4618
        %v4838 = vunpack.c.h.b16 %v4618
        %v4839 = vunpack.c.l.b16 %v4619
        %v4840 = vunpack.c.h.b16 %v4619
        %v4841 = vunpack.c.l.b16 %v4620
        %v4842 = vunpack.c.h.b16 %v4620
        %v4843 = vunpack.c.l.b16 %v4621
        %v4844 = vunpack.c.h.b16 %v4621
        %v4845 = vunpack.c.l.b16 %v4622
        %v4846 = vunpack.c.h.b16 %v4622
        %v4847 = vunpack.c.l.b16 %v4623
        %v4848 = vunpack.c.h.b16 %v4623
        %v4849 = vunpack.c.l.b16 %v4624
        %v4850 = vunpack.c.h.b16 %v4624
        %v4851 = vunpack.c.l.b16 %v4625
        %v4852 = vunpack.c.h.b16 %v4625
        %v4853 = vunpack.c.l.b16 %v4626
        %v4854 = vunpack.c.h.b16 %v4626
        %v4855 = vunpack.c.l.b16 %v4627
        %v4856 = vunpack.c.h.b16 %v4627
        %v4857 = vunpack.c.l.b16 %v4628
        %v4858 = vunpack.c.h.b16 %v4628
        %v4859 = vunpack.c.l.b16 %v4629
        %v4860 = vunpack.c.h.b16 %v4629
        %v4861 = vunpack.c.l.b16 %v4630
        %v4862 = vunpack.c.h.b16 %v4630
        %v4863 = vunpack.c.l.b16 %v4631
        %v4864 = vunpack.c.h.b16 %v4631
        %v4865 = vunpack.c.l.b16 %v4632
        %v4866 = vunpack.c.h.b16 %v4632
        %v4867 = vunpack.c.l.b16 %v4633
        %v4868 = vunpack.c.h.b16 %v4633
        %v4869 = vunpack.c.l.b16 %v4634
        %v4870 = vunpack.c.h.b16 %v4634
        %v4871 = vunpack.c.l.b16 %v4635
        %v4872 = vunpack.c.h.b16 %v4635
        %v4873 = vunpack.c.l.b16 %v4636
        %v4874 = vunpack.c.h.b16 %v4636
        %v4875 = vunpack.c.l.b16 %v4637
        %v4876 = vunpack.c.h.b16 %v4637
        %v4877 = vunpack.c.l.b16 %v4638
        %v4878 = vunpack.c.h.b16 %v4638
        %v4879 = vunpack.c.l.b16 %v4639
        %v4880 = vunpack.c.h.b16 %v4639
        %v4881 = vunpack.c.l.b16 %v4640
        %v4882 = vunpack.c.h.b16 %v4640
        %v4883 = vunpack.c.l.b16 %v4641
        %v4884 = vunpack.c.h.b16 %v4641
        %v4885 = vunpack.c.l.b16 %v4642
        %v4886 = vunpack.c.h.b16 %v4642
        %v4887 = vunpack.c.l.b16 %v4643
        %v4888 = vunpack.c.h.b16 %v4643
        %v4889 = vunpack.c.l.b16 %v4644
        %v4890 = vunpack.c.h.b16 %v4644
        %v4891 = vunpack.c.l.b16 %v4645
        %v4892 = vunpack.c.h.b16 %v4645
        %v4893 = vunpack.c.l.b16 %v4646
        %v4894 = vunpack.c.h.b16 %v4646
        %v4895 = vunpack.c.l.b16 %v4647
        %v4896 = vunpack.c.h.b16 %v4647
        %v4897 = vunpack.c.l.b16 %v4648
        %v4898 = vunpack.c.h.b16 %v4648
        %v4899 = vunpack.c.l.b16 %v4649
        %v4900 = vunpack.c.h.b16 %v4649
        %v4901 = vunpack.c.l.b16 %v4650
        %v4902 = vunpack.c.h.b16 %v4650
        %v4903 = vunpack.c.l.b16 %v4651
        %v4904 = vunpack.c.h.b16 %v4651
        %v4905 = vunpack.c.l.b16 %v4652
        %v4906 = vunpack.c.h.b16 %v4652
        %v4907 = vunpack.c.l.b16 %v4653
        %v4908 = vunpack.c.h.b16 %v4653
        %v4909 = vunpack.c.l.b16 %v4654
        %v4910 = vunpack.c.h.b16 %v4654
        %v4911 = vunpack.c.l.b16 %v4655
        %v4912 = vunpack.c.h.b16 %v4655
        %v4913 = vunpack.c.l.b16 %v4656
        %v4914 = vunpack.c.h.b16 %v4656
        %v4915 = vunpack.c.l.b16 %v4657
        %v4916 = vunpack.c.h.b16 %v4657
        %v4917 = vunpack.c.l.b16 %v4658
        %v4918 = vunpack.c.h.b16 %v4658
        %v4919 = vunpack.c.l.b16 %v4659
        %v4920 = vunpack.c.h.b16 %v4659
        %v4921 = vunpack.c.l.b16 %v4660
        %v4922 = vunpack.c.h.b16 %v4660
        %v4923 = vunpack.c.l.b16 %v4661
        %v4924 = vunpack.c.h.b16 %v4661
        %v4925 = vunpack.c.l.b16 %v4662
        %v4926 = vunpack.c.h.b16 %v4662
        %v4927 = vunpack.c.l.b16 %v4663
        %v4928 = vunpack.c.h.b16 %v4663
        %v4929 = vunpack.c.l.b16 %v4664
        %v4930 = vunpack.c.h.b16 %v4664
        %v4931 = vunpack.c.l.b16 %v4665
        %v4932 = vunpack.c.h.b16 %v4665
        %v4933 = vunpack.c.l.b16 %v4666
        %v4934 = vunpack.c.h.b16 %v4666
        %v4935 = vunpack.c.l.b16 %v4667
        %v4936 = vunpack.c.h.b16 %v4667
        %v4937 = vunpack.c.l.b16 %v4668
        %v4938 = vunpack.c.h.b16 %v4668
        %v4939 = vunpack.c.l.b16 %v4669
        %v4940 = vunpack.c.h.b16 %v4669
        %v4941 = vunpack.c.l.b16 %v4670
        %v4942 = vunpack.c.h.b16 %v4670
        %v4943 = vunpack.c.l.b16 %v4671
        %v4944 = vunpack.c.h.b16 %v4671
        %v4945 = vunpack.c.l.b16 %v4672
        %v4946 = vunpack.c.h.b16 %v4672
        %v4947 = vunpack.c.l.b16 %v4673
        %v4948 = vunpack.c.h.b16 %v4673
        %v4949 = vunpack.c.l.b16 %v4674
        %v4950 = vunpack.c.h.b16 %v4674
        %v4951 = vunpack.c.l.b16 %v4675
        %v4952 = vunpack.c.h.b16 %v4675
        %v4953 = vunpack.c.l.b16 %v4676
        %v4954 = vunpack.c.h.b16 %v4676
        %v4955 = vunpack.c.l.b16 %v4677
        %v4956 = vunpack.c.h.b16 %v4677
        %v4957 = vunpack.c.l.b16 %v4678
        %v4958 = vunpack.c.h.b16 %v4678
        %v4959 = vunpack.c.l.b16 %v4679
        %v4960 = vunpack.c.h.b16 %v4679
        %v4961 = vunpack.c.l.b16 %v4680
        %v4962 = vunpack.c.h.b16 %v4680
        %v4963 = vunpack.c.l.b16 %v4681
        %v4964 = vunpack.c.h.b16 %v4681
        %v4965 = vunpack.c.l.b16 %v4682
        %v4966 = vunpack.c.h.b16 %v4682
        %v4967 = vunpack.c.l.b16 %v4683
        %v4968 = vunpack.c.h.b16 %v4683
        %v4969 = vunpack.c.l.b16 %v4684
        %v4970 = vunpack.c.h.b16 %v4684
        %v4971 = vunpack.c.l.b16 %v4685
        %v4972 = vunpack.c.h.b16 %v4685
        %v4973 = vunpack.c.l.b16 %v4686
        %v4974 = vunpack.c.h.b16 %v4686
        %v4975 = vunpack.c.l.b16 %v4687
        %v4976 = vunpack.c.h.b16 %v4687
        %v4977 = vunpack.c.l.b16 %v4688
        %v4978 = vunpack.c.h.b16 %v4688
        %v4979 = vpack.c.b16 %v4789, %v4787
        %v4980 = vpack.c.b16 %v4790, %v4788
        %v4981 = vpack.c.b16 %v4793, %v4791
        %v4982 = vpack.c.b16 %v4794, %v4792
        %v4983 = vpack.c.b16 %v4797, %v4795
        %v4984 = vpack.c.b16 %v4798, %v4796
        %v4985 = vpack.c.b16 %v4801, %v4799
        %v4986 = vpack.c.b16 %v4802, %v4800
        %v4987 = vpack.c.b16 %v4805, %v4803
        %v4988 = vpack.c.b16 %v4806, %v4804
        %v4989 = vpack.c.b16 %v4809, %v4807
        %v4990 = vpack.c.b16 %v4810, %v4808
        %v4991 = vpack.c.b16 %v4813, %v4811
        %v4992 = vpack.c.b16 %v4814, %v4812
        %v4993 = vpack.c.b16 %v4817, %v4815
        %v4994 = vpack.c.b16 %v4818, %v4816
        %v4995 = vpack.c.b16 %v4821, %v4819
        %v4996 = vpack.c.b16 %v4822, %v4820
        %v4997 = vpack.c.b16 %v4825, %v4823
        %v4998 = vpack.c.b16 %v4826, %v4824
        %v4999 = vpack.c.b16 %v4829, %v4827
        %v5000 = vpack.c.b16 %v4830, %v4828
        %v5001 = vpack.c.b16 %v4833, %v4831
        %v5002 = vpack.c.b16 %v4834, %v4832
        %v5003 = vpack.c.b16 %v4837, %v4835
        %v5004 = vpack.c.b16 %v4838, %v4836
        %v5005 = vpack.c.b16 %v4841, %v4839
        %v5006 = vpack.c.b16 %v4842, %v4840
        %v5007 = vpack.c.b16 %v4845, %v4843
        %v5008 = vpack.c.b16 %v4846, %v4844
        %v5009 = vpack.c.b16 %v4849, %v4847
        %v5010 = vpack.c.b16 %v4850, %v4848
        %v5011 = vpack.c.b16 %v4853, %v4851
        %v5012 = vpack.c.b16 %v4854, %v4852
        %v5013 = vpack.c.b16 %v4857, %v4855
        %v5014 = vpack.c.b16 %v4858, %v4856
        %v5015 = vpack.c.b16 %v4861, %v4859
        %v5016 = vpack.c.b16 %v4862, %v4860
        %v5017 = vpack.c.b16 %v4865, %v4863
        %v5018 = vpack.c.b16 %v4866, %v4864
        %v5019 = vpack.c.b16 %v4869, %v4867
        %v5020 = vpack.c.b16 %v4870, %v4868
        %v5021 = vpack.c.b16 %v4873, %v4871
        %v5022 = vpack.c.b16 %v4874, %v4872
        %v5023 = vpack.c.b16 %v4877, %v4875
        %v5024 = vpack.c.b16 %v4878, %v4876
        %v5025 = vpack.c.b16 %v4881, %v4879
        %v5026 = vpack.c.b16 %v4882, %v4880
        %v5027 = vpack.c.b16 %v4885, %v4883
        %v5028 = vpack.c.b16 %v4886, %v4884
        %v5029 = vpack.c.b16 %v4889, %v4887
        %v5030 = vpack.c.b16 %v4890, %v4888
        %v5031 = vpack.c.b16 %v4893, %v4891
        %v5032 = vpack.c.b16 %v4894, %v4892
        %v5033 = vpack.c.b16 %v4897, %v4895
        %v5034 = vpack.c.b16 %v4898, %v4896
        %v5035 = vpack.c.b16 %v4901, %v4899
        %v5036 = vpack.c.b16 %v4902, %v4900
        %v5037 = vpack.c.b16 %v4905, %v4903
        %v5038 = vpack.c.b16 %v4906, %v4904
        %v5039 = vpack.c.b16 %v4909, %v4907
        %v5040 = vpack.c.b16 %v4910, %v4908
        %v5041 = vpack.c.b16 %v4913, %v4911
        %v5042 = vpack.c.b16 %v4914, %v4912
        %v5043 = vpack.c.b16 %v4917, %v4915
        %v5044 = vpack.c.b16 %v4918, %v4916
        %v5045 = vpack.c.b16 %v4921, %v4919
        %v5046 = vpack.c.b16 %v4922, %v4920
        %v5047 = vpack.c.b16 %v4925, %v4923
        %v5048 = vpack.c.b16 %v4926, %v4924
        %v5049 = vpack.c.b16 %v4929, %v4927
        %v5050 = vpack.c.b16 %v4930, %v4928
        %v5051 = vpack.c.b16 %v4933, %v4931
        %v5052 = vpack.c.b16 %v4934, %v4932
        %v5053 = vpack.c.b16 %v4937, %v4935
        %v5054 = vpack.c.b16 %v4938, %v4936
        %v5055 = vpack.c.b16 %v4941, %v4939
        %v5056 = vpack.c.b16 %v4942, %v4940
        %v5057 = vpack.c.b16 %v4945, %v4943
        %v5058 = vpack.c.b16 %v4946, %v4944
        %v5059 = vpack.c.b16 %v4949, %v4947
        %v5060 = vpack.c.b16 %v4950, %v4948
        %v5061 = vpack.c.b16 %v4953, %v4951
        %v5062 = vpack.c.b16 %v4954, %v4952
        %v5063 = vpack.c.b16 %v4957, %v4955
        %v5064 = vpack.c.b16 %v4958, %v4956
        %v5065 = vpack.c.b16 %v4961, %v4959
        %v5066 = vpack.c.b16 %v4962, %v4960
        %v5067 = vpack.c.b16 %v4965, %v4963
        %v5068 = vpack.c.b16 %v4966, %v4964
        %v5069 = vpack.c.b16 %v4969, %v4967
        %v5070 = vpack.c.b16 %v4970, %v4968
        %v5071 = vpack.c.b16 %v4973, %v4971
        %v5072 = vpack.c.b16 %v4974, %v4972
        %v5073 = vpack.c.b16 %v4977, %v4975
        %v5074 = vpack.c.b16 %v4978, %v4976
        %5171 = vmatpush.bf16.msra.mxu0 %v4993
        %5172 = vmatpush.bf16.msra.mxu0 %v4991
        %5173 = vmatpush.bf16.msra.mxu0 %v4989
        %5174 = vmatpush.bf16.msra.mxu0 %v4987
        %5175 = vmatpush.bf16.msra.mxu0 %v4985
        %5176 = vmatpush.bf16.msra.mxu0 %v4983
        %5177 = vmatpush.bf16.msra.mxu0 %v4981
        %5178 = vmatpush.bf16.msra.mxu0 %v4979
        %5179 = vmatmul.bf16.gmra.mxu0 %v4586
        %v5180 = vpop.f32.mrf.mxu0
        %v5181 = vadd.f32 %v4689, %v5180
        %v5182 = vpop.f32.mrf.mxu0
        %v5183 = vadd.f32 %v4689, %v5182
        %5184 = vdwg.mxu0
        %5185 = vmatpush.bf16.msra.mxu0 %v5009
        %5186 = vmatpush.bf16.msra.mxu0 %v5007
        %5187 = vmatpush.bf16.msra.mxu0 %v5005
        %5188 = vmatpush.bf16.msra.mxu0 %v5003
        %5189 = vmatpush.bf16.msra.mxu0 %v5001
        %5190 = vmatpush.bf16.msra.mxu0 %v4999
        %5191 = vmatpush.bf16.msra.mxu0 %v4997
        %5192 = vmatpush.bf16.msra.mxu0 %v4995
        %5193 = vmatmul.bf16.gmra.mxu0 %v4587
        %v5194 = vpop.f32.mrf.mxu0
        %v5195 = vadd.f32 %v5181, %v5194
        %v5196 = vpop.f32.mrf.mxu0
        %v5197 = vadd.f32 %v5183, %v5196
        %5198 = vdwg.mxu0
        %5199 = vmatpush.bf16.msra.mxu0 %v5025
        %5200 = vmatpush.bf16.msra.mxu0 %v5023
        %5201 = vmatpush.bf16.msra.mxu0 %v5021
        %5202 = vmatpush.bf16.msra.mxu0 %v5019
        %5203 = vmatpush.bf16.msra.mxu0 %v5017
        %5204 = vmatpush.bf16.msra.mxu0 %v5015
        %5205 = vmatpush.bf16.msra.mxu0 %v5013
        %5206 = vmatpush.bf16.msra.mxu0 %v5011
        %5207 = vmatmul.bf16.gmra.mxu0 %v4588
        %v5208 = vpop.f32.mrf.mxu0
        %v5209 = vadd.f32 %v5195, %v5208
        %v5210 = vpop.f32.mrf.mxu0
        %v5211 = vadd.f32 %v5197, %v5210
        %5212 = vdwg.mxu0
        %5213 = vmatpush.bf16.msra.mxu0 %v5041
        %5214 = vmatpush.bf16.msra.mxu0 %v5039
        %5215 = vmatpush.bf16.msra.mxu0 %v5037
        %5216 = vmatpush.bf16.msra.mxu0 %v5035
        %5217 = vmatpush.bf16.msra.mxu0 %v5033
        %5218 = vmatpush.bf16.msra.mxu0 %v5031
        %5219 = vmatpush.bf16.msra.mxu0 %v5029
        %5220 = vmatpush.bf16.msra.mxu0 %v5027
        %5221 = vmatmul.bf16.gmra.mxu0 %v4589
        %v5222 = vpop.f32.mrf.mxu0
        %v5223 = vadd.f32 %v5209, %v5222
        %v5224 = vpop.f32.mrf.mxu0
        %v5225 = vadd.f32 %v5211, %v5224
        %5226 = vdwg.mxu0
        %5227 = vmatpush.bf16.msra.mxu0 %v5057
        %5228 = vmatpush.bf16.msra.mxu0 %v5055
        %5229 = vmatpush.bf16.msra.mxu0 %v5053
        %5230 = vmatpush.bf16.msra.mxu0 %v5051
        %5231 = vmatpush.bf16.msra.mxu0 %v5049
        %5232 = vmatpush.bf16.msra.mxu0 %v5047
        %5233 = vmatpush.bf16.msra.mxu0 %v5045
        %5234 = vmatpush.bf16.msra.mxu0 %v5043
        %5235 = vmatmul.bf16.gmra.mxu0 %v4590
        %v5236 = vpop.f32.mrf.mxu0
        %v5237 = vadd.f32 %v5223, %v5236
        %v5238 = vpop.f32.mrf.mxu0
        %v5239 = vadd.f32 %v5225, %v5238
        %5240 = vdwg.mxu0
        %5241 = vmatpush.bf16.msra.mxu0 %v5073
        %5242 = vmatpush.bf16.msra.mxu0 %v5071
        %5243 = vmatpush.bf16.msra.mxu0 %v5069
        %5244 = vmatpush.bf16.msra.mxu0 %v5067
        %5245 = vmatpush.bf16.msra.mxu0 %v5065
        %5246 = vmatpush.bf16.msra.mxu0 %v5063
        %5247 = vmatpush.bf16.msra.mxu0 %v5061
        %5248 = vmatpush.bf16.msra.mxu0 %v5059
        %5249 = vmatmul.bf16.gmra.mxu0 %v4591
        %v5250 = vpop.f32.mrf.mxu0
        %v5251 = vadd.f32 %v5237, %v5250
        %v5252 = vpop.f32.mrf.mxu0
        %v5253 = vadd.f32 %v5239, %v5252
        %5254 = vdwg.mxu0
        %5255 = vmatpush.bf16.msra.mxu0 %v4994
        %5256 = vmatpush.bf16.msra.mxu0 %v4992
        %5257 = vmatpush.bf16.msra.mxu0 %v4990
        %5258 = vmatpush.bf16.msra.mxu0 %v4988
        %5259 = vmatpush.bf16.msra.mxu0 %v4986
        %5260 = vmatpush.bf16.msra.mxu0 %v4984
        %5261 = vmatpush.bf16.msra.mxu0 %v4982
        %5262 = vmatpush.bf16.msra.mxu0 %v4980
        %5263 = vmatmul.bf16.gmra.mxu0 %v4586
        %v5264 = vpop.f32.mrf.mxu0
        %v5265 = vadd.f32 %v4690, %v5264
        %v5266 = vpop.f32.mrf.mxu0
        %v5267 = vadd.f32 %v4690, %v5266
        %5268 = vdwg.mxu0
        %5269 = vmatpush.bf16.msra.mxu0 %v5010
        %5270 = vmatpush.bf16.msra.mxu0 %v5008
        %5271 = vmatpush.bf16.msra.mxu0 %v5006
        %5272 = vmatpush.bf16.msra.mxu0 %v5004
        %5273 = vmatpush.bf16.msra.mxu0 %v5002
        %5274 = vmatpush.bf16.msra.mxu0 %v5000
        %5275 = vmatpush.bf16.msra.mxu0 %v4998
        %5276 = vmatpush.bf16.msra.mxu0 %v4996
        %5277 = vmatmul.bf16.gmra.mxu0 %v4587
        %v5278 = vpop.f32.mrf.mxu0
        %v5279 = vadd.f32 %v5265, %v5278
        %v5280 = vpop.f32.mrf.mxu0
        %v5281 = vadd.f32 %v5267, %v5280
        %5282 = vdwg.mxu0
        %5283 = vmatpush.bf16.msra.mxu0 %v5026
        %5284 = vmatpush.bf16.msra.mxu0 %v5024
        %5285 = vmatpush.bf16.msra.mxu0 %v5022
        %5286 = vmatpush.bf16.msra.mxu0 %v5020
        %5287 = vmatpush.bf16.msra.mxu0 %v5018
        %5288 = vmatpush.bf16.msra.mxu0 %v5016
        %5289 = vmatpush.bf16.msra.mxu0 %v5014
        %5290 = vmatpush.bf16.msra.mxu0 %v5012
        %5291 = vmatmul.bf16.gmra.mxu0 %v4588
        %v5292 = vpop.f32.mrf.mxu0
        %v5293 = vadd.f32 %v5279, %v5292
        %v5294 = vpop.f32.mrf.mxu0
        %v5295 = vadd.f32 %v5281, %v5294
        %5296 = vdwg.mxu0
        %5297 = vmatpush.bf16.msra.mxu0 %v5042
        %5298 = vmatpush.bf16.msra.mxu0 %v5040
        %5299 = vmatpush.bf16.msra.mxu0 %v5038
        %5300 = vmatpush.bf16.msra.mxu0 %v5036
        %5301 = vmatpush.bf16.msra.mxu0 %v5034
        %5302 = vmatpush.bf16.msra.mxu0 %v5032
        %5303 = vmatpush.bf16.msra.mxu0 %v5030
        %5304 = vmatpush.bf16.msra.mxu0 %v5028
        %5305 = vmatmul.bf16.gmra.mxu0 %v4589
        %v5306 = vpop.f32.mrf.mxu0
        %v5307 = vadd.f32 %v5293, %v5306
        %v5308 = vpop.f32.mrf.mxu0
        %v5309 = vadd.f32 %v5295, %v5308
        %5310 = vdwg.mxu0
        %5311 = vmatpush.bf16.msra.mxu0 %v5058
        %5312 = vmatpush.bf16.msra.mxu0 %v5056
        %5313 = vmatpush.bf16.msra.mxu0 %v5054
        %5314 = vmatpush.bf16.msra.mxu0 %v5052
        %5315 = vmatpush.bf16.msra.mxu0 %v5050
        %5316 = vmatpush.bf16.msra.mxu0 %v5048
        %5317 = vmatpush.bf16.msra.mxu0 %v5046
        %5318 = vmatpush.bf16.msra.mxu0 %v5044
        %5319 = vmatmul.bf16.gmra.mxu0 %v4590
        %v5320 = vpop.f32.mrf.mxu0
        %v5321 = vadd.f32 %v5307, %v5320
        %v5322 = vpop.f32.mrf.mxu0
        %v5323 = vadd.f32 %v5309, %v5322
        %5324 = vdwg.mxu0
        %5325 = vmatpush.bf16.msra.mxu0 %v5074
        %5326 = vmatpush.bf16.msra.mxu0 %v5072
        %5327 = vmatpush.bf16.msra.mxu0 %v5070
        %5328 = vmatpush.bf16.msra.mxu0 %v5068
        %5329 = vmatpush.bf16.msra.mxu0 %v5066
        %5330 = vmatpush.bf16.msra.mxu0 %v5064
        %5331 = vmatpush.bf16.msra.mxu0 %v5062
        %5332 = vmatpush.bf16.msra.mxu0 %v5060
        %5333 = vmatmul.bf16.gmra.mxu0 %v4591
        %v5334 = vpop.f32.mrf.mxu0
        %v5335 = vadd.f32 %v5321, %v5334
        %v5336 = vpop.f32.mrf.mxu0
        %v5337 = vadd.f32 %v5323, %v5336
        %5338 = vdwg.mxu0
        %v5339 = vmul.f32 %v5251, %v317
        %v5340 = vmul.f32 %v5335, %v318
        %v5341 = vmul.f32 %v5253, %v319
        %v5342 = vmul.f32 %v5337, %v320
        %v5343 = vadd.f32 %v5339, %v5341
        %v5344 = vrot.slane %v5343, 4
        %v5345 = vadd.f32 %v5343, %v5344
        %v5346 = vrot.slane %v5345, 2
        %v5347 = vadd.f32 %v5345, %v5346
        %v5348 = vrot.slane %v5347, 1
        %v5349 = vadd.f32 %v5347, %v5348
        %v5350 = vadd.f32 %v5340, %v5342
        %v5351 = vrot.slane %v5350, 4
        %v5352 = vadd.f32 %v5350, %v5351
        %v5353 = vrot.slane %v5352, 2
        %v5354 = vadd.f32 %v5352, %v5353
        %v5355 = vrot.slane %v5354, 1
        %v5356 = vadd.f32 %v5354, %v5355
        %v5357 = vmul.f32 %v5339, %v5251
        %v5358 = vmul.f32 %v5340, %v5335
        %v5359 = vmul.f32 %v5341, %v5253
        %v5360 = vmul.f32 %v5342, %v5337
        %v5361 = vadd.f32 %v5357, %v5359
        %v5362 = vrot.slane %v5361, 4
        %v5363 = vadd.f32 %v5361, %v5362
        %v5364 = vrot.slane %v5363, 2
        %v5365 = vadd.f32 %v5363, %v5364
        %v5366 = vrot.slane %v5365, 1
        %v5367 = vadd.f32 %v5365, %v5366
        %v5368 = vadd.f32 %v5358, %v5360
        %v5369 = vrot.slane %v5368, 4
        %v5370 = vadd.f32 %v5368, %v5369
        %v5371 = vrot.slane %v5370, 2
        %v5372 = vadd.f32 %v5370, %v5371
        %v5373 = vrot.slane %v5372, 1
        %v5374 = vadd.f32 %v5372, %v5373
        %v5375 = vsel %vm1290, %v5349, %v5367
        %v5376 = vsel %vm1290, %v5356, %v5374
        %5377 = vmatpush.msra.mxu0 %v351
        %5378 = vmatpush.msra.mxu0 %v349
        %5379 = vmatpush.msra.mxu0 %v347
        %5380 = vmatpush.msra.mxu0 %v345
        %5381 = vmatpush.msra.mxu0 %v343
        %5382 = vmatpush.msra.mxu0 %v341
        %5383 = vmatpush.msra.mxu0 %v339
        %5384 = vmatpush.msra.mxu0 %v337
        %5385 = vmatpush.msra.mxu0 %v335
        %5386 = vmatpush.msra.mxu0 %v333
        %5387 = vmatpush.msra.mxu0 %v331
        %5388 = vmatpush.msra.mxu0 %v329
        %5389 = vmatpush.msra.mxu0 %v327
        %5390 = vmatpush.msra.mxu0 %v325
        %5391 = vmatpush.msra.mxu0 %v323
        %5392 = vmatpush.msra.mxu0 %v321
        %5393 = vmatmul.f32.gmra.mxu0 %v5375
        %v5394 = vpop.f32.mrf.mxu0
        %v5395 = vadd.f32 0.0, %v5394
        %5396 = vdwg.mxu0
        %5397 = vmatpush.msra.mxu0 %v383
        %5398 = vmatpush.msra.mxu0 %v381
        %5399 = vmatpush.msra.mxu0 %v379
        %5400 = vmatpush.msra.mxu0 %v377
        %5401 = vmatpush.msra.mxu0 %v375
        %5402 = vmatpush.msra.mxu0 %v373
        %5403 = vmatpush.msra.mxu0 %v371
        %5404 = vmatpush.msra.mxu0 %v369
        %5405 = vmatpush.msra.mxu0 %v367
        %5406 = vmatpush.msra.mxu0 %v365
        %5407 = vmatpush.msra.mxu0 %v363
        %5408 = vmatpush.msra.mxu0 %v361
        %5409 = vmatpush.msra.mxu0 %v359
        %5410 = vmatpush.msra.mxu0 %v357
        %5411 = vmatpush.msra.mxu0 %v355
        %5412 = vmatpush.msra.mxu0 %v353
        %5413 = vmatmul.f32.gmra.mxu0 %v5376
        %v5414 = vpop.f32.mrf.mxu0
        %v5415 = vadd.f32 %v5395, %v5414
        %5416 = vdwg.mxu0
        %5417 = vmatpush.msra.mxu0 %v352
        %5418 = vmatpush.msra.mxu0 %v350
        %5419 = vmatpush.msra.mxu0 %v348
        %5420 = vmatpush.msra.mxu0 %v346
        %5421 = vmatpush.msra.mxu0 %v344
        %5422 = vmatpush.msra.mxu0 %v342
        %5423 = vmatpush.msra.mxu0 %v340
        %5424 = vmatpush.msra.mxu0 %v338
        %5425 = vmatpush.msra.mxu0 %v336
        %5426 = vmatpush.msra.mxu0 %v334
        %5427 = vmatpush.msra.mxu0 %v332
        %5428 = vmatpush.msra.mxu0 %v330
        %5429 = vmatpush.msra.mxu0 %v328
        %5430 = vmatpush.msra.mxu0 %v326
        %5431 = vmatpush.msra.mxu0 %v324
        %5432 = vmatpush.msra.mxu0 %v322
        %5433 = vmatmul.f32.gmra.mxu0 %v5375
        %v5434 = vpop.f32.mrf.mxu0
        %v5435 = vadd.f32 0.0, %v5434
        %5436 = vdwg.mxu0
        %5437 = vmatpush.msra.mxu0 %v384
        %5438 = vmatpush.msra.mxu0 %v382
        %5439 = vmatpush.msra.mxu0 %v380
        %5440 = vmatpush.msra.mxu0 %v378
        %5441 = vmatpush.msra.mxu0 %v376
        %5442 = vmatpush.msra.mxu0 %v374
        %5443 = vmatpush.msra.mxu0 %v372
        %5444 = vmatpush.msra.mxu0 %v370
        %5445 = vmatpush.msra.mxu0 %v368
        %5446 = vmatpush.msra.mxu0 %v366
        %5447 = vmatpush.msra.mxu0 %v364
        %5448 = vmatpush.msra.mxu0 %v362
        %5449 = vmatpush.msra.mxu0 %v360
        %5450 = vmatpush.msra.mxu0 %v358
        %5451 = vmatpush.msra.mxu0 %v356
        %5452 = vmatpush.msra.mxu0 %v354
        %5453 = vmatmul.f32.gmra.mxu0 %v5376
        %v5454 = vpop.f32.mrf.mxu0
        %v5455 = vadd.f32 %v5435, %v5454
        %5456 = vdwg.mxu0
        %v5457 = vmul.f32 %v5415, 0.015625
        %v5458 = vmul.f32 %v5455, 0.015625
        %v5459 = vmul.f32 %v5457, %v5457
        %v5460 = vmul.f32 %v5458, %v5458
        %v5463 = vrot.slane %v5459, 7
        %v5464 = vrot.slane %v5460, 7
        %v5467 = vsub.f32 %v5457, %v5463
        %v5468 = vsub.f32 %v5458, %v5464
        %v5469 = vperm.slane %v5457, 0
        %v5470 = vperm.slane %v5458, 0
        %v5471 = vsub.f32 %v5251, %v5469
        %v5472 = vsub.f32 %v5335, %v5470
        %v5473 = vsub.f32 %v5253, %v5469
        %v5474 = vsub.f32 %v5337, %v5470
        %v5475 = vadd.f32 %v5467, 1e-05
        %v5476 = vadd.f32 %v5468, 1e-05
        %v5477 = vrsqrt.pop %v5475
        %v5478 = vmul.f32 %v5477, %v5475
        %v5479 = vmul.f32 %v5478, %v5477
        %v5480 = vmul.f32 0.5, %v5479
        %v5481 = vsub.f32 1.5, %v5480
        %v5482 = vmul.f32 %v5477, %v5481
        %vm5483 = vweird.f32 %v5475
        %vm5484 = vweird.f32 %v5477
        %vm5485 = vmor %vm5483, %vm5484
        %v5486 = vsel %vm5485, %v5477, %v5482
        %v5487 = vrsqrt.pop %v5476
        %v5488 = vmul.f32 %v5487, %v5476
        %v5489 = vmul.f32 %v5488, %v5487
        %v5490 = vmul.f32 0.5, %v5489
        %v5491 = vsub.f32 1.5, %v5490
        %v5492 = vmul.f32 %v5487, %v5491
        %vm5493 = vweird.f32 %v5476
        %vm5494 = vweird.f32 %v5487
        %vm5495 = vmor %vm5493, %vm5494
        %v5496 = vsel %vm5495, %v5487, %v5492
        %v5497 = vperm.slane %v5486, 1
        %v5498 = vperm.slane %v5496, 1
        %v5499 = vmul.f32 %v5471, %v5497
        %v5500 = vmul.f32 %v5472, %v5498
        %v5501 = vmul.f32 %v5473, %v5497
        %v5502 = vmul.f32 %v5474, %v5498
        %v5503 = vperm.slane %v400, 0
        %v5504 = vperm.slane %v401, 0
        %v5505 = vmul.f32 %v5499, %v5503
        %v5506 = vmul.f32 %v5500, %v5504
        %v5507 = vmul.f32 %v5501, %v5503
        %v5508 = vmul.f32 %v5502, %v5504
        %v5509 = vperm.slane %v400, 1
        %v5510 = vperm.slane %v401, 1
        %v5511 = vadd.f32 %v5505, %v5509
        %v5512 = vadd.f32 %v5506, %v5510
        %v5513 = vadd.f32 %v5507, %v5509
        %v5514 = vadd.f32 %v5508, %v5510
        %v5515 = vmax.f32 %v5511, 0.0
        %v5516 = vmax.f32 %v5512, 0.0
        %v5517 = vmax.f32 %v5513, 0.0
        %v5518 = vmax.f32 %v5514, 0.0
        %v5519 = vpack.c.bf16 %v5517, %v5515
        %v5520 = vpack.c.bf16 %v5518, %v5516
        %5521 = vmatpush.bf16.msra.mxu0 0
        %5522 = vmatpush.bf16.msra.mxu0 0
        %5523 = vmatpush.bf16.msra.mxu0 0
        %5524 = vmatpush.bf16.msra.mxu0 0
        %5525 = vmatpush.bf16.msra.mxu0 0
        %5526 = vmatpush.bf16.msra.mxu0 0
        %5527 = vmatpush.bf16.msra.mxu0 0
        %5528 = vmatpush.bf16.msra.mxu0 %v5519
        %5529 = vmatmul.bf16.gmra.mxu0 %v410
        %v5530 = vpop.f32.mrf.mxu0
        %v5531 = vadd.f32 0.0, %v5530
        %v5532 = vpop.f32.mrf.mxu0
        %v5533 = vadd.f32 0.0, %v5532
        %5534 = vdwg.mxu0
        %5535 = vmatpush.bf16.msra.mxu0 0
        %5536 = vmatpush.bf16.msra.mxu0 0
        %5537 = vmatpush.bf16.msra.mxu0 0
        %5538 = vmatpush.bf16.msra.mxu0 0
        %5539 = vmatpush.bf16.msra.mxu0 0
        %5540 = vmatpush.bf16.msra.mxu0 0
        %5541 = vmatpush.bf16.msra.mxu0 0
        %5542 = vmatpush.bf16.msra.mxu0 %v5520
        %5543 = vmatmul.bf16.gmra.mxu0 %v410
        %v5544 = vpop.f32.mrf.mxu0
        %v5545 = vadd.f32 0.0, %v5544
        %v5546 = vpop.f32.mrf.mxu0
        %v5547 = vadd.f32 0.0, %v5546
        %5548 = vdwg.mxu0
        %5549 = vmatpush.bf16.msra.mxu0 0
        %5550 = vmatpush.bf16.msra.mxu0 0
        %5551 = vmatpush.bf16.msra.mxu0 0
        %5552 = vmatpush.bf16.msra.mxu0 0
        %5553 = vmatpush.bf16.msra.mxu0 0
        %5554 = vmatpush.bf16.msra.mxu0 0
        %5555 = vmatpush.bf16.msra.mxu0 0
        %5556 = vmatpush.bf16.msra.mxu0 %v5519
        %5557 = vmatmul.bf16.gmra.mxu0 %v441
        %v5558 = vpop.f32.mrf.mxu0
        %v5559 = vadd.f32 0.0, %v5558
        %v5560 = vpop.f32.mrf.mxu0
        %v5561 = vadd.f32 0.0, %v5560
        %5562 = vdwg.mxu0
        %5563 = vmatpush.bf16.msra.mxu0 0
        %5564 = vmatpush.bf16.msra.mxu0 0
        %5565 = vmatpush.bf16.msra.mxu0 0
        %5566 = vmatpush.bf16.msra.mxu0 0
        %5567 = vmatpush.bf16.msra.mxu0 0
        %5568 = vmatpush.bf16.msra.mxu0 0
        %5569 = vmatpush.bf16.msra.mxu0 0
        %5570 = vmatpush.bf16.msra.mxu0 %v5520
        %5571 = vmatmul.bf16.gmra.mxu0 %v441
        %v5572 = vpop.f32.mrf.mxu0
        %v5573 = vadd.f32 0.0, %v5572
        %v5574 = vpop.f32.mrf.mxu0
        %v5575 = vadd.f32 0.0, %v5574
        %5576 = vdwg.mxu0
        %5577 = vmatpush.bf16.msra.mxu0 0
        %5578 = vmatpush.bf16.msra.mxu0 0
        %5579 = vmatpush.bf16.msra.mxu0 0
        %5580 = vmatpush.bf16.msra.mxu0 0
        %5581 = vmatpush.bf16.msra.mxu0 0
        %5582 = vmatpush.bf16.msra.mxu0 0
        %5583 = vmatpush.bf16.msra.mxu0 0
        %5584 = vmatpush.bf16.msra.mxu0 %v5519
        %5585 = vmatmul.bf16.gmra.mxu0 %v472
        %v5586 = vpop.f32.mrf.mxu0
        %v5587 = vadd.f32 0.0, %v5586
        %v5588 = vpop.f32.mrf.mxu0
        %v5589 = vadd.f32 0.0, %v5588
        %5590 = vdwg.mxu0
        %5591 = vmatpush.bf16.msra.mxu0 0
        %5592 = vmatpush.bf16.msra.mxu0 0
        %5593 = vmatpush.bf16.msra.mxu0 0
        %5594 = vmatpush.bf16.msra.mxu0 0
        %5595 = vmatpush.bf16.msra.mxu0 0
        %5596 = vmatpush.bf16.msra.mxu0 0
        %5597 = vmatpush.bf16.msra.mxu0 0
        %5598 = vmatpush.bf16.msra.mxu0 %v5520
        %5599 = vmatmul.bf16.gmra.mxu0 %v472
        %v5600 = vpop.f32.mrf.mxu0
        %v5601 = vadd.f32 0.0, %v5600
        %v5602 = vpop.f32.mrf.mxu0
        %v5603 = vadd.f32 0.0, %v5602
        %5604 = vdwg.mxu0
        %v5605 = vpack.c.bf16 %v5533, %v5531
        %v5606 = vpack.c.bf16 %v5547, %v5545
        %v5607 = vpack.c.bf16 %v5561, %v5559
        %v5608 = vpack.c.bf16 %v5575, %v5573
        %v5609 = vpack.c.bf16 %v5589, %v5587
        %v5610 = vpack.c.bf16 %v5603, %v5601
        %s5611 = scalar_lea.vmem [#allocation2], 3840
        %v5612 = vld [vmem:[%s5611] sm:$0xff]
        %v5613 = vld [vmem:[%s5611 + $0x8] sm:$0xff]
        %v5614 = vld [vmem:[%s5611 + $0x10] sm:$0xff]
        %v5615 = vld [vmem:[%s5611 + $0x18] sm:$0xff]
        %v5616 = vld [vmem:[%s5611 + $0x20] sm:$0xff]
        %v5617 = vld [vmem:[%s5611 + $0x28] sm:$0xff]
        %v5618 = vld [vmem:[%s5611 + $0x30] sm:$0xff]
        %v5619 = vld [vmem:[%s5611 + $0x38] sm:$0xff]
        %v5620 = vld [vmem:[%s5611 + $0x40] sm:$0xff]
        %v5621 = vld [vmem:[%s5611 + $0x48] sm:$0xff]
        %v5622 = vld [vmem:[%s5611 + $0x50] sm:$0xff]
        %v5623 = vld [vmem:[%s5611 + $0x58] sm:$0xff]
        %v5624 = vld [vmem:[%s5611 + $0x60] sm:$0xff]
        %v5625 = vld [vmem:[%s5611 + $0x68] sm:$0xff]
        %v5626 = vld [vmem:[%s5611 + $0x70] sm:$0xff]
        %v5627 = vld [vmem:[%s5611 + $0x78] sm:$0xff]
        %v5628 = vld [vmem:[%s5611 + $0x80] sm:$0xff]
        %v5629 = vld [vmem:[%s5611 + $0x88] sm:$0xff]
        %v5630 = vld [vmem:[%s5611 + $0x90] sm:$0xff]
        %v5631 = vld [vmem:[%s5611 + $0x98] sm:$0xff]
        %v5632 = vld [vmem:[%s5611 + $0xa0] sm:$0xff]
        %v5633 = vld [vmem:[%s5611 + $0xa8] sm:$0xff]
        %v5634 = vld [vmem:[%s5611 + $0xb0] sm:$0xff]
        %v5635 = vld [vmem:[%s5611 + $0xb8] sm:$0xff]
        %v5636 = vld [vmem:[%s5611 + $0xc0] sm:$0xff]
        %v5637 = vld [vmem:[%s5611 + $0xc8] sm:$0xff]
        %v5638 = vld [vmem:[%s5611 + $0xd0] sm:$0xff]
        %v5639 = vld [vmem:[%s5611 + $0xd8] sm:$0xff]
        %v5640 = vld [vmem:[%s5611 + $0xe0] sm:$0xff]
        %v5641 = vld [vmem:[%s5611 + $0xe8] sm:$0xff]
        %v5642 = vld [vmem:[%s5611 + $0xf0] sm:$0xff]
        %v5643 = vld [vmem:[%s5611 + $0xf8] sm:$0xff]
        %v5644 = vld [vmem:[%s5611 + $0x100] sm:$0xff]
        %v5645 = vld [vmem:[%s5611 + $0x108] sm:$0xff]
        %v5646 = vld [vmem:[%s5611 + $0x110] sm:$0xff]
        %v5647 = vld [vmem:[%s5611 + $0x118] sm:$0xff]
        %v5648 = vld [vmem:[%s5611 + $0x120] sm:$0xff]
        %v5649 = vld [vmem:[%s5611 + $0x128] sm:$0xff]
        %v5650 = vld [vmem:[%s5611 + $0x130] sm:$0xff]
        %v5651 = vld [vmem:[%s5611 + $0x138] sm:$0xff]
        %v5652 = vld [vmem:[%s5611 + $0x140] sm:$0xff]
        %v5653 = vld [vmem:[%s5611 + $0x148] sm:$0xff]
        %v5654 = vld [vmem:[%s5611 + $0x150] sm:$0xff]
        %v5655 = vld [vmem:[%s5611 + $0x158] sm:$0xff]
        %v5656 = vld [vmem:[%s5611 + $0x160] sm:$0xff]
        %v5657 = vld [vmem:[%s5611 + $0x168] sm:$0xff]
        %v5658 = vld [vmem:[%s5611 + $0x170] sm:$0xff]
        %v5659 = vld [vmem:[%s5611 + $0x178] sm:$0xff]
        %v5660 = vld [vmem:[%s5611 + $0x180] sm:$0xff]
        %v5661 = vld [vmem:[%s5611 + $0x188] sm:$0xff]
        %v5662 = vld [vmem:[%s5611 + $0x190] sm:$0xff]
        %v5663 = vld [vmem:[%s5611 + $0x198] sm:$0xff]
        %v5664 = vld [vmem:[%s5611 + $0x1a0] sm:$0xff]
        %v5665 = vld [vmem:[%s5611 + $0x1a8] sm:$0xff]
        %v5666 = vld [vmem:[%s5611 + $0x1b0] sm:$0xff]
        %v5667 = vld [vmem:[%s5611 + $0x1b8] sm:$0xff]
        %v5668 = vld [vmem:[%s5611 + $0x1c0] sm:$0xff]
        %v5669 = vld [vmem:[%s5611 + $0x1c8] sm:$0xff]
        %v5670 = vld [vmem:[%s5611 + $0x1d0] sm:$0xff]
        %v5671 = vld [vmem:[%s5611 + $0x1d8] sm:$0xff]
        %v5672 = vld [vmem:[%s5611 + $0x1e0] sm:$0xff]
        %v5673 = vld [vmem:[%s5611 + $0x1e8] sm:$0xff]
        %v5674 = vld [vmem:[%s5611 + $0x1f0] sm:$0xff]
        %v5675 = vld [vmem:[%s5611 + $0x1f8] sm:$0xff]
        %v5676 = vld [vmem:[%s5611 + $0x200] sm:$0xff]
        %v5677 = vld [vmem:[%s5611 + $0x208] sm:$0xff]
        %v5678 = vld [vmem:[%s5611 + $0x210] sm:$0xff]
        %v5679 = vld [vmem:[%s5611 + $0x218] sm:$0xff]
        %v5680 = vld [vmem:[%s5611 + $0x220] sm:$0xff]
        %v5681 = vld [vmem:[%s5611 + $0x228] sm:$0xff]
        %v5682 = vld [vmem:[%s5611 + $0x230] sm:$0xff]
        %v5683 = vld [vmem:[%s5611 + $0x238] sm:$0xff]
        %v5684 = vld [vmem:[%s5611 + $0x240] sm:$0xff]
        %v5685 = vld [vmem:[%s5611 + $0x248] sm:$0xff]
        %v5686 = vld [vmem:[%s5611 + $0x250] sm:$0xff]
        %v5687 = vld [vmem:[%s5611 + $0x258] sm:$0xff]
        %v5688 = vld [vmem:[%s5611 + $0x260] sm:$0xff]
        %v5689 = vld [vmem:[%s5611 + $0x268] sm:$0xff]
        %v5690 = vld [vmem:[%s5611 + $0x270] sm:$0xff]
        %v5691 = vld [vmem:[%s5611 + $0x278] sm:$0xff]
        %v5692 = vld [vmem:[%s5611 + $0x280] sm:$0xff]
        %v5693 = vld [vmem:[%s5611 + $0x288] sm:$0xff]
        %v5694 = vld [vmem:[%s5611 + $0x290] sm:$0xff]
        %v5695 = vld [vmem:[%s5611 + $0x298] sm:$0xff]
        %v5696 = vld [vmem:[%s5611 + $0x2a0] sm:$0xff]
        %v5697 = vld [vmem:[%s5611 + $0x2a8] sm:$0xff]
        %v5698 = vld [vmem:[%s5611 + $0x2b0] sm:$0xff]
        %v5699 = vld [vmem:[%s5611 + $0x2b8] sm:$0xff]
        %v5700 = vld [vmem:[%s5611 + $0x2c0] sm:$0xff]
        %v5701 = vld [vmem:[%s5611 + $0x2c8] sm:$0xff]
        %v5702 = vld [vmem:[%s5611 + $0x2d0] sm:$0xff]
        %v5703 = vld [vmem:[%s5611 + $0x2d8] sm:$0xff]
        %v5704 = vld [vmem:[%s5611 + $0x2e0] sm:$0xff]
        %v5705 = vld [vmem:[%s5611 + $0x2e8] sm:$0xff]
        %v5706 = vld [vmem:[%s5611 + $0x2f0] sm:$0xff]
        %v5707 = vld [vmem:[%s5611 + $0x2f8] sm:$0xff]
        %v5708 = vperm.slane %v396, 5
        %v5709 = vperm.slane %v397, 5
        %v5806 = vunpack.c.l.b16 %v5612
        %v5807 = vunpack.c.h.b16 %v5612
        %v5808 = vunpack.c.l.b16 %v5613
        %v5809 = vunpack.c.h.b16 %v5613
        %v5810 = vunpack.c.l.b16 %v5614
        %v5811 = vunpack.c.h.b16 %v5614
        %v5812 = vunpack.c.l.b16 %v5615
        %v5813 = vunpack.c.h.b16 %v5615
        %v5814 = vunpack.c.l.b16 %v5616
        %v5815 = vunpack.c.h.b16 %v5616
        %v5816 = vunpack.c.l.b16 %v5617
        %v5817 = vunpack.c.h.b16 %v5617
        %v5818 = vunpack.c.l.b16 %v5618
        %v5819 = vunpack.c.h.b16 %v5618
        %v5820 = vunpack.c.l.b16 %v5619
        %v5821 = vunpack.c.h.b16 %v5619
        %v5822 = vunpack.c.l.b16 %v5620
        %v5823 = vunpack.c.h.b16 %v5620
        %v5824 = vunpack.c.l.b16 %v5621
        %v5825 = vunpack.c.h.b16 %v5621
        %v5826 = vunpack.c.l.b16 %v5622
        %v5827 = vunpack.c.h.b16 %v5622
        %v5828 = vunpack.c.l.b16 %v5623
        %v5829 = vunpack.c.h.b16 %v5623
        %v5830 = vunpack.c.l.b16 %v5624
        %v5831 = vunpack.c.h.b16 %v5624
        %v5832 = vunpack.c.l.b16 %v5625
        %v5833 = vunpack.c.h.b16 %v5625
        %v5834 = vunpack.c.l.b16 %v5626
        %v5835 = vunpack.c.h.b16 %v5626
        %v5836 = vunpack.c.l.b16 %v5627
        %v5837 = vunpack.c.h.b16 %v5627
        %v5838 = vunpack.c.l.b16 %v5628
        %v5839 = vunpack.c.h.b16 %v5628
        %v5840 = vunpack.c.l.b16 %v5629
        %v5841 = vunpack.c.h.b16 %v5629
        %v5842 = vunpack.c.l.b16 %v5630
        %v5843 = vunpack.c.h.b16 %v5630
        %v5844 = vunpack.c.l.b16 %v5631
        %v5845 = vunpack.c.h.b16 %v5631
        %v5846 = vunpack.c.l.b16 %v5632
        %v5847 = vunpack.c.h.b16 %v5632
        %v5848 = vunpack.c.l.b16 %v5633
        %v5849 = vunpack.c.h.b16 %v5633
        %v5850 = vunpack.c.l.b16 %v5634
        %v5851 = vunpack.c.h.b16 %v5634
        %v5852 = vunpack.c.l.b16 %v5635
        %v5853 = vunpack.c.h.b16 %v5635
        %v5854 = vunpack.c.l.b16 %v5636
        %v5855 = vunpack.c.h.b16 %v5636
        %v5856 = vunpack.c.l.b16 %v5637
        %v5857 = vunpack.c.h.b16 %v5637
        %v5858 = vunpack.c.l.b16 %v5638
        %v5859 = vunpack.c.h.b16 %v5638
        %v5860 = vunpack.c.l.b16 %v5639
        %v5861 = vunpack.c.h.b16 %v5639
        %v5862 = vunpack.c.l.b16 %v5640
        %v5863 = vunpack.c.h.b16 %v5640
        %v5864 = vunpack.c.l.b16 %v5641
        %v5865 = vunpack.c.h.b16 %v5641
        %v5866 = vunpack.c.l.b16 %v5642
        %v5867 = vunpack.c.h.b16 %v5642
        %v5868 = vunpack.c.l.b16 %v5643
        %v5869 = vunpack.c.h.b16 %v5643
        %v5870 = vunpack.c.l.b16 %v5644
        %v5871 = vunpack.c.h.b16 %v5644
        %v5872 = vunpack.c.l.b16 %v5645
        %v5873 = vunpack.c.h.b16 %v5645
        %v5874 = vunpack.c.l.b16 %v5646
        %v5875 = vunpack.c.h.b16 %v5646
        %v5876 = vunpack.c.l.b16 %v5647
        %v5877 = vunpack.c.h.b16 %v5647
        %v5878 = vunpack.c.l.b16 %v5648
        %v5879 = vunpack.c.h.b16 %v5648
        %v5880 = vunpack.c.l.b16 %v5649
        %v5881 = vunpack.c.h.b16 %v5649
        %v5882 = vunpack.c.l.b16 %v5650
        %v5883 = vunpack.c.h.b16 %v5650
        %v5884 = vunpack.c.l.b16 %v5651
        %v5885 = vunpack.c.h.b16 %v5651
        %v5886 = vunpack.c.l.b16 %v5652
        %v5887 = vunpack.c.h.b16 %v5652
        %v5888 = vunpack.c.l.b16 %v5653
        %v5889 = vunpack.c.h.b16 %v5653
        %v5890 = vunpack.c.l.b16 %v5654
        %v5891 = vunpack.c.h.b16 %v5654
        %v5892 = vunpack.c.l.b16 %v5655
        %v5893 = vunpack.c.h.b16 %v5655
        %v5894 = vunpack.c.l.b16 %v5656
        %v5895 = vunpack.c.h.b16 %v5656
        %v5896 = vunpack.c.l.b16 %v5657
        %v5897 = vunpack.c.h.b16 %v5657
        %v5898 = vunpack.c.l.b16 %v5658
        %v5899 = vunpack.c.h.b16 %v5658
        %v5900 = vunpack.c.l.b16 %v5659
        %v5901 = vunpack.c.h.b16 %v5659
        %v5902 = vunpack.c.l.b16 %v5660
        %v5903 = vunpack.c.h.b16 %v5660
        %v5904 = vunpack.c.l.b16 %v5661
        %v5905 = vunpack.c.h.b16 %v5661
        %v5906 = vunpack.c.l.b16 %v5662
        %v5907 = vunpack.c.h.b16 %v5662
        %v5908 = vunpack.c.l.b16 %v5663
        %v5909 = vunpack.c.h.b16 %v5663
        %v5910 = vunpack.c.l.b16 %v5664
        %v5911 = vunpack.c.h.b16 %v5664
        %v5912 = vunpack.c.l.b16 %v5665
        %v5913 = vunpack.c.h.b16 %v5665
        %v5914 = vunpack.c.l.b16 %v5666
        %v5915 = vunpack.c.h.b16 %v5666
        %v5916 = vunpack.c.l.b16 %v5667
        %v5917 = vunpack.c.h.b16 %v5667
        %v5918 = vunpack.c.l.b16 %v5668
        %v5919 = vunpack.c.h.b16 %v5668
        %v5920 = vunpack.c.l.b16 %v5669
        %v5921 = vunpack.c.h.b16 %v5669
        %v5922 = vunpack.c.l.b16 %v5670
        %v5923 = vunpack.c.h.b16 %v5670
        %v5924 = vunpack.c.l.b16 %v5671
        %v5925 = vunpack.c.h.b16 %v5671
        %v5926 = vunpack.c.l.b16 %v5672
        %v5927 = vunpack.c.h.b16 %v5672
        %v5928 = vunpack.c.l.b16 %v5673
        %v5929 = vunpack.c.h.b16 %v5673
        %v5930 = vunpack.c.l.b16 %v5674
        %v5931 = vunpack.c.h.b16 %v5674
        %v5932 = vunpack.c.l.b16 %v5675
        %v5933 = vunpack.c.h.b16 %v5675
        %v5934 = vunpack.c.l.b16 %v5676
        %v5935 = vunpack.c.h.b16 %v5676
        %v5936 = vunpack.c.l.b16 %v5677
        %v5937 = vunpack.c.h.b16 %v5677
        %v5938 = vunpack.c.l.b16 %v5678
        %v5939 = vunpack.c.h.b16 %v5678
        %v5940 = vunpack.c.l.b16 %v5679
        %v5941 = vunpack.c.h.b16 %v5679
        %v5942 = vunpack.c.l.b16 %v5680
        %v5943 = vunpack.c.h.b16 %v5680
        %v5944 = vunpack.c.l.b16 %v5681
        %v5945 = vunpack.c.h.b16 %v5681
        %v5946 = vunpack.c.l.b16 %v5682
        %v5947 = vunpack.c.h.b16 %v5682
        %v5948 = vunpack.c.l.b16 %v5683
        %v5949 = vunpack.c.h.b16 %v5683
        %v5950 = vunpack.c.l.b16 %v5684
        %v5951 = vunpack.c.h.b16 %v5684
        %v5952 = vunpack.c.l.b16 %v5685
        %v5953 = vunpack.c.h.b16 %v5685
        %v5954 = vunpack.c.l.b16 %v5686
        %v5955 = vunpack.c.h.b16 %v5686
        %v5956 = vunpack.c.l.b16 %v5687
        %v5957 = vunpack.c.h.b16 %v5687
        %v5958 = vunpack.c.l.b16 %v5688
        %v5959 = vunpack.c.h.b16 %v5688
        %v5960 = vunpack.c.l.b16 %v5689
        %v5961 = vunpack.c.h.b16 %v5689
        %v5962 = vunpack.c.l.b16 %v5690
        %v5963 = vunpack.c.h.b16 %v5690
        %v5964 = vunpack.c.l.b16 %v5691
        %v5965 = vunpack.c.h.b16 %v5691
        %v5966 = vunpack.c.l.b16 %v5692
        %v5967 = vunpack.c.h.b16 %v5692
        %v5968 = vunpack.c.l.b16 %v5693
        %v5969 = vunpack.c.h.b16 %v5693
        %v5970 = vunpack.c.l.b16 %v5694
        %v5971 = vunpack.c.h.b16 %v5694
        %v5972 = vunpack.c.l.b16 %v5695
        %v5973 = vunpack.c.h.b16 %v5695
        %v5974 = vunpack.c.l.b16 %v5696
        %v5975 = vunpack.c.h.b16 %v5696
        %v5976 = vunpack.c.l.b16 %v5697
        %v5977 = vunpack.c.h.b16 %v5697
        %v5978 = vunpack.c.l.b16 %v5698
        %v5979 = vunpack.c.h.b16 %v5698
        %v5980 = vunpack.c.l.b16 %v5699
        %v5981 = vunpack.c.h.b16 %v5699
        %v5982 = vunpack.c.l.b16 %v5700
        %v5983 = vunpack.c.h.b16 %v5700
        %v5984 = vunpack.c.l.b16 %v5701
        %v5985 = vunpack.c.h.b16 %v5701
        %v5986 = vunpack.c.l.b16 %v5702
        %v5987 = vunpack.c.h.b16 %v5702
        %v5988 = vunpack.c.l.b16 %v5703
        %v5989 = vunpack.c.h.b16 %v5703
        %v5990 = vunpack.c.l.b16 %v5704
        %v5991 = vunpack.c.h.b16 %v5704
        %v5992 = vunpack.c.l.b16 %v5705
        %v5993 = vunpack.c.h.b16 %v5705
        %v5994 = vunpack.c.l.b16 %v5706
        %v5995 = vunpack.c.h.b16 %v5706
        %v5996 = vunpack.c.l.b16 %v5707
        %v5997 = vunpack.c.h.b16 %v5707
        %v5998 = vpack.c.b16 %v5808, %v5806
        %v5999 = vpack.c.b16 %v5809, %v5807
        %v6000 = vpack.c.b16 %v5812, %v5810
        %v6001 = vpack.c.b16 %v5813, %v5811
        %v6002 = vpack.c.b16 %v5816, %v5814
        %v6003 = vpack.c.b16 %v5817, %v5815
        %v6004 = vpack.c.b16 %v5820, %v5818
        %v6005 = vpack.c.b16 %v5821, %v5819
        %v6006 = vpack.c.b16 %v5824, %v5822
        %v6007 = vpack.c.b16 %v5825, %v5823
        %v6008 = vpack.c.b16 %v5828, %v5826
        %v6009 = vpack.c.b16 %v5829, %v5827
        %v6010 = vpack.c.b16 %v5832, %v5830
        %v6011 = vpack.c.b16 %v5833, %v5831
        %v6012 = vpack.c.b16 %v5836, %v5834
        %v6013 = vpack.c.b16 %v5837, %v5835
        %v6014 = vpack.c.b16 %v5840, %v5838
        %v6015 = vpack.c.b16 %v5841, %v5839
        %v6016 = vpack.c.b16 %v5844, %v5842
        %v6017 = vpack.c.b16 %v5845, %v5843
        %v6018 = vpack.c.b16 %v5848, %v5846
        %v6019 = vpack.c.b16 %v5849, %v5847
        %v6020 = vpack.c.b16 %v5852, %v5850
        %v6021 = vpack.c.b16 %v5853, %v5851
        %v6022 = vpack.c.b16 %v5856, %v5854
        %v6023 = vpack.c.b16 %v5857, %v5855
        %v6024 = vpack.c.b16 %v5860, %v5858
        %v6025 = vpack.c.b16 %v5861, %v5859
        %v6026 = vpack.c.b16 %v5864, %v5862
        %v6027 = vpack.c.b16 %v5865, %v5863
        %v6028 = vpack.c.b16 %v5868, %v5866
        %v6029 = vpack.c.b16 %v5869, %v5867
        %v6030 = vpack.c.b16 %v5872, %v5870
        %v6031 = vpack.c.b16 %v5873, %v5871
        %v6032 = vpack.c.b16 %v5876, %v5874
        %v6033 = vpack.c.b16 %v5877, %v5875
        %v6034 = vpack.c.b16 %v5880, %v5878
        %v6035 = vpack.c.b16 %v5881, %v5879
        %v6036 = vpack.c.b16 %v5884, %v5882
        %v6037 = vpack.c.b16 %v5885, %v5883
        %v6038 = vpack.c.b16 %v5888, %v5886
        %v6039 = vpack.c.b16 %v5889, %v5887
        %v6040 = vpack.c.b16 %v5892, %v5890
        %v6041 = vpack.c.b16 %v5893, %v5891
        %v6042 = vpack.c.b16 %v5896, %v5894
        %v6043 = vpack.c.b16 %v5897, %v5895
        %v6044 = vpack.c.b16 %v5900, %v5898
        %v6045 = vpack.c.b16 %v5901, %v5899
        %v6046 = vpack.c.b16 %v5904, %v5902
        %v6047 = vpack.c.b16 %v5905, %v5903
        %v6048 = vpack.c.b16 %v5908, %v5906
        %v6049 = vpack.c.b16 %v5909, %v5907
        %v6050 = vpack.c.b16 %v5912, %v5910
        %v6051 = vpack.c.b16 %v5913, %v5911
        %v6052 = vpack.c.b16 %v5916, %v5914
        %v6053 = vpack.c.b16 %v5917, %v5915
        %v6054 = vpack.c.b16 %v5920, %v5918
        %v6055 = vpack.c.b16 %v5921, %v5919
        %v6056 = vpack.c.b16 %v5924, %v5922
        %v6057 = vpack.c.b16 %v5925, %v5923
        %v6058 = vpack.c.b16 %v5928, %v5926
        %v6059 = vpack.c.b16 %v5929, %v5927
        %v6060 = vpack.c.b16 %v5932, %v5930
        %v6061 = vpack.c.b16 %v5933, %v5931
        %v6062 = vpack.c.b16 %v5936, %v5934
        %v6063 = vpack.c.b16 %v5937, %v5935
        %v6064 = vpack.c.b16 %v5940, %v5938
        %v6065 = vpack.c.b16 %v5941, %v5939
        %v6066 = vpack.c.b16 %v5944, %v5942
        %v6067 = vpack.c.b16 %v5945, %v5943
        %v6068 = vpack.c.b16 %v5948, %v5946
        %v6069 = vpack.c.b16 %v5949, %v5947
        %v6070 = vpack.c.b16 %v5952, %v5950
        %v6071 = vpack.c.b16 %v5953, %v5951
        %v6072 = vpack.c.b16 %v5956, %v5954
        %v6073 = vpack.c.b16 %v5957, %v5955
        %v6074 = vpack.c.b16 %v5960, %v5958
        %v6075 = vpack.c.b16 %v5961, %v5959
        %v6076 = vpack.c.b16 %v5964, %v5962
        %v6077 = vpack.c.b16 %v5965, %v5963
        %v6078 = vpack.c.b16 %v5968, %v5966
        %v6079 = vpack.c.b16 %v5969, %v5967
        %v6080 = vpack.c.b16 %v5972, %v5970
        %v6081 = vpack.c.b16 %v5973, %v5971
        %v6082 = vpack.c.b16 %v5976, %v5974
        %v6083 = vpack.c.b16 %v5977, %v5975
        %v6084 = vpack.c.b16 %v5980, %v5978
        %v6085 = vpack.c.b16 %v5981, %v5979
        %v6086 = vpack.c.b16 %v5984, %v5982
        %v6087 = vpack.c.b16 %v5985, %v5983
        %v6088 = vpack.c.b16 %v5988, %v5986
        %v6089 = vpack.c.b16 %v5989, %v5987
        %v6090 = vpack.c.b16 %v5992, %v5990
        %v6091 = vpack.c.b16 %v5993, %v5991
        %v6092 = vpack.c.b16 %v5996, %v5994
        %v6093 = vpack.c.b16 %v5997, %v5995
        %6190 = vmatpush.bf16.msra.mxu0 %v6012
        %6191 = vmatpush.bf16.msra.mxu0 %v6010
        %6192 = vmatpush.bf16.msra.mxu0 %v6008
        %6193 = vmatpush.bf16.msra.mxu0 %v6006
        %6194 = vmatpush.bf16.msra.mxu0 %v6004
        %6195 = vmatpush.bf16.msra.mxu0 %v6002
        %6196 = vmatpush.bf16.msra.mxu0 %v6000
        %6197 = vmatpush.bf16.msra.mxu0 %v5998
        %6198 = vmatmul.bf16.gmra.mxu0 %v5605
        %v6199 = vpop.f32.mrf.mxu0
        %v6200 = vadd.f32 %v5708, %v6199
        %v6201 = vpop.f32.mrf.mxu0
        %v6202 = vadd.f32 %v5708, %v6201
        %6203 = vdwg.mxu0
        %6204 = vmatpush.bf16.msra.mxu0 %v6028
        %6205 = vmatpush.bf16.msra.mxu0 %v6026
        %6206 = vmatpush.bf16.msra.mxu0 %v6024
        %6207 = vmatpush.bf16.msra.mxu0 %v6022
        %6208 = vmatpush.bf16.msra.mxu0 %v6020
        %6209 = vmatpush.bf16.msra.mxu0 %v6018
        %6210 = vmatpush.bf16.msra.mxu0 %v6016
        %6211 = vmatpush.bf16.msra.mxu0 %v6014
        %6212 = vmatmul.bf16.gmra.mxu0 %v5606
        %v6213 = vpop.f32.mrf.mxu0
        %v6214 = vadd.f32 %v6200, %v6213
        %v6215 = vpop.f32.mrf.mxu0
        %v6216 = vadd.f32 %v6202, %v6215
        %6217 = vdwg.mxu0
        %6218 = vmatpush.bf16.msra.mxu0 %v6044
        %6219 = vmatpush.bf16.msra.mxu0 %v6042
        %6220 = vmatpush.bf16.msra.mxu0 %v6040
        %6221 = vmatpush.bf16.msra.mxu0 %v6038
        %6222 = vmatpush.bf16.msra.mxu0 %v6036
        %6223 = vmatpush.bf16.msra.mxu0 %v6034
        %6224 = vmatpush.bf16.msra.mxu0 %v6032
        %6225 = vmatpush.bf16.msra.mxu0 %v6030
        %6226 = vmatmul.bf16.gmra.mxu0 %v5607
        %v6227 = vpop.f32.mrf.mxu0
        %v6228 = vadd.f32 %v6214, %v6227
        %v6229 = vpop.f32.mrf.mxu0
        %v6230 = vadd.f32 %v6216, %v6229
        %6231 = vdwg.mxu0
        %6232 = vmatpush.bf16.msra.mxu0 %v6060
        %6233 = vmatpush.bf16.msra.mxu0 %v6058
        %6234 = vmatpush.bf16.msra.mxu0 %v6056
        %6235 = vmatpush.bf16.msra.mxu0 %v6054
        %6236 = vmatpush.bf16.msra.mxu0 %v6052
        %6237 = vmatpush.bf16.msra.mxu0 %v6050
        %6238 = vmatpush.bf16.msra.mxu0 %v6048
        %6239 = vmatpush.bf16.msra.mxu0 %v6046
        %6240 = vmatmul.bf16.gmra.mxu0 %v5608
        %v6241 = vpop.f32.mrf.mxu0
        %v6242 = vadd.f32 %v6228, %v6241
        %v6243 = vpop.f32.mrf.mxu0
        %v6244 = vadd.f32 %v6230, %v6243
        %6245 = vdwg.mxu0
        %6246 = vmatpush.bf16.msra.mxu0 %v6076
        %6247 = vmatpush.bf16.msra.mxu0 %v6074
        %6248 = vmatpush.bf16.msra.mxu0 %v6072
        %6249 = vmatpush.bf16.msra.mxu0 %v6070
        %6250 = vmatpush.bf16.msra.mxu0 %v6068
        %6251 = vmatpush.bf16.msra.mxu0 %v6066
        %6252 = vmatpush.bf16.msra.mxu0 %v6064
        %6253 = vmatpush.bf16.msra.mxu0 %v6062
        %6254 = vmatmul.bf16.gmra.mxu0 %v5609
        %v6255 = vpop.f32.mrf.mxu0
        %v6256 = vadd.f32 %v6242, %v6255
        %v6257 = vpop.f32.mrf.mxu0
        %v6258 = vadd.f32 %v6244, %v6257
        %6259 = vdwg.mxu0
        %6260 = vmatpush.bf16.msra.mxu0 %v6092
        %6261 = vmatpush.bf16.msra.mxu0 %v6090
        %6262 = vmatpush.bf16.msra.mxu0 %v6088
        %6263 = vmatpush.bf16.msra.mxu0 %v6086
        %6264 = vmatpush.bf16.msra.mxu0 %v6084
        %6265 = vmatpush.bf16.msra.mxu0 %v6082
        %6266 = vmatpush.bf16.msra.mxu0 %v6080
        %6267 = vmatpush.bf16.msra.mxu0 %v6078
        %6268 = vmatmul.bf16.gmra.mxu0 %v5610
        %v6269 = vpop.f32.mrf.mxu0
        %v6270 = vadd.f32 %v6256, %v6269
        %v6271 = vpop.f32.mrf.mxu0
        %v6272 = vadd.f32 %v6258, %v6271
        %6273 = vdwg.mxu0
        %6274 = vmatpush.bf16.msra.mxu0 %v6013
        %6275 = vmatpush.bf16.msra.mxu0 %v6011
        %6276 = vmatpush.bf16.msra.mxu0 %v6009
        %6277 = vmatpush.bf16.msra.mxu0 %v6007
        %6278 = vmatpush.bf16.msra.mxu0 %v6005
        %6279 = vmatpush.bf16.msra.mxu0 %v6003
        %6280 = vmatpush.bf16.msra.mxu0 %v6001
        %6281 = vmatpush.bf16.msra.mxu0 %v5999
        %6282 = vmatmul.bf16.gmra.mxu0 %v5605
        %v6283 = vpop.f32.mrf.mxu0
        %v6284 = vadd.f32 %v5709, %v6283
        %v6285 = vpop.f32.mrf.mxu0
        %v6286 = vadd.f32 %v5709, %v6285
        %6287 = vdwg.mxu0
        %6288 = vmatpush.bf16.msra.mxu0 %v6029
        %6289 = vmatpush.bf16.msra.mxu0 %v6027
        %6290 = vmatpush.bf16.msra.mxu0 %v6025
        %6291 = vmatpush.bf16.msra.mxu0 %v6023
        %6292 = vmatpush.bf16.msra.mxu0 %v6021
        %6293 = vmatpush.bf16.msra.mxu0 %v6019
        %6294 = vmatpush.bf16.msra.mxu0 %v6017
        %6295 = vmatpush.bf16.msra.mxu0 %v6015
        %6296 = vmatmul.bf16.gmra.mxu0 %v5606
        %v6297 = vpop.f32.mrf.mxu0
        %v6298 = vadd.f32 %v6284, %v6297
        %v6299 = vpop.f32.mrf.mxu0
        %v6300 = vadd.f32 %v6286, %v6299
        %6301 = vdwg.mxu0
        %6302 = vmatpush.bf16.msra.mxu0 %v6045
        %6303 = vmatpush.bf16.msra.mxu0 %v6043
        %6304 = vmatpush.bf16.msra.mxu0 %v6041
        %6305 = vmatpush.bf16.msra.mxu0 %v6039
        %6306 = vmatpush.bf16.msra.mxu0 %v6037
        %6307 = vmatpush.bf16.msra.mxu0 %v6035
        %6308 = vmatpush.bf16.msra.mxu0 %v6033
        %6309 = vmatpush.bf16.msra.mxu0 %v6031
        %6310 = vmatmul.bf16.gmra.mxu0 %v5607
        %v6311 = vpop.f32.mrf.mxu0
        %v6312 = vadd.f32 %v6298, %v6311
        %v6313 = vpop.f32.mrf.mxu0
        %v6314 = vadd.f32 %v6300, %v6313
        %6315 = vdwg.mxu0
        %6316 = vmatpush.bf16.msra.mxu0 %v6061
        %6317 = vmatpush.bf16.msra.mxu0 %v6059
        %6318 = vmatpush.bf16.msra.mxu0 %v6057
        %6319 = vmatpush.bf16.msra.mxu0 %v6055
        %6320 = vmatpush.bf16.msra.mxu0 %v6053
        %6321 = vmatpush.bf16.msra.mxu0 %v6051
        %6322 = vmatpush.bf16.msra.mxu0 %v6049
        %6323 = vmatpush.bf16.msra.mxu0 %v6047
        %6324 = vmatmul.bf16.gmra.mxu0 %v5608
        %v6325 = vpop.f32.mrf.mxu0
        %v6326 = vadd.f32 %v6312, %v6325
        %v6327 = vpop.f32.mrf.mxu0
        %v6328 = vadd.f32 %v6314, %v6327
        %6329 = vdwg.mxu0
        %6330 = vmatpush.bf16.msra.mxu0 %v6077
        %6331 = vmatpush.bf16.msra.mxu0 %v6075
        %6332 = vmatpush.bf16.msra.mxu0 %v6073
        %6333 = vmatpush.bf16.msra.mxu0 %v6071
        %6334 = vmatpush.bf16.msra.mxu0 %v6069
        %6335 = vmatpush.bf16.msra.mxu0 %v6067
        %6336 = vmatpush.bf16.msra.mxu0 %v6065
        %6337 = vmatpush.bf16.msra.mxu0 %v6063
        %6338 = vmatmul.bf16.gmra.mxu0 %v5609
        %v6339 = vpop.f32.mrf.mxu0
        %v6340 = vadd.f32 %v6326, %v6339
        %v6341 = vpop.f32.mrf.mxu0
        %v6342 = vadd.f32 %v6328, %v6341
        %6343 = vdwg.mxu0
        %6344 = vmatpush.bf16.msra.mxu0 %v6093
        %6345 = vmatpush.bf16.msra.mxu0 %v6091
        %6346 = vmatpush.bf16.msra.mxu0 %v6089
        %6347 = vmatpush.bf16.msra.mxu0 %v6087
        %6348 = vmatpush.bf16.msra.mxu0 %v6085
        %6349 = vmatpush.bf16.msra.mxu0 %v6083
        %6350 = vmatpush.bf16.msra.mxu0 %v6081
        %6351 = vmatpush.bf16.msra.mxu0 %v6079
        %6352 = vmatmul.bf16.gmra.mxu0 %v5610
        %v6353 = vpop.f32.mrf.mxu0
        %v6354 = vadd.f32 %v6340, %v6353
        %v6355 = vpop.f32.mrf.mxu0
        %v6356 = vadd.f32 %v6342, %v6355
        %6357 = vdwg.mxu0
        %v6358 = vmul.f32 %v6270, %v317
        %v6359 = vmul.f32 %v6354, %v318
        %v6360 = vmul.f32 %v6272, %v319
        %v6361 = vmul.f32 %v6356, %v320
        %v6362 = vadd.f32 %v6358, %v6360
        %v6363 = vrot.slane %v6362, 4
        %v6364 = vadd.f32 %v6362, %v6363
        %v6365 = vrot.slane %v6364, 2
        %v6366 = vadd.f32 %v6364, %v6365
        %v6367 = vrot.slane %v6366, 1
        %v6368 = vadd.f32 %v6366, %v6367
        %v6369 = vadd.f32 %v6359, %v6361
        %v6370 = vrot.slane %v6369, 4
        %v6371 = vadd.f32 %v6369, %v6370
        %v6372 = vrot.slane %v6371, 2
        %v6373 = vadd.f32 %v6371, %v6372
        %v6374 = vrot.slane %v6373, 1
        %v6375 = vadd.f32 %v6373, %v6374
        %v6376 = vmul.f32 %v6358, %v6270
        %v6377 = vmul.f32 %v6359, %v6354
        %v6378 = vmul.f32 %v6360, %v6272
        %v6379 = vmul.f32 %v6361, %v6356
        %v6380 = vadd.f32 %v6376, %v6378
        %v6381 = vrot.slane %v6380, 4
        %v6382 = vadd.f32 %v6380, %v6381
        %v6383 = vrot.slane %v6382, 2
        %v6384 = vadd.f32 %v6382, %v6383
        %v6385 = vrot.slane %v6384, 1
        %v6386 = vadd.f32 %v6384, %v6385
        %v6387 = vadd.f32 %v6377, %v6379
        %v6388 = vrot.slane %v6387, 4
        %v6389 = vadd.f32 %v6387, %v6388
        %v6390 = vrot.slane %v6389, 2
        %v6391 = vadd.f32 %v6389, %v6390
        %v6392 = vrot.slane %v6391, 1
        %v6393 = vadd.f32 %v6391, %v6392
        %v6394 = vsel %vm1290, %v6368, %v6386
        %v6395 = vsel %vm1290, %v6375, %v6393
        %6396 = vmatpush.msra.mxu0 %v351
        %6397 = vmatpush.msra.mxu0 %v349
        %6398 = vmatpush.msra.mxu0 %v347
        %6399 = vmatpush.msra.mxu0 %v345
        %6400 = vmatpush.msra.mxu0 %v343
        %6401 = vmatpush.msra.mxu0 %v341
        %6402 = vmatpush.msra.mxu0 %v339
        %6403 = vmatpush.msra.mxu0 %v337
        %6404 = vmatpush.msra.mxu0 %v335
        %6405 = vmatpush.msra.mxu0 %v333
        %6406 = vmatpush.msra.mxu0 %v331
        %6407 = vmatpush.msra.mxu0 %v329
        %6408 = vmatpush.msra.mxu0 %v327
        %6409 = vmatpush.msra.mxu0 %v325
        %6410 = vmatpush.msra.mxu0 %v323
        %6411 = vmatpush.msra.mxu0 %v321
        %6412 = vmatmul.f32.gmra.mxu0 %v6394
        %v6413 = vpop.f32.mrf.mxu0
        %v6414 = vadd.f32 0.0, %v6413
        %6415 = vdwg.mxu0
        %6416 = vmatpush.msra.mxu0 %v383
        %6417 = vmatpush.msra.mxu0 %v381
        %6418 = vmatpush.msra.mxu0 %v379
        %6419 = vmatpush.msra.mxu0 %v377
        %6420 = vmatpush.msra.mxu0 %v375
        %6421 = vmatpush.msra.mxu0 %v373
        %6422 = vmatpush.msra.mxu0 %v371
        %6423 = vmatpush.msra.mxu0 %v369
        %6424 = vmatpush.msra.mxu0 %v367
        %6425 = vmatpush.msra.mxu0 %v365
        %6426 = vmatpush.msra.mxu0 %v363
        %6427 = vmatpush.msra.mxu0 %v361
        %6428 = vmatpush.msra.mxu0 %v359
        %6429 = vmatpush.msra.mxu0 %v357
        %6430 = vmatpush.msra.mxu0 %v355
        %6431 = vmatpush.msra.mxu0 %v353
        %6432 = vmatmul.f32.gmra.mxu0 %v6395
        %v6433 = vpop.f32.mrf.mxu0
        %v6434 = vadd.f32 %v6414, %v6433
        %6435 = vdwg.mxu0
        %6436 = vmatpush.msra.mxu0 %v352
        %6437 = vmatpush.msra.mxu0 %v350
        %6438 = vmatpush.msra.mxu0 %v348
        %6439 = vmatpush.msra.mxu0 %v346
        %6440 = vmatpush.msra.mxu0 %v344
        %6441 = vmatpush.msra.mxu0 %v342
        %6442 = vmatpush.msra.mxu0 %v340
        %6443 = vmatpush.msra.mxu0 %v338
        %6444 = vmatpush.msra.mxu0 %v336
        %6445 = vmatpush.msra.mxu0 %v334
        %6446 = vmatpush.msra.mxu0 %v332
        %6447 = vmatpush.msra.mxu0 %v330
        %6448 = vmatpush.msra.mxu0 %v328
        %6449 = vmatpush.msra.mxu0 %v326
        %6450 = vmatpush.msra.mxu0 %v324
        %6451 = vmatpush.msra.mxu0 %v322
        %6452 = vmatmul.f32.gmra.mxu0 %v6394
        %v6453 = vpop.f32.mrf.mxu0
        %v6454 = vadd.f32 0.0, %v6453
        %6455 = vdwg.mxu0
        %6456 = vmatpush.msra.mxu0 %v384
        %6457 = vmatpush.msra.mxu0 %v382
        %6458 = vmatpush.msra.mxu0 %v380
        %6459 = vmatpush.msra.mxu0 %v378
        %6460 = vmatpush.msra.mxu0 %v376
        %6461 = vmatpush.msra.mxu0 %v374
        %6462 = vmatpush.msra.mxu0 %v372
        %6463 = vmatpush.msra.mxu0 %v370
        %6464 = vmatpush.msra.mxu0 %v368
        %6465 = vmatpush.msra.mxu0 %v366
        %6466 = vmatpush.msra.mxu0 %v364
        %6467 = vmatpush.msra.mxu0 %v362
        %6468 = vmatpush.msra.mxu0 %v360
        %6469 = vmatpush.msra.mxu0 %v358
        %6470 = vmatpush.msra.mxu0 %v356
        %6471 = vmatpush.msra.mxu0 %v354
        %6472 = vmatmul.f32.gmra.mxu0 %v6395
        %v6473 = vpop.f32.mrf.mxu0
        %v6474 = vadd.f32 %v6454, %v6473
        %6475 = vdwg.mxu0
        %v6476 = vmul.f32 %v6434, 0.015625
        %v6477 = vmul.f32 %v6474, 0.015625
        %v6478 = vmul.f32 %v6476, %v6476
        %v6479 = vmul.f32 %v6477, %v6477
        %v6482 = vrot.slane %v6478, 7
        %v6483 = vrot.slane %v6479, 7
        %v6486 = vsub.f32 %v6476, %v6482
        %v6487 = vsub.f32 %v6477, %v6483
        %v6488 = vperm.slane %v6476, 0
        %v6489 = vperm.slane %v6477, 0
        %v6490 = vsub.f32 %v6270, %v6488
        %v6491 = vsub.f32 %v6354, %v6489
        %v6492 = vsub.f32 %v6272, %v6488
        %v6493 = vsub.f32 %v6356, %v6489
        %v6494 = vadd.f32 %v6486, 1e-05
        %v6495 = vadd.f32 %v6487, 1e-05
        %v6496 = vrsqrt.pop %v6494
        %v6497 = vmul.f32 %v6496, %v6494
        %v6498 = vmul.f32 %v6497, %v6496
        %v6499 = vmul.f32 0.5, %v6498
        %v6500 = vsub.f32 1.5, %v6499
        %v6501 = vmul.f32 %v6496, %v6500
        %vm6502 = vweird.f32 %v6494
        %vm6503 = vweird.f32 %v6496
        %vm6504 = vmor %vm6502, %vm6503
        %v6505 = vsel %vm6504, %v6496, %v6501
        %v6506 = vrsqrt.pop %v6495
        %v6507 = vmul.f32 %v6506, %v6495
        %v6508 = vmul.f32 %v6507, %v6506
        %v6509 = vmul.f32 0.5, %v6508
        %v6510 = vsub.f32 1.5, %v6509
        %v6511 = vmul.f32 %v6506, %v6510
        %vm6512 = vweird.f32 %v6495
        %vm6513 = vweird.f32 %v6506
        %vm6514 = vmor %vm6512, %vm6513
        %v6515 = vsel %vm6514, %v6506, %v6511
        %v6516 = vperm.slane %v6505, 1
        %v6517 = vperm.slane %v6515, 1
        %v6518 = vmul.f32 %v6490, %v6516
        %v6519 = vmul.f32 %v6491, %v6517
        %v6520 = vmul.f32 %v6492, %v6516
        %v6521 = vmul.f32 %v6493, %v6517
        %v6522 = vperm.slane %v400, 2
        %v6523 = vperm.slane %v401, 2
        %v6524 = vmul.f32 %v6518, %v6522
        %v6525 = vmul.f32 %v6519, %v6523
        %v6526 = vmul.f32 %v6520, %v6522
        %v6527 = vmul.f32 %v6521, %v6523
        %v6528 = vperm.slane %v400, 3
        %v6529 = vperm.slane %v401, 3
        %v6530 = vadd.f32 %v6524, %v6528
        %v6531 = vadd.f32 %v6525, %v6529
        %v6532 = vadd.f32 %v6526, %v6528
        %v6533 = vadd.f32 %v6527, %v6529
        %v6534 = vadd.f32 %v4496, %v6530
        %v6535 = vadd.f32 %v4497, %v6531
        %v6536 = vadd.f32 %v4498, %v6532
        %v6537 = vadd.f32 %v4499, %v6533
        %v6538 = vmul.f32 %v6534, %v317
        %v6539 = vmul.f32 %v6535, %v318
        %v6540 = vmul.f32 %v6536, %v319
        %v6541 = vmul.f32 %v6537, %v320
        %6542 = vst [vmem:[%s315] sm:$0xff] %v6538
        %6543 = vst [vmem:[%s315 + $0x8] sm:$0xff] %v6539
        %6544 = vst [vmem:[%s315 + $0x10] sm:$0xff] %v6540
        %6545 = vst [vmem:[%s315 + $0x18] sm:$0xff] %v6541
        %p6546 = scmp.lt.s32.totalorder %s19, 1
        %s6547 = scalar_select %p6546, %s19, 1
        %s6548 = smul.addr %s6547, 4
        %s6549 = smul.addr %s6548, 8
        %s6550 = scalar_lea.vmem %s7, %s6549
        // Predicated region
        $region53: #{decoder_forward.1} parent=47 // pred_check
          %p6551 = pneg %p194
        $region54: #{decoder_forward.1} parent=47 // pred_check_branch
          %6553 = sbr.rel (%p6551) target = $region56
        $region55: #{decoder_forward.1} parent=47 // pred_region
          _
        $region56: #{decoder_forward.1} parent=47 // pred_fallthru
          _
      $region48: #{decoder_forward.1} parent=5 // pred_fallthru
        _
      %p6554 = scmp.le.s32.totalorder 2, %s14
      // Predicated region
      $region57: #{decoder_forward.1} parent=5 // pred_check
        %p6555 = pneg %p6554
      $region58: #{decoder_forward.1} parent=5 // pred_check_branch
        %6557 = sbr.rel (%p6555) target = $region60
      $region59: #{decoder_forward.1} parent=5 // pred_region
        %s6558 = ssub.s32 %s14, 2
        // Predicated region
        $region61: #{decoder_forward.1} parent=59 // pred_check
          %p6559 = pneg %p200
        $region62: #{decoder_forward.1} parent=59 // pred_check_branch
          %6561 = sbr.rel (%p6559) target = $region64
        $region63: #{decoder_forward.1} parent=59 // pred_region
          %p6562 = scmp.lt.s32.totalorder %s20, 1
          %s6563 = scalar_select %p6562, %s20, 1
          %s6564 = smul.addr %s6563, 4
          %s6565 = smul.addr %s6564, 8
          %s6566 = scalar_lea.vmem %s7, %s6565
        $region64: #{decoder_forward.1} parent=59 // pred_fallthru
          _
      $region60: #{decoder_forward.1} parent=5 // pred_fallthru
        _
    $region6: #{decoder_forward.1} parent=1 // loop_footer
      %s18 = sadd.s32 1, %s14
    $region7: #{decoder_forward.1} parent=1 // loop_footer_branch
      %13 = sbr.rel target = $region3
    $region8: #{decoder_forward.1} parent=1 // loop_exit
      _
    %6567 = vsyncpa [#allocation3], 1
    %s6568 = scalar_lea.sflag [#allocation3], 1
    %6569 = vsyncpa %s6568, 1

</llo_original>
